<compile_context>
chip_gen: v6e
topology: v6e:2x2x1
jax: 0.10.0
libtpu: 0.0.40
codegen_flags: <defaults>
</compile_context>

<pallas_src>
import functools
import math

import jax
import jax.numpy as jnp
from jax.experimental import pallas as pl
from jax.experimental.pallas import tpu as pltpu


# -----------------------------------------------------------------------------
# Fused kernel: relu1 -> lstm1(L0,L1) -> [dropout1] -> relu2 ->
#               lstm2(L0,L1 init=hc1) -> [dropout2] -> last step -> linear
# -----------------------------------------------------------------------------
def _fused_lstm_model_kernel(
        x_ref,                                   # (T, B, D), relu1 applied here
        wih0_ref, whh0_ref, b0_ref,              # lstm1 layer 0
        wih1_ref, whh1_ref, b1_ref,              # lstm1 layer 1
        wih2_ref, whh2_ref, b2_ref,              # lstm2 layer 0
        wih3_ref, whh3_ref, b3_ref,              # lstm2 layer 1
        lin_w_ref, lin_b_ref,                    # final linear (lane-padded out)
        out_ref,                                 # (B, O_pad)
        y1_sc,                                   # scratch: lstm1 out seq (T, B, H)
        *, seq_len, hidden):
    H = hidden
    B = x_ref.shape[1]

    # Hoist bias broadcasts out of the unrolled time loops (no CSE otherwise).
    b0 = jnp.broadcast_to(b0_ref[...], (B, 4 * H))
    b1 = jnp.broadcast_to(b1_ref[...], (B, 4 * H))
    b2 = jnp.broadcast_to(b2_ref[...], (B, 4 * H))
    b3 = jnp.broadcast_to(b3_ref[...], (B, 4 * H))

    def cell(x_t, h, c, wih_ref, whh_ref, b):
        # Gate columns are packed [i, f, o, g].
        gates = (jnp.dot(x_t, wih_ref[...], preferred_element_type=jnp.float32)
                 + jnp.dot(h, whh_ref[...], preferred_element_type=jnp.float32)
                 + b)                                   # (B, 4H)
        sig = jax.nn.sigmoid(gates[:, :3 * H])          # i, f, o in one EUP pass
        g_g = jnp.tanh(gates[:, 3 * H:])                # g in one EUP pass
        i_g = sig[:, 0 * H:1 * H]
        f_g = sig[:, 1 * H:2 * H]
        o_g = sig[:, 2 * H:3 * H]
        c_new = f_g * c + i_g * g_g
        h_new = o_g * jnp.tanh(c_new)
        return h_new, c_new

    zeros = jnp.zeros((B, H), jnp.float32)

    # ---- phase 1: relu1 -> lstm1 (2 layers), zero initial state -------------
    def phase1(t, carry):
        h0, c0, h1, c1 = carry
        x_t = jnp.maximum(x_ref[t], 0.0)                # relu1
        h0, c0 = cell(x_t, h0, c0, wih0_ref, whh0_ref, b0)
        h1, c1 = cell(h0, h1, c1, wih1_ref, whh1_ref, b1)
        y1_sc[t] = h1                                   # lstm1 hidden sequence
        return h0, c0, h1, c1

    h0f, c0f, h1f, c1f = jax.lax.fori_loop(
        0, seq_len, phase1, (zeros, zeros, zeros, zeros), unroll=True)

    # ---- phase 2: dropout1(id) -> relu2 -> lstm2 (2 layers), init = hc1 -----
    # lstm2 layer k starts from lstm1 layer k's final (h, c), matching
    # torch.nn.LSTM(x, hc1) per-layer initial-state semantics.
    def phase2(t, carry):
        h2, c2, h3, c3 = carry
        x_t = jnp.maximum(y1_sc[t], 0.0)                # relu2
        h2, c2 = cell(x_t, h2, c2, wih2_ref, whh2_ref, b2)
        h3, c3 = cell(h2, h3, c3, wih3_ref, whh3_ref, b3)
        return h2, c2, h3, c3

    _, _, h3f, _ = jax.lax.fori_loop(
        0, seq_len, phase2, (h0f, c0f, h1f, c1f), unroll=True)

    # ---- dropout2(id) -> last timestep -> linear -----------------------------
    out_ref[...] = (jnp.dot(h3f, lin_w_ref[...],
                            preferred_element_type=jnp.float32)
                    + lin_b_ref[...])


# -----------------------------------------------------------------------------
# Parameter construction.
# Weights are generated in PyTorch layout (gate rows [i, f, g, o]) and then
# packed to the kernel layout: transposed, gate COLUMNS reordered to
# [i, f, o, g], biases pre-summed (b_ih + b_hh).
# -----------------------------------------------------------------------------
def pack_lstm_layer(w_ih, w_hh, b_ih, b_hh):
    def reorder_t(w):                                   # (4H, X) -> (X, 4H)
        i, f, g, o = jnp.split(w, 4, axis=0)
        return jnp.concatenate([i, f, o, g], axis=0).T
    b = b_ih + b_hh
    bi, bf, bg, bo = jnp.split(b, 4)
    b_row = jnp.concatenate([bi, bf, bo, bg]).reshape(1, -1)
    return reorder_t(w_ih), reorder_t(w_hh), b_row


def init_params(key, input_size, hidden_size, output_shape):
    H = hidden_size
    bound = 1.0 / math.sqrt(H)

    def uni(k, shape):
        return jax.random.uniform(k, shape, jnp.float32, -bound, bound)

    keys = iter(jax.random.split(key, 18))
    p = {"hidden_size": H, "output_shape": output_shape}

    def make_layer(prefix, in_dim):
        w_ih = uni(next(keys), (4 * H, in_dim))         # PyTorch layout
        w_hh = uni(next(keys), (4 * H, H))
        b_ih = uni(next(keys), (4 * H,))
        b_hh = uni(next(keys), (4 * H,))
        wih_t, whh_t, b_row = pack_lstm_layer(w_ih, w_hh, b_ih, b_hh)
        p[prefix + "_wih"] = wih_t
        p[prefix + "_whh"] = whh_t
        p[prefix + "_b"] = b_row

    make_layer("l1_0", input_size)                      # lstm1
    make_layer("l1_1", H)
    make_layer("l2_0", H)                               # lstm2
    make_layer("l2_1", H)

    p["lin_w"] = uni(next(keys), (H, output_shape))     # stored as W^T: (H, O)
    p["lin_b"] = uni(next(keys), (output_shape,))
    return p


# -----------------------------------------------------------------------------
# Public wrapper: batch-first input (B, T, input_size), like PyTorch
# batch_first=True.  Pads batch to the sublane height and the linear output to
# a full lane width, then slices the real result back out.
# -----------------------------------------------------------------------------
def lstm_model_forward(x_btd, params):
    B, T, D = x_btd.shape
    H = params["hidden_size"]
    O = params["output_shape"]

    B_pad = max(8, ((B + 7) // 8) * 8)                  # f32 sublane height
    O_pad = ((O + 127) // 128) * 128                    # lane-dense final store

    x_tbd = jnp.transpose(x_btd, (1, 0, 2)).astype(jnp.float32)   # time-major
    x_pad = jnp.pad(x_tbd, ((0, 0), (0, B_pad - B), (0, 0)))

    lin_w_pad = jnp.pad(params["lin_w"], ((0, 0), (0, O_pad - O)))
    lin_b_pad = jnp.pad(params["lin_b"], (0, O_pad - O)).reshape(1, O_pad)

    kernel = functools.partial(_fused_lstm_model_kernel, seq_len=T, hidden=H)

    out_pad = pl.pallas_call(
        kernel,
        out_shape=jax.ShapeDtypeStruct((B_pad, O_pad), jnp.float32),
        scratch_shapes=[pltpu.VMEM((T, B_pad, H), jnp.float32)],   # lstm1 seq
    )(x_pad,
      params["l1_0_wih"], params["l1_0_whh"], params["l1_0_b"],
      params["l1_1_wih"], params["l1_1_whh"], params["l1_1_b"],
      params["l2_0_wih"], params["l2_0_whh"], params["l2_0_b"],
      params["l2_1_wih"], params["l2_1_whh"], params["l2_1_b"],
      lin_w_pad, lin_b_pad)

    return out_pad[:B, :O]


if __name__ == "__main__":
    INPUT_SIZE, HIDDEN_SIZE, OUTPUT_SHAPE = 8, 32, 4
    B, T = 2, 8

    key = jax.random.PRNGKey(0)
    k_x, k_p = jax.random.split(key)
    x = jax.random.normal(k_x, (B, T, INPUT_SIZE), jnp.float32)
    params = init_params(k_p, INPUT_SIZE, HIDDEN_SIZE, OUTPUT_SHAPE)

    out = lstm_model_forward(x, params)
    jax.block_until_ready(out)
    assert out.shape == (B, OUTPUT_SHAPE)
    assert bool(jnp.all(jnp.isfinite(out)))
    print("KERNEL_OK")
</pallas_src>

<mosaic_0001>
module attributes {stable_mosaic.version = 11 : i64} {
  func.func @_fused_lstm_model_kernel(%arg0: memref<8x8x8xf32, #tpu.memory_space<vmem>>, %arg1: memref<8x128xf32, #tpu.memory_space<vmem>>, %arg2: memref<32x128xf32, #tpu.memory_space<vmem>>, %arg3: memref<1x128xf32, #tpu.memory_space<vmem>>, %arg4: memref<32x128xf32, #tpu.memory_space<vmem>>, %arg5: memref<32x128xf32, #tpu.memory_space<vmem>>, %arg6: memref<1x128xf32, #tpu.memory_space<vmem>>, %arg7: memref<32x128xf32, #tpu.memory_space<vmem>>, %arg8: memref<32x128xf32, #tpu.memory_space<vmem>>, %arg9: memref<1x128xf32, #tpu.memory_space<vmem>>, %arg10: memref<32x128xf32, #tpu.memory_space<vmem>>, %arg11: memref<32x128xf32, #tpu.memory_space<vmem>>, %arg12: memref<1x128xf32, #tpu.memory_space<vmem>>, %arg13: memref<32x128xf32, #tpu.memory_space<vmem>>, %arg14: memref<1x128xf32, #tpu.memory_space<vmem>>, %arg15: memref<8x128xf32, #tpu.memory_space<vmem>>, %arg16: memref<8x8x32xf32, #tpu.memory_space<vmem>>) attributes {dimension_semantics = [], scalar_prefetch = 0 : i64, scratch_operands = 1 : i64, tpu.core_type = #tpu.core_type<tc>} {
    %c0 = arith.constant 0 : index
    %c0_0 = arith.constant 0 : index
    %0 = vector.load %arg3[%c0, %c0_0] : memref<1x128xf32, #tpu.memory_space<vmem>>, vector<1x128xf32>
    %1 = vector.shape_cast %0 : vector<1x128xf32> to vector<1x128xf32>
    %2 = vector.broadcast %1 : vector<1x128xf32> to vector<8x128xf32>
    %c0_1 = arith.constant 0 : index
    %c0_2 = arith.constant 0 : index
    %3 = vector.load %arg6[%c0_1, %c0_2] : memref<1x128xf32, #tpu.memory_space<vmem>>, vector<1x128xf32>
    %4 = vector.shape_cast %3 : vector<1x128xf32> to vector<1x128xf32>
    %5 = vector.broadcast %4 : vector<1x128xf32> to vector<8x128xf32>
    %c0_3 = arith.constant 0 : index
    %c0_4 = arith.constant 0 : index
    %6 = vector.load %arg9[%c0_3, %c0_4] : memref<1x128xf32, #tpu.memory_space<vmem>>, vector<1x128xf32>
    %7 = vector.shape_cast %6 : vector<1x128xf32> to vector<1x128xf32>
    %8 = vector.broadcast %7 : vector<1x128xf32> to vector<8x128xf32>
    %c0_5 = arith.constant 0 : index
    %c0_6 = arith.constant 0 : index
    %9 = vector.load %arg12[%c0_5, %c0_6] : memref<1x128xf32, #tpu.memory_space<vmem>>, vector<1x128xf32>
    %10 = vector.shape_cast %9 : vector<1x128xf32> to vector<1x128xf32>
    %11 = vector.broadcast %10 : vector<1x128xf32> to vector<8x128xf32>
    %cst = arith.constant 0.000000e+00 : f32
    %12 = vector.broadcast %cst : f32 to vector<8x32xf32>
    %c0_i32 = arith.constant 0 : i32
    %13 = arith.index_cast %c0_i32 : i32 to index
    %c0_7 = arith.constant 0 : index
    %c0_8 = arith.constant 0 : index
    %14 = vector.load %arg0[%13, %c0_7, %c0_8] : memref<8x8x8xf32, #tpu.memory_space<vmem>>, vector<1x8x8xf32>
    %15 = vector.shape_cast %14 : vector<1x8x8xf32> to vector<8x8xf32>
    %cst_9 = arith.constant 0.000000e+00 : f32
    %16 = vector.broadcast %cst_9 : f32 to vector<8x8xf32>
    %17 = arith.maximumf %15, %16 : vector<8x8xf32>
    %c0_10 = arith.constant 0 : index
    %c0_11 = arith.constant 0 : index
    %18 = vector.load %arg1[%c0_10, %c0_11] : memref<8x128xf32, #tpu.memory_space<vmem>>, vector<8x128xf32>
    %cst_12 = arith.constant dense<0.000000e+00> : vector<8x128xf32>
    %19 = tpu.matmul %17, %18, %cst_12 {dimension_numbers = #tpu.dot_dimension_numbers<[1], [0], [0], [1], [0, 0, 1, 1], [], []>} : vector<8x8xf32>, vector<8x128xf32>, vector<8x128xf32> -> vector<8x128xf32>
    %c0_13 = arith.constant 0 : index
    %c0_14 = arith.constant 0 : index
    %20 = vector.load %arg2[%c0_13, %c0_14] : memref<32x128xf32, #tpu.memory_space<vmem>>, vector<32x128xf32>
    %cst_15 = arith.constant dense<0.000000e+00> : vector<8x128xf32>
    %21 = tpu.matmul %12, %20, %cst_15 {dimension_numbers = #tpu.dot_dimension_numbers<[1], [0], [0], [1], [0, 0, 1, 1], [], []>} : vector<8x32xf32>, vector<32x128xf32>, vector<8x128xf32> -> vector<8x128xf32>
    %22 = arith.addf %19, %21 : vector<8x128xf32>
    %23 = arith.addf %22, %2 : vector<8x128xf32>
    %24 = vector.extract_strided_slice %23 {offsets = [0, 0], sizes = [8, 96], strides = [1, 1]} : vector<8x128xf32> to vector<8x96xf32>
    %25 = arith.negf %24 : vector<8x96xf32>
    %26 = math.exp %25 : vector<8x96xf32>
    %cst_16 = arith.constant 1.000000e+00 : f32
    %27 = vector.broadcast %cst_16 : f32 to vector<8x96xf32>
    %28 = arith.addf %27, %26 : vector<8x96xf32>
    %29 = arith.divf %27, %28 : vector<8x96xf32>
    %30 = vector.extract_strided_slice %23 {offsets = [0, 96], sizes = [8, 32], strides = [1, 1]} : vector<8x128xf32> to vector<8x32xf32>
    %31 = math.tanh %30 : vector<8x32xf32>
    %32 = vector.extract_strided_slice %29 {offsets = [0, 0], sizes = [8, 32], strides = [1, 1]} : vector<8x96xf32> to vector<8x32xf32>
    %33 = vector.extract_strided_slice %29 {offsets = [0, 32], sizes = [8, 32], strides = [1, 1]} : vector<8x96xf32> to vector<8x32xf32>
    %34 = vector.extract_strided_slice %29 {offsets = [0, 64], sizes = [8, 32], strides = [1, 1]} : vector<8x96xf32> to vector<8x32xf32>
    %35 = arith.mulf %33, %12 : vector<8x32xf32>
    %36 = arith.mulf %32, %31 : vector<8x32xf32>
    %37 = arith.addf %35, %36 : vector<8x32xf32>
    %38 = math.tanh %37 : vector<8x32xf32>
    %39 = arith.mulf %34, %38 : vector<8x32xf32>
    %c0_17 = arith.constant 0 : index
    %c0_18 = arith.constant 0 : index
    %40 = vector.load %arg4[%c0_17, %c0_18] : memref<32x128xf32, #tpu.memory_space<vmem>>, vector<32x128xf32>
    %cst_19 = arith.constant dense<0.000000e+00> : vector<8x128xf32>
    %41 = tpu.matmul %39, %40, %cst_19 {dimension_numbers = #tpu.dot_dimension_numbers<[1], [0], [0], [1], [0, 0, 1, 1], [], []>} : vector<8x32xf32>, vector<32x128xf32>, vector<8x128xf32> -> vector<8x128xf32>
    %c0_20 = arith.constant 0 : index
    %c0_21 = arith.constant 0 : index
    %42 = vector.load %arg5[%c0_20, %c0_21] : memref<32x128xf32, #tpu.memory_space<vmem>>, vector<32x128xf32>
    %cst_22 = arith.constant dense<0.000000e+00> : vector<8x128xf32>
    %43 = tpu.matmul %12, %42, %cst_22 {dimension_numbers = #tpu.dot_dimension_numbers<[1], [0], [0], [1], [0, 0, 1, 1], [], []>} : vector<8x32xf32>, vector<32x128xf32>, vector<8x128xf32> -> vector<8x128xf32>
    %44 = arith.addf %41, %43 : vector<8x128xf32>
    %45 = arith.addf %44, %5 : vector<8x128xf32>
    %46 = vector.extract_strided_slice %45 {offsets = [0, 0], sizes = [8, 96], strides = [1, 1]} : vector<8x128xf32> to vector<8x96xf32>
    %47 = arith.negf %46 : vector<8x96xf32>
    %48 = math.exp %47 : vector<8x96xf32>
    %cst_23 = arith.constant 1.000000e+00 : f32
    %49 = vector.broadcast %cst_23 : f32 to vector<8x96xf32>
    %50 = arith.addf %49, %48 : vector<8x96xf32>
    %51 = arith.divf %49, %50 : vector<8x96xf32>
    %52 = vector.extract_strided_slice %45 {offsets = [0, 96], sizes = [8, 32], strides = [1, 1]} : vector<8x128xf32> to vector<8x32xf32>
    %53 = math.tanh %52 : vector<8x32xf32>
    %54 = vector.extract_strided_slice %51 {offsets = [0, 0], sizes = [8, 32], strides = [1, 1]} : vector<8x96xf32> to vector<8x32xf32>
    %55 = vector.extract_strided_slice %51 {offsets = [0, 32], sizes = [8, 32], strides = [1, 1]} : vector<8x96xf32> to vector<8x32xf32>
    %56 = vector.extract_strided_slice %51 {offsets = [0, 64], sizes = [8, 32], strides = [1, 1]} : vector<8x96xf32> to vector<8x32xf32>
    %57 = arith.mulf %55, %12 : vector<8x32xf32>
    %58 = arith.mulf %54, %53 : vector<8x32xf32>
    %59 = arith.addf %57, %58 : vector<8x32xf32>
    %60 = math.tanh %59 : vector<8x32xf32>
    %61 = arith.mulf %56, %60 : vector<8x32xf32>
    %62 = arith.index_cast %c0_i32 : i32 to index
    %c0_24 = arith.constant 0 : index
    %c0_25 = arith.constant 0 : index
    %63 = vector.load %arg16[%62, %c0_24, %c0_25] : memref<8x8x32xf32, #tpu.memory_space<vmem>>, vector<1x8x32xf32>
    %64 = vector.shape_cast %63 : vector<1x8x32xf32> to vector<8x32xf32>
    %65 = vector.shape_cast %61 : vector<8x32xf32> to vector<1x8x32xf32>
    tpu.vector_store %arg16[%62, %c0_24, %c0_25], %65 {strides = array<i32>} : memref<8x8x32xf32, #tpu.memory_space<vmem>>, vector<1x8x32xf32>,
    %c1_i32 = arith.constant 1 : i32
    %66 = arith.index_cast %c1_i32 : i32 to index
    %c0_26 = arith.constant 0 : index
    %c0_27 = arith.constant 0 : index
    %67 = vector.load %arg0[%66, %c0_26, %c0_27] : memref<8x8x8xf32, #tpu.memory_space<vmem>>, vector<1x8x8xf32>
    %68 = vector.shape_cast %67 : vector<1x8x8xf32> to vector<8x8xf32>
    %cst_28 = arith.constant 0.000000e+00 : f32
    %69 = vector.broadcast %cst_28 : f32 to vector<8x8xf32>
    %70 = arith.maximumf %68, %69 : vector<8x8xf32>
    %c0_29 = arith.constant 0 : index
    %c0_30 = arith.constant 0 : index
    %71 = vector.load %arg1[%c0_29, %c0_30] : memref<8x128xf32, #tpu.memory_space<vmem>>, vector<8x128xf32>
    %cst_31 = arith.constant dense<0.000000e+00> : vector<8x128xf32>
    %72 = tpu.matmul %70, %71, %cst_31 {dimension_numbers = #tpu.dot_dimension_numbers<[1], [0], [0], [1], [0, 0, 1, 1], [], []>} : vector<8x8xf32>, vector<8x128xf32>, vector<8x128xf32> -> vector<8x128xf32>
    %c0_32 = arith.constant 0 : index
    %c0_33 = arith.constant 0 : index
    %73 = vector.load %arg2[%c0_32, %c0_33] : memref<32x128xf32, #tpu.memory_space<vmem>>, vector<32x128xf32>
    %cst_34 = arith.constant dense<0.000000e+00> : vector<8x128xf32>
    %74 = tpu.matmul %39, %73, %cst_34 {dimension_numbers = #tpu.dot_dimension_numbers<[1], [0], [0], [1], [0, 0, 1, 1], [], []>} : vector<8x32xf32>, vector<32x128xf32>, vector<8x128xf32> -> vector<8x128xf32>
    %75 = arith.addf %72, %74 : vector<8x128xf32>
    %76 = arith.addf %75, %2 : vector<8x128xf32>
    %77 = vector.extract_strided_slice %76 {offsets = [0, 0], sizes = [8, 96], strides = [1, 1]} : vector<8x128xf32> to vector<8x96xf32>
    %78 = arith.negf %77 : vector<8x96xf32>
    %79 = math.exp %78 : vector<8x96xf32>
    %cst_35 = arith.constant 1.000000e+00 : f32
    %80 = vector.broadcast %cst_35 : f32 to vector<8x96xf32>
    %81 = arith.addf %80, %79 : vector<8x96xf32>
    %82 = arith.divf %80, %81 : vector<8x96xf32>
    %83 = vector.extract_strided_slice %76 {offsets = [0, 96], sizes = [8, 32], strides = [1, 1]} : vector<8x128xf32> to vector<8x32xf32>
    %84 = math.tanh %83 : vector<8x32xf32>
    %85 = vector.extract_strided_slice %82 {offsets = [0, 0], sizes = [8, 32], strides = [1, 1]} : vector<8x96xf32> to vector<8x32xf32>
    %86 = vector.extract_strided_slice %82 {offsets = [0, 32], sizes = [8, 32], strides = [1, 1]} : vector<8x96xf32> to vector<8x32xf32>
    %87 = vector.extract_strided_slice %82 {offsets = [0, 64], sizes = [8, 32], strides = [1, 1]} : vector<8x96xf32> to vector<8x32xf32>
    %88 = arith.mulf %86, %37 : vector<8x32xf32>
    %89 = arith.mulf %85, %84 : vector<8x32xf32>
    %90 = arith.addf %88, %89 : vector<8x32xf32>
    %91 = math.tanh %90 : vector<8x32xf32>
    %92 = arith.mulf %87, %91 : vector<8x32xf32>
    %c0_36 = arith.constant 0 : index
    %c0_37 = arith.constant 0 : index
    %93 = vector.load %arg4[%c0_36, %c0_37] : memref<32x128xf32, #tpu.memory_space<vmem>>, vector<32x128xf32>
    %cst_38 = arith.constant dense<0.000000e+00> : vector<8x128xf32>
    %94 = tpu.matmul %92, %93, %cst_38 {dimension_numbers = #tpu.dot_dimension_numbers<[1], [0], [0], [1], [0, 0, 1, 1], [], []>} : vector<8x32xf32>, vector<32x128xf32>, vector<8x128xf32> -> vector<8x128xf32>
    %c0_39 = arith.constant 0 : index
    %c0_40 = arith.constant 0 : index
    %95 = vector.load %arg5[%c0_39, %c0_40] : memref<32x128xf32, #tpu.memory_space<vmem>>, vector<32x128xf32>
    %cst_41 = arith.constant dense<0.000000e+00> : vector<8x128xf32>
    %96 = tpu.matmul %61, %95, %cst_41 {dimension_numbers = #tpu.dot_dimension_numbers<[1], [0], [0], [1], [0, 0, 1, 1], [], []>} : vector<8x32xf32>, vector<32x128xf32>, vector<8x128xf32> -> vector<8x128xf32>
    %97 = arith.addf %94, %96 : vector<8x128xf32>
    %98 = arith.addf %97, %5 : vector<8x128xf32>
    %99 = vector.extract_strided_slice %98 {offsets = [0, 0], sizes = [8, 96], strides = [1, 1]} : vector<8x128xf32> to vector<8x96xf32>
    %100 = arith.negf %99 : vector<8x96xf32>
    %101 = math.exp %100 : vector<8x96xf32>
    %cst_42 = arith.constant 1.000000e+00 : f32
    %102 = vector.broadcast %cst_42 : f32 to vector<8x96xf32>
    %103 = arith.addf %102, %101 : vector<8x96xf32>
    %104 = arith.divf %102, %103 : vector<8x96xf32>
    %105 = vector.extract_strided_slice %98 {offsets = [0, 96], sizes = [8, 32], strides = [1, 1]} : vector<8x128xf32> to vector<8x32xf32>
    %106 = math.tanh %105 : vector<8x32xf32>
    %107 = vector.extract_strided_slice %104 {offsets = [0, 0], sizes = [8, 32], strides = [1, 1]} : vector<8x96xf32> to vector<8x32xf32>
    %108 = vector.extract_strided_slice %104 {offsets = [0, 32], sizes = [8, 32], strides = [1, 1]} : vector<8x96xf32> to vector<8x32xf32>
    %109 = vector.extract_strided_slice %104 {offsets = [0, 64], sizes = [8, 32], strides = [1, 1]} : vector<8x96xf32> to vector<8x32xf32>
    %110 = arith.mulf %108, %59 : vector<8x32xf32>
    %111 = arith.mulf %107, %106 : vector<8x32xf32>
    %112 = arith.addf %110, %111 : vector<8x32xf32>
    %113 = math.tanh %112 : vector<8x32xf32>
    %114 = arith.mulf %109, %113 : vector<8x32xf32>
    %115 = arith.index_cast %c1_i32 : i32 to index
    %c0_43 = arith.constant 0 : index
    %c0_44 = arith.constant 0 : index
    %116 = vector.load %arg16[%115, %c0_43, %c0_44] : memref<8x8x32xf32, #tpu.memory_space<vmem>>, vector<1x8x32xf32>
    %117 = vector.shape_cast %116 : vector<1x8x32xf32> to vector<8x32xf32>
    %118 = vector.shape_cast %114 : vector<8x32xf32> to vector<1x8x32xf32>
    tpu.vector_store %arg16[%115, %c0_43, %c0_44], %118 {strides = array<i32>} : memref<8x8x32xf32, #tpu.memory_space<vmem>>, vector<1x8x32xf32>,
    %c2_i32 = arith.constant 2 : i32
    %119 = arith.index_cast %c2_i32 : i32 to index
    %c0_45 = arith.constant 0 : index
    %c0_46 = arith.constant 0 : index
    %120 = vector.load %arg0[%119, %c0_45, %c0_46] : memref<8x8x8xf32, #tpu.memory_space<vmem>>, vector<1x8x8xf32>
    %121 = vector.shape_cast %120 : vector<1x8x8xf32> to vector<8x8xf32>
    %cst_47 = arith.constant 0.000000e+00 : f32
    %122 = vector.broadcast %cst_47 : f32 to vector<8x8xf32>
    %123 = arith.maximumf %121, %122 : vector<8x8xf32>
    %c0_48 = arith.constant 0 : index
    %c0_49 = arith.constant 0 : index
    %124 = vector.load %arg1[%c0_48, %c0_49] : memref<8x128xf32, #tpu.memory_space<vmem>>, vector<8x128xf32>
    %cst_50 = arith.constant dense<0.000000e+00> : vector<8x128xf32>
    %125 = tpu.matmul %123, %124, %cst_50 {dimension_numbers = #tpu.dot_dimension_numbers<[1], [0], [0], [1], [0, 0, 1, 1], [], []>} : vector<8x8xf32>, vector<8x128xf32>, vector<8x128xf32> -> vector<8x128xf32>
    %c0_51 = arith.constant 0 : index
    %c0_52 = arith.constant 0 : index
    %126 = vector.load %arg2[%c0_51, %c0_52] : memref<32x128xf32, #tpu.memory_space<vmem>>, vector<32x128xf32>
    %cst_53 = arith.constant dense<0.000000e+00> : vector<8x128xf32>
    %127 = tpu.matmul %92, %126, %cst_53 {dimension_numbers = #tpu.dot_dimension_numbers<[1], [0], [0], [1], [0, 0, 1, 1], [], []>} : vector<8x32xf32>, vector<32x128xf32>, vector<8x128xf32> -> vector<8x128xf32>
    %128 = arith.addf %125, %127 : vector<8x128xf32>
    %129 = arith.addf %128, %2 : vector<8x128xf32>
    %130 = vector.extract_strided_slice %129 {offsets = [0, 0], sizes = [8, 96], strides = [1, 1]} : vector<8x128xf32> to vector<8x96xf32>
    %131 = arith.negf %130 : vector<8x96xf32>
    %132 = math.exp %131 : vector<8x96xf32>
    %cst_54 = arith.constant 1.000000e+00 : f32
    %133 = vector.broadcast %cst_54 : f32 to vector<8x96xf32>
    %134 = arith.addf %133, %132 : vector<8x96xf32>
    %135 = arith.divf %133, %134 : vector<8x96xf32>
    %136 = vector.extract_strided_slice %129 {offsets = [0, 96], sizes = [8, 32], strides = [1, 1]} : vector<8x128xf32> to vector<8x32xf32>
    %137 = math.tanh %136 : vector<8x32xf32>
    %138 = vector.extract_strided_slice %135 {offsets = [0, 0], sizes = [8, 32], strides = [1, 1]} : vector<8x96xf32> to vector<8x32xf32>
    %139 = vector.extract_strided_slice %135 {offsets = [0, 32], sizes = [8, 32], strides = [1, 1]} : vector<8x96xf32> to vector<8x32xf32>
    %140 = vector.extract_strided_slice %135 {offsets = [0, 64], sizes = [8, 32], strides = [1, 1]} : vector<8x96xf32> to vector<8x32xf32>
    %141 = arith.mulf %139, %90 : vector<8x32xf32>
    %142 = arith.mulf %138, %137 : vector<8x32xf32>
    %143 = arith.addf %141, %142 : vector<8x32xf32>
    %144 = math.tanh %143 : vector<8x32xf32>
    %145 = arith.mulf %140, %144 : vector<8x32xf32>
    %c0_55 = arith.constant 0 : index
    %c0_56 = arith.constant 0 : index
    %146 = vector.load %arg4[%c0_55, %c0_56] : memref<32x128xf32, #tpu.memory_space<vmem>>, vector<32x128xf32>
    %cst_57 = arith.constant dense<0.000000e+00> : vector<8x128xf32>
    %147 = tpu.matmul %145, %146, %cst_57 {dimension_numbers = #tpu.dot_dimension_numbers<[1], [0], [0], [1], [0, 0, 1, 1], [], []>} : vector<8x32xf32>, vector<32x128xf32>, vector<8x128xf32> -> vector<8x128xf32>
    %c0_58 = arith.constant 0 : index
    %c0_59 = arith.constant 0 : index
    %148 = vector.load %arg5[%c0_58, %c0_59] : memref<32x128xf32, #tpu.memory_space<vmem>>, vector<32x128xf32>
    %cst_60 = arith.constant dense<0.000000e+00> : vector<8x128xf32>
    %149 = tpu.matmul %114, %148, %cst_60 {dimension_numbers = #tpu.dot_dimension_numbers<[1], [0], [0], [1], [0, 0, 1, 1], [], []>} : vector<8x32xf32>, vector<32x128xf32>, vector<8x128xf32> -> vector<8x128xf32>
    %150 = arith.addf %147, %149 : vector<8x128xf32>
    %151 = arith.addf %150, %5 : vector<8x128xf32>
    %152 = vector.extract_strided_slice %151 {offsets = [0, 0], sizes = [8, 96], strides = [1, 1]} : vector<8x128xf32> to vector<8x96xf32>
    %153 = arith.negf %152 : vector<8x96xf32>
    %154 = math.exp %153 : vector<8x96xf32>
    %cst_61 = arith.constant 1.000000e+00 : f32
    %155 = vector.broadcast %cst_61 : f32 to vector<8x96xf32>
    %156 = arith.addf %155, %154 : vector<8x96xf32>
    %157 = arith.divf %155, %156 : vector<8x96xf32>
    %158 = vector.extract_strided_slice %151 {offsets = [0, 96], sizes = [8, 32], strides = [1, 1]} : vector<8x128xf32> to vector<8x32xf32>
    %159 = math.tanh %158 : vector<8x32xf32>
    %160 = vector.extract_strided_slice %157 {offsets = [0, 0], sizes = [8, 32], strides = [1, 1]} : vector<8x96xf32> to vector<8x32xf32>
    %161 = vector.extract_strided_slice %157 {offsets = [0, 32], sizes = [8, 32], strides = [1, 1]} : vector<8x96xf32> to vector<8x32xf32>
    %162 = vector.extract_strided_slice %157 {offsets = [0, 64], sizes = [8, 32], strides = [1, 1]} : vector<8x96xf32> to vector<8x32xf32>
    %163 = arith.mulf %161, %112 : vector<8x32xf32>
    %164 = arith.mulf %160, %159 : vector<8x32xf32>
    %165 = arith.addf %163, %164 : vector<8x32xf32>
    %166 = math.tanh %165 : vector<8x32xf32>
    %167 = arith.mulf %162, %166 : vector<8x32xf32>
    %168 = arith.index_cast %c2_i32 : i32 to index
    %c0_62 = arith.constant 0 : index
    %c0_63 = arith.constant 0 : index
    %169 = vector.load %arg16[%168, %c0_62, %c0_63] : memref<8x8x32xf32, #tpu.memory_space<vmem>>, vector<1x8x32xf32>
    %170 = vector.shape_cast %169 : vector<1x8x32xf32> to vector<8x32xf32>
    %171 = vector.shape_cast %167 : vector<8x32xf32> to vector<1x8x32xf32>
    tpu.vector_store %arg16[%168, %c0_62, %c0_63], %171 {strides = array<i32>} : memref<8x8x32xf32, #tpu.memory_space<vmem>>, vector<1x8x32xf32>,
    %c3_i32 = arith.constant 3 : i32
    %172 = arith.index_cast %c3_i32 : i32 to index
    %c0_64 = arith.constant 0 : index
    %c0_65 = arith.constant 0 : index
    %173 = vector.load %arg0[%172, %c0_64, %c0_65] : memref<8x8x8xf32, #tpu.memory_space<vmem>>, vector<1x8x8xf32>
    %174 = vector.shape_cast %173 : vector<1x8x8xf32> to vector<8x8xf32>
    %cst_66 = arith.constant 0.000000e+00 : f32
    %175 = vector.broadcast %cst_66 : f32 to vector<8x8xf32>
    %176 = arith.maximumf %174, %175 : vector<8x8xf32>
    %c0_67 = arith.constant 0 : index
    %c0_68 = arith.constant 0 : index
    %177 = vector.load %arg1[%c0_67, %c0_68] : memref<8x128xf32, #tpu.memory_space<vmem>>, vector<8x128xf32>
    %cst_69 = arith.constant dense<0.000000e+00> : vector<8x128xf32>
    %178 = tpu.matmul %176, %177, %cst_69 {dimension_numbers = #tpu.dot_dimension_numbers<[1], [0], [0], [1], [0, 0, 1, 1], [], []>} : vector<8x8xf32>, vector<8x128xf32>, vector<8x128xf32> -> vector<8x128xf32>
    %c0_70 = arith.constant 0 : index
    %c0_71 = arith.constant 0 : index
    %179 = vector.load %arg2[%c0_70, %c0_71] : memref<32x128xf32, #tpu.memory_space<vmem>>, vector<32x128xf32>
    %cst_72 = arith.constant dense<0.000000e+00> : vector<8x128xf32>
    %180 = tpu.matmul %145, %179, %cst_72 {dimension_numbers = #tpu.dot_dimension_numbers<[1], [0], [0], [1], [0, 0, 1, 1], [], []>} : vector<8x32xf32>, vector<32x128xf32>, vector<8x128xf32> -> vector<8x128xf32>
    %181 = arith.addf %178, %180 : vector<8x128xf32>
    %182 = arith.addf %181, %2 : vector<8x128xf32>
    %183 = vector.extract_strided_slice %182 {offsets = [0, 0], sizes = [8, 96], strides = [1, 1]} : vector<8x128xf32> to vector<8x96xf32>
    %184 = arith.negf %183 : vector<8x96xf32>
    %185 = math.exp %184 : vector<8x96xf32>
    %cst_73 = arith.constant 1.000000e+00 : f32
    %186 = vector.broadcast %cst_73 : f32 to vector<8x96xf32>
    %187 = arith.addf %186, %185 : vector<8x96xf32>
    %188 = arith.divf %186, %187 : vector<8x96xf32>
    %189 = vector.extract_strided_slice %182 {offsets = [0, 96], sizes = [8, 32], strides = [1, 1]} : vector<8x128xf32> to vector<8x32xf32>
    %190 = math.tanh %189 : vector<8x32xf32>
    %191 = vector.extract_strided_slice %188 {offsets = [0, 0], sizes = [8, 32], strides = [1, 1]} : vector<8x96xf32> to vector<8x32xf32>
    %192 = vector.extract_strided_slice %188 {offsets = [0, 32], sizes = [8, 32], strides = [1, 1]} : vector<8x96xf32> to vector<8x32xf32>
    %193 = vector.extract_strided_slice %188 {offsets = [0, 64], sizes = [8, 32], strides = [1, 1]} : vector<8x96xf32> to vector<8x32xf32>
    %194 = arith.mulf %192, %143 : vector<8x32xf32>
    %195 = arith.mulf %191, %190 : vector<8x32xf32>
    %196 = arith.addf %194, %195 : vector<8x32xf32>
    %197 = math.tanh %196 : vector<8x32xf32>
    %198 = arith.mulf %193, %197 : vector<8x32xf32>
    %c0_74 = arith.constant 0 : index
    %c0_75 = arith.constant 0 : index
    %199 = vector.load %arg4[%c0_74, %c0_75] : memref<32x128xf32, #tpu.memory_space<vmem>>, vector<32x128xf32>
    %cst_76 = arith.constant dense<0.000000e+00> : vector<8x128xf32>
    %200 = tpu.matmul %198, %199, %cst_76 {dimension_numbers = #tpu.dot_dimension_numbers<[1], [0], [0], [1], [0, 0, 1, 1], [], []>} : vector<8x32xf32>, vector<32x128xf32>, vector<8x128xf32> -> vector<8x128xf32>
    %c0_77 = arith.constant 0 : index
    %c0_78 = arith.constant 0 : index
    %201 = vector.load %arg5[%c0_77, %c0_78] : memref<32x128xf32, #tpu.memory_space<vmem>>, vector<32x128xf32>
    %cst_79 = arith.constant dense<0.000000e+00> : vector<8x128xf32>
    %202 = tpu.matmul %167, %201, %cst_79 {dimension_numbers = #tpu.dot_dimension_numbers<[1], [0], [0], [1], [0, 0, 1, 1], [], []>} : vector<8x32xf32>, vector<32x128xf32>, vector<8x128xf32> -> vector<8x128xf32>
    %203 = arith.addf %200, %202 : vector<8x128xf32>
    %204 = arith.addf %203, %5 : vector<8x128xf32>
    %205 = vector.extract_strided_slice %204 {offsets = [0, 0], sizes = [8, 96], strides = [1, 1]} : vector<8x128xf32> to vector<8x96xf32>
    %206 = arith.negf %205 : vector<8x96xf32>
    %207 = math.exp %206 : vector<8x96xf32>
    %cst_80 = arith.constant 1.000000e+00 : f32
    %208 = vector.broadcast %cst_80 : f32 to vector<8x96xf32>
    %209 = arith.addf %208, %207 : vector<8x96xf32>
    %210 = arith.divf %208, %209 : vector<8x96xf32>
    %211 = vector.extract_strided_slice %204 {offsets = [0, 96], sizes = [8, 32], strides = [1, 1]} : vector<8x128xf32> to vector<8x32xf32>
    %212 = math.tanh %211 : vector<8x32xf32>
    %213 = vector.extract_strided_slice %210 {offsets = [0, 0], sizes = [8, 32], strides = [1, 1]} : vector<8x96xf32> to vector<8x32xf32>
    %214 = vector.extract_strided_slice %210 {offsets = [0, 32], sizes = [8, 32], strides = [1, 1]} : vector<8x96xf32> to vector<8x32xf32>
    %215 = vector.extract_strided_slice %210 {offsets = [0, 64], sizes = [8, 32], strides = [1, 1]} : vector<8x96xf32> to vector<8x32xf32>
    %216 = arith.mulf %214, %165 : vector<8x32xf32>
    %217 = arith.mulf %213, %212 : vector<8x32xf32>
    %218 = arith.addf %216, %217 : vector<8x32xf32>
    %219 = math.tanh %218 : vector<8x32xf32>
    %220 = arith.mulf %215, %219 : vector<8x32xf32>
    %221 = arith.index_cast %c3_i32 : i32 to index
    %c0_81 = arith.constant 0 : index
    %c0_82 = arith.constant 0 : index
    %222 = vector.load %arg16[%221, %c0_81, %c0_82] : memref<8x8x32xf32, #tpu.memory_space<vmem>>, vector<1x8x32xf32>
    %223 = vector.shape_cast %222 : vector<1x8x32xf32> to vector<8x32xf32>
    %224 = vector.shape_cast %220 : vector<8x32xf32> to vector<1x8x32xf32>
    tpu.vector_store %arg16[%221, %c0_81, %c0_82], %224 {strides = array<i32>} : memref<8x8x32xf32, #tpu.memory_space<vmem>>, vector<1x8x32xf32>,
    %c4_i32 = arith.constant 4 : i32
    %225 = arith.index_cast %c4_i32 : i32 to index
    %c0_83 = arith.constant 0 : index
    %c0_84 = arith.constant 0 : index
    %226 = vector.load %arg0[%225, %c0_83, %c0_84] : memref<8x8x8xf32, #tpu.memory_space<vmem>>, vector<1x8x8xf32>
    %227 = vector.shape_cast %226 : vector<1x8x8xf32> to vector<8x8xf32>
    %cst_85 = arith.constant 0.000000e+00 : f32
    %228 = vector.broadcast %cst_85 : f32 to vector<8x8xf32>
    %229 = arith.maximumf %227, %228 : vector<8x8xf32>
    %c0_86 = arith.constant 0 : index
    %c0_87 = arith.constant 0 : index
    %230 = vector.load %arg1[%c0_86, %c0_87] : memref<8x128xf32, #tpu.memory_space<vmem>>, vector<8x128xf32>
    %cst_88 = arith.constant dense<0.000000e+00> : vector<8x128xf32>
    %231 = tpu.matmul %229, %230, %cst_88 {dimension_numbers = #tpu.dot_dimension_numbers<[1], [0], [0], [1], [0, 0, 1, 1], [], []>} : vector<8x8xf32>, vector<8x128xf32>, vector<8x128xf32> -> vector<8x128xf32>
    %c0_89 = arith.constant 0 : index
    %c0_90 = arith.constant 0 : index
    %232 = vector.load %arg2[%c0_89, %c0_90] : memref<32x128xf32, #tpu.memory_space<vmem>>, vector<32x128xf32>
    %cst_91 = arith.constant dense<0.000000e+00> : vector<8x128xf32>
    %233 = tpu.matmul %198, %232, %cst_91 {dimension_numbers = #tpu.dot_dimension_numbers<[1], [0], [0], [1], [0, 0, 1, 1], [], []>} : vector<8x32xf32>, vector<32x128xf32>, vector<8x128xf32> -> vector<8x128xf32>
    %234 = arith.addf %231, %233 : vector<8x128xf32>
    %235 = arith.addf %234, %2 : vector<8x128xf32>
    %236 = vector.extract_strided_slice %235 {offsets = [0, 0], sizes = [8, 96], strides = [1, 1]} : vector<8x128xf32> to vector<8x96xf32>
    %237 = arith.negf %236 : vector<8x96xf32>
    %238 = math.exp %237 : vector<8x96xf32>
    %cst_92 = arith.constant 1.000000e+00 : f32
    %239 = vector.broadcast %cst_92 : f32 to vector<8x96xf32>
    %240 = arith.addf %239, %238 : vector<8x96xf32>
    %241 = arith.divf %239, %240 : vector<8x96xf32>
    %242 = vector.extract_strided_slice %235 {offsets = [0, 96], sizes = [8, 32], strides = [1, 1]} : vector<8x128xf32> to vector<8x32xf32>
    %243 = math.tanh %242 : vector<8x32xf32>
    %244 = vector.extract_strided_slice %241 {offsets = [0, 0], sizes = [8, 32], strides = [1, 1]} : vector<8x96xf32> to vector<8x32xf32>
    %245 = vector.extract_strided_slice %241 {offsets = [0, 32], sizes = [8, 32], strides = [1, 1]} : vector<8x96xf32> to vector<8x32xf32>
    %246 = vector.extract_strided_slice %241 {offsets = [0, 64], sizes = [8, 32], strides = [1, 1]} : vector<8x96xf32> to vector<8x32xf32>
    %247 = arith.mulf %245, %196 : vector<8x32xf32>
    %248 = arith.mulf %244, %243 : vector<8x32xf32>
    %249 = arith.addf %247, %248 : vector<8x32xf32>
    %250 = math.tanh %249 : vector<8x32xf32>
    %251 = arith.mulf %246, %250 : vector<8x32xf32>
    %c0_93 = arith.constant 0 : index
    %c0_94 = arith.constant 0 : index
    %252 = vector.load %arg4[%c0_93, %c0_94] : memref<32x128xf32, #tpu.memory_space<vmem>>, vector<32x128xf32>
    %cst_95 = arith.constant dense<0.000000e+00> : vector<8x128xf32>
    %253 = tpu.matmul %251, %252, %cst_95 {dimension_numbers = #tpu.dot_dimension_numbers<[1], [0], [0], [1], [0, 0, 1, 1], [], []>} : vector<8x32xf32>, vector<32x128xf32>, vector<8x128xf32> -> vector<8x128xf32>
    %c0_96 = arith.constant 0 : index
    %c0_97 = arith.constant 0 : index
    %254 = vector.load %arg5[%c0_96, %c0_97] : memref<32x128xf32, #tpu.memory_space<vmem>>, vector<32x128xf32>
    %cst_98 = arith.constant dense<0.000000e+00> : vector<8x128xf32>
    %255 = tpu.matmul %220, %254, %cst_98 {dimension_numbers = #tpu.dot_dimension_numbers<[1], [0], [0], [1], [0, 0, 1, 1], [], []>} : vector<8x32xf32>, vector<32x128xf32>, vector<8x128xf32> -> vector<8x128xf32>
    %256 = arith.addf %253, %255 : vector<8x128xf32>
    %257 = arith.addf %256, %5 : vector<8x128xf32>
    %258 = vector.extract_strided_slice %257 {offsets = [0, 0], sizes = [8, 96], strides = [1, 1]} : vector<8x128xf32> to vector<8x96xf32>
    %259 = arith.negf %258 : vector<8x96xf32>
    %260 = math.exp %259 : vector<8x96xf32>
    %cst_99 = arith.constant 1.000000e+00 : f32
    %261 = vector.broadcast %cst_99 : f32 to vector<8x96xf32>
    %262 = arith.addf %261, %260 : vector<8x96xf32>
    %263 = arith.divf %261, %262 : vector<8x96xf32>
    %264 = vector.extract_strided_slice %257 {offsets = [0, 96], sizes = [8, 32], strides = [1, 1]} : vector<8x128xf32> to vector<8x32xf32>
    %265 = math.tanh %264 : vector<8x32xf32>
    %266 = vector.extract_strided_slice %263 {offsets = [0, 0], sizes = [8, 32], strides = [1, 1]} : vector<8x96xf32> to vector<8x32xf32>
    %267 = vector.extract_strided_slice %263 {offsets = [0, 32], sizes = [8, 32], strides = [1, 1]} : vector<8x96xf32> to vector<8x32xf32>
    %268 = vector.extract_strided_slice %263 {offsets = [0, 64], sizes = [8, 32], strides = [1, 1]} : vector<8x96xf32> to vector<8x32xf32>
    %269 = arith.mulf %267, %218 : vector<8x32xf32>
    %270 = arith.mulf %266, %265 : vector<8x32xf32>
    %271 = arith.addf %269, %270 : vector<8x32xf32>
    %272 = math.tanh %271 : vector<8x32xf32>
    %273 = arith.mulf %268, %272 : vector<8x32xf32>
    %274 = arith.index_cast %c4_i32 : i32 to index
    %c0_100 = arith.constant 0 : index
    %c0_101 = arith.constant 0 : index
    %275 = vector.load %arg16[%274, %c0_100, %c0_101] : memref<8x8x32xf32, #tpu.memory_space<vmem>>, vector<1x8x32xf32>
    %276 = vector.shape_cast %275 : vector<1x8x32xf32> to vector<8x32xf32>
    %277 = vector.shape_cast %273 : vector<8x32xf32> to vector<1x8x32xf32>
    tpu.vector_store %arg16[%274, %c0_100, %c0_101], %277 {strides = array<i32>} : memref<8x8x32xf32, #tpu.memory_space<vmem>>, vector<1x8x32xf32>,
    %c5_i32 = arith.constant 5 : i32
    %278 = arith.index_cast %c5_i32 : i32 to index
    %c0_102 = arith.constant 0 : index
    %c0_103 = arith.constant 0 : index
    %279 = vector.load %arg0[%278, %c0_102, %c0_103] : memref<8x8x8xf32, #tpu.memory_space<vmem>>, vector<1x8x8xf32>
    %280 = vector.shape_cast %279 : vector<1x8x8xf32> to vector<8x8xf32>
    %cst_104 = arith.constant 0.000000e+00 : f32
    %281 = vector.broadcast %cst_104 : f32 to vector<8x8xf32>
    %282 = arith.maximumf %280, %281 : vector<8x8xf32>
    %c0_105 = arith.constant 0 : index
    %c0_106 = arith.constant 0 : index
    %283 = vector.load %arg1[%c0_105, %c0_106] : memref<8x128xf32, #tpu.memory_space<vmem>>, vector<8x128xf32>
    %cst_107 = arith.constant dense<0.000000e+00> : vector<8x128xf32>
    %284 = tpu.matmul %282, %283, %cst_107 {dimension_numbers = #tpu.dot_dimension_numbers<[1], [0], [0], [1], [0, 0, 1, 1], [], []>} : vector<8x8xf32>, vector<8x128xf32>, vector<8x128xf32> -> vector<8x128xf32>
    %c0_108 = arith.constant 0 : index
    %c0_109 = arith.constant 0 : index
    %285 = vector.load %arg2[%c0_108, %c0_109] : memref<32x128xf32, #tpu.memory_space<vmem>>, vector<32x128xf32>
    %cst_110 = arith.constant dense<0.000000e+00> : vector<8x128xf32>
    %286 = tpu.matmul %251, %285, %cst_110 {dimension_numbers = #tpu.dot_dimension_numbers<[1], [0], [0], [1], [0, 0, 1, 1], [], []>} : vector<8x32xf32>, vector<32x128xf32>, vector<8x128xf32> -> vector<8x128xf32>
    %287 = arith.addf %284, %286 : vector<8x128xf32>
    %288 = arith.addf %287, %2 : vector<8x128xf32>
    %289 = vector.extract_strided_slice %288 {offsets = [0, 0], sizes = [8, 96], strides = [1, 1]} : vector<8x128xf32> to vector<8x96xf32>
    %290 = arith.negf %289 : vector<8x96xf32>
    %291 = math.exp %290 : vector<8x96xf32>
    %cst_111 = arith.constant 1.000000e+00 : f32
    %292 = vector.broadcast %cst_111 : f32 to vector<8x96xf32>
    %293 = arith.addf %292, %291 : vector<8x96xf32>
    %294 = arith.divf %292, %293 : vector<8x96xf32>
    %295 = vector.extract_strided_slice %288 {offsets = [0, 96], sizes = [8, 32], strides = [1, 1]} : vector<8x128xf32> to vector<8x32xf32>
    %296 = math.tanh %295 : vector<8x32xf32>
    %297 = vector.extract_strided_slice %294 {offsets = [0, 0], sizes = [8, 32], strides = [1, 1]} : vector<8x96xf32> to vector<8x32xf32>
    %298 = vector.extract_strided_slice %294 {offsets = [0, 32], sizes = [8, 32], strides = [1, 1]} : vector<8x96xf32> to vector<8x32xf32>
    %299 = vector.extract_strided_slice %294 {offsets = [0, 64], sizes = [8, 32], strides = [1, 1]} : vector<8x96xf32> to vector<8x32xf32>
    %300 = arith.mulf %298, %249 : vector<8x32xf32>
    %301 = arith.mulf %297, %296 : vector<8x32xf32>
    %302 = arith.addf %300, %301 : vector<8x32xf32>
    %303 = math.tanh %302 : vector<8x32xf32>
    %304 = arith.mulf %299, %303 : vector<8x32xf32>
    %c0_112 = arith.constant 0 : index
    %c0_113 = arith.constant 0 : index
    %305 = vector.load %arg4[%c0_112, %c0_113] : memref<32x128xf32, #tpu.memory_space<vmem>>, vector<32x128xf32>
    %cst_114 = arith.constant dense<0.000000e+00> : vector<8x128xf32>
    %306 = tpu.matmul %304, %305, %cst_114 {dimension_numbers = #tpu.dot_dimension_numbers<[1], [0], [0], [1], [0, 0, 1, 1], [], []>} : vector<8x32xf32>, vector<32x128xf32>, vector<8x128xf32> -> vector<8x128xf32>
    %c0_115 = arith.constant 0 : index
    %c0_116 = arith.constant 0 : index
    %307 = vector.load %arg5[%c0_115, %c0_116] : memref<32x128xf32, #tpu.memory_space<vmem>>, vector<32x128xf32>
    %cst_117 = arith.constant dense<0.000000e+00> : vector<8x128xf32>
    %308 = tpu.matmul %273, %307, %cst_117 {dimension_numbers = #tpu.dot_dimension_numbers<[1], [0], [0], [1], [0, 0, 1, 1], [], []>} : vector<8x32xf32>, vector<32x128xf32>, vector<8x128xf32> -> vector<8x128xf32>
    %309 = arith.addf %306, %308 : vector<8x128xf32>
    %310 = arith.addf %309, %5 : vector<8x128xf32>
    %311 = vector.extract_strided_slice %310 {offsets = [0, 0], sizes = [8, 96], strides = [1, 1]} : vector<8x128xf32> to vector<8x96xf32>
    %312 = arith.negf %311 : vector<8x96xf32>
    %313 = math.exp %312 : vector<8x96xf32>
    %cst_118 = arith.constant 1.000000e+00 : f32
    %314 = vector.broadcast %cst_118 : f32 to vector<8x96xf32>
    %315 = arith.addf %314, %313 : vector<8x96xf32>
    %316 = arith.divf %314, %315 : vector<8x96xf32>
    %317 = vector.extract_strided_slice %310 {offsets = [0, 96], sizes = [8, 32], strides = [1, 1]} : vector<8x128xf32> to vector<8x32xf32>
    %318 = math.tanh %317 : vector<8x32xf32>
    %319 = vector.extract_strided_slice %316 {offsets = [0, 0], sizes = [8, 32], strides = [1, 1]} : vector<8x96xf32> to vector<8x32xf32>
    %320 = vector.extract_strided_slice %316 {offsets = [0, 32], sizes = [8, 32], strides = [1, 1]} : vector<8x96xf32> to vector<8x32xf32>
    %321 = vector.extract_strided_slice %316 {offsets = [0, 64], sizes = [8, 32], strides = [1, 1]} : vector<8x96xf32> to vector<8x32xf32>
    %322 = arith.mulf %320, %271 : vector<8x32xf32>
    %323 = arith.mulf %319, %318 : vector<8x32xf32>
    %324 = arith.addf %322, %323 : vector<8x32xf32>
    %325 = math.tanh %324 : vector<8x32xf32>
    %326 = arith.mulf %321, %325 : vector<8x32xf32>
    %327 = arith.index_cast %c5_i32 : i32 to index
    %c0_119 = arith.constant 0 : index
    %c0_120 = arith.constant 0 : index
    %328 = vector.load %arg16[%327, %c0_119, %c0_120] : memref<8x8x32xf32, #tpu.memory_space<vmem>>, vector<1x8x32xf32>
    %329 = vector.shape_cast %328 : vector<1x8x32xf32> to vector<8x32xf32>
    %330 = vector.shape_cast %326 : vector<8x32xf32> to vector<1x8x32xf32>
    tpu.vector_store %arg16[%327, %c0_119, %c0_120], %330 {strides = array<i32>} : memref<8x8x32xf32, #tpu.memory_space<vmem>>, vector<1x8x32xf32>,
    %c6_i32 = arith.constant 6 : i32
    %331 = arith.index_cast %c6_i32 : i32 to index
    %c0_121 = arith.constant 0 : index
    %c0_122 = arith.constant 0 : index
    %332 = vector.load %arg0[%331, %c0_121, %c0_122] : memref<8x8x8xf32, #tpu.memory_space<vmem>>, vector<1x8x8xf32>
    %333 = vector.shape_cast %332 : vector<1x8x8xf32> to vector<8x8xf32>
    %cst_123 = arith.constant 0.000000e+00 : f32
    %334 = vector.broadcast %cst_123 : f32 to vector<8x8xf32>
    %335 = arith.maximumf %333, %334 : vector<8x8xf32>
    %c0_124 = arith.constant 0 : index
    %c0_125 = arith.constant 0 : index
    %336 = vector.load %arg1[%c0_124, %c0_125] : memref<8x128xf32, #tpu.memory_space<vmem>>, vector<8x128xf32>
    %cst_126 = arith.constant dense<0.000000e+00> : vector<8x128xf32>
    %337 = tpu.matmul %335, %336, %cst_126 {dimension_numbers = #tpu.dot_dimension_numbers<[1], [0], [0], [1], [0, 0, 1, 1], [], []>} : vector<8x8xf32>, vector<8x128xf32>, vector<8x128xf32> -> vector<8x128xf32>
    %c0_127 = arith.constant 0 : index
    %c0_128 = arith.constant 0 : index
    %338 = vector.load %arg2[%c0_127, %c0_128] : memref<32x128xf32, #tpu.memory_space<vmem>>, vector<32x128xf32>
    %cst_129 = arith.constant dense<0.000000e+00> : vector<8x128xf32>
    %339 = tpu.matmul %304, %338, %cst_129 {dimension_numbers = #tpu.dot_dimension_numbers<[1], [0], [0], [1], [0, 0, 1, 1], [], []>} : vector<8x32xf32>, vector<32x128xf32>, vector<8x128xf32> -> vector<8x128xf32>
    %340 = arith.addf %337, %339 : vector<8x128xf32>
    %341 = arith.addf %340, %2 : vector<8x128xf32>
    %342 = vector.extract_strided_slice %341 {offsets = [0, 0], sizes = [8, 96], strides = [1, 1]} : vector<8x128xf32> to vector<8x96xf32>
    %343 = arith.negf %342 : vector<8x96xf32>
    %344 = math.exp %343 : vector<8x96xf32>
    %cst_130 = arith.constant 1.000000e+00 : f32
    %345 = vector.broadcast %cst_130 : f32 to vector<8x96xf32>
    %346 = arith.addf %345, %344 : vector<8x96xf32>
    %347 = arith.divf %345, %346 : vector<8x96xf32>
    %348 = vector.extract_strided_slice %341 {offsets = [0, 96], sizes = [8, 32], strides = [1, 1]} : vector<8x128xf32> to vector<8x32xf32>
    %349 = math.tanh %348 : vector<8x32xf32>
    %350 = vector.extract_strided_slice %347 {offsets = [0, 0], sizes = [8, 32], strides = [1, 1]} : vector<8x96xf32> to vector<8x32xf32>
    %351 = vector.extract_strided_slice %347 {offsets = [0, 32], sizes = [8, 32], strides = [1, 1]} : vector<8x96xf32> to vector<8x32xf32>
    %352 = vector.extract_strided_slice %347 {offsets = [0, 64], sizes = [8, 32], strides = [1, 1]} : vector<8x96xf32> to vector<8x32xf32>
    %353 = arith.mulf %351, %302 : vector<8x32xf32>
    %354 = arith.mulf %350, %349 : vector<8x32xf32>
    %355 = arith.addf %353, %354 : vector<8x32xf32>
    %356 = math.tanh %355 : vector<8x32xf32>
    %357 = arith.mulf %352, %356 : vector<8x32xf32>
    %c0_131 = arith.constant 0 : index
    %c0_132 = arith.constant 0 : index
    %358 = vector.load %arg4[%c0_131, %c0_132] : memref<32x128xf32, #tpu.memory_space<vmem>>, vector<32x128xf32>
    %cst_133 = arith.constant dense<0.000000e+00> : vector<8x128xf32>
    %359 = tpu.matmul %357, %358, %cst_133 {dimension_numbers = #tpu.dot_dimension_numbers<[1], [0], [0], [1], [0, 0, 1, 1], [], []>} : vector<8x32xf32>, vector<32x128xf32>, vector<8x128xf32> -> vector<8x128xf32>
    %c0_134 = arith.constant 0 : index
    %c0_135 = arith.constant 0 : index
    %360 = vector.load %arg5[%c0_134, %c0_135] : memref<32x128xf32, #tpu.memory_space<vmem>>, vector<32x128xf32>
    %cst_136 = arith.constant dense<0.000000e+00> : vector<8x128xf32>
    %361 = tpu.matmul %326, %360, %cst_136 {dimension_numbers = #tpu.dot_dimension_numbers<[1], [0], [0], [1], [0, 0, 1, 1], [], []>} : vector<8x32xf32>, vector<32x128xf32>, vector<8x128xf32> -> vector<8x128xf32>
    %362 = arith.addf %359, %361 : vector<8x128xf32>
    %363 = arith.addf %362, %5 : vector<8x128xf32>
    %364 = vector.extract_strided_slice %363 {offsets = [0, 0], sizes = [8, 96], strides = [1, 1]} : vector<8x128xf32> to vector<8x96xf32>
    %365 = arith.negf %364 : vector<8x96xf32>
    %366 = math.exp %365 : vector<8x96xf32>
    %cst_137 = arith.constant 1.000000e+00 : f32
    %367 = vector.broadcast %cst_137 : f32 to vector<8x96xf32>
    %368 = arith.addf %367, %366 : vector<8x96xf32>
    %369 = arith.divf %367, %368 : vector<8x96xf32>
    %370 = vector.extract_strided_slice %363 {offsets = [0, 96], sizes = [8, 32], strides = [1, 1]} : vector<8x128xf32> to vector<8x32xf32>
    %371 = math.tanh %370 : vector<8x32xf32>
    %372 = vector.extract_strided_slice %369 {offsets = [0, 0], sizes = [8, 32], strides = [1, 1]} : vector<8x96xf32> to vector<8x32xf32>
    %373 = vector.extract_strided_slice %369 {offsets = [0, 32], sizes = [8, 32], strides = [1, 1]} : vector<8x96xf32> to vector<8x32xf32>
    %374 = vector.extract_strided_slice %369 {offsets = [0, 64], sizes = [8, 32], strides = [1, 1]} : vector<8x96xf32> to vector<8x32xf32>
    %375 = arith.mulf %373, %324 : vector<8x32xf32>
    %376 = arith.mulf %372, %371 : vector<8x32xf32>
    %377 = arith.addf %375, %376 : vector<8x32xf32>
    %378 = math.tanh %377 : vector<8x32xf32>
    %379 = arith.mulf %374, %378 : vector<8x32xf32>
    %380 = arith.index_cast %c6_i32 : i32 to index
    %c0_138 = arith.constant 0 : index
    %c0_139 = arith.constant 0 : index
    %381 = vector.load %arg16[%380, %c0_138, %c0_139] : memref<8x8x32xf32, #tpu.memory_space<vmem>>, vector<1x8x32xf32>
    %382 = vector.shape_cast %381 : vector<1x8x32xf32> to vector<8x32xf32>
    %383 = vector.shape_cast %379 : vector<8x32xf32> to vector<1x8x32xf32>
    tpu.vector_store %arg16[%380, %c0_138, %c0_139], %383 {strides = array<i32>} : memref<8x8x32xf32, #tpu.memory_space<vmem>>, vector<1x8x32xf32>,
    %c7_i32 = arith.constant 7 : i32
    %384 = arith.index_cast %c7_i32 : i32 to index
    %c0_140 = arith.constant 0 : index
    %c0_141 = arith.constant 0 : index
    %385 = vector.load %arg0[%384, %c0_140, %c0_141] : memref<8x8x8xf32, #tpu.memory_space<vmem>>, vector<1x8x8xf32>
    %386 = vector.shape_cast %385 : vector<1x8x8xf32> to vector<8x8xf32>
    %cst_142 = arith.constant 0.000000e+00 : f32
    %387 = vector.broadcast %cst_142 : f32 to vector<8x8xf32>
    %388 = arith.maximumf %386, %387 : vector<8x8xf32>
    %c0_143 = arith.constant 0 : index
    %c0_144 = arith.constant 0 : index
    %389 = vector.load %arg1[%c0_143, %c0_144] : memref<8x128xf32, #tpu.memory_space<vmem>>, vector<8x128xf32>
    %cst_145 = arith.constant dense<0.000000e+00> : vector<8x128xf32>
    %390 = tpu.matmul %388, %389, %cst_145 {dimension_numbers = #tpu.dot_dimension_numbers<[1], [0], [0], [1], [0, 0, 1, 1], [], []>} : vector<8x8xf32>, vector<8x128xf32>, vector<8x128xf32> -> vector<8x128xf32>
    %c0_146 = arith.constant 0 : index
    %c0_147 = arith.constant 0 : index
    %391 = vector.load %arg2[%c0_146, %c0_147] : memref<32x128xf32, #tpu.memory_space<vmem>>, vector<32x128xf32>
    %cst_148 = arith.constant dense<0.000000e+00> : vector<8x128xf32>
    %392 = tpu.matmul %357, %391, %cst_148 {dimension_numbers = #tpu.dot_dimension_numbers<[1], [0], [0], [1], [0, 0, 1, 1], [], []>} : vector<8x32xf32>, vector<32x128xf32>, vector<8x128xf32> -> vector<8x128xf32>
    %393 = arith.addf %390, %392 : vector<8x128xf32>
    %394 = arith.addf %393, %2 : vector<8x128xf32>
    %395 = vector.extract_strided_slice %394 {offsets = [0, 0], sizes = [8, 96], strides = [1, 1]} : vector<8x128xf32> to vector<8x96xf32>
    %396 = arith.negf %395 : vector<8x96xf32>
    %397 = math.exp %396 : vector<8x96xf32>
    %cst_149 = arith.constant 1.000000e+00 : f32
    %398 = vector.broadcast %cst_149 : f32 to vector<8x96xf32>
    %399 = arith.addf %398, %397 : vector<8x96xf32>
    %400 = arith.divf %398, %399 : vector<8x96xf32>
    %401 = vector.extract_strided_slice %394 {offsets = [0, 96], sizes = [8, 32], strides = [1, 1]} : vector<8x128xf32> to vector<8x32xf32>
    %402 = math.tanh %401 : vector<8x32xf32>
    %403 = vector.extract_strided_slice %400 {offsets = [0, 0], sizes = [8, 32], strides = [1, 1]} : vector<8x96xf32> to vector<8x32xf32>
    %404 = vector.extract_strided_slice %400 {offsets = [0, 32], sizes = [8, 32], strides = [1, 1]} : vector<8x96xf32> to vector<8x32xf32>
    %405 = vector.extract_strided_slice %400 {offsets = [0, 64], sizes = [8, 32], strides = [1, 1]} : vector<8x96xf32> to vector<8x32xf32>
    %406 = arith.mulf %404, %355 : vector<8x32xf32>
    %407 = arith.mulf %403, %402 : vector<8x32xf32>
    %408 = arith.addf %406, %407 : vector<8x32xf32>
    %409 = math.tanh %408 : vector<8x32xf32>
    %410 = arith.mulf %405, %409 : vector<8x32xf32>
    %c0_150 = arith.constant 0 : index
    %c0_151 = arith.constant 0 : index
    %411 = vector.load %arg4[%c0_150, %c0_151] : memref<32x128xf32, #tpu.memory_space<vmem>>, vector<32x128xf32>
    %cst_152 = arith.constant dense<0.000000e+00> : vector<8x128xf32>
    %412 = tpu.matmul %410, %411, %cst_152 {dimension_numbers = #tpu.dot_dimension_numbers<[1], [0], [0], [1], [0, 0, 1, 1], [], []>} : vector<8x32xf32>, vector<32x128xf32>, vector<8x128xf32> -> vector<8x128xf32>
    %c0_153 = arith.constant 0 : index
    %c0_154 = arith.constant 0 : index
    %413 = vector.load %arg5[%c0_153, %c0_154] : memref<32x128xf32, #tpu.memory_space<vmem>>, vector<32x128xf32>
    %cst_155 = arith.constant dense<0.000000e+00> : vector<8x128xf32>
    %414 = tpu.matmul %379, %413, %cst_155 {dimension_numbers = #tpu.dot_dimension_numbers<[1], [0], [0], [1], [0, 0, 1, 1], [], []>} : vector<8x32xf32>, vector<32x128xf32>, vector<8x128xf32> -> vector<8x128xf32>
    %415 = arith.addf %412, %414 : vector<8x128xf32>
    %416 = arith.addf %415, %5 : vector<8x128xf32>
    %417 = vector.extract_strided_slice %416 {offsets = [0, 0], sizes = [8, 96], strides = [1, 1]} : vector<8x128xf32> to vector<8x96xf32>
    %418 = arith.negf %417 : vector<8x96xf32>
    %419 = math.exp %418 : vector<8x96xf32>
    %cst_156 = arith.constant 1.000000e+00 : f32
    %420 = vector.broadcast %cst_156 : f32 to vector<8x96xf32>
    %421 = arith.addf %420, %419 : vector<8x96xf32>
    %422 = arith.divf %420, %421 : vector<8x96xf32>
    %423 = vector.extract_strided_slice %416 {offsets = [0, 96], sizes = [8, 32], strides = [1, 1]} : vector<8x128xf32> to vector<8x32xf32>
    %424 = math.tanh %423 : vector<8x32xf32>
    %425 = vector.extract_strided_slice %422 {offsets = [0, 0], sizes = [8, 32], strides = [1, 1]} : vector<8x96xf32> to vector<8x32xf32>
    %426 = vector.extract_strided_slice %422 {offsets = [0, 32], sizes = [8, 32], strides = [1, 1]} : vector<8x96xf32> to vector<8x32xf32>
    %427 = vector.extract_strided_slice %422 {offsets = [0, 64], sizes = [8, 32], strides = [1, 1]} : vector<8x96xf32> to vector<8x32xf32>
    %428 = arith.mulf %426, %377 : vector<8x32xf32>
    %429 = arith.mulf %425, %424 : vector<8x32xf32>
    %430 = arith.addf %428, %429 : vector<8x32xf32>
    %431 = math.tanh %430 : vector<8x32xf32>
    %432 = arith.mulf %427, %431 : vector<8x32xf32>
    %433 = arith.index_cast %c7_i32 : i32 to index
    %c0_157 = arith.constant 0 : index
    %c0_158 = arith.constant 0 : index
    %434 = vector.load %arg16[%433, %c0_157, %c0_158] : memref<8x8x32xf32, #tpu.memory_space<vmem>>, vector<1x8x32xf32>
    %435 = vector.shape_cast %434 : vector<1x8x32xf32> to vector<8x32xf32>
    %436 = vector.shape_cast %432 : vector<8x32xf32> to vector<1x8x32xf32>
    tpu.vector_store %arg16[%433, %c0_157, %c0_158], %436 {strides = array<i32>} : memref<8x8x32xf32, #tpu.memory_space<vmem>>, vector<1x8x32xf32>,
    %c8_i32 = arith.constant 8 : i32
    %c0_i32_159 = arith.constant 0 : i32
    %437 = arith.index_cast %c0_i32_159 : i32 to index
    %c0_160 = arith.constant 0 : index
    %c0_161 = arith.constant 0 : index
    %438 = vector.load %arg16[%437, %c0_160, %c0_161] : memref<8x8x32xf32, #tpu.memory_space<vmem>>, vector<1x8x32xf32>
    %439 = vector.shape_cast %438 : vector<1x8x32xf32> to vector<8x32xf32>
    %cst_162 = arith.constant 0.000000e+00 : f32
    %440 = vector.broadcast %cst_162 : f32 to vector<8x32xf32>
    %441 = arith.maximumf %439, %440 : vector<8x32xf32>
    %c0_163 = arith.constant 0 : index
    %c0_164 = arith.constant 0 : index
    %442 = vector.load %arg7[%c0_163, %c0_164] : memref<32x128xf32, #tpu.memory_space<vmem>>, vector<32x128xf32>
    %cst_165 = arith.constant dense<0.000000e+00> : vector<8x128xf32>
    %443 = tpu.matmul %441, %442, %cst_165 {dimension_numbers = #tpu.dot_dimension_numbers<[1], [0], [0], [1], [0, 0, 1, 1], [], []>} : vector<8x32xf32>, vector<32x128xf32>, vector<8x128xf32> -> vector<8x128xf32>
    %c0_166 = arith.constant 0 : index
    %c0_167 = arith.constant 0 : index
    %444 = vector.load %arg8[%c0_166, %c0_167] : memref<32x128xf32, #tpu.memory_space<vmem>>, vector<32x128xf32>
    %cst_168 = arith.constant dense<0.000000e+00> : vector<8x128xf32>
    %445 = tpu.matmul %410, %444, %cst_168 {dimension_numbers = #tpu.dot_dimension_numbers<[1], [0], [0], [1], [0, 0, 1, 1], [], []>} : vector<8x32xf32>, vector<32x128xf32>, vector<8x128xf32> -> vector<8x128xf32>
    %446 = arith.addf %443, %445 : vector<8x128xf32>
    %447 = arith.addf %446, %8 : vector<8x128xf32>
    %448 = vector.extract_strided_slice %447 {offsets = [0, 0], sizes = [8, 96], strides = [1, 1]} : vector<8x128xf32> to vector<8x96xf32>
    %449 = arith.negf %448 : vector<8x96xf32>
    %450 = math.exp %449 : vector<8x96xf32>
    %cst_169 = arith.constant 1.000000e+00 : f32
    %451 = vector.broadcast %cst_169 : f32 to vector<8x96xf32>
    %452 = arith.addf %451, %450 : vector<8x96xf32>
    %453 = arith.divf %451, %452 : vector<8x96xf32>
    %454 = vector.extract_strided_slice %447 {offsets = [0, 96], sizes = [8, 32], strides = [1, 1]} : vector<8x128xf32> to vector<8x32xf32>
    %455 = math.tanh %454 : vector<8x32xf32>
    %456 = vector.extract_strided_slice %453 {offsets = [0, 0], sizes = [8, 32], strides = [1, 1]} : vector<8x96xf32> to vector<8x32xf32>
    %457 = vector.extract_strided_slice %453 {offsets = [0, 32], sizes = [8, 32], strides = [1, 1]} : vector<8x96xf32> to vector<8x32xf32>
    %458 = vector.extract_strided_slice %453 {offsets = [0, 64], sizes = [8, 32], strides = [1, 1]} : vector<8x96xf32> to vector<8x32xf32>
    %459 = arith.mulf %457, %408 : vector<8x32xf32>
    %460 = arith.mulf %456, %455 : vector<8x32xf32>
    %461 = arith.addf %459, %460 : vector<8x32xf32>
    %462 = math.tanh %461 : vector<8x32xf32>
    %463 = arith.mulf %458, %462 : vector<8x32xf32>
    %c0_170 = arith.constant 0 : index
    %c0_171 = arith.constant 0 : index
    %464 = vector.load %arg10[%c0_170, %c0_171] : memref<32x128xf32, #tpu.memory_space<vmem>>, vector<32x128xf32>
    %cst_172 = arith.constant dense<0.000000e+00> : vector<8x128xf32>
    %465 = tpu.matmul %463, %464, %cst_172 {dimension_numbers = #tpu.dot_dimension_numbers<[1], [0], [0], [1], [0, 0, 1, 1], [], []>} : vector<8x32xf32>, vector<32x128xf32>, vector<8x128xf32> -> vector<8x128xf32>
    %c0_173 = arith.constant 0 : index
    %c0_174 = arith.constant 0 : index
    %466 = vector.load %arg11[%c0_173, %c0_174] : memref<32x128xf32, #tpu.memory_space<vmem>>, vector<32x128xf32>
    %cst_175 = arith.constant dense<0.000000e+00> : vector<8x128xf32>
    %467 = tpu.matmul %432, %466, %cst_175 {dimension_numbers = #tpu.dot_dimension_numbers<[1], [0], [0], [1], [0, 0, 1, 1], [], []>} : vector<8x32xf32>, vector<32x128xf32>, vector<8x128xf32> -> vector<8x128xf32>
    %468 = arith.addf %465, %467 : vector<8x128xf32>
    %469 = arith.addf %468, %11 : vector<8x128xf32>
    %470 = vector.extract_strided_slice %469 {offsets = [0, 0], sizes = [8, 96], strides = [1, 1]} : vector<8x128xf32> to vector<8x96xf32>
    %471 = arith.negf %470 : vector<8x96xf32>
    %472 = math.exp %471 : vector<8x96xf32>
    %cst_176 = arith.constant 1.000000e+00 : f32
    %473 = vector.broadcast %cst_176 : f32 to vector<8x96xf32>
    %474 = arith.addf %473, %472 : vector<8x96xf32>
    %475 = arith.divf %473, %474 : vector<8x96xf32>
    %476 = vector.extract_strided_slice %469 {offsets = [0, 96], sizes = [8, 32], strides = [1, 1]} : vector<8x128xf32> to vector<8x32xf32>
    %477 = math.tanh %476 : vector<8x32xf32>
    %478 = vector.extract_strided_slice %475 {offsets = [0, 0], sizes = [8, 32], strides = [1, 1]} : vector<8x96xf32> to vector<8x32xf32>
    %479 = vector.extract_strided_slice %475 {offsets = [0, 32], sizes = [8, 32], strides = [1, 1]} : vector<8x96xf32> to vector<8x32xf32>
    %480 = vector.extract_strided_slice %475 {offsets = [0, 64], sizes = [8, 32], strides = [1, 1]} : vector<8x96xf32> to vector<8x32xf32>
    %481 = arith.mulf %479, %430 : vector<8x32xf32>
    %482 = arith.mulf %478, %477 : vector<8x32xf32>
    %483 = arith.addf %481, %482 : vector<8x32xf32>
    %484 = math.tanh %483 : vector<8x32xf32>
    %485 = arith.mulf %480, %484 : vector<8x32xf32>
    %c1_i32_177 = arith.constant 1 : i32
    %486 = arith.index_cast %c1_i32_177 : i32 to index
    %c0_178 = arith.constant 0 : index
    %c0_179 = arith.constant 0 : index
    %487 = vector.load %arg16[%486, %c0_178, %c0_179] : memref<8x8x32xf32, #tpu.memory_space<vmem>>, vector<1x8x32xf32>
    %488 = vector.shape_cast %487 : vector<1x8x32xf32> to vector<8x32xf32>
    %cst_180 = arith.constant 0.000000e+00 : f32
    %489 = vector.broadcast %cst_180 : f32 to vector<8x32xf32>
    %490 = arith.maximumf %488, %489 : vector<8x32xf32>
    %c0_181 = arith.constant 0 : index
    %c0_182 = arith.constant 0 : index
    %491 = vector.load %arg7[%c0_181, %c0_182] : memref<32x128xf32, #tpu.memory_space<vmem>>, vector<32x128xf32>
    %cst_183 = arith.constant dense<0.000000e+00> : vector<8x128xf32>
    %492 = tpu.matmul %490, %491, %cst_183 {dimension_numbers = #tpu.dot_dimension_numbers<[1], [0], [0], [1], [0, 0, 1, 1], [], []>} : vector<8x32xf32>, vector<32x128xf32>, vector<8x128xf32> -> vector<8x128xf32>
    %c0_184 = arith.constant 0 : index
    %c0_185 = arith.constant 0 : index
    %493 = vector.load %arg8[%c0_184, %c0_185] : memref<32x128xf32, #tpu.memory_space<vmem>>, vector<32x128xf32>
    %cst_186 = arith.constant dense<0.000000e+00> : vector<8x128xf32>
    %494 = tpu.matmul %463, %493, %cst_186 {dimension_numbers = #tpu.dot_dimension_numbers<[1], [0], [0], [1], [0, 0, 1, 1], [], []>} : vector<8x32xf32>, vector<32x128xf32>, vector<8x128xf32> -> vector<8x128xf32>
    %495 = arith.addf %492, %494 : vector<8x128xf32>
    %496 = arith.addf %495, %8 : vector<8x128xf32>
    %497 = vector.extract_strided_slice %496 {offsets = [0, 0], sizes = [8, 96], strides = [1, 1]} : vector<8x128xf32> to vector<8x96xf32>
    %498 = arith.negf %497 : vector<8x96xf32>
    %499 = math.exp %498 : vector<8x96xf32>
    %cst_187 = arith.constant 1.000000e+00 : f32
    %500 = vector.broadcast %cst_187 : f32 to vector<8x96xf32>
    %501 = arith.addf %500, %499 : vector<8x96xf32>
    %502 = arith.divf %500, %501 : vector<8x96xf32>
    %503 = vector.extract_strided_slice %496 {offsets = [0, 96], sizes = [8, 32], strides = [1, 1]} : vector<8x128xf32> to vector<8x32xf32>
    %504 = math.tanh %503 : vector<8x32xf32>
    %505 = vector.extract_strided_slice %502 {offsets = [0, 0], sizes = [8, 32], strides = [1, 1]} : vector<8x96xf32> to vector<8x32xf32>
    %506 = vector.extract_strided_slice %502 {offsets = [0, 32], sizes = [8, 32], strides = [1, 1]} : vector<8x96xf32> to vector<8x32xf32>
    %507 = vector.extract_strided_slice %502 {offsets = [0, 64], sizes = [8, 32], strides = [1, 1]} : vector<8x96xf32> to vector<8x32xf32>
    %508 = arith.mulf %506, %461 : vector<8x32xf32>
    %509 = arith.mulf %505, %504 : vector<8x32xf32>
    %510 = arith.addf %508, %509 : vector<8x32xf32>
    %511 = math.tanh %510 : vector<8x32xf32>
    %512 = arith.mulf %507, %511 : vector<8x32xf32>
    %c0_188 = arith.constant 0 : index
    %c0_189 = arith.constant 0 : index
    %513 = vector.load %arg10[%c0_188, %c0_189] : memref<32x128xf32, #tpu.memory_space<vmem>>, vector<32x128xf32>
    %cst_190 = arith.constant dense<0.000000e+00> : vector<8x128xf32>
    %514 = tpu.matmul %512, %513, %cst_190 {dimension_numbers = #tpu.dot_dimension_numbers<[1], [0], [0], [1], [0, 0, 1, 1], [], []>} : vector<8x32xf32>, vector<32x128xf32>, vector<8x128xf32> -> vector<8x128xf32>
    %c0_191 = arith.constant 0 : index
    %c0_192 = arith.constant 0 : index
    %515 = vector.load %arg11[%c0_191, %c0_192] : memref<32x128xf32, #tpu.memory_space<vmem>>, vector<32x128xf32>
    %cst_193 = arith.constant dense<0.000000e+00> : vector<8x128xf32>
    %516 = tpu.matmul %485, %515, %cst_193 {dimension_numbers = #tpu.dot_dimension_numbers<[1], [0], [0], [1], [0, 0, 1, 1], [], []>} : vector<8x32xf32>, vector<32x128xf32>, vector<8x128xf32> -> vector<8x128xf32>
    %517 = arith.addf %514, %516 : vector<8x128xf32>
    %518 = arith.addf %517, %11 : vector<8x128xf32>
    %519 = vector.extract_strided_slice %518 {offsets = [0, 0], sizes = [8, 96], strides = [1, 1]} : vector<8x128xf32> to vector<8x96xf32>
    %520 = arith.negf %519 : vector<8x96xf32>
    %521 = math.exp %520 : vector<8x96xf32>
    %cst_194 = arith.constant 1.000000e+00 : f32
    %522 = vector.broadcast %cst_194 : f32 to vector<8x96xf32>
    %523 = arith.addf %522, %521 : vector<8x96xf32>
    %524 = arith.divf %522, %523 : vector<8x96xf32>
    %525 = vector.extract_strided_slice %518 {offsets = [0, 96], sizes = [8, 32], strides = [1, 1]} : vector<8x128xf32> to vector<8x32xf32>
    %526 = math.tanh %525 : vector<8x32xf32>
    %527 = vector.extract_strided_slice %524 {offsets = [0, 0], sizes = [8, 32], strides = [1, 1]} : vector<8x96xf32> to vector<8x32xf32>
    %528 = vector.extract_strided_slice %524 {offsets = [0, 32], sizes = [8, 32], strides = [1, 1]} : vector<8x96xf32> to vector<8x32xf32>
    %529 = vector.extract_strided_slice %524 {offsets = [0, 64], sizes = [8, 32], strides = [1, 1]} : vector<8x96xf32> to vector<8x32xf32>
    %530 = arith.mulf %528, %483 : vector<8x32xf32>
    %531 = arith.mulf %527, %526 : vector<8x32xf32>
    %532 = arith.addf %530, %531 : vector<8x32xf32>
    %533 = math.tanh %532 : vector<8x32xf32>
    %534 = arith.mulf %529, %533 : vector<8x32xf32>
    %c2_i32_195 = arith.constant 2 : i32
    %535 = arith.index_cast %c2_i32_195 : i32 to index
    %c0_196 = arith.constant 0 : index
    %c0_197 = arith.constant 0 : index
    %536 = vector.load %arg16[%535, %c0_196, %c0_197] : memref<8x8x32xf32, #tpu.memory_space<vmem>>, vector<1x8x32xf32>
    %537 = vector.shape_cast %536 : vector<1x8x32xf32> to vector<8x32xf32>
    %cst_198 = arith.constant 0.000000e+00 : f32
    %538 = vector.broadcast %cst_198 : f32 to vector<8x32xf32>
    %539 = arith.maximumf %537, %538 : vector<8x32xf32>
    %c0_199 = arith.constant 0 : index
    %c0_200 = arith.constant 0 : index
    %540 = vector.load %arg7[%c0_199, %c0_200] : memref<32x128xf32, #tpu.memory_space<vmem>>, vector<32x128xf32>
    %cst_201 = arith.constant dense<0.000000e+00> : vector<8x128xf32>
    %541 = tpu.matmul %539, %540, %cst_201 {dimension_numbers = #tpu.dot_dimension_numbers<[1], [0], [0], [1], [0, 0, 1, 1], [], []>} : vector<8x32xf32>, vector<32x128xf32>, vector<8x128xf32> -> vector<8x128xf32>
    %c0_202 = arith.constant 0 : index
    %c0_203 = arith.constant 0 : index
    %542 = vector.load %arg8[%c0_202, %c0_203] : memref<32x128xf32, #tpu.memory_space<vmem>>, vector<32x128xf32>
    %cst_204 = arith.constant dense<0.000000e+00> : vector<8x128xf32>
    %543 = tpu.matmul %512, %542, %cst_204 {dimension_numbers = #tpu.dot_dimension_numbers<[1], [0], [0], [1], [0, 0, 1, 1], [], []>} : vector<8x32xf32>, vector<32x128xf32>, vector<8x128xf32> -> vector<8x128xf32>
    %544 = arith.addf %541, %543 : vector<8x128xf32>
    %545 = arith.addf %544, %8 : vector<8x128xf32>
    %546 = vector.extract_strided_slice %545 {offsets = [0, 0], sizes = [8, 96], strides = [1, 1]} : vector<8x128xf32> to vector<8x96xf32>
    %547 = arith.negf %546 : vector<8x96xf32>
    %548 = math.exp %547 : vector<8x96xf32>
    %cst_205 = arith.constant 1.000000e+00 : f32
    %549 = vector.broadcast %cst_205 : f32 to vector<8x96xf32>
    %550 = arith.addf %549, %548 : vector<8x96xf32>
    %551 = arith.divf %549, %550 : vector<8x96xf32>
    %552 = vector.extract_strided_slice %545 {offsets = [0, 96], sizes = [8, 32], strides = [1, 1]} : vector<8x128xf32> to vector<8x32xf32>
    %553 = math.tanh %552 : vector<8x32xf32>
    %554 = vector.extract_strided_slice %551 {offsets = [0, 0], sizes = [8, 32], strides = [1, 1]} : vector<8x96xf32> to vector<8x32xf32>
    %555 = vector.extract_strided_slice %551 {offsets = [0, 32], sizes = [8, 32], strides = [1, 1]} : vector<8x96xf32> to vector<8x32xf32>
    %556 = vector.extract_strided_slice %551 {offsets = [0, 64], sizes = [8, 32], strides = [1, 1]} : vector<8x96xf32> to vector<8x32xf32>
    %557 = arith.mulf %555, %510 : vector<8x32xf32>
    %558 = arith.mulf %554, %553 : vector<8x32xf32>
    %559 = arith.addf %557, %558 : vector<8x32xf32>
    %560 = math.tanh %559 : vector<8x32xf32>
    %561 = arith.mulf %556, %560 : vector<8x32xf32>
    %c0_206 = arith.constant 0 : index
    %c0_207 = arith.constant 0 : index
    %562 = vector.load %arg10[%c0_206, %c0_207] : memref<32x128xf32, #tpu.memory_space<vmem>>, vector<32x128xf32>
    %cst_208 = arith.constant dense<0.000000e+00> : vector<8x128xf32>
    %563 = tpu.matmul %561, %562, %cst_208 {dimension_numbers = #tpu.dot_dimension_numbers<[1], [0], [0], [1], [0, 0, 1, 1], [], []>} : vector<8x32xf32>, vector<32x128xf32>, vector<8x128xf32> -> vector<8x128xf32>
    %c0_209 = arith.constant 0 : index
    %c0_210 = arith.constant 0 : index
    %564 = vector.load %arg11[%c0_209, %c0_210] : memref<32x128xf32, #tpu.memory_space<vmem>>, vector<32x128xf32>
    %cst_211 = arith.constant dense<0.000000e+00> : vector<8x128xf32>
    %565 = tpu.matmul %534, %564, %cst_211 {dimension_numbers = #tpu.dot_dimension_numbers<[1], [0], [0], [1], [0, 0, 1, 1], [], []>} : vector<8x32xf32>, vector<32x128xf32>, vector<8x128xf32> -> vector<8x128xf32>
    %566 = arith.addf %563, %565 : vector<8x128xf32>
    %567 = arith.addf %566, %11 : vector<8x128xf32>
    %568 = vector.extract_strided_slice %567 {offsets = [0, 0], sizes = [8, 96], strides = [1, 1]} : vector<8x128xf32> to vector<8x96xf32>
    %569 = arith.negf %568 : vector<8x96xf32>
    %570 = math.exp %569 : vector<8x96xf32>
    %cst_212 = arith.constant 1.000000e+00 : f32
    %571 = vector.broadcast %cst_212 : f32 to vector<8x96xf32>
    %572 = arith.addf %571, %570 : vector<8x96xf32>
    %573 = arith.divf %571, %572 : vector<8x96xf32>
    %574 = vector.extract_strided_slice %567 {offsets = [0, 96], sizes = [8, 32], strides = [1, 1]} : vector<8x128xf32> to vector<8x32xf32>
    %575 = math.tanh %574 : vector<8x32xf32>
    %576 = vector.extract_strided_slice %573 {offsets = [0, 0], sizes = [8, 32], strides = [1, 1]} : vector<8x96xf32> to vector<8x32xf32>
    %577 = vector.extract_strided_slice %573 {offsets = [0, 32], sizes = [8, 32], strides = [1, 1]} : vector<8x96xf32> to vector<8x32xf32>
    %578 = vector.extract_strided_slice %573 {offsets = [0, 64], sizes = [8, 32], strides = [1, 1]} : vector<8x96xf32> to vector<8x32xf32>
    %579 = arith.mulf %577, %532 : vector<8x32xf32>
    %580 = arith.mulf %576, %575 : vector<8x32xf32>
    %581 = arith.addf %579, %580 : vector<8x32xf32>
    %582 = math.tanh %581 : vector<8x32xf32>
    %583 = arith.mulf %578, %582 : vector<8x32xf32>
    %c3_i32_213 = arith.constant 3 : i32
    %584 = arith.index_cast %c3_i32_213 : i32 to index
    %c0_214 = arith.constant 0 : index
    %c0_215 = arith.constant 0 : index
    %585 = vector.load %arg16[%584, %c0_214, %c0_215] : memref<8x8x32xf32, #tpu.memory_space<vmem>>, vector<1x8x32xf32>
    %586 = vector.shape_cast %585 : vector<1x8x32xf32> to vector<8x32xf32>
    %cst_216 = arith.constant 0.000000e+00 : f32
    %587 = vector.broadcast %cst_216 : f32 to vector<8x32xf32>
    %588 = arith.maximumf %586, %587 : vector<8x32xf32>
    %c0_217 = arith.constant 0 : index
    %c0_218 = arith.constant 0 : index
    %589 = vector.load %arg7[%c0_217, %c0_218] : memref<32x128xf32, #tpu.memory_space<vmem>>, vector<32x128xf32>
    %cst_219 = arith.constant dense<0.000000e+00> : vector<8x128xf32>
    %590 = tpu.matmul %588, %589, %cst_219 {dimension_numbers = #tpu.dot_dimension_numbers<[1], [0], [0], [1], [0, 0, 1, 1], [], []>} : vector<8x32xf32>, vector<32x128xf32>, vector<8x128xf32> -> vector<8x128xf32>
    %c0_220 = arith.constant 0 : index
    %c0_221 = arith.constant 0 : index
    %591 = vector.load %arg8[%c0_220, %c0_221] : memref<32x128xf32, #tpu.memory_space<vmem>>, vector<32x128xf32>
    %cst_222 = arith.constant dense<0.000000e+00> : vector<8x128xf32>
    %592 = tpu.matmul %561, %591, %cst_222 {dimension_numbers = #tpu.dot_dimension_numbers<[1], [0], [0], [1], [0, 0, 1, 1], [], []>} : vector<8x32xf32>, vector<32x128xf32>, vector<8x128xf32> -> vector<8x128xf32>
    %593 = arith.addf %590, %592 : vector<8x128xf32>
    %594 = arith.addf %593, %8 : vector<8x128xf32>
    %595 = vector.extract_strided_slice %594 {offsets = [0, 0], sizes = [8, 96], strides = [1, 1]} : vector<8x128xf32> to vector<8x96xf32>
    %596 = arith.negf %595 : vector<8x96xf32>
    %597 = math.exp %596 : vector<8x96xf32>
    %cst_223 = arith.constant 1.000000e+00 : f32
    %598 = vector.broadcast %cst_223 : f32 to vector<8x96xf32>
    %599 = arith.addf %598, %597 : vector<8x96xf32>
    %600 = arith.divf %598, %599 : vector<8x96xf32>
    %601 = vector.extract_strided_slice %594 {offsets = [0, 96], sizes = [8, 32], strides = [1, 1]} : vector<8x128xf32> to vector<8x32xf32>
    %602 = math.tanh %601 : vector<8x32xf32>
    %603 = vector.extract_strided_slice %600 {offsets = [0, 0], sizes = [8, 32], strides = [1, 1]} : vector<8x96xf32> to vector<8x32xf32>
    %604 = vector.extract_strided_slice %600 {offsets = [0, 32], sizes = [8, 32], strides = [1, 1]} : vector<8x96xf32> to vector<8x32xf32>
    %605 = vector.extract_strided_slice %600 {offsets = [0, 64], sizes = [8, 32], strides = [1, 1]} : vector<8x96xf32> to vector<8x32xf32>
    %606 = arith.mulf %604, %559 : vector<8x32xf32>
    %607 = arith.mulf %603, %602 : vector<8x32xf32>
    %608 = arith.addf %606, %607 : vector<8x32xf32>
    %609 = math.tanh %608 : vector<8x32xf32>
    %610 = arith.mulf %605, %609 : vector<8x32xf32>
    %c0_224 = arith.constant 0 : index
    %c0_225 = arith.constant 0 : index
    %611 = vector.load %arg10[%c0_224, %c0_225] : memref<32x128xf32, #tpu.memory_space<vmem>>, vector<32x128xf32>
    %cst_226 = arith.constant dense<0.000000e+00> : vector<8x128xf32>
    %612 = tpu.matmul %610, %611, %cst_226 {dimension_numbers = #tpu.dot_dimension_numbers<[1], [0], [0], [1], [0, 0, 1, 1], [], []>} : vector<8x32xf32>, vector<32x128xf32>, vector<8x128xf32> -> vector<8x128xf32>
    %c0_227 = arith.constant 0 : index
    %c0_228 = arith.constant 0 : index
    %613 = vector.load %arg11[%c0_227, %c0_228] : memref<32x128xf32, #tpu.memory_space<vmem>>, vector<32x128xf32>
    %cst_229 = arith.constant dense<0.000000e+00> : vector<8x128xf32>
    %614 = tpu.matmul %583, %613, %cst_229 {dimension_numbers = #tpu.dot_dimension_numbers<[1], [0], [0], [1], [0, 0, 1, 1], [], []>} : vector<8x32xf32>, vector<32x128xf32>, vector<8x128xf32> -> vector<8x128xf32>
    %615 = arith.addf %612, %614 : vector<8x128xf32>
    %616 = arith.addf %615, %11 : vector<8x128xf32>
    %617 = vector.extract_strided_slice %616 {offsets = [0, 0], sizes = [8, 96], strides = [1, 1]} : vector<8x128xf32> to vector<8x96xf32>
    %618 = arith.negf %617 : vector<8x96xf32>
    %619 = math.exp %618 : vector<8x96xf32>
    %cst_230 = arith.constant 1.000000e+00 : f32
    %620 = vector.broadcast %cst_230 : f32 to vector<8x96xf32>
    %621 = arith.addf %620, %619 : vector<8x96xf32>
    %622 = arith.divf %620, %621 : vector<8x96xf32>
    %623 = vector.extract_strided_slice %616 {offsets = [0, 96], sizes = [8, 32], strides = [1, 1]} : vector<8x128xf32> to vector<8x32xf32>
    %624 = math.tanh %623 : vector<8x32xf32>
    %625 = vector.extract_strided_slice %622 {offsets = [0, 0], sizes = [8, 32], strides = [1, 1]} : vector<8x96xf32> to vector<8x32xf32>
    %626 = vector.extract_strided_slice %622 {offsets = [0, 32], sizes = [8, 32], strides = [1, 1]} : vector<8x96xf32> to vector<8x32xf32>
    %627 = vector.extract_strided_slice %622 {offsets = [0, 64], sizes = [8, 32], strides = [1, 1]} : vector<8x96xf32> to vector<8x32xf32>
    %628 = arith.mulf %626, %581 : vector<8x32xf32>
    %629 = arith.mulf %625, %624 : vector<8x32xf32>
    %630 = arith.addf %628, %629 : vector<8x32xf32>
    %631 = math.tanh %630 : vector<8x32xf32>
    %632 = arith.mulf %627, %631 : vector<8x32xf32>
    %c4_i32_231 = arith.constant 4 : i32
    %633 = arith.index_cast %c4_i32_231 : i32 to index
    %c0_232 = arith.constant 0 : index
    %c0_233 = arith.constant 0 : index
    %634 = vector.load %arg16[%633, %c0_232, %c0_233] : memref<8x8x32xf32, #tpu.memory_space<vmem>>, vector<1x8x32xf32>
    %635 = vector.shape_cast %634 : vector<1x8x32xf32> to vector<8x32xf32>
    %cst_234 = arith.constant 0.000000e+00 : f32
    %636 = vector.broadcast %cst_234 : f32 to vector<8x32xf32>
    %637 = arith.maximumf %635, %636 : vector<8x32xf32>
    %c0_235 = arith.constant 0 : index
    %c0_236 = arith.constant 0 : index
    %638 = vector.load %arg7[%c0_235, %c0_236] : memref<32x128xf32, #tpu.memory_space<vmem>>, vector<32x128xf32>
    %cst_237 = arith.constant dense<0.000000e+00> : vector<8x128xf32>
    %639 = tpu.matmul %637, %638, %cst_237 {dimension_numbers = #tpu.dot_dimension_numbers<[1], [0], [0], [1], [0, 0, 1, 1], [], []>} : vector<8x32xf32>, vector<32x128xf32>, vector<8x128xf32> -> vector<8x128xf32>
    %c0_238 = arith.constant 0 : index
    %c0_239 = arith.constant 0 : index
    %640 = vector.load %arg8[%c0_238, %c0_239] : memref<32x128xf32, #tpu.memory_space<vmem>>, vector<32x128xf32>
    %cst_240 = arith.constant dense<0.000000e+00> : vector<8x128xf32>
    %641 = tpu.matmul %610, %640, %cst_240 {dimension_numbers = #tpu.dot_dimension_numbers<[1], [0], [0], [1], [0, 0, 1, 1], [], []>} : vector<8x32xf32>, vector<32x128xf32>, vector<8x128xf32> -> vector<8x128xf32>
    %642 = arith.addf %639, %641 : vector<8x128xf32>
    %643 = arith.addf %642, %8 : vector<8x128xf32>
    %644 = vector.extract_strided_slice %643 {offsets = [0, 0], sizes = [8, 96], strides = [1, 1]} : vector<8x128xf32> to vector<8x96xf32>
    %645 = arith.negf %644 : vector<8x96xf32>
    %646 = math.exp %645 : vector<8x96xf32>
    %cst_241 = arith.constant 1.000000e+00 : f32
    %647 = vector.broadcast %cst_241 : f32 to vector<8x96xf32>
    %648 = arith.addf %647, %646 : vector<8x96xf32>
    %649 = arith.divf %647, %648 : vector<8x96xf32>
    %650 = vector.extract_strided_slice %643 {offsets = [0, 96], sizes = [8, 32], strides = [1, 1]} : vector<8x128xf32> to vector<8x32xf32>
    %651 = math.tanh %650 : vector<8x32xf32>
    %652 = vector.extract_strided_slice %649 {offsets = [0, 0], sizes = [8, 32], strides = [1, 1]} : vector<8x96xf32> to vector<8x32xf32>
    %653 = vector.extract_strided_slice %649 {offsets = [0, 32], sizes = [8, 32], strides = [1, 1]} : vector<8x96xf32> to vector<8x32xf32>
    %654 = vector.extract_strided_slice %649 {offsets = [0, 64], sizes = [8, 32], strides = [1, 1]} : vector<8x96xf32> to vector<8x32xf32>
    %655 = arith.mulf %653, %608 : vector<8x32xf32>
    %656 = arith.mulf %652, %651 : vector<8x32xf32>
    %657 = arith.addf %655, %656 : vector<8x32xf32>
    %658 = math.tanh %657 : vector<8x32xf32>
    %659 = arith.mulf %654, %658 : vector<8x32xf32>
    %c0_242 = arith.constant 0 : index
    %c0_243 = arith.constant 0 : index
    %660 = vector.load %arg10[%c0_242, %c0_243] : memref<32x128xf32, #tpu.memory_space<vmem>>, vector<32x128xf32>
    %cst_244 = arith.constant dense<0.000000e+00> : vector<8x128xf32>
    %661 = tpu.matmul %659, %660, %cst_244 {dimension_numbers = #tpu.dot_dimension_numbers<[1], [0], [0], [1], [0, 0, 1, 1], [], []>} : vector<8x32xf32>, vector<32x128xf32>, vector<8x128xf32> -> vector<8x128xf32>
    %c0_245 = arith.constant 0 : index
    %c0_246 = arith.constant 0 : index
    %662 = vector.load %arg11[%c0_245, %c0_246] : memref<32x128xf32, #tpu.memory_space<vmem>>, vector<32x128xf32>
    %cst_247 = arith.constant dense<0.000000e+00> : vector<8x128xf32>
    %663 = tpu.matmul %632, %662, %cst_247 {dimension_numbers = #tpu.dot_dimension_numbers<[1], [0], [0], [1], [0, 0, 1, 1], [], []>} : vector<8x32xf32>, vector<32x128xf32>, vector<8x128xf32> -> vector<8x128xf32>
    %664 = arith.addf %661, %663 : vector<8x128xf32>
    %665 = arith.addf %664, %11 : vector<8x128xf32>
    %666 = vector.extract_strided_slice %665 {offsets = [0, 0], sizes = [8, 96], strides = [1, 1]} : vector<8x128xf32> to vector<8x96xf32>
    %667 = arith.negf %666 : vector<8x96xf32>
    %668 = math.exp %667 : vector<8x96xf32>
    %cst_248 = arith.constant 1.000000e+00 : f32
    %669 = vector.broadcast %cst_248 : f32 to vector<8x96xf32>
    %670 = arith.addf %669, %668 : vector<8x96xf32>
    %671 = arith.divf %669, %670 : vector<8x96xf32>
    %672 = vector.extract_strided_slice %665 {offsets = [0, 96], sizes = [8, 32], strides = [1, 1]} : vector<8x128xf32> to vector<8x32xf32>
    %673 = math.tanh %672 : vector<8x32xf32>
    %674 = vector.extract_strided_slice %671 {offsets = [0, 0], sizes = [8, 32], strides = [1, 1]} : vector<8x96xf32> to vector<8x32xf32>
    %675 = vector.extract_strided_slice %671 {offsets = [0, 32], sizes = [8, 32], strides = [1, 1]} : vector<8x96xf32> to vector<8x32xf32>
    %676 = vector.extract_strided_slice %671 {offsets = [0, 64], sizes = [8, 32], strides = [1, 1]} : vector<8x96xf32> to vector<8x32xf32>
    %677 = arith.mulf %675, %630 : vector<8x32xf32>
    %678 = arith.mulf %674, %673 : vector<8x32xf32>
    %679 = arith.addf %677, %678 : vector<8x32xf32>
    %680 = math.tanh %679 : vector<8x32xf32>
    %681 = arith.mulf %676, %680 : vector<8x32xf32>
    %c5_i32_249 = arith.constant 5 : i32
    %682 = arith.index_cast %c5_i32_249 : i32 to index
    %c0_250 = arith.constant 0 : index
    %c0_251 = arith.constant 0 : index
    %683 = vector.load %arg16[%682, %c0_250, %c0_251] : memref<8x8x32xf32, #tpu.memory_space<vmem>>, vector<1x8x32xf32>
    %684 = vector.shape_cast %683 : vector<1x8x32xf32> to vector<8x32xf32>
    %cst_252 = arith.constant 0.000000e+00 : f32
    %685 = vector.broadcast %cst_252 : f32 to vector<8x32xf32>
    %686 = arith.maximumf %684, %685 : vector<8x32xf32>
    %c0_253 = arith.constant 0 : index
    %c0_254 = arith.constant 0 : index
    %687 = vector.load %arg7[%c0_253, %c0_254] : memref<32x128xf32, #tpu.memory_space<vmem>>, vector<32x128xf32>
    %cst_255 = arith.constant dense<0.000000e+00> : vector<8x128xf32>
    %688 = tpu.matmul %686, %687, %cst_255 {dimension_numbers = #tpu.dot_dimension_numbers<[1], [0], [0], [1], [0, 0, 1, 1], [], []>} : vector<8x32xf32>, vector<32x128xf32>, vector<8x128xf32> -> vector<8x128xf32>
    %c0_256 = arith.constant 0 : index
    %c0_257 = arith.constant 0 : index
    %689 = vector.load %arg8[%c0_256, %c0_257] : memref<32x128xf32, #tpu.memory_space<vmem>>, vector<32x128xf32>
    %cst_258 = arith.constant dense<0.000000e+00> : vector<8x128xf32>
    %690 = tpu.matmul %659, %689, %cst_258 {dimension_numbers = #tpu.dot_dimension_numbers<[1], [0], [0], [1], [0, 0, 1, 1], [], []>} : vector<8x32xf32>, vector<32x128xf32>, vector<8x128xf32> -> vector<8x128xf32>
    %691 = arith.addf %688, %690 : vector<8x128xf32>
    %692 = arith.addf %691, %8 : vector<8x128xf32>
    %693 = vector.extract_strided_slice %692 {offsets = [0, 0], sizes = [8, 96], strides = [1, 1]} : vector<8x128xf32> to vector<8x96xf32>
    %694 = arith.negf %693 : vector<8x96xf32>
    %695 = math.exp %694 : vector<8x96xf32>
    %cst_259 = arith.constant 1.000000e+00 : f32
    %696 = vector.broadcast %cst_259 : f32 to vector<8x96xf32>
    %697 = arith.addf %696, %695 : vector<8x96xf32>
    %698 = arith.divf %696, %697 : vector<8x96xf32>
    %699 = vector.extract_strided_slice %692 {offsets = [0, 96], sizes = [8, 32], strides = [1, 1]} : vector<8x128xf32> to vector<8x32xf32>
    %700 = math.tanh %699 : vector<8x32xf32>
    %701 = vector.extract_strided_slice %698 {offsets = [0, 0], sizes = [8, 32], strides = [1, 1]} : vector<8x96xf32> to vector<8x32xf32>
    %702 = vector.extract_strided_slice %698 {offsets = [0, 32], sizes = [8, 32], strides = [1, 1]} : vector<8x96xf32> to vector<8x32xf32>
    %703 = vector.extract_strided_slice %698 {offsets = [0, 64], sizes = [8, 32], strides = [1, 1]} : vector<8x96xf32> to vector<8x32xf32>
    %704 = arith.mulf %702, %657 : vector<8x32xf32>
    %705 = arith.mulf %701, %700 : vector<8x32xf32>
    %706 = arith.addf %704, %705 : vector<8x32xf32>
    %707 = math.tanh %706 : vector<8x32xf32>
    %708 = arith.mulf %703, %707 : vector<8x32xf32>
    %c0_260 = arith.constant 0 : index
    %c0_261 = arith.constant 0 : index
    %709 = vector.load %arg10[%c0_260, %c0_261] : memref<32x128xf32, #tpu.memory_space<vmem>>, vector<32x128xf32>
    %cst_262 = arith.constant dense<0.000000e+00> : vector<8x128xf32>
    %710 = tpu.matmul %708, %709, %cst_262 {dimension_numbers = #tpu.dot_dimension_numbers<[1], [0], [0], [1], [0, 0, 1, 1], [], []>} : vector<8x32xf32>, vector<32x128xf32>, vector<8x128xf32> -> vector<8x128xf32>
    %c0_263 = arith.constant 0 : index
    %c0_264 = arith.constant 0 : index
    %711 = vector.load %arg11[%c0_263, %c0_264] : memref<32x128xf32, #tpu.memory_space<vmem>>, vector<32x128xf32>
    %cst_265 = arith.constant dense<0.000000e+00> : vector<8x128xf32>
    %712 = tpu.matmul %681, %711, %cst_265 {dimension_numbers = #tpu.dot_dimension_numbers<[1], [0], [0], [1], [0, 0, 1, 1], [], []>} : vector<8x32xf32>, vector<32x128xf32>, vector<8x128xf32> -> vector<8x128xf32>
    %713 = arith.addf %710, %712 : vector<8x128xf32>
    %714 = arith.addf %713, %11 : vector<8x128xf32>
    %715 = vector.extract_strided_slice %714 {offsets = [0, 0], sizes = [8, 96], strides = [1, 1]} : vector<8x128xf32> to vector<8x96xf32>
    %716 = arith.negf %715 : vector<8x96xf32>
    %717 = math.exp %716 : vector<8x96xf32>
    %cst_266 = arith.constant 1.000000e+00 : f32
    %718 = vector.broadcast %cst_266 : f32 to vector<8x96xf32>
    %719 = arith.addf %718, %717 : vector<8x96xf32>
    %720 = arith.divf %718, %719 : vector<8x96xf32>
    %721 = vector.extract_strided_slice %714 {offsets = [0, 96], sizes = [8, 32], strides = [1, 1]} : vector<8x128xf32> to vector<8x32xf32>
    %722 = math.tanh %721 : vector<8x32xf32>
    %723 = vector.extract_strided_slice %720 {offsets = [0, 0], sizes = [8, 32], strides = [1, 1]} : vector<8x96xf32> to vector<8x32xf32>
    %724 = vector.extract_strided_slice %720 {offsets = [0, 32], sizes = [8, 32], strides = [1, 1]} : vector<8x96xf32> to vector<8x32xf32>
    %725 = vector.extract_strided_slice %720 {offsets = [0, 64], sizes = [8, 32], strides = [1, 1]} : vector<8x96xf32> to vector<8x32xf32>
    %726 = arith.mulf %724, %679 : vector<8x32xf32>
    %727 = arith.mulf %723, %722 : vector<8x32xf32>
    %728 = arith.addf %726, %727 : vector<8x32xf32>
    %729 = math.tanh %728 : vector<8x32xf32>
    %730 = arith.mulf %725, %729 : vector<8x32xf32>
    %c6_i32_267 = arith.constant 6 : i32
    %731 = arith.index_cast %c6_i32_267 : i32 to index
    %c0_268 = arith.constant 0 : index
    %c0_269 = arith.constant 0 : index
    %732 = vector.load %arg16[%731, %c0_268, %c0_269] : memref<8x8x32xf32, #tpu.memory_space<vmem>>, vector<1x8x32xf32>
    %733 = vector.shape_cast %732 : vector<1x8x32xf32> to vector<8x32xf32>
    %cst_270 = arith.constant 0.000000e+00 : f32
    %734 = vector.broadcast %cst_270 : f32 to vector<8x32xf32>
    %735 = arith.maximumf %733, %734 : vector<8x32xf32>
    %c0_271 = arith.constant 0 : index
    %c0_272 = arith.constant 0 : index
    %736 = vector.load %arg7[%c0_271, %c0_272] : memref<32x128xf32, #tpu.memory_space<vmem>>, vector<32x128xf32>
    %cst_273 = arith.constant dense<0.000000e+00> : vector<8x128xf32>
    %737 = tpu.matmul %735, %736, %cst_273 {dimension_numbers = #tpu.dot_dimension_numbers<[1], [0], [0], [1], [0, 0, 1, 1], [], []>} : vector<8x32xf32>, vector<32x128xf32>, vector<8x128xf32> -> vector<8x128xf32>
    %c0_274 = arith.constant 0 : index
    %c0_275 = arith.constant 0 : index
    %738 = vector.load %arg8[%c0_274, %c0_275] : memref<32x128xf32, #tpu.memory_space<vmem>>, vector<32x128xf32>
    %cst_276 = arith.constant dense<0.000000e+00> : vector<8x128xf32>
    %739 = tpu.matmul %708, %738, %cst_276 {dimension_numbers = #tpu.dot_dimension_numbers<[1], [0], [0], [1], [0, 0, 1, 1], [], []>} : vector<8x32xf32>, vector<32x128xf32>, vector<8x128xf32> -> vector<8x128xf32>
    %740 = arith.addf %737, %739 : vector<8x128xf32>
    %741 = arith.addf %740, %8 : vector<8x128xf32>
    %742 = vector.extract_strided_slice %741 {offsets = [0, 0], sizes = [8, 96], strides = [1, 1]} : vector<8x128xf32> to vector<8x96xf32>
    %743 = arith.negf %742 : vector<8x96xf32>
    %744 = math.exp %743 : vector<8x96xf32>
    %cst_277 = arith.constant 1.000000e+00 : f32
    %745 = vector.broadcast %cst_277 : f32 to vector<8x96xf32>
    %746 = arith.addf %745, %744 : vector<8x96xf32>
    %747 = arith.divf %745, %746 : vector<8x96xf32>
    %748 = vector.extract_strided_slice %741 {offsets = [0, 96], sizes = [8, 32], strides = [1, 1]} : vector<8x128xf32> to vector<8x32xf32>
    %749 = math.tanh %748 : vector<8x32xf32>
    %750 = vector.extract_strided_slice %747 {offsets = [0, 0], sizes = [8, 32], strides = [1, 1]} : vector<8x96xf32> to vector<8x32xf32>
    %751 = vector.extract_strided_slice %747 {offsets = [0, 32], sizes = [8, 32], strides = [1, 1]} : vector<8x96xf32> to vector<8x32xf32>
    %752 = vector.extract_strided_slice %747 {offsets = [0, 64], sizes = [8, 32], strides = [1, 1]} : vector<8x96xf32> to vector<8x32xf32>
    %753 = arith.mulf %751, %706 : vector<8x32xf32>
    %754 = arith.mulf %750, %749 : vector<8x32xf32>
    %755 = arith.addf %753, %754 : vector<8x32xf32>
    %756 = math.tanh %755 : vector<8x32xf32>
    %757 = arith.mulf %752, %756 : vector<8x32xf32>
    %c0_278 = arith.constant 0 : index
    %c0_279 = arith.constant 0 : index
    %758 = vector.load %arg10[%c0_278, %c0_279] : memref<32x128xf32, #tpu.memory_space<vmem>>, vector<32x128xf32>
    %cst_280 = arith.constant dense<0.000000e+00> : vector<8x128xf32>
    %759 = tpu.matmul %757, %758, %cst_280 {dimension_numbers = #tpu.dot_dimension_numbers<[1], [0], [0], [1], [0, 0, 1, 1], [], []>} : vector<8x32xf32>, vector<32x128xf32>, vector<8x128xf32> -> vector<8x128xf32>
    %c0_281 = arith.constant 0 : index
    %c0_282 = arith.constant 0 : index
    %760 = vector.load %arg11[%c0_281, %c0_282] : memref<32x128xf32, #tpu.memory_space<vmem>>, vector<32x128xf32>
    %cst_283 = arith.constant dense<0.000000e+00> : vector<8x128xf32>
    %761 = tpu.matmul %730, %760, %cst_283 {dimension_numbers = #tpu.dot_dimension_numbers<[1], [0], [0], [1], [0, 0, 1, 1], [], []>} : vector<8x32xf32>, vector<32x128xf32>, vector<8x128xf32> -> vector<8x128xf32>
    %762 = arith.addf %759, %761 : vector<8x128xf32>
    %763 = arith.addf %762, %11 : vector<8x128xf32>
    %764 = vector.extract_strided_slice %763 {offsets = [0, 0], sizes = [8, 96], strides = [1, 1]} : vector<8x128xf32> to vector<8x96xf32>
    %765 = arith.negf %764 : vector<8x96xf32>
    %766 = math.exp %765 : vector<8x96xf32>
    %cst_284 = arith.constant 1.000000e+00 : f32
    %767 = vector.broadcast %cst_284 : f32 to vector<8x96xf32>
    %768 = arith.addf %767, %766 : vector<8x96xf32>
    %769 = arith.divf %767, %768 : vector<8x96xf32>
    %770 = vector.extract_strided_slice %763 {offsets = [0, 96], sizes = [8, 32], strides = [1, 1]} : vector<8x128xf32> to vector<8x32xf32>
    %771 = math.tanh %770 : vector<8x32xf32>
    %772 = vector.extract_strided_slice %769 {offsets = [0, 0], sizes = [8, 32], strides = [1, 1]} : vector<8x96xf32> to vector<8x32xf32>
    %773 = vector.extract_strided_slice %769 {offsets = [0, 32], sizes = [8, 32], strides = [1, 1]} : vector<8x96xf32> to vector<8x32xf32>
    %774 = vector.extract_strided_slice %769 {offsets = [0, 64], sizes = [8, 32], strides = [1, 1]} : vector<8x96xf32> to vector<8x32xf32>
    %775 = arith.mulf %773, %728 : vector<8x32xf32>
    %776 = arith.mulf %772, %771 : vector<8x32xf32>
    %777 = arith.addf %775, %776 : vector<8x32xf32>
    %778 = math.tanh %777 : vector<8x32xf32>
    %779 = arith.mulf %774, %778 : vector<8x32xf32>
    %c7_i32_285 = arith.constant 7 : i32
    %780 = arith.index_cast %c7_i32_285 : i32 to index
    %c0_286 = arith.constant 0 : index
    %c0_287 = arith.constant 0 : index
    %781 = vector.load %arg16[%780, %c0_286, %c0_287] : memref<8x8x32xf32, #tpu.memory_space<vmem>>, vector<1x8x32xf32>
    %782 = vector.shape_cast %781 : vector<1x8x32xf32> to vector<8x32xf32>
    %cst_288 = arith.constant 0.000000e+00 : f32
    %783 = vector.broadcast %cst_288 : f32 to vector<8x32xf32>
    %784 = arith.maximumf %782, %783 : vector<8x32xf32>
    %c0_289 = arith.constant 0 : index
    %c0_290 = arith.constant 0 : index
    %785 = vector.load %arg7[%c0_289, %c0_290] : memref<32x128xf32, #tpu.memory_space<vmem>>, vector<32x128xf32>
    %cst_291 = arith.constant dense<0.000000e+00> : vector<8x128xf32>
    %786 = tpu.matmul %784, %785, %cst_291 {dimension_numbers = #tpu.dot_dimension_numbers<[1], [0], [0], [1], [0, 0, 1, 1], [], []>} : vector<8x32xf32>, vector<32x128xf32>, vector<8x128xf32> -> vector<8x128xf32>
    %c0_292 = arith.constant 0 : index
    %c0_293 = arith.constant 0 : index
    %787 = vector.load %arg8[%c0_292, %c0_293] : memref<32x128xf32, #tpu.memory_space<vmem>>, vector<32x128xf32>
    %cst_294 = arith.constant dense<0.000000e+00> : vector<8x128xf32>
    %788 = tpu.matmul %757, %787, %cst_294 {dimension_numbers = #tpu.dot_dimension_numbers<[1], [0], [0], [1], [0, 0, 1, 1], [], []>} : vector<8x32xf32>, vector<32x128xf32>, vector<8x128xf32> -> vector<8x128xf32>
    %789 = arith.addf %786, %788 : vector<8x128xf32>
    %790 = arith.addf %789, %8 : vector<8x128xf32>
    %791 = vector.extract_strided_slice %790 {offsets = [0, 0], sizes = [8, 96], strides = [1, 1]} : vector<8x128xf32> to vector<8x96xf32>
    %792 = arith.negf %791 : vector<8x96xf32>
    %793 = math.exp %792 : vector<8x96xf32>
    %cst_295 = arith.constant 1.000000e+00 : f32
    %794 = vector.broadcast %cst_295 : f32 to vector<8x96xf32>
    %795 = arith.addf %794, %793 : vector<8x96xf32>
    %796 = arith.divf %794, %795 : vector<8x96xf32>
    %797 = vector.extract_strided_slice %790 {offsets = [0, 96], sizes = [8, 32], strides = [1, 1]} : vector<8x128xf32> to vector<8x32xf32>
    %798 = math.tanh %797 : vector<8x32xf32>
    %799 = vector.extract_strided_slice %796 {offsets = [0, 0], sizes = [8, 32], strides = [1, 1]} : vector<8x96xf32> to vector<8x32xf32>
    %800 = vector.extract_strided_slice %796 {offsets = [0, 32], sizes = [8, 32], strides = [1, 1]} : vector<8x96xf32> to vector<8x32xf32>
    %801 = vector.extract_strided_slice %796 {offsets = [0, 64], sizes = [8, 32], strides = [1, 1]} : vector<8x96xf32> to vector<8x32xf32>
    %802 = arith.mulf %800, %755 : vector<8x32xf32>
    %803 = arith.mulf %799, %798 : vector<8x32xf32>
    %804 = arith.addf %802, %803 : vector<8x32xf32>
    %805 = math.tanh %804 : vector<8x32xf32>
    %806 = arith.mulf %801, %805 : vector<8x32xf32>
    %c0_296 = arith.constant 0 : index
    %c0_297 = arith.constant 0 : index
    %807 = vector.load %arg10[%c0_296, %c0_297] : memref<32x128xf32, #tpu.memory_space<vmem>>, vector<32x128xf32>
    %cst_298 = arith.constant dense<0.000000e+00> : vector<8x128xf32>
    %808 = tpu.matmul %806, %807, %cst_298 {dimension_numbers = #tpu.dot_dimension_numbers<[1], [0], [0], [1], [0, 0, 1, 1], [], []>} : vector<8x32xf32>, vector<32x128xf32>, vector<8x128xf32> -> vector<8x128xf32>
    %c0_299 = arith.constant 0 : index
    %c0_300 = arith.constant 0 : index
    %809 = vector.load %arg11[%c0_299, %c0_300] : memref<32x128xf32, #tpu.memory_space<vmem>>, vector<32x128xf32>
    %cst_301 = arith.constant dense<0.000000e+00> : vector<8x128xf32>
    %810 = tpu.matmul %779, %809, %cst_301 {dimension_numbers = #tpu.dot_dimension_numbers<[1], [0], [0], [1], [0, 0, 1, 1], [], []>} : vector<8x32xf32>, vector<32x128xf32>, vector<8x128xf32> -> vector<8x128xf32>
    %811 = arith.addf %808, %810 : vector<8x128xf32>
    %812 = arith.addf %811, %11 : vector<8x128xf32>
    %813 = vector.extract_strided_slice %812 {offsets = [0, 0], sizes = [8, 96], strides = [1, 1]} : vector<8x128xf32> to vector<8x96xf32>
    %814 = arith.negf %813 : vector<8x96xf32>
    %815 = math.exp %814 : vector<8x96xf32>
    %cst_302 = arith.constant 1.000000e+00 : f32
    %816 = vector.broadcast %cst_302 : f32 to vector<8x96xf32>
    %817 = arith.addf %816, %815 : vector<8x96xf32>
    %818 = arith.divf %816, %817 : vector<8x96xf32>
    %819 = vector.extract_strided_slice %812 {offsets = [0, 96], sizes = [8, 32], strides = [1, 1]} : vector<8x128xf32> to vector<8x32xf32>
    %820 = math.tanh %819 : vector<8x32xf32>
    %821 = vector.extract_strided_slice %818 {offsets = [0, 0], sizes = [8, 32], strides = [1, 1]} : vector<8x96xf32> to vector<8x32xf32>
    %822 = vector.extract_strided_slice %818 {offsets = [0, 32], sizes = [8, 32], strides = [1, 1]} : vector<8x96xf32> to vector<8x32xf32>
    %823 = vector.extract_strided_slice %818 {offsets = [0, 64], sizes = [8, 32], strides = [1, 1]} : vector<8x96xf32> to vector<8x32xf32>
    %824 = arith.mulf %822, %777 : vector<8x32xf32>
    %825 = arith.mulf %821, %820 : vector<8x32xf32>
    %826 = arith.addf %824, %825 : vector<8x32xf32>
    %827 = math.tanh %826 : vector<8x32xf32>
    %828 = arith.mulf %823, %827 : vector<8x32xf32>
    %c8_i32_303 = arith.constant 8 : i32
    %c0_304 = arith.constant 0 : index
    %c0_305 = arith.constant 0 : index
    %829 = vector.load %arg13[%c0_304, %c0_305] : memref<32x128xf32, #tpu.memory_space<vmem>>, vector<32x128xf32>
    %cst_306 = arith.constant dense<0.000000e+00> : vector<8x128xf32>
    %830 = tpu.matmul %828, %829, %cst_306 {dimension_numbers = #tpu.dot_dimension_numbers<[1], [0], [0], [1], [0, 0, 1, 1], [], []>} : vector<8x32xf32>, vector<32x128xf32>, vector<8x128xf32> -> vector<8x128xf32>
    %c0_307 = arith.constant 0 : index
    %c0_308 = arith.constant 0 : index
    %831 = vector.load %arg14[%c0_307, %c0_308] : memref<1x128xf32, #tpu.memory_space<vmem>>, vector<1x128xf32>
    %832 = vector.broadcast %831 : vector<1x128xf32> to vector<8x128xf32>
    %833 = arith.addf %830, %832 : vector<8x128xf32>
    %c0_309 = arith.constant 0 : index
    %c0_310 = arith.constant 0 : index
    %834 = vector.load %arg15[%c0_309, %c0_310] : memref<8x128xf32, #tpu.memory_space<vmem>>, vector<8x128xf32>
    tpu.vector_store %arg15[%c0_309, %c0_310], %833 {strides = array<i32>} : memref<8x128xf32, #tpu.memory_space<vmem>>, vector<8x128xf32>,
    return
  }
}

</mosaic_0001>

<llo_original>
// kernel: tpu_custom_call.1
$region0: #{tpu_custom_call.1}
  #allocation0 [shape = 'u32[]', space=smem, size = 0x4, offset = 0x4, fixed_abs, tag = 'smem constant byte address 0x4 - core index']
  #allocation1 [shape = 'u32[144,128]{1,0:T(1,128)}', space=vmem, size = 0x12000, scoped, tag = 'internal scratch']
  #allocation2 [shape = 'f32[8,8,32]{2,1,0:T(8,128)}', space=vmem, size = 0x8000, scoped, tag = 'scratch operand']
  %s0 = inlined_call_operand.hbm [shape: f32[8,8,8], index: 0, kind: input, shape index: {}]
  %s1 = inlined_call_operand.hbm [shape: f32[8,128], index: 1, kind: input, shape index: {}]
  %s2 = inlined_call_operand.hbm [shape: f32[32,128], index: 2, kind: input, shape index: {}]
  %s3 = inlined_call_operand.vmem [shape: f32[1,128], index: 3, kind: input, shape index: {}]
  %s4 = inlined_call_operand.hbm [shape: f32[32,128], index: 4, kind: input, shape index: {}]
  %s5 = inlined_call_operand.hbm [shape: f32[32,128], index: 5, kind: input, shape index: {}]
  %s6 = inlined_call_operand.vmem [shape: f32[1,128], index: 6, kind: input, shape index: {}]
  %s7 = inlined_call_operand.hbm [shape: f32[32,128], index: 7, kind: input, shape index: {}]
  %s8 = inlined_call_operand.hbm [shape: f32[32,128], index: 8, kind: input, shape index: {}]
  %s9 = inlined_call_operand.vmem [shape: f32[1,128], index: 9, kind: input, shape index: {}]
  %s10 = inlined_call_operand.hbm [shape: f32[32,128], index: 10, kind: input, shape index: {}]
  %s11 = inlined_call_operand.hbm [shape: f32[32,128], index: 11, kind: input, shape index: {}]
  %s12 = inlined_call_operand.vmem [shape: f32[1,128], index: 12, kind: input, shape index: {}]
  %s13 = inlined_call_operand.hbm [shape: f32[32,128], index: 13, kind: input, shape index: {}]
  %s14 = inlined_call_operand.vmem [shape: f32[1,128], index: 14, kind: input, shape index: {}]
  %s15 = inlined_call_operand.hbm [shape: f32[8,128], index: 15, kind: output, shape index: {}]
  %s16 = sld [smem:[#allocation0]]
  $region110: #{tpu_custom_call.1} parent=0
    _
  %s18 = ssub.s32 1, %s16
  %s19 = scalar_select 0, %s18, %s16
  $region1: #{tpu_custom_call.1} parent=0
    #allocation3 [shape = 'u8[32768]{0}', space=vmem, size = 0x8000, scoped, tag = 'input window, operand 0, single buffered']
    #allocation4 [shape = 's32[1]{0}', space=sflag, size = 0x4, scoped, tag = 'scoped memory for tpu_custom_call.1']
    #allocation5 [shape = 's32[1]{0}', space=sflag, size = 0x4, scoped, tag = 'scoped memory for tpu_custom_call.1']
    #allocation6 [shape = 'u8[4096]{0}', space=vmem, size = 0x1000, scoped, tag = 'input window, operand 1, single buffered']
    #allocation7 [shape = 's32[1]{0}', space=sflag, size = 0x4, scoped, tag = 'scoped memory for tpu_custom_call.1']
    #allocation8 [shape = 'u8[16384]{0}', space=vmem, size = 0x4000, scoped, tag = 'input window, operand 2, single buffered']
    #allocation9 [shape = 'u8[16384]{0}', space=vmem, size = 0x4000, scoped, tag = 'input window, operand 4, single buffered']
    #allocation10 [shape = 's32[1]{0}', space=sflag, size = 0x4, scoped, tag = 'scoped memory for tpu_custom_call.1']
    #allocation11 [shape = 'u8[16384]{0}', space=vmem, size = 0x4000, scoped, tag = 'input window, operand 5, single buffered']
    #allocation12 [shape = 'u8[16384]{0}', space=vmem, size = 0x4000, scoped, tag = 'input window, operand 7, single buffered']
    #allocation13 [shape = 's32[1]{0}', space=sflag, size = 0x4, scoped, tag = 'scoped memory for tpu_custom_call.1']
    #allocation14 [shape = 'u8[16384]{0}', space=vmem, size = 0x4000, scoped, tag = 'input window, operand 8, single buffered']
    #allocation15 [shape = 'u8[16384]{0}', space=vmem, size = 0x4000, scoped, tag = 'input window, operand 10, single buffered']
    #allocation16 [shape = 's32[1]{0}', space=sflag, size = 0x4, scoped, tag = 'scoped memory for tpu_custom_call.1']
    #allocation17 [shape = 'u8[16384]{0}', space=vmem, size = 0x4000, scoped, tag = 'input window, operand 11, single buffered']
    #allocation18 [shape = 'u8[16384]{0}', space=vmem, size = 0x4000, scoped, tag = 'input window, operand 13, single buffered']
    #allocation19 [shape = 's32[1]{0}', space=sflag, size = 0x4, scoped, tag = 'scoped memory for tpu_custom_call.1']
    #allocation20 [shape = 'u8[4096]{0}', space=vmem, size = 0x1000, scoped, tag = 'output window, operand 0, single buffered']
    %20 = vsyncpa [#allocation4], 0
    %21 = vsyncpa [#allocation7], 0
    %22 = vsyncpa [#allocation10], 0
    %23 = vsyncpa [#allocation13], 0
    %24 = vsyncpa [#allocation16], 0
    %25 = vsyncpa [#allocation19], 0
    %26 = vsyncpa [#allocation5], 0
    // Predicated region
    $region2: #{tpu_custom_call.1} parent=1 // pred_check
      _
    $region3: #{tpu_custom_call.1} parent=1 // pred_check_branch
      %28 = sbr.rel (0) target = $region5
    $region4: #{tpu_custom_call.1} parent=1 // pred_region
      %s30 = ssub.s32 1024, 1024
      %31 = vsyncadd [#allocation4], %s30
      %s32 = sshll.u32 [#allocation3], 4
      %s33 = int_to_ptr.vmem [resolvable:$true] %s32
      %38 = dma.hbm_to_vmem [thread:$0]  %s0, 1024, %s33, [#allocation4], 128, 128, 8
    $region5: #{tpu_custom_call.1} parent=1 // pred_fallthru
      _
    // Predicated region
    $region6: #{tpu_custom_call.1} parent=1 // pred_check
      _
    $region7: #{tpu_custom_call.1} parent=1 // pred_check_branch
      %40 = sbr.rel (0) target = $region9
    $region8: #{tpu_custom_call.1} parent=1 // pred_region
      %s42 = ssub.s32 128, 128
      %43 = vsyncadd [#allocation7], %s42
      %s45 = sshll.u32 [#allocation6], 4
      %s46 = int_to_ptr.vmem [resolvable:$true] %s45
      %48 = dma.hbm_to_vmem [thread:$0]  %s1, 128, %s46, [#allocation7]
    $region9: #{tpu_custom_call.1} parent=1 // pred_fallthru
      _
    // Predicated region
    $region10: #{tpu_custom_call.1} parent=1 // pred_check
      _
    $region11: #{tpu_custom_call.1} parent=1 // pred_check_branch
      %50 = sbr.rel (0) target = $region13
    $region12: #{tpu_custom_call.1} parent=1 // pred_region
      %s52 = ssub.s32 512, 512
      %53 = vsyncadd [#allocation7], %s52
      %s54 = sshll.u32 [#allocation8], 4
      %s55 = int_to_ptr.vmem [resolvable:$true] %s54
      %60 = dma.hbm_to_vmem [thread:$0]  %s2, 512, %s55, [#allocation7], 128, 128, 8
    $region13: #{tpu_custom_call.1} parent=1 // pred_fallthru
      _
    // Predicated region
    $region14: #{tpu_custom_call.1} parent=1 // pred_check
      _
    $region15: #{tpu_custom_call.1} parent=1 // pred_check_branch
      %62 = sbr.rel (0) target = $region17
    $region16: #{tpu_custom_call.1} parent=1 // pred_region
      _
    $region17: #{tpu_custom_call.1} parent=1 // pred_fallthru
      _
    // Predicated region
    $region18: #{tpu_custom_call.1} parent=1 // pred_check
      _
    $region19: #{tpu_custom_call.1} parent=1 // pred_check_branch
      %64 = sbr.rel (0) target = $region21
    $region20: #{tpu_custom_call.1} parent=1 // pred_region
      %s66 = ssub.s32 512, 512
      %67 = vsyncadd [#allocation10], %s66
      %s68 = sshll.u32 [#allocation9], 4
      %s69 = int_to_ptr.vmem [resolvable:$true] %s68
      %74 = dma.hbm_to_vmem [thread:$0]  %s4, 512, %s69, [#allocation10], 128, 128, 8
    $region21: #{tpu_custom_call.1} parent=1 // pred_fallthru
      _
    // Predicated region
    $region22: #{tpu_custom_call.1} parent=1 // pred_check
      _
    $region23: #{tpu_custom_call.1} parent=1 // pred_check_branch
      %76 = sbr.rel (0) target = $region25
    $region24: #{tpu_custom_call.1} parent=1 // pred_region
      %s78 = ssub.s32 512, 512
      %79 = vsyncadd [#allocation10], %s78
      %s80 = sshll.u32 [#allocation11], 4
      %s81 = int_to_ptr.vmem [resolvable:$true] %s80
      %86 = dma.hbm_to_vmem [thread:$0]  %s5, 512, %s81, [#allocation10], 128, 128, 8
    $region25: #{tpu_custom_call.1} parent=1 // pred_fallthru
      _
    // Predicated region
    $region26: #{tpu_custom_call.1} parent=1 // pred_check
      _
    $region27: #{tpu_custom_call.1} parent=1 // pred_check_branch
      %88 = sbr.rel (0) target = $region29
    $region28: #{tpu_custom_call.1} parent=1 // pred_region
      _
    $region29: #{tpu_custom_call.1} parent=1 // pred_fallthru
      _
    // Predicated region
    $region30: #{tpu_custom_call.1} parent=1 // pred_check
      _
    $region31: #{tpu_custom_call.1} parent=1 // pred_check_branch
      %90 = sbr.rel (0) target = $region33
    $region32: #{tpu_custom_call.1} parent=1 // pred_region
      %s92 = ssub.s32 512, 512
      %93 = vsyncadd [#allocation13], %s92
      %s94 = sshll.u32 [#allocation12], 4
      %s95 = int_to_ptr.vmem [resolvable:$true] %s94
      %100 = dma.hbm_to_vmem [thread:$0]  %s7, 512, %s95, [#allocation13], 128, 128, 8
    $region33: #{tpu_custom_call.1} parent=1 // pred_fallthru
      _
    // Predicated region
    $region34: #{tpu_custom_call.1} parent=1 // pred_check
      _
    $region35: #{tpu_custom_call.1} parent=1 // pred_check_branch
      %102 = sbr.rel (0) target = $region37
    $region36: #{tpu_custom_call.1} parent=1 // pred_region
      %s104 = ssub.s32 512, 512
      %105 = vsyncadd [#allocation13], %s104
      %s106 = sshll.u32 [#allocation14], 4
      %s107 = int_to_ptr.vmem [resolvable:$true] %s106
      %112 = dma.hbm_to_vmem [thread:$0]  %s8, 512, %s107, [#allocation13], 128, 128, 8
    $region37: #{tpu_custom_call.1} parent=1 // pred_fallthru
      _
    // Predicated region
    $region38: #{tpu_custom_call.1} parent=1 // pred_check
      _
    $region39: #{tpu_custom_call.1} parent=1 // pred_check_branch
      %114 = sbr.rel (0) target = $region41
    $region40: #{tpu_custom_call.1} parent=1 // pred_region
      _
    $region41: #{tpu_custom_call.1} parent=1 // pred_fallthru
      _
    // Predicated region
    $region42: #{tpu_custom_call.1} parent=1 // pred_check
      _
    $region43: #{tpu_custom_call.1} parent=1 // pred_check_branch
      %116 = sbr.rel (0) target = $region45
    $region44: #{tpu_custom_call.1} parent=1 // pred_region
      %s118 = ssub.s32 512, 512
      %119 = vsyncadd [#allocation16], %s118
      %s120 = sshll.u32 [#allocation15], 4
      %s121 = int_to_ptr.vmem [resolvable:$true] %s120
      %126 = dma.hbm_to_vmem [thread:$0]  %s10, 512, %s121, [#allocation16], 128, 128, 8
    $region45: #{tpu_custom_call.1} parent=1 // pred_fallthru
      _
    // Predicated region
    $region46: #{tpu_custom_call.1} parent=1 // pred_check
      _
    $region47: #{tpu_custom_call.1} parent=1 // pred_check_branch
      %128 = sbr.rel (0) target = $region49
    $region48: #{tpu_custom_call.1} parent=1 // pred_region
      %s130 = ssub.s32 512, 512
      %131 = vsyncadd [#allocation16], %s130
      %s132 = sshll.u32 [#allocation17], 4
      %s133 = int_to_ptr.vmem [resolvable:$true] %s132
      %138 = dma.hbm_to_vmem [thread:$0]  %s11, 512, %s133, [#allocation16], 128, 128, 8
    $region49: #{tpu_custom_call.1} parent=1 // pred_fallthru
      _
    // Predicated region
    $region50: #{tpu_custom_call.1} parent=1 // pred_check
      _
    $region51: #{tpu_custom_call.1} parent=1 // pred_check_branch
      %140 = sbr.rel (0) target = $region53
    $region52: #{tpu_custom_call.1} parent=1 // pred_region
      _
    $region53: #{tpu_custom_call.1} parent=1 // pred_fallthru
      _
    // Predicated region
    $region54: #{tpu_custom_call.1} parent=1 // pred_check
      _
    $region55: #{tpu_custom_call.1} parent=1 // pred_check_branch
      %142 = sbr.rel (0) target = $region57
    $region56: #{tpu_custom_call.1} parent=1 // pred_region
      %s144 = ssub.s32 512, 512
      %145 = vsyncadd [#allocation19], %s144
      %s146 = sshll.u32 [#allocation18], 4
      %s147 = int_to_ptr.vmem [resolvable:$true] %s146
      %152 = dma.hbm_to_vmem [thread:$0]  %s13, 512, %s147, [#allocation19], 128, 128, 8
    $region57: #{tpu_custom_call.1} parent=1 // pred_fallthru
      _
    // Predicated region
    $region58: #{tpu_custom_call.1} parent=1 // pred_check
      _
    $region59: #{tpu_custom_call.1} parent=1 // pred_check_branch
      %154 = sbr.rel (0) target = $region61
    $region60: #{tpu_custom_call.1} parent=1 // pred_region
      _
    $region61: #{tpu_custom_call.1} parent=1 // pred_fallthru
      _
    // Predicated region
    $region62: #{tpu_custom_call.1} parent=1 // pred_check
      _
    $region63: #{tpu_custom_call.1} parent=1 // pred_check_branch
      %156 = sbr.rel (0) target = $region65
    $region64: #{tpu_custom_call.1} parent=1 // pred_region
      %157 = dma.done [#allocation4], 1024
    $region65: #{tpu_custom_call.1} parent=1 // pred_fallthru
      _
    // Predicated region
    $region66: #{tpu_custom_call.1} parent=1 // pred_check
      _
    $region67: #{tpu_custom_call.1} parent=1 // pred_check_branch
      %159 = sbr.rel (0) target = $region69
    $region68: #{tpu_custom_call.1} parent=1 // pred_region
      %160 = dma.done [#allocation7], 128
    $region69: #{tpu_custom_call.1} parent=1 // pred_fallthru
      _
    // Predicated region
    $region70: #{tpu_custom_call.1} parent=1 // pred_check
      _
    $region71: #{tpu_custom_call.1} parent=1 // pred_check_branch
      %162 = sbr.rel (0) target = $region73
    $region72: #{tpu_custom_call.1} parent=1 // pred_region
      %163 = dma.done [#allocation7], 512
    $region73: #{tpu_custom_call.1} parent=1 // pred_fallthru
      _
    // Predicated region
    $region74: #{tpu_custom_call.1} parent=1 // pred_check
      _
    $region75: #{tpu_custom_call.1} parent=1 // pred_check_branch
      %165 = sbr.rel (0) target = $region77
    $region76: #{tpu_custom_call.1} parent=1 // pred_region
      %166 = dma.done [#allocation10], 512
    $region77: #{tpu_custom_call.1} parent=1 // pred_fallthru
      _
    // Predicated region
    $region78: #{tpu_custom_call.1} parent=1 // pred_check
      _
    $region79: #{tpu_custom_call.1} parent=1 // pred_check_branch
      %168 = sbr.rel (0) target = $region81
    $region80: #{tpu_custom_call.1} parent=1 // pred_region
      %169 = dma.done [#allocation10], 512
    $region81: #{tpu_custom_call.1} parent=1 // pred_fallthru
      _
    // Predicated region
    $region82: #{tpu_custom_call.1} parent=1 // pred_check
      _
    $region83: #{tpu_custom_call.1} parent=1 // pred_check_branch
      %171 = sbr.rel (0) target = $region85
    $region84: #{tpu_custom_call.1} parent=1 // pred_region
      %172 = dma.done [#allocation13], 512
    $region85: #{tpu_custom_call.1} parent=1 // pred_fallthru
      _
    // Predicated region
    $region86: #{tpu_custom_call.1} parent=1 // pred_check
      _
    $region87: #{tpu_custom_call.1} parent=1 // pred_check_branch
      %174 = sbr.rel (0) target = $region89
    $region88: #{tpu_custom_call.1} parent=1 // pred_region
      %175 = dma.done [#allocation13], 512
    $region89: #{tpu_custom_call.1} parent=1 // pred_fallthru
      _
    // Predicated region
    $region90: #{tpu_custom_call.1} parent=1 // pred_check
      _
    $region91: #{tpu_custom_call.1} parent=1 // pred_check_branch
      %177 = sbr.rel (0) target = $region93
    $region92: #{tpu_custom_call.1} parent=1 // pred_region
      %178 = dma.done [#allocation16], 512
    $region93: #{tpu_custom_call.1} parent=1 // pred_fallthru
      _
    // Predicated region
    $region94: #{tpu_custom_call.1} parent=1 // pred_check
      _
    $region95: #{tpu_custom_call.1} parent=1 // pred_check_branch
      %180 = sbr.rel (0) target = $region97
    $region96: #{tpu_custom_call.1} parent=1 // pred_region
      %181 = dma.done [#allocation16], 512
    $region97: #{tpu_custom_call.1} parent=1 // pred_fallthru
      _
    // Predicated region
    $region98: #{tpu_custom_call.1} parent=1 // pred_check
      _
    $region99: #{tpu_custom_call.1} parent=1 // pred_check_branch
      %183 = sbr.rel (0) target = $region101
    $region100: #{tpu_custom_call.1} parent=1 // pred_region
      %184 = dma.done [#allocation19], 512
    $region101: #{tpu_custom_call.1} parent=1 // pred_fallthru
      _
    %v185 = vld [vmem:[%s3] sm:$0x1]
    %v187 = vlaneseq
    %v188 = vshrl.u32 %v187, 7
    %v189 = vsub.s32 0, %v188
    %v190 = vrot.slane %v185, %v189
    %v192 = vld [vmem:[%s6] sm:$0x1]
    %v194 = vlaneseq
    %v195 = vshrl.u32 %v194, 7
    %v196 = vsub.s32 0, %v195
    %v197 = vrot.slane %v192, %v196
    %v199 = vld [vmem:[%s9] sm:$0x1]
    %v201 = vlaneseq
    %v202 = vshrl.u32 %v201, 7
    %v203 = vsub.s32 0, %v202
    %v204 = vrot.slane %v199, %v203
    %v206 = vld [vmem:[%s12] sm:$0x1]
    %v208 = vlaneseq
    %v209 = vshrl.u32 %v208, 7
    %v210 = vsub.s32 0, %v209
    %v211 = vrot.slane %v206, %v210
    %v213 = vld [vmem:[#allocation3] sm:$0xff]
    %v214 = vmax.f32 %v213, 0.0
    %v215 = vld [vmem:[#allocation6] sm:$0xff]
    %v216 = vld [vmem:[#allocation8] sm:$0xff]
    %v217 = vld [vmem:[#allocation8 + $0x8] sm:$0xff]
    %v218 = vld [vmem:[#allocation8 + $0x10] sm:$0xff]
    %v219 = vld [vmem:[#allocation8 + $0x18] sm:$0xff]
    %vm220 = vcmask 261120
    %v222 = vsel %vm220, 0.0, 0
    %224 = vmatprep.subr.mxu0 0.0
    %225 = vmatpush1.msra.mxu0 0.0
    %226 = vmatprep.subr.mxu0 0.0
    %227 = vmatpush1.msra.mxu0 0.0
    %228 = vmatprep.subr.mxu0 0.0
    %229 = vmatpush1.msra.mxu0 0.0
    %230 = vmatprep.subr.mxu0 0.0
    %231 = vmatpush1.msra.mxu0 0.0
    %232 = vmatprep.subr.mxu0 0.0
    %233 = vmatpush1.msra.mxu0 0.0
    %234 = vmatprep.subr.mxu0 0.0
    %235 = vmatpush1.msra.mxu0 0.0
    %236 = vmatprep.subr.mxu0 0.0
    %237 = vmatpush1.msra.mxu0 0.0
    %238 = vmatprep.subr.mxu0 0.0
    %239 = vmatpush1.msra.mxu0 0.0
    %240 = vmatprep.subr.mxu0 0.0
    %241 = vmatpush1.msra.mxu0 0.0
    %242 = vmatprep.subr.mxu0 0.0
    %243 = vmatpush1.msra.mxu0 0.0
    %244 = vmatprep.subr.mxu0 0.0
    %245 = vmatpush1.msra.mxu0 0.0
    %246 = vmatprep.subr.mxu0 0.0
    %247 = vmatpush1.msra.mxu0 0.0
    %248 = vmatprep.subr.mxu0 0.0
    %249 = vmatpush1.msra.mxu0 %v219
    %250 = vmatprep.subr.mxu0 0.0
    %251 = vmatpush1.msra.mxu0 %v218
    %252 = vmatprep.subr.mxu0 0.0
    %253 = vmatpush1.msra.mxu0 %v217
    %254 = vmatprep.subr.mxu0 0.0
    %255 = vmatpush1.msra.mxu0 %v216
    %256 = vmatprep.subr.mxu0 0.0
    %257 = vmatpush2.msra.mxu0 0.0
    %258 = vmatprep.subr.mxu0 0.0
    %259 = vmatpush2.msra.mxu0 0.0
    %260 = vmatprep.subr.mxu0 0.0
    %261 = vmatpush2.msra.mxu0 0.0
    %262 = vmatprep.subr.mxu0 0.0
    %263 = vmatpush2.msra.mxu0 0.0
    %264 = vmatprep.subr.mxu0 0.0
    %265 = vmatpush2.msra.mxu0 0.0
    %266 = vmatprep.subr.mxu0 0.0
    %267 = vmatpush2.msra.mxu0 0.0
    %268 = vmatprep.subr.mxu0 0.0
    %269 = vmatpush2.msra.mxu0 0.0
    %270 = vmatprep.subr.mxu0 0.0
    %271 = vmatpush2.msra.mxu0 0.0
    %272 = vmatprep.subr.mxu0 0.0
    %273 = vmatpush2.msra.mxu0 0.0
    %274 = vmatprep.subr.mxu0 0.0
    %275 = vmatpush2.msra.mxu0 0.0
    %276 = vmatprep.subr.mxu0 0.0
    %277 = vmatpush2.msra.mxu0 0.0
    %278 = vmatprep.subr.mxu0 0.0
    %279 = vmatpush2.msra.mxu0 0.0
    %280 = vmatprep.subr.mxu0 0.0
    %281 = vmatpush2.msra.mxu0 0.0
    %282 = vmatprep.subr.mxu0 0.0
    %283 = vmatpush2.msra.mxu0 0.0
    %284 = vmatprep.subr.mxu0 0.0
    %285 = vmatpush2.msra.mxu0 0.0
    %286 = vmatprep.subr.mxu0 0.0
    %287 = vmatpush2.msra.mxu0 0.0
    %288 = vmatprep.mubr.f32.mxu0 0.0
    %289 = vmatmul.mubr.f32.gmra.mxu0 %v222
    %v290 = vpop.f32.mrf.mxu0
    %v291 = vadd.f32 0.0, %v290
    %v292 = vpop.f32.mrf.mxu0
    %293 = vdwg.mxu0
    %vm294 = vcmask 64512
    %v296 = vsel %vm294, %v214, 0
    %298 = vmatprep.subr.mxu0 0.0
    %299 = vmatpush1.msra.mxu0 0.0
    %300 = vmatprep.subr.mxu0 0.0
    %301 = vmatpush1.msra.mxu0 0.0
    %302 = vmatprep.subr.mxu0 0.0
    %303 = vmatpush1.msra.mxu0 0.0
    %304 = vmatprep.subr.mxu0 0.0
    %305 = vmatpush1.msra.mxu0 0.0
    %306 = vmatprep.subr.mxu0 0.0
    %307 = vmatpush1.msra.mxu0 0.0
    %308 = vmatprep.subr.mxu0 0.0
    %309 = vmatpush1.msra.mxu0 0.0
    %310 = vmatprep.subr.mxu0 0.0
    %311 = vmatpush1.msra.mxu0 0.0
    %312 = vmatprep.subr.mxu0 0.0
    %313 = vmatpush1.msra.mxu0 0.0
    %314 = vmatprep.subr.mxu0 0.0
    %315 = vmatpush1.msra.mxu0 0.0
    %316 = vmatprep.subr.mxu0 0.0
    %317 = vmatpush1.msra.mxu0 0.0
    %318 = vmatprep.subr.mxu0 0.0
    %319 = vmatpush1.msra.mxu0 0.0
    %320 = vmatprep.subr.mxu0 0.0
    %321 = vmatpush1.msra.mxu0 0.0
    %322 = vmatprep.subr.mxu0 0.0
    %323 = vmatpush1.msra.mxu0 0.0
    %324 = vmatprep.subr.mxu0 0.0
    %325 = vmatpush1.msra.mxu0 0.0
    %326 = vmatprep.subr.mxu0 0.0
    %327 = vmatpush1.msra.mxu0 0.0
    %328 = vmatprep.subr.mxu0 0.0
    %329 = vmatpush1.msra.mxu0 %v215
    %330 = vmatprep.subr.mxu0 0.0
    %331 = vmatpush2.msra.mxu0 0.0
    %332 = vmatprep.subr.mxu0 0.0
    %333 = vmatpush2.msra.mxu0 0.0
    %334 = vmatprep.subr.mxu0 0.0
    %335 = vmatpush2.msra.mxu0 0.0
    %336 = vmatprep.subr.mxu0 0.0
    %337 = vmatpush2.msra.mxu0 0.0
    %338 = vmatprep.subr.mxu0 0.0
    %339 = vmatpush2.msra.mxu0 0.0
    %340 = vmatprep.subr.mxu0 0.0
    %341 = vmatpush2.msra.mxu0 0.0
    %342 = vmatprep.subr.mxu0 0.0
    %343 = vmatpush2.msra.mxu0 0.0
    %344 = vmatprep.subr.mxu0 0.0
    %345 = vmatpush2.msra.mxu0 0.0
    %346 = vmatprep.subr.mxu0 0.0
    %347 = vmatpush2.msra.mxu0 0.0
    %348 = vmatprep.subr.mxu0 0.0
    %349 = vmatpush2.msra.mxu0 0.0
    %350 = vmatprep.subr.mxu0 0.0
    %351 = vmatpush2.msra.mxu0 0.0
    %352 = vmatprep.subr.mxu0 0.0
    %353 = vmatpush2.msra.mxu0 0.0
    %354 = vmatprep.subr.mxu0 0.0
    %355 = vmatpush2.msra.mxu0 0.0
    %356 = vmatprep.subr.mxu0 0.0
    %357 = vmatpush2.msra.mxu0 0.0
    %358 = vmatprep.subr.mxu0 0.0
    %359 = vmatpush2.msra.mxu0 0.0
    %360 = vmatprep.subr.mxu0 0.0
    %361 = vmatpush2.msra.mxu0 0.0
    %362 = vmatprep.mubr.f32.mxu0 0.0
    %363 = vmatmul.mubr.f32.gmra.mxu0 %v296
    %v364 = vpop.f32.mrf.mxu0
    %v365 = vadd.f32 %v291, %v364
    %v366 = vpop.f32.mrf.mxu0
    %367 = vdwg.mxu0
    %v368 = vadd.f32 %v365, %v190
    %v369 = vxor.u32 %v368, 2147483648
    %v370 = vmul.f32 %v369, 1.442695
    %v371 = vpow.pop %v370
    %v372 = vadd.f32 %v371, 1.0
    %v373 = vrcp.pop %v372
    %v374 = vmul.f32 1.0, %v373
    %v375 = vtanh.pop %v368
    %v376 = vmul.f32 %v374, 0.0
    %378 = vrot.lane.b32.xlu0 %v375, 32
    %v379 = vpop.permute.xlu0 %378
    %v381 = vmul.f32 %v374, %v379
    %383 = vrot.lane.b32.xlu0 %v381, 32
    %v384 = vpop.permute.xlu0 %383
    %v386 = vadd.f32 %v376, %v384
    %v387 = vtanh.pop %v386
    %389 = vrot.lane.b32.xlu0 %v387, 32
    %v390 = vpop.permute.xlu0 %389
    %v392 = vmul.f32 %v374, %v390
    %v393 = vld [vmem:[#allocation9] sm:$0xff]
    %v394 = vld [vmem:[#allocation9 + $0x8] sm:$0xff]
    %v395 = vld [vmem:[#allocation9 + $0x10] sm:$0xff]
    %v396 = vld [vmem:[#allocation9 + $0x18] sm:$0xff]
    %v397 = vld [vmem:[#allocation11] sm:$0xff]
    %v398 = vld [vmem:[#allocation11 + $0x8] sm:$0xff]
    %v399 = vld [vmem:[#allocation11 + $0x10] sm:$0xff]
    %v400 = vld [vmem:[#allocation11 + $0x18] sm:$0xff]
    %401 = vmatprep.subr.mxu0 0.0
    %402 = vmatpush1.msra.mxu0 0.0
    %403 = vmatprep.subr.mxu0 0.0
    %404 = vmatpush1.msra.mxu0 0.0
    %405 = vmatprep.subr.mxu0 0.0
    %406 = vmatpush1.msra.mxu0 0.0
    %407 = vmatprep.subr.mxu0 0.0
    %408 = vmatpush1.msra.mxu0 0.0
    %409 = vmatprep.subr.mxu0 0.0
    %410 = vmatpush1.msra.mxu0 0.0
    %411 = vmatprep.subr.mxu0 0.0
    %412 = vmatpush1.msra.mxu0 0.0
    %413 = vmatprep.subr.mxu0 0.0
    %414 = vmatpush1.msra.mxu0 0.0
    %415 = vmatprep.subr.mxu0 0.0
    %416 = vmatpush1.msra.mxu0 0.0
    %417 = vmatprep.subr.mxu0 0.0
    %418 = vmatpush1.msra.mxu0 0.0
    %419 = vmatprep.subr.mxu0 0.0
    %420 = vmatpush1.msra.mxu0 0.0
    %421 = vmatprep.subr.mxu0 0.0
    %422 = vmatpush1.msra.mxu0 0.0
    %423 = vmatprep.subr.mxu0 0.0
    %424 = vmatpush1.msra.mxu0 0.0
    %425 = vmatprep.subr.mxu0 0.0
    %426 = vmatpush1.msra.mxu0 %v400
    %427 = vmatprep.subr.mxu0 0.0
    %428 = vmatpush1.msra.mxu0 %v399
    %429 = vmatprep.subr.mxu0 0.0
    %430 = vmatpush1.msra.mxu0 %v398
    %431 = vmatprep.subr.mxu0 0.0
    %432 = vmatpush1.msra.mxu0 %v397
    %433 = vmatprep.subr.mxu0 0.0
    %434 = vmatpush2.msra.mxu0 0.0
    %435 = vmatprep.subr.mxu0 0.0
    %436 = vmatpush2.msra.mxu0 0.0
    %437 = vmatprep.subr.mxu0 0.0
    %438 = vmatpush2.msra.mxu0 0.0
    %439 = vmatprep.subr.mxu0 0.0
    %440 = vmatpush2.msra.mxu0 0.0
    %441 = vmatprep.subr.mxu0 0.0
    %442 = vmatpush2.msra.mxu0 0.0
    %443 = vmatprep.subr.mxu0 0.0
    %444 = vmatpush2.msra.mxu0 0.0
    %445 = vmatprep.subr.mxu0 0.0
    %446 = vmatpush2.msra.mxu0 0.0
    %447 = vmatprep.subr.mxu0 0.0
    %448 = vmatpush2.msra.mxu0 0.0
    %449 = vmatprep.subr.mxu0 0.0
    %450 = vmatpush2.msra.mxu0 0.0
    %451 = vmatprep.subr.mxu0 0.0
    %452 = vmatpush2.msra.mxu0 0.0
    %453 = vmatprep.subr.mxu0 0.0
    %454 = vmatpush2.msra.mxu0 0.0
    %455 = vmatprep.subr.mxu0 0.0
    %456 = vmatpush2.msra.mxu0 0.0
    %457 = vmatprep.subr.mxu0 0.0
    %458 = vmatpush2.msra.mxu0 0.0
    %459 = vmatprep.subr.mxu0 0.0
    %460 = vmatpush2.msra.mxu0 0.0
    %461 = vmatprep.subr.mxu0 0.0
    %462 = vmatpush2.msra.mxu0 0.0
    %463 = vmatprep.subr.mxu0 0.0
    %464 = vmatpush2.msra.mxu0 0.0
    %465 = vmatprep.mubr.f32.mxu0 0.0
    %466 = vmatmul.mubr.f32.gmra.mxu0 %v222
    %v467 = vpop.f32.mrf.mxu0
    %v468 = vadd.f32 0.0, %v467
    %v469 = vpop.f32.mrf.mxu0
    %470 = vdwg.mxu0
    %472 = vrot.lane.b32.xlu0 %v392, 64
    %v473 = vpop.permute.xlu0 %472
    %v474 = vsel %vm220, %v473, 0
    %476 = vmatprep.subr.mxu0 0.0
    %477 = vmatpush1.msra.mxu0 0.0
    %478 = vmatprep.subr.mxu0 0.0
    %479 = vmatpush1.msra.mxu0 0.0
    %480 = vmatprep.subr.mxu0 0.0
    %481 = vmatpush1.msra.mxu0 0.0
    %482 = vmatprep.subr.mxu0 0.0
    %483 = vmatpush1.msra.mxu0 0.0
    %484 = vmatprep.subr.mxu0 0.0
    %485 = vmatpush1.msra.mxu0 0.0
    %486 = vmatprep.subr.mxu0 0.0
    %487 = vmatpush1.msra.mxu0 0.0
    %488 = vmatprep.subr.mxu0 0.0
    %489 = vmatpush1.msra.mxu0 0.0
    %490 = vmatprep.subr.mxu0 0.0
    %491 = vmatpush1.msra.mxu0 0.0
    %492 = vmatprep.subr.mxu0 0.0
    %493 = vmatpush1.msra.mxu0 0.0
    %494 = vmatprep.subr.mxu0 0.0
    %495 = vmatpush1.msra.mxu0 0.0
    %496 = vmatprep.subr.mxu0 0.0
    %497 = vmatpush1.msra.mxu0 0.0
    %498 = vmatprep.subr.mxu0 0.0
    %499 = vmatpush1.msra.mxu0 0.0
    %500 = vmatprep.subr.mxu0 0.0
    %501 = vmatpush1.msra.mxu0 %v396
    %502 = vmatprep.subr.mxu0 0.0
    %503 = vmatpush1.msra.mxu0 %v395
    %504 = vmatprep.subr.mxu0 0.0
    %505 = vmatpush1.msra.mxu0 %v394
    %506 = vmatprep.subr.mxu0 0.0
    %507 = vmatpush1.msra.mxu0 %v393
    %508 = vmatprep.subr.mxu0 0.0
    %509 = vmatpush2.msra.mxu0 0.0
    %510 = vmatprep.subr.mxu0 0.0
    %511 = vmatpush2.msra.mxu0 0.0
    %512 = vmatprep.subr.mxu0 0.0
    %513 = vmatpush2.msra.mxu0 0.0
    %514 = vmatprep.subr.mxu0 0.0
    %515 = vmatpush2.msra.mxu0 0.0
    %516 = vmatprep.subr.mxu0 0.0
    %517 = vmatpush2.msra.mxu0 0.0
    %518 = vmatprep.subr.mxu0 0.0
    %519 = vmatpush2.msra.mxu0 0.0
    %520 = vmatprep.subr.mxu0 0.0
    %521 = vmatpush2.msra.mxu0 0.0
    %522 = vmatprep.subr.mxu0 0.0
    %523 = vmatpush2.msra.mxu0 0.0
    %524 = vmatprep.subr.mxu0 0.0
    %525 = vmatpush2.msra.mxu0 0.0
    %526 = vmatprep.subr.mxu0 0.0
    %527 = vmatpush2.msra.mxu0 0.0
    %528 = vmatprep.subr.mxu0 0.0
    %529 = vmatpush2.msra.mxu0 0.0
    %530 = vmatprep.subr.mxu0 0.0
    %531 = vmatpush2.msra.mxu0 0.0
    %532 = vmatprep.subr.mxu0 0.0
    %533 = vmatpush2.msra.mxu0 0.0
    %534 = vmatprep.subr.mxu0 0.0
    %535 = vmatpush2.msra.mxu0 0.0
    %536 = vmatprep.subr.mxu0 0.0
    %537 = vmatpush2.msra.mxu0 0.0
    %538 = vmatprep.subr.mxu0 0.0
    %539 = vmatpush2.msra.mxu0 0.0
    %540 = vmatprep.mubr.f32.mxu0 0.0
    %541 = vmatmul.mubr.f32.gmra.mxu0 %v474
    %v542 = vpop.f32.mrf.mxu0
    %v543 = vadd.f32 %v468, %v542
    %v544 = vpop.f32.mrf.mxu0
    %545 = vdwg.mxu0
    %v546 = vadd.f32 %v543, %v197
    %v547 = vxor.u32 %v546, 2147483648
    %v548 = vmul.f32 %v547, 1.442695
    %v549 = vpow.pop %v548
    %v550 = vadd.f32 %v549, 1.0
    %v551 = vrcp.pop %v550
    %v552 = vmul.f32 1.0, %v551
    %v553 = vtanh.pop %v546
    %v554 = vmul.f32 %v552, 0.0
    %556 = vrot.lane.b32.xlu0 %v553, 32
    %v557 = vpop.permute.xlu0 %556
    %v559 = vmul.f32 %v552, %v557
    %561 = vrot.lane.b32.xlu0 %v559, 32
    %v562 = vpop.permute.xlu0 %561
    %v564 = vadd.f32 %v554, %v562
    %v565 = vtanh.pop %v564
    %567 = vrot.lane.b32.xlu0 %v565, 32
    %v568 = vpop.permute.xlu0 %567
    %v570 = vmul.f32 %v552, %v568
    %572 = vrot.lane.b32.xlu0 %v570, 64
    %v573 = vpop.permute.xlu0 %572
    %575 = vst.msk [vmem:[#allocation2] sm:$0xff] %vm220, %v573
    %s576 = scalar_lea.vmem [#allocation3], 8
    %v577 = vld [vmem:[%s576] sm:$0xff]
    %v578 = vmax.f32 %v577, 0.0
    %v579 = vld [vmem:[#allocation6] sm:$0xff]
    %v580 = vld [vmem:[#allocation8] sm:$0xff]
    %v581 = vld [vmem:[#allocation8 + $0x8] sm:$0xff]
    %v582 = vld [vmem:[#allocation8 + $0x10] sm:$0xff]
    %v583 = vld [vmem:[#allocation8 + $0x18] sm:$0xff]
    %584 = vmatprep.subr.mxu0 0.0
    %585 = vmatpush1.msra.mxu0 0.0
    %586 = vmatprep.subr.mxu0 0.0
    %587 = vmatpush1.msra.mxu0 0.0
    %588 = vmatprep.subr.mxu0 0.0
    %589 = vmatpush1.msra.mxu0 0.0
    %590 = vmatprep.subr.mxu0 0.0
    %591 = vmatpush1.msra.mxu0 0.0
    %592 = vmatprep.subr.mxu0 0.0
    %593 = vmatpush1.msra.mxu0 0.0
    %594 = vmatprep.subr.mxu0 0.0
    %595 = vmatpush1.msra.mxu0 0.0
    %596 = vmatprep.subr.mxu0 0.0
    %597 = vmatpush1.msra.mxu0 0.0
    %598 = vmatprep.subr.mxu0 0.0
    %599 = vmatpush1.msra.mxu0 0.0
    %600 = vmatprep.subr.mxu0 0.0
    %601 = vmatpush1.msra.mxu0 0.0
    %602 = vmatprep.subr.mxu0 0.0
    %603 = vmatpush1.msra.mxu0 0.0
    %604 = vmatprep.subr.mxu0 0.0
    %605 = vmatpush1.msra.mxu0 0.0
    %606 = vmatprep.subr.mxu0 0.0
    %607 = vmatpush1.msra.mxu0 0.0
    %608 = vmatprep.subr.mxu0 0.0
    %609 = vmatpush1.msra.mxu0 %v583
    %610 = vmatprep.subr.mxu0 0.0
    %611 = vmatpush1.msra.mxu0 %v582
    %612 = vmatprep.subr.mxu0 0.0
    %613 = vmatpush1.msra.mxu0 %v581
    %614 = vmatprep.subr.mxu0 0.0
    %615 = vmatpush1.msra.mxu0 %v580
    %616 = vmatprep.subr.mxu0 0.0
    %617 = vmatpush2.msra.mxu0 0.0
    %618 = vmatprep.subr.mxu0 0.0
    %619 = vmatpush2.msra.mxu0 0.0
    %620 = vmatprep.subr.mxu0 0.0
    %621 = vmatpush2.msra.mxu0 0.0
    %622 = vmatprep.subr.mxu0 0.0
    %623 = vmatpush2.msra.mxu0 0.0
    %624 = vmatprep.subr.mxu0 0.0
    %625 = vmatpush2.msra.mxu0 0.0
    %626 = vmatprep.subr.mxu0 0.0
    %627 = vmatpush2.msra.mxu0 0.0
    %628 = vmatprep.subr.mxu0 0.0
    %629 = vmatpush2.msra.mxu0 0.0
    %630 = vmatprep.subr.mxu0 0.0
    %631 = vmatpush2.msra.mxu0 0.0
    %632 = vmatprep.subr.mxu0 0.0
    %633 = vmatpush2.msra.mxu0 0.0
    %634 = vmatprep.subr.mxu0 0.0
    %635 = vmatpush2.msra.mxu0 0.0
    %636 = vmatprep.subr.mxu0 0.0
    %637 = vmatpush2.msra.mxu0 0.0
    %638 = vmatprep.subr.mxu0 0.0
    %639 = vmatpush2.msra.mxu0 0.0
    %640 = vmatprep.subr.mxu0 0.0
    %641 = vmatpush2.msra.mxu0 0.0
    %642 = vmatprep.subr.mxu0 0.0
    %643 = vmatpush2.msra.mxu0 0.0
    %644 = vmatprep.subr.mxu0 0.0
    %645 = vmatpush2.msra.mxu0 0.0
    %646 = vmatprep.subr.mxu0 0.0
    %647 = vmatpush2.msra.mxu0 0.0
    %648 = vmatprep.mubr.f32.mxu0 0.0
    %649 = vmatmul.mubr.f32.gmra.mxu0 %v474
    %v650 = vpop.f32.mrf.mxu0
    %v651 = vadd.f32 0.0, %v650
    %v652 = vpop.f32.mrf.mxu0
    %653 = vdwg.mxu0
    %v655 = vsel %vm294, %v578, 0
    %657 = vmatprep.subr.mxu0 0.0
    %658 = vmatpush1.msra.mxu0 0.0
    %659 = vmatprep.subr.mxu0 0.0
    %660 = vmatpush1.msra.mxu0 0.0
    %661 = vmatprep.subr.mxu0 0.0
    %662 = vmatpush1.msra.mxu0 0.0
    %663 = vmatprep.subr.mxu0 0.0
    %664 = vmatpush1.msra.mxu0 0.0
    %665 = vmatprep.subr.mxu0 0.0
    %666 = vmatpush1.msra.mxu0 0.0
    %667 = vmatprep.subr.mxu0 0.0
    %668 = vmatpush1.msra.mxu0 0.0
    %669 = vmatprep.subr.mxu0 0.0
    %670 = vmatpush1.msra.mxu0 0.0
    %671 = vmatprep.subr.mxu0 0.0
    %672 = vmatpush1.msra.mxu0 0.0
    %673 = vmatprep.subr.mxu0 0.0
    %674 = vmatpush1.msra.mxu0 0.0
    %675 = vmatprep.subr.mxu0 0.0
    %676 = vmatpush1.msra.mxu0 0.0
    %677 = vmatprep.subr.mxu0 0.0
    %678 = vmatpush1.msra.mxu0 0.0
    %679 = vmatprep.subr.mxu0 0.0
    %680 = vmatpush1.msra.mxu0 0.0
    %681 = vmatprep.subr.mxu0 0.0
    %682 = vmatpush1.msra.mxu0 0.0
    %683 = vmatprep.subr.mxu0 0.0
    %684 = vmatpush1.msra.mxu0 0.0
    %685 = vmatprep.subr.mxu0 0.0
    %686 = vmatpush1.msra.mxu0 0.0
    %687 = vmatprep.subr.mxu0 0.0
    %688 = vmatpush1.msra.mxu0 %v579
    %689 = vmatprep.subr.mxu0 0.0
    %690 = vmatpush2.msra.mxu0 0.0
    %691 = vmatprep.subr.mxu0 0.0
    %692 = vmatpush2.msra.mxu0 0.0
    %693 = vmatprep.subr.mxu0 0.0
    %694 = vmatpush2.msra.mxu0 0.0
    %695 = vmatprep.subr.mxu0 0.0
    %696 = vmatpush2.msra.mxu0 0.0
    %697 = vmatprep.subr.mxu0 0.0
    %698 = vmatpush2.msra.mxu0 0.0
    %699 = vmatprep.subr.mxu0 0.0
    %700 = vmatpush2.msra.mxu0 0.0
    %701 = vmatprep.subr.mxu0 0.0
    %702 = vmatpush2.msra.mxu0 0.0
    %703 = vmatprep.subr.mxu0 0.0
    %704 = vmatpush2.msra.mxu0 0.0
    %705 = vmatprep.subr.mxu0 0.0
    %706 = vmatpush2.msra.mxu0 0.0
    %707 = vmatprep.subr.mxu0 0.0
    %708 = vmatpush2.msra.mxu0 0.0
    %709 = vmatprep.subr.mxu0 0.0
    %710 = vmatpush2.msra.mxu0 0.0
    %711 = vmatprep.subr.mxu0 0.0
    %712 = vmatpush2.msra.mxu0 0.0
    %713 = vmatprep.subr.mxu0 0.0
    %714 = vmatpush2.msra.mxu0 0.0
    %715 = vmatprep.subr.mxu0 0.0
    %716 = vmatpush2.msra.mxu0 0.0
    %717 = vmatprep.subr.mxu0 0.0
    %718 = vmatpush2.msra.mxu0 0.0
    %719 = vmatprep.subr.mxu0 0.0
    %720 = vmatpush2.msra.mxu0 0.0
    %721 = vmatprep.mubr.f32.mxu0 0.0
    %722 = vmatmul.mubr.f32.gmra.mxu0 %v655
    %v723 = vpop.f32.mrf.mxu0
    %v724 = vadd.f32 %v651, %v723
    %v725 = vpop.f32.mrf.mxu0
    %726 = vdwg.mxu0
    %v727 = vadd.f32 %v724, %v190
    %v728 = vxor.u32 %v727, 2147483648
    %v729 = vmul.f32 %v728, 1.442695
    %v730 = vpow.pop %v729
    %v731 = vadd.f32 %v730, 1.0
    %v732 = vrcp.pop %v731
    %v733 = vmul.f32 1.0, %v732
    %v734 = vtanh.pop %v727
    %v735 = vmul.f32 %v733, %v386
    %737 = vrot.lane.b32.xlu0 %v734, 32
    %v738 = vpop.permute.xlu0 %737
    %v740 = vmul.f32 %v733, %v738
    %742 = vrot.lane.b32.xlu0 %v740, 32
    %v743 = vpop.permute.xlu0 %742
    %v745 = vadd.f32 %v735, %v743
    %v746 = vtanh.pop %v745
    %748 = vrot.lane.b32.xlu0 %v746, 32
    %v749 = vpop.permute.xlu0 %748
    %v751 = vmul.f32 %v733, %v749
    %v752 = vld [vmem:[#allocation9] sm:$0xff]
    %v753 = vld [vmem:[#allocation9 + $0x8] sm:$0xff]
    %v754 = vld [vmem:[#allocation9 + $0x10] sm:$0xff]
    %v755 = vld [vmem:[#allocation9 + $0x18] sm:$0xff]
    %v756 = vld [vmem:[#allocation11] sm:$0xff]
    %v757 = vld [vmem:[#allocation11 + $0x8] sm:$0xff]
    %v758 = vld [vmem:[#allocation11 + $0x10] sm:$0xff]
    %v759 = vld [vmem:[#allocation11 + $0x18] sm:$0xff]
    %v760 = vsel %vm220, %v573, 0
    %762 = vmatprep.subr.mxu0 0.0
    %763 = vmatpush1.msra.mxu0 0.0
    %764 = vmatprep.subr.mxu0 0.0
    %765 = vmatpush1.msra.mxu0 0.0
    %766 = vmatprep.subr.mxu0 0.0
    %767 = vmatpush1.msra.mxu0 0.0
    %768 = vmatprep.subr.mxu0 0.0
    %769 = vmatpush1.msra.mxu0 0.0
    %770 = vmatprep.subr.mxu0 0.0
    %771 = vmatpush1.msra.mxu0 0.0
    %772 = vmatprep.subr.mxu0 0.0
    %773 = vmatpush1.msra.mxu0 0.0
    %774 = vmatprep.subr.mxu0 0.0
    %775 = vmatpush1.msra.mxu0 0.0
    %776 = vmatprep.subr.mxu0 0.0
    %777 = vmatpush1.msra.mxu0 0.0
    %778 = vmatprep.subr.mxu0 0.0
    %779 = vmatpush1.msra.mxu0 0.0
    %780 = vmatprep.subr.mxu0 0.0
    %781 = vmatpush1.msra.mxu0 0.0
    %782 = vmatprep.subr.mxu0 0.0
    %783 = vmatpush1.msra.mxu0 0.0
    %784 = vmatprep.subr.mxu0 0.0
    %785 = vmatpush1.msra.mxu0 0.0
    %786 = vmatprep.subr.mxu0 0.0
    %787 = vmatpush1.msra.mxu0 %v759
    %788 = vmatprep.subr.mxu0 0.0
    %789 = vmatpush1.msra.mxu0 %v758
    %790 = vmatprep.subr.mxu0 0.0
    %791 = vmatpush1.msra.mxu0 %v757
    %792 = vmatprep.subr.mxu0 0.0
    %793 = vmatpush1.msra.mxu0 %v756
    %794 = vmatprep.subr.mxu0 0.0
    %795 = vmatpush2.msra.mxu0 0.0
    %796 = vmatprep.subr.mxu0 0.0
    %797 = vmatpush2.msra.mxu0 0.0
    %798 = vmatprep.subr.mxu0 0.0
    %799 = vmatpush2.msra.mxu0 0.0
    %800 = vmatprep.subr.mxu0 0.0
    %801 = vmatpush2.msra.mxu0 0.0
    %802 = vmatprep.subr.mxu0 0.0
    %803 = vmatpush2.msra.mxu0 0.0
    %804 = vmatprep.subr.mxu0 0.0
    %805 = vmatpush2.msra.mxu0 0.0
    %806 = vmatprep.subr.mxu0 0.0
    %807 = vmatpush2.msra.mxu0 0.0
    %808 = vmatprep.subr.mxu0 0.0
    %809 = vmatpush2.msra.mxu0 0.0
    %810 = vmatprep.subr.mxu0 0.0
    %811 = vmatpush2.msra.mxu0 0.0
    %812 = vmatprep.subr.mxu0 0.0
    %813 = vmatpush2.msra.mxu0 0.0
    %814 = vmatprep.subr.mxu0 0.0
    %815 = vmatpush2.msra.mxu0 0.0
    %816 = vmatprep.subr.mxu0 0.0
    %817 = vmatpush2.msra.mxu0 0.0
    %818 = vmatprep.subr.mxu0 0.0
    %819 = vmatpush2.msra.mxu0 0.0
    %820 = vmatprep.subr.mxu0 0.0
    %821 = vmatpush2.msra.mxu0 0.0
    %822 = vmatprep.subr.mxu0 0.0
    %823 = vmatpush2.msra.mxu0 0.0
    %824 = vmatprep.subr.mxu0 0.0
    %825 = vmatpush2.msra.mxu0 0.0
    %826 = vmatprep.mubr.f32.mxu0 0.0
    %827 = vmatmul.mubr.f32.gmra.mxu0 %v760
    %v828 = vpop.f32.mrf.mxu0
    %v829 = vadd.f32 0.0, %v828
    %v830 = vpop.f32.mrf.mxu0
    %831 = vdwg.mxu0
    %833 = vrot.lane.b32.xlu0 %v751, 64
    %v834 = vpop.permute.xlu0 %833
    %v835 = vsel %vm220, %v834, 0
    %837 = vmatprep.subr.mxu0 0.0
    %838 = vmatpush1.msra.mxu0 0.0
    %839 = vmatprep.subr.mxu0 0.0
    %840 = vmatpush1.msra.mxu0 0.0
    %841 = vmatprep.subr.mxu0 0.0
    %842 = vmatpush1.msra.mxu0 0.0
    %843 = vmatprep.subr.mxu0 0.0
    %844 = vmatpush1.msra.mxu0 0.0
    %845 = vmatprep.subr.mxu0 0.0
    %846 = vmatpush1.msra.mxu0 0.0
    %847 = vmatprep.subr.mxu0 0.0
    %848 = vmatpush1.msra.mxu0 0.0
    %849 = vmatprep.subr.mxu0 0.0
    %850 = vmatpush1.msra.mxu0 0.0
    %851 = vmatprep.subr.mxu0 0.0
    %852 = vmatpush1.msra.mxu0 0.0
    %853 = vmatprep.subr.mxu0 0.0
    %854 = vmatpush1.msra.mxu0 0.0
    %855 = vmatprep.subr.mxu0 0.0
    %856 = vmatpush1.msra.mxu0 0.0
    %857 = vmatprep.subr.mxu0 0.0
    %858 = vmatpush1.msra.mxu0 0.0
    %859 = vmatprep.subr.mxu0 0.0
    %860 = vmatpush1.msra.mxu0 0.0
    %861 = vmatprep.subr.mxu0 0.0
    %862 = vmatpush1.msra.mxu0 %v755
    %863 = vmatprep.subr.mxu0 0.0
    %864 = vmatpush1.msra.mxu0 %v754
    %865 = vmatprep.subr.mxu0 0.0
    %866 = vmatpush1.msra.mxu0 %v753
    %867 = vmatprep.subr.mxu0 0.0
    %868 = vmatpush1.msra.mxu0 %v752
    %869 = vmatprep.subr.mxu0 0.0
    %870 = vmatpush2.msra.mxu0 0.0
    %871 = vmatprep.subr.mxu0 0.0
    %872 = vmatpush2.msra.mxu0 0.0
    %873 = vmatprep.subr.mxu0 0.0
    %874 = vmatpush2.msra.mxu0 0.0
    %875 = vmatprep.subr.mxu0 0.0
    %876 = vmatpush2.msra.mxu0 0.0
    %877 = vmatprep.subr.mxu0 0.0
    %878 = vmatpush2.msra.mxu0 0.0
    %879 = vmatprep.subr.mxu0 0.0
    %880 = vmatpush2.msra.mxu0 0.0
    %881 = vmatprep.subr.mxu0 0.0
    %882 = vmatpush2.msra.mxu0 0.0
    %883 = vmatprep.subr.mxu0 0.0
    %884 = vmatpush2.msra.mxu0 0.0
    %885 = vmatprep.subr.mxu0 0.0
    %886 = vmatpush2.msra.mxu0 0.0
    %887 = vmatprep.subr.mxu0 0.0
    %888 = vmatpush2.msra.mxu0 0.0
    %889 = vmatprep.subr.mxu0 0.0
    %890 = vmatpush2.msra.mxu0 0.0
    %891 = vmatprep.subr.mxu0 0.0
    %892 = vmatpush2.msra.mxu0 0.0
    %893 = vmatprep.subr.mxu0 0.0
    %894 = vmatpush2.msra.mxu0 0.0
    %895 = vmatprep.subr.mxu0 0.0
    %896 = vmatpush2.msra.mxu0 0.0
    %897 = vmatprep.subr.mxu0 0.0
    %898 = vmatpush2.msra.mxu0 0.0
    %899 = vmatprep.subr.mxu0 0.0
    %900 = vmatpush2.msra.mxu0 0.0
    %901 = vmatprep.mubr.f32.mxu0 0.0
    %902 = vmatmul.mubr.f32.gmra.mxu0 %v835
    %v903 = vpop.f32.mrf.mxu0
    %v904 = vadd.f32 %v829, %v903
    %v905 = vpop.f32.mrf.mxu0
    %906 = vdwg.mxu0
    %v907 = vadd.f32 %v904, %v197
    %v908 = vxor.u32 %v907, 2147483648
    %v909 = vmul.f32 %v908, 1.442695
    %v910 = vpow.pop %v909
    %v911 = vadd.f32 %v910, 1.0
    %v912 = vrcp.pop %v911
    %v913 = vmul.f32 1.0, %v912
    %v914 = vtanh.pop %v907
    %v915 = vmul.f32 %v913, %v564
    %917 = vrot.lane.b32.xlu0 %v914, 32
    %v918 = vpop.permute.xlu0 %917
    %v920 = vmul.f32 %v913, %v918
    %922 = vrot.lane.b32.xlu0 %v920, 32
    %v923 = vpop.permute.xlu0 %922
    %v925 = vadd.f32 %v915, %v923
    %v926 = vtanh.pop %v925
    %928 = vrot.lane.b32.xlu0 %v926, 32
    %v929 = vpop.permute.xlu0 %928
    %v931 = vmul.f32 %v913, %v929
    %933 = vrot.lane.b32.xlu0 %v931, 64
    %v934 = vpop.permute.xlu0 %933
    %s936 = scalar_lea.vmem [#allocation2], 8
    %937 = vst.msk [vmem:[%s936] sm:$0xff] %vm220, %v934
    %s938 = scalar_lea.vmem [#allocation3], 16
    %v939 = vld [vmem:[%s938] sm:$0xff]
    %v940 = vmax.f32 %v939, 0.0
    %v941 = vld [vmem:[#allocation6] sm:$0xff]
    %v942 = vld [vmem:[#allocation8] sm:$0xff]
    %v943 = vld [vmem:[#allocation8 + $0x8] sm:$0xff]
    %v944 = vld [vmem:[#allocation8 + $0x10] sm:$0xff]
    %v945 = vld [vmem:[#allocation8 + $0x18] sm:$0xff]
    %946 = vmatprep.subr.mxu0 0.0
    %947 = vmatpush1.msra.mxu0 0.0
    %948 = vmatprep.subr.mxu0 0.0
    %949 = vmatpush1.msra.mxu0 0.0
    %950 = vmatprep.subr.mxu0 0.0
    %951 = vmatpush1.msra.mxu0 0.0
    %952 = vmatprep.subr.mxu0 0.0
    %953 = vmatpush1.msra.mxu0 0.0
    %954 = vmatprep.subr.mxu0 0.0
    %955 = vmatpush1.msra.mxu0 0.0
    %956 = vmatprep.subr.mxu0 0.0
    %957 = vmatpush1.msra.mxu0 0.0
    %958 = vmatprep.subr.mxu0 0.0
    %959 = vmatpush1.msra.mxu0 0.0
    %960 = vmatprep.subr.mxu0 0.0
    %961 = vmatpush1.msra.mxu0 0.0
    %962 = vmatprep.subr.mxu0 0.0
    %963 = vmatpush1.msra.mxu0 0.0
    %964 = vmatprep.subr.mxu0 0.0
    %965 = vmatpush1.msra.mxu0 0.0
    %966 = vmatprep.subr.mxu0 0.0
    %967 = vmatpush1.msra.mxu0 0.0
    %968 = vmatprep.subr.mxu0 0.0
    %969 = vmatpush1.msra.mxu0 0.0
    %970 = vmatprep.subr.mxu0 0.0
    %971 = vmatpush1.msra.mxu0 %v945
    %972 = vmatprep.subr.mxu0 0.0
    %973 = vmatpush1.msra.mxu0 %v944
    %974 = vmatprep.subr.mxu0 0.0
    %975 = vmatpush1.msra.mxu0 %v943
    %976 = vmatprep.subr.mxu0 0.0
    %977 = vmatpush1.msra.mxu0 %v942
    %978 = vmatprep.subr.mxu0 0.0
    %979 = vmatpush2.msra.mxu0 0.0
    %980 = vmatprep.subr.mxu0 0.0
    %981 = vmatpush2.msra.mxu0 0.0
    %982 = vmatprep.subr.mxu0 0.0
    %983 = vmatpush2.msra.mxu0 0.0
    %984 = vmatprep.subr.mxu0 0.0
    %985 = vmatpush2.msra.mxu0 0.0
    %986 = vmatprep.subr.mxu0 0.0
    %987 = vmatpush2.msra.mxu0 0.0
    %988 = vmatprep.subr.mxu0 0.0
    %989 = vmatpush2.msra.mxu0 0.0
    %990 = vmatprep.subr.mxu0 0.0
    %991 = vmatpush2.msra.mxu0 0.0
    %992 = vmatprep.subr.mxu0 0.0
    %993 = vmatpush2.msra.mxu0 0.0
    %994 = vmatprep.subr.mxu0 0.0
    %995 = vmatpush2.msra.mxu0 0.0
    %996 = vmatprep.subr.mxu0 0.0
    %997 = vmatpush2.msra.mxu0 0.0
    %998 = vmatprep.subr.mxu0 0.0
    %999 = vmatpush2.msra.mxu0 0.0
    %1000 = vmatprep.subr.mxu0 0.0
    %1001 = vmatpush2.msra.mxu0 0.0
    %1002 = vmatprep.subr.mxu0 0.0
    %1003 = vmatpush2.msra.mxu0 0.0
    %1004 = vmatprep.subr.mxu0 0.0
    %1005 = vmatpush2.msra.mxu0 0.0
    %1006 = vmatprep.subr.mxu0 0.0
    %1007 = vmatpush2.msra.mxu0 0.0
    %1008 = vmatprep.subr.mxu0 0.0
    %1009 = vmatpush2.msra.mxu0 0.0
    %1010 = vmatprep.mubr.f32.mxu0 0.0
    %1011 = vmatmul.mubr.f32.gmra.mxu0 %v835
    %v1012 = vpop.f32.mrf.mxu0
    %v1013 = vadd.f32 0.0, %v1012
    %v1014 = vpop.f32.mrf.mxu0
    %1015 = vdwg.mxu0
    %v1017 = vsel %vm294, %v940, 0
    %1019 = vmatprep.subr.mxu0 0.0
    %1020 = vmatpush1.msra.mxu0 0.0
    %1021 = vmatprep.subr.mxu0 0.0
    %1022 = vmatpush1.msra.mxu0 0.0
    %1023 = vmatprep.subr.mxu0 0.0
    %1024 = vmatpush1.msra.mxu0 0.0
    %1025 = vmatprep.subr.mxu0 0.0
    %1026 = vmatpush1.msra.mxu0 0.0
    %1027 = vmatprep.subr.mxu0 0.0
    %1028 = vmatpush1.msra.mxu0 0.0
    %1029 = vmatprep.subr.mxu0 0.0
    %1030 = vmatpush1.msra.mxu0 0.0
    %1031 = vmatprep.subr.mxu0 0.0
    %1032 = vmatpush1.msra.mxu0 0.0
    %1033 = vmatprep.subr.mxu0 0.0
    %1034 = vmatpush1.msra.mxu0 0.0
    %1035 = vmatprep.subr.mxu0 0.0
    %1036 = vmatpush1.msra.mxu0 0.0
    %1037 = vmatprep.subr.mxu0 0.0
    %1038 = vmatpush1.msra.mxu0 0.0
    %1039 = vmatprep.subr.mxu0 0.0
    %1040 = vmatpush1.msra.mxu0 0.0
    %1041 = vmatprep.subr.mxu0 0.0
    %1042 = vmatpush1.msra.mxu0 0.0
    %1043 = vmatprep.subr.mxu0 0.0
    %1044 = vmatpush1.msra.mxu0 0.0
    %1045 = vmatprep.subr.mxu0 0.0
    %1046 = vmatpush1.msra.mxu0 0.0
    %1047 = vmatprep.subr.mxu0 0.0
    %1048 = vmatpush1.msra.mxu0 0.0
    %1049 = vmatprep.subr.mxu0 0.0
    %1050 = vmatpush1.msra.mxu0 %v941
    %1051 = vmatprep.subr.mxu0 0.0
    %1052 = vmatpush2.msra.mxu0 0.0
    %1053 = vmatprep.subr.mxu0 0.0
    %1054 = vmatpush2.msra.mxu0 0.0
    %1055 = vmatprep.subr.mxu0 0.0
    %1056 = vmatpush2.msra.mxu0 0.0
    %1057 = vmatprep.subr.mxu0 0.0
    %1058 = vmatpush2.msra.mxu0 0.0
    %1059 = vmatprep.subr.mxu0 0.0
    %1060 = vmatpush2.msra.mxu0 0.0
    %1061 = vmatprep.subr.mxu0 0.0
    %1062 = vmatpush2.msra.mxu0 0.0
    %1063 = vmatprep.subr.mxu0 0.0
    %1064 = vmatpush2.msra.mxu0 0.0
    %1065 = vmatprep.subr.mxu0 0.0
    %1066 = vmatpush2.msra.mxu0 0.0
    %1067 = vmatprep.subr.mxu0 0.0
    %1068 = vmatpush2.msra.mxu0 0.0
    %1069 = vmatprep.subr.mxu0 0.0
    %1070 = vmatpush2.msra.mxu0 0.0
    %1071 = vmatprep.subr.mxu0 0.0
    %1072 = vmatpush2.msra.mxu0 0.0
    %1073 = vmatprep.subr.mxu0 0.0
    %1074 = vmatpush2.msra.mxu0 0.0
    %1075 = vmatprep.subr.mxu0 0.0
    %1076 = vmatpush2.msra.mxu0 0.0
    %1077 = vmatprep.subr.mxu0 0.0
    %1078 = vmatpush2.msra.mxu0 0.0
    %1079 = vmatprep.subr.mxu0 0.0
    %1080 = vmatpush2.msra.mxu0 0.0
    %1081 = vmatprep.subr.mxu0 0.0
    %1082 = vmatpush2.msra.mxu0 0.0
    %1083 = vmatprep.mubr.f32.mxu0 0.0
    %1084 = vmatmul.mubr.f32.gmra.mxu0 %v1017
    %v1085 = vpop.f32.mrf.mxu0
    %v1086 = vadd.f32 %v1013, %v1085
    %v1087 = vpop.f32.mrf.mxu0
    %1088 = vdwg.mxu0
    %v1089 = vadd.f32 %v1086, %v190
    %v1090 = vxor.u32 %v1089, 2147483648
    %v1091 = vmul.f32 %v1090, 1.442695
    %v1092 = vpow.pop %v1091
    %v1093 = vadd.f32 %v1092, 1.0
    %v1094 = vrcp.pop %v1093
    %v1095 = vmul.f32 1.0, %v1094
    %v1096 = vtanh.pop %v1089
    %v1097 = vmul.f32 %v1095, %v745
    %1099 = vrot.lane.b32.xlu0 %v1096, 32
    %v1100 = vpop.permute.xlu0 %1099
    %v1102 = vmul.f32 %v1095, %v1100
    %1104 = vrot.lane.b32.xlu0 %v1102, 32
    %v1105 = vpop.permute.xlu0 %1104
    %v1107 = vadd.f32 %v1097, %v1105
    %v1108 = vtanh.pop %v1107
    %1110 = vrot.lane.b32.xlu0 %v1108, 32
    %v1111 = vpop.permute.xlu0 %1110
    %v1113 = vmul.f32 %v1095, %v1111
    %v1114 = vld [vmem:[#allocation9] sm:$0xff]
    %v1115 = vld [vmem:[#allocation9 + $0x8] sm:$0xff]
    %v1116 = vld [vmem:[#allocation9 + $0x10] sm:$0xff]
    %v1117 = vld [vmem:[#allocation9 + $0x18] sm:$0xff]
    %v1118 = vld [vmem:[#allocation11] sm:$0xff]
    %v1119 = vld [vmem:[#allocation11 + $0x8] sm:$0xff]
    %v1120 = vld [vmem:[#allocation11 + $0x10] sm:$0xff]
    %v1121 = vld [vmem:[#allocation11 + $0x18] sm:$0xff]
    %v1122 = vsel %vm220, %v934, 0
    %1124 = vmatprep.subr.mxu0 0.0
    %1125 = vmatpush1.msra.mxu0 0.0
    %1126 = vmatprep.subr.mxu0 0.0
    %1127 = vmatpush1.msra.mxu0 0.0
    %1128 = vmatprep.subr.mxu0 0.0
    %1129 = vmatpush1.msra.mxu0 0.0
    %1130 = vmatprep.subr.mxu0 0.0
    %1131 = vmatpush1.msra.mxu0 0.0
    %1132 = vmatprep.subr.mxu0 0.0
    %1133 = vmatpush1.msra.mxu0 0.0
    %1134 = vmatprep.subr.mxu0 0.0
    %1135 = vmatpush1.msra.mxu0 0.0
    %1136 = vmatprep.subr.mxu0 0.0
    %1137 = vmatpush1.msra.mxu0 0.0
    %1138 = vmatprep.subr.mxu0 0.0
    %1139 = vmatpush1.msra.mxu0 0.0
    %1140 = vmatprep.subr.mxu0 0.0
    %1141 = vmatpush1.msra.mxu0 0.0
    %1142 = vmatprep.subr.mxu0 0.0
    %1143 = vmatpush1.msra.mxu0 0.0
    %1144 = vmatprep.subr.mxu0 0.0
    %1145 = vmatpush1.msra.mxu0 0.0
    %1146 = vmatprep.subr.mxu0 0.0
    %1147 = vmatpush1.msra.mxu0 0.0
    %1148 = vmatprep.subr.mxu0 0.0
    %1149 = vmatpush1.msra.mxu0 %v1121
    %1150 = vmatprep.subr.mxu0 0.0
    %1151 = vmatpush1.msra.mxu0 %v1120
    %1152 = vmatprep.subr.mxu0 0.0
    %1153 = vmatpush1.msra.mxu0 %v1119
    %1154 = vmatprep.subr.mxu0 0.0
    %1155 = vmatpush1.msra.mxu0 %v1118
    %1156 = vmatprep.subr.mxu0 0.0
    %1157 = vmatpush2.msra.mxu0 0.0
    %1158 = vmatprep.subr.mxu0 0.0
    %1159 = vmatpush2.msra.mxu0 0.0
    %1160 = vmatprep.subr.mxu0 0.0
    %1161 = vmatpush2.msra.mxu0 0.0
    %1162 = vmatprep.subr.mxu0 0.0
    %1163 = vmatpush2.msra.mxu0 0.0
    %1164 = vmatprep.subr.mxu0 0.0
    %1165 = vmatpush2.msra.mxu0 0.0
    %1166 = vmatprep.subr.mxu0 0.0
    %1167 = vmatpush2.msra.mxu0 0.0
    %1168 = vmatprep.subr.mxu0 0.0
    %1169 = vmatpush2.msra.mxu0 0.0
    %1170 = vmatprep.subr.mxu0 0.0
    %1171 = vmatpush2.msra.mxu0 0.0
    %1172 = vmatprep.subr.mxu0 0.0
    %1173 = vmatpush2.msra.mxu0 0.0
    %1174 = vmatprep.subr.mxu0 0.0
    %1175 = vmatpush2.msra.mxu0 0.0
    %1176 = vmatprep.subr.mxu0 0.0
    %1177 = vmatpush2.msra.mxu0 0.0
    %1178 = vmatprep.subr.mxu0 0.0
    %1179 = vmatpush2.msra.mxu0 0.0
    %1180 = vmatprep.subr.mxu0 0.0
    %1181 = vmatpush2.msra.mxu0 0.0
    %1182 = vmatprep.subr.mxu0 0.0
    %1183 = vmatpush2.msra.mxu0 0.0
    %1184 = vmatprep.subr.mxu0 0.0
    %1185 = vmatpush2.msra.mxu0 0.0
    %1186 = vmatprep.subr.mxu0 0.0
    %1187 = vmatpush2.msra.mxu0 0.0
    %1188 = vmatprep.mubr.f32.mxu0 0.0
    %1189 = vmatmul.mubr.f32.gmra.mxu0 %v1122
    %v1190 = vpop.f32.mrf.mxu0
    %v1191 = vadd.f32 0.0, %v1190
    %v1192 = vpop.f32.mrf.mxu0
    %1193 = vdwg.mxu0
    %1195 = vrot.lane.b32.xlu0 %v1113, 64
    %v1196 = vpop.permute.xlu0 %1195
    %v1197 = vsel %vm220, %v1196, 0
    %1199 = vmatprep.subr.mxu0 0.0
    %1200 = vmatpush1.msra.mxu0 0.0
    %1201 = vmatprep.subr.mxu0 0.0
    %1202 = vmatpush1.msra.mxu0 0.0
    %1203 = vmatprep.subr.mxu0 0.0
    %1204 = vmatpush1.msra.mxu0 0.0
    %1205 = vmatprep.subr.mxu0 0.0
    %1206 = vmatpush1.msra.mxu0 0.0
    %1207 = vmatprep.subr.mxu0 0.0
    %1208 = vmatpush1.msra.mxu0 0.0
    %1209 = vmatprep.subr.mxu0 0.0
    %1210 = vmatpush1.msra.mxu0 0.0
    %1211 = vmatprep.subr.mxu0 0.0
    %1212 = vmatpush1.msra.mxu0 0.0
    %1213 = vmatprep.subr.mxu0 0.0
    %1214 = vmatpush1.msra.mxu0 0.0
    %1215 = vmatprep.subr.mxu0 0.0
    %1216 = vmatpush1.msra.mxu0 0.0
    %1217 = vmatprep.subr.mxu0 0.0
    %1218 = vmatpush1.msra.mxu0 0.0
    %1219 = vmatprep.subr.mxu0 0.0
    %1220 = vmatpush1.msra.mxu0 0.0
    %1221 = vmatprep.subr.mxu0 0.0
    %1222 = vmatpush1.msra.mxu0 0.0
    %1223 = vmatprep.subr.mxu0 0.0
    %1224 = vmatpush1.msra.mxu0 %v1117
    %1225 = vmatprep.subr.mxu0 0.0
    %1226 = vmatpush1.msra.mxu0 %v1116
    %1227 = vmatprep.subr.mxu0 0.0
    %1228 = vmatpush1.msra.mxu0 %v1115
    %1229 = vmatprep.subr.mxu0 0.0
    %1230 = vmatpush1.msra.mxu0 %v1114
    %1231 = vmatprep.subr.mxu0 0.0
    %1232 = vmatpush2.msra.mxu0 0.0
    %1233 = vmatprep.subr.mxu0 0.0
    %1234 = vmatpush2.msra.mxu0 0.0
    %1235 = vmatprep.subr.mxu0 0.0
    %1236 = vmatpush2.msra.mxu0 0.0
    %1237 = vmatprep.subr.mxu0 0.0
    %1238 = vmatpush2.msra.mxu0 0.0
    %1239 = vmatprep.subr.mxu0 0.0
    %1240 = vmatpush2.msra.mxu0 0.0
    %1241 = vmatprep.subr.mxu0 0.0
    %1242 = vmatpush2.msra.mxu0 0.0
    %1243 = vmatprep.subr.mxu0 0.0
    %1244 = vmatpush2.msra.mxu0 0.0
    %1245 = vmatprep.subr.mxu0 0.0
    %1246 = vmatpush2.msra.mxu0 0.0
    %1247 = vmatprep.subr.mxu0 0.0
    %1248 = vmatpush2.msra.mxu0 0.0
    %1249 = vmatprep.subr.mxu0 0.0
    %1250 = vmatpush2.msra.mxu0 0.0
    %1251 = vmatprep.subr.mxu0 0.0
    %1252 = vmatpush2.msra.mxu0 0.0
    %1253 = vmatprep.subr.mxu0 0.0
    %1254 = vmatpush2.msra.mxu0 0.0
    %1255 = vmatprep.subr.mxu0 0.0
    %1256 = vmatpush2.msra.mxu0 0.0
    %1257 = vmatprep.subr.mxu0 0.0
    %1258 = vmatpush2.msra.mxu0 0.0
    %1259 = vmatprep.subr.mxu0 0.0
    %1260 = vmatpush2.msra.mxu0 0.0
    %1261 = vmatprep.subr.mxu0 0.0
    %1262 = vmatpush2.msra.mxu0 0.0
    %1263 = vmatprep.mubr.f32.mxu0 0.0
    %1264 = vmatmul.mubr.f32.gmra.mxu0 %v1197
    %v1265 = vpop.f32.mrf.mxu0
    %v1266 = vadd.f32 %v1191, %v1265
    %v1267 = vpop.f32.mrf.mxu0
    %1268 = vdwg.mxu0
    %v1269 = vadd.f32 %v1266, %v197
    %v1270 = vxor.u32 %v1269, 2147483648
    %v1271 = vmul.f32 %v1270, 1.442695
    %v1272 = vpow.pop %v1271
    %v1273 = vadd.f32 %v1272, 1.0
    %v1274 = vrcp.pop %v1273
    %v1275 = vmul.f32 1.0, %v1274
    %v1276 = vtanh.pop %v1269
    %v1277 = vmul.f32 %v1275, %v925
    %1279 = vrot.lane.b32.xlu0 %v1276, 32
    %v1280 = vpop.permute.xlu0 %1279
    %v1282 = vmul.f32 %v1275, %v1280
    %1284 = vrot.lane.b32.xlu0 %v1282, 32
    %v1285 = vpop.permute.xlu0 %1284
    %v1287 = vadd.f32 %v1277, %v1285
    %v1288 = vtanh.pop %v1287
    %1290 = vrot.lane.b32.xlu0 %v1288, 32
    %v1291 = vpop.permute.xlu0 %1290
    %v1293 = vmul.f32 %v1275, %v1291
    %1295 = vrot.lane.b32.xlu0 %v1293, 64
    %v1296 = vpop.permute.xlu0 %1295
    %s1298 = scalar_lea.vmem [#allocation2], 16
    %1299 = vst.msk [vmem:[%s1298] sm:$0xff] %vm220, %v1296
    %s1300 = scalar_lea.vmem [#allocation3], 24
    %v1301 = vld [vmem:[%s1300] sm:$0xff]
    %v1302 = vmax.f32 %v1301, 0.0
    %v1303 = vld [vmem:[#allocation6] sm:$0xff]
    %v1304 = vld [vmem:[#allocation8] sm:$0xff]
    %v1305 = vld [vmem:[#allocation8 + $0x8] sm:$0xff]
    %v1306 = vld [vmem:[#allocation8 + $0x10] sm:$0xff]
    %v1307 = vld [vmem:[#allocation8 + $0x18] sm:$0xff]
    %1308 = vmatprep.subr.mxu0 0.0
    %1309 = vmatpush1.msra.mxu0 0.0
    %1310 = vmatprep.subr.mxu0 0.0
    %1311 = vmatpush1.msra.mxu0 0.0
    %1312 = vmatprep.subr.mxu0 0.0
    %1313 = vmatpush1.msra.mxu0 0.0
    %1314 = vmatprep.subr.mxu0 0.0
    %1315 = vmatpush1.msra.mxu0 0.0
    %1316 = vmatprep.subr.mxu0 0.0
    %1317 = vmatpush1.msra.mxu0 0.0
    %1318 = vmatprep.subr.mxu0 0.0
    %1319 = vmatpush1.msra.mxu0 0.0
    %1320 = vmatprep.subr.mxu0 0.0
    %1321 = vmatpush1.msra.mxu0 0.0
    %1322 = vmatprep.subr.mxu0 0.0
    %1323 = vmatpush1.msra.mxu0 0.0
    %1324 = vmatprep.subr.mxu0 0.0
    %1325 = vmatpush1.msra.mxu0 0.0
    %1326 = vmatprep.subr.mxu0 0.0
    %1327 = vmatpush1.msra.mxu0 0.0
    %1328 = vmatprep.subr.mxu0 0.0
    %1329 = vmatpush1.msra.mxu0 0.0
    %1330 = vmatprep.subr.mxu0 0.0
    %1331 = vmatpush1.msra.mxu0 0.0
    %1332 = vmatprep.subr.mxu0 0.0
    %1333 = vmatpush1.msra.mxu0 %v1307
    %1334 = vmatprep.subr.mxu0 0.0
    %1335 = vmatpush1.msra.mxu0 %v1306
    %1336 = vmatprep.subr.mxu0 0.0
    %1337 = vmatpush1.msra.mxu0 %v1305
    %1338 = vmatprep.subr.mxu0 0.0
    %1339 = vmatpush1.msra.mxu0 %v1304
    %1340 = vmatprep.subr.mxu0 0.0
    %1341 = vmatpush2.msra.mxu0 0.0
    %1342 = vmatprep.subr.mxu0 0.0
    %1343 = vmatpush2.msra.mxu0 0.0
    %1344 = vmatprep.subr.mxu0 0.0
    %1345 = vmatpush2.msra.mxu0 0.0
    %1346 = vmatprep.subr.mxu0 0.0
    %1347 = vmatpush2.msra.mxu0 0.0
    %1348 = vmatprep.subr.mxu0 0.0
    %1349 = vmatpush2.msra.mxu0 0.0
    %1350 = vmatprep.subr.mxu0 0.0
    %1351 = vmatpush2.msra.mxu0 0.0
    %1352 = vmatprep.subr.mxu0 0.0
    %1353 = vmatpush2.msra.mxu0 0.0
    %1354 = vmatprep.subr.mxu0 0.0
    %1355 = vmatpush2.msra.mxu0 0.0
    %1356 = vmatprep.subr.mxu0 0.0
    %1357 = vmatpush2.msra.mxu0 0.0
    %1358 = vmatprep.subr.mxu0 0.0
    %1359 = vmatpush2.msra.mxu0 0.0
    %1360 = vmatprep.subr.mxu0 0.0
    %1361 = vmatpush2.msra.mxu0 0.0
    %1362 = vmatprep.subr.mxu0 0.0
    %1363 = vmatpush2.msra.mxu0 0.0
    %1364 = vmatprep.subr.mxu0 0.0
    %1365 = vmatpush2.msra.mxu0 0.0
    %1366 = vmatprep.subr.mxu0 0.0
    %1367 = vmatpush2.msra.mxu0 0.0
    %1368 = vmatprep.subr.mxu0 0.0
    %1369 = vmatpush2.msra.mxu0 0.0
    %1370 = vmatprep.subr.mxu0 0.0
    %1371 = vmatpush2.msra.mxu0 0.0
    %1372 = vmatprep.mubr.f32.mxu0 0.0
    %1373 = vmatmul.mubr.f32.gmra.mxu0 %v1197
    %v1374 = vpop.f32.mrf.mxu0
    %v1375 = vadd.f32 0.0, %v1374
    %v1376 = vpop.f32.mrf.mxu0
    %1377 = vdwg.mxu0
    %v1379 = vsel %vm294, %v1302, 0
    %1381 = vmatprep.subr.mxu0 0.0
    %1382 = vmatpush1.msra.mxu0 0.0
    %1383 = vmatprep.subr.mxu0 0.0
    %1384 = vmatpush1.msra.mxu0 0.0
    %1385 = vmatprep.subr.mxu0 0.0
    %1386 = vmatpush1.msra.mxu0 0.0
    %1387 = vmatprep.subr.mxu0 0.0
    %1388 = vmatpush1.msra.mxu0 0.0
    %1389 = vmatprep.subr.mxu0 0.0
    %1390 = vmatpush1.msra.mxu0 0.0
    %1391 = vmatprep.subr.mxu0 0.0
    %1392 = vmatpush1.msra.mxu0 0.0
    %1393 = vmatprep.subr.mxu0 0.0
    %1394 = vmatpush1.msra.mxu0 0.0
    %1395 = vmatprep.subr.mxu0 0.0
    %1396 = vmatpush1.msra.mxu0 0.0
    %1397 = vmatprep.subr.mxu0 0.0
    %1398 = vmatpush1.msra.mxu0 0.0
    %1399 = vmatprep.subr.mxu0 0.0
    %1400 = vmatpush1.msra.mxu0 0.0
    %1401 = vmatprep.subr.mxu0 0.0
    %1402 = vmatpush1.msra.mxu0 0.0
    %1403 = vmatprep.subr.mxu0 0.0
    %1404 = vmatpush1.msra.mxu0 0.0
    %1405 = vmatprep.subr.mxu0 0.0
    %1406 = vmatpush1.msra.mxu0 0.0
    %1407 = vmatprep.subr.mxu0 0.0
    %1408 = vmatpush1.msra.mxu0 0.0
    %1409 = vmatprep.subr.mxu0 0.0
    %1410 = vmatpush1.msra.mxu0 0.0
    %1411 = vmatprep.subr.mxu0 0.0
    %1412 = vmatpush1.msra.mxu0 %v1303
    %1413 = vmatprep.subr.mxu0 0.0
    %1414 = vmatpush2.msra.mxu0 0.0
    %1415 = vmatprep.subr.mxu0 0.0
    %1416 = vmatpush2.msra.mxu0 0.0
    %1417 = vmatprep.subr.mxu0 0.0
    %1418 = vmatpush2.msra.mxu0 0.0
    %1419 = vmatprep.subr.mxu0 0.0
    %1420 = vmatpush2.msra.mxu0 0.0
    %1421 = vmatprep.subr.mxu0 0.0
    %1422 = vmatpush2.msra.mxu0 0.0
    %1423 = vmatprep.subr.mxu0 0.0
    %1424 = vmatpush2.msra.mxu0 0.0
    %1425 = vmatprep.subr.mxu0 0.0
    %1426 = vmatpush2.msra.mxu0 0.0
    %1427 = vmatprep.subr.mxu0 0.0
    %1428 = vmatpush2.msra.mxu0 0.0
    %1429 = vmatprep.subr.mxu0 0.0
    %1430 = vmatpush2.msra.mxu0 0.0
    %1431 = vmatprep.subr.mxu0 0.0
    %1432 = vmatpush2.msra.mxu0 0.0
    %1433 = vmatprep.subr.mxu0 0.0
    %1434 = vmatpush2.msra.mxu0 0.0
    %1435 = vmatprep.subr.mxu0 0.0
    %1436 = vmatpush2.msra.mxu0 0.0
    %1437 = vmatprep.subr.mxu0 0.0
    %1438 = vmatpush2.msra.mxu0 0.0
    %1439 = vmatprep.subr.mxu0 0.0
    %1440 = vmatpush2.msra.mxu0 0.0
    %1441 = vmatprep.subr.mxu0 0.0
    %1442 = vmatpush2.msra.mxu0 0.0
    %1443 = vmatprep.subr.mxu0 0.0
    %1444 = vmatpush2.msra.mxu0 0.0
    %1445 = vmatprep.mubr.f32.mxu0 0.0
    %1446 = vmatmul.mubr.f32.gmra.mxu0 %v1379
    %v1447 = vpop.f32.mrf.mxu0
    %v1448 = vadd.f32 %v1375, %v1447
    %v1449 = vpop.f32.mrf.mxu0
    %1450 = vdwg.mxu0
    %v1451 = vadd.f32 %v1448, %v190
    %v1452 = vxor.u32 %v1451, 2147483648
    %v1453 = vmul.f32 %v1452, 1.442695
    %v1454 = vpow.pop %v1453
    %v1455 = vadd.f32 %v1454, 1.0
    %v1456 = vrcp.pop %v1455
    %v1457 = vmul.f32 1.0, %v1456
    %v1458 = vtanh.pop %v1451
    %v1459 = vmul.f32 %v1457, %v1107
    %1461 = vrot.lane.b32.xlu0 %v1458, 32
    %v1462 = vpop.permute.xlu0 %1461
    %v1464 = vmul.f32 %v1457, %v1462
    %1466 = vrot.lane.b32.xlu0 %v1464, 32
    %v1467 = vpop.permute.xlu0 %1466
    %v1469 = vadd.f32 %v1459, %v1467
    %v1470 = vtanh.pop %v1469
    %1472 = vrot.lane.b32.xlu0 %v1470, 32
    %v1473 = vpop.permute.xlu0 %1472
    %v1475 = vmul.f32 %v1457, %v1473
    %v1476 = vld [vmem:[#allocation9] sm:$0xff]
    %v1477 = vld [vmem:[#allocation9 + $0x8] sm:$0xff]
    %v1478 = vld [vmem:[#allocation9 + $0x10] sm:$0xff]
    %v1479 = vld [vmem:[#allocation9 + $0x18] sm:$0xff]
    %v1480 = vld [vmem:[#allocation11] sm:$0xff]
    %v1481 = vld [vmem:[#allocation11 + $0x8] sm:$0xff]
    %v1482 = vld [vmem:[#allocation11 + $0x10] sm:$0xff]
    %v1483 = vld [vmem:[#allocation11 + $0x18] sm:$0xff]
    %v1484 = vsel %vm220, %v1296, 0
    %1486 = vmatprep.subr.mxu0 0.0
    %1487 = vmatpush1.msra.mxu0 0.0
    %1488 = vmatprep.subr.mxu0 0.0
    %1489 = vmatpush1.msra.mxu0 0.0
    %1490 = vmatprep.subr.mxu0 0.0
    %1491 = vmatpush1.msra.mxu0 0.0
    %1492 = vmatprep.subr.mxu0 0.0
    %1493 = vmatpush1.msra.mxu0 0.0
    %1494 = vmatprep.subr.mxu0 0.0
    %1495 = vmatpush1.msra.mxu0 0.0
    %1496 = vmatprep.subr.mxu0 0.0
    %1497 = vmatpush1.msra.mxu0 0.0
    %1498 = vmatprep.subr.mxu0 0.0
    %1499 = vmatpush1.msra.mxu0 0.0
    %1500 = vmatprep.subr.mxu0 0.0
    %1501 = vmatpush1.msra.mxu0 0.0
    %1502 = vmatprep.subr.mxu0 0.0
    %1503 = vmatpush1.msra.mxu0 0.0
    %1504 = vmatprep.subr.mxu0 0.0
    %1505 = vmatpush1.msra.mxu0 0.0
    %1506 = vmatprep.subr.mxu0 0.0
    %1507 = vmatpush1.msra.mxu0 0.0
    %1508 = vmatprep.subr.mxu0 0.0
    %1509 = vmatpush1.msra.mxu0 0.0
    %1510 = vmatprep.subr.mxu0 0.0
    %1511 = vmatpush1.msra.mxu0 %v1483
    %1512 = vmatprep.subr.mxu0 0.0
    %1513 = vmatpush1.msra.mxu0 %v1482
    %1514 = vmatprep.subr.mxu0 0.0
    %1515 = vmatpush1.msra.mxu0 %v1481
    %1516 = vmatprep.subr.mxu0 0.0
    %1517 = vmatpush1.msra.mxu0 %v1480
    %1518 = vmatprep.subr.mxu0 0.0
    %1519 = vmatpush2.msra.mxu0 0.0
    %1520 = vmatprep.subr.mxu0 0.0
    %1521 = vmatpush2.msra.mxu0 0.0
    %1522 = vmatprep.subr.mxu0 0.0
    %1523 = vmatpush2.msra.mxu0 0.0
    %1524 = vmatprep.subr.mxu0 0.0
    %1525 = vmatpush2.msra.mxu0 0.0
    %1526 = vmatprep.subr.mxu0 0.0
    %1527 = vmatpush2.msra.mxu0 0.0
    %1528 = vmatprep.subr.mxu0 0.0
    %1529 = vmatpush2.msra.mxu0 0.0
    %1530 = vmatprep.subr.mxu0 0.0
    %1531 = vmatpush2.msra.mxu0 0.0
    %1532 = vmatprep.subr.mxu0 0.0
    %1533 = vmatpush2.msra.mxu0 0.0
    %1534 = vmatprep.subr.mxu0 0.0
    %1535 = vmatpush2.msra.mxu0 0.0
    %1536 = vmatprep.subr.mxu0 0.0
    %1537 = vmatpush2.msra.mxu0 0.0
    %1538 = vmatprep.subr.mxu0 0.0
    %1539 = vmatpush2.msra.mxu0 0.0
    %1540 = vmatprep.subr.mxu0 0.0
    %1541 = vmatpush2.msra.mxu0 0.0
    %1542 = vmatprep.subr.mxu0 0.0
    %1543 = vmatpush2.msra.mxu0 0.0
    %1544 = vmatprep.subr.mxu0 0.0
    %1545 = vmatpush2.msra.mxu0 0.0
    %1546 = vmatprep.subr.mxu0 0.0
    %1547 = vmatpush2.msra.mxu0 0.0
    %1548 = vmatprep.subr.mxu0 0.0
    %1549 = vmatpush2.msra.mxu0 0.0
    %1550 = vmatprep.mubr.f32.mxu0 0.0
    %1551 = vmatmul.mubr.f32.gmra.mxu0 %v1484
    %v1552 = vpop.f32.mrf.mxu0
    %v1553 = vadd.f32 0.0, %v1552
    %v1554 = vpop.f32.mrf.mxu0
    %1555 = vdwg.mxu0
    %1557 = vrot.lane.b32.xlu0 %v1475, 64
    %v1558 = vpop.permute.xlu0 %1557
    %v1559 = vsel %vm220, %v1558, 0
    %1561 = vmatprep.subr.mxu0 0.0
    %1562 = vmatpush1.msra.mxu0 0.0
    %1563 = vmatprep.subr.mxu0 0.0
    %1564 = vmatpush1.msra.mxu0 0.0
    %1565 = vmatprep.subr.mxu0 0.0
    %1566 = vmatpush1.msra.mxu0 0.0
    %1567 = vmatprep.subr.mxu0 0.0
    %1568 = vmatpush1.msra.mxu0 0.0
    %1569 = vmatprep.subr.mxu0 0.0
    %1570 = vmatpush1.msra.mxu0 0.0
    %1571 = vmatprep.subr.mxu0 0.0
    %1572 = vmatpush1.msra.mxu0 0.0
    %1573 = vmatprep.subr.mxu0 0.0
    %1574 = vmatpush1.msra.mxu0 0.0
    %1575 = vmatprep.subr.mxu0 0.0
    %1576 = vmatpush1.msra.mxu0 0.0
    %1577 = vmatprep.subr.mxu0 0.0
    %1578 = vmatpush1.msra.mxu0 0.0
    %1579 = vmatprep.subr.mxu0 0.0
    %1580 = vmatpush1.msra.mxu0 0.0
    %1581 = vmatprep.subr.mxu0 0.0
    %1582 = vmatpush1.msra.mxu0 0.0
    %1583 = vmatprep.subr.mxu0 0.0
    %1584 = vmatpush1.msra.mxu0 0.0
    %1585 = vmatprep.subr.mxu0 0.0
    %1586 = vmatpush1.msra.mxu0 %v1479
    %1587 = vmatprep.subr.mxu0 0.0
    %1588 = vmatpush1.msra.mxu0 %v1478
    %1589 = vmatprep.subr.mxu0 0.0
    %1590 = vmatpush1.msra.mxu0 %v1477
    %1591 = vmatprep.subr.mxu0 0.0
    %1592 = vmatpush1.msra.mxu0 %v1476
    %1593 = vmatprep.subr.mxu0 0.0
    %1594 = vmatpush2.msra.mxu0 0.0
    %1595 = vmatprep.subr.mxu0 0.0
    %1596 = vmatpush2.msra.mxu0 0.0
    %1597 = vmatprep.subr.mxu0 0.0
    %1598 = vmatpush2.msra.mxu0 0.0
    %1599 = vmatprep.subr.mxu0 0.0
    %1600 = vmatpush2.msra.mxu0 0.0
    %1601 = vmatprep.subr.mxu0 0.0
    %1602 = vmatpush2.msra.mxu0 0.0
    %1603 = vmatprep.subr.mxu0 0.0
    %1604 = vmatpush2.msra.mxu0 0.0
    %1605 = vmatprep.subr.mxu0 0.0
    %1606 = vmatpush2.msra.mxu0 0.0
    %1607 = vmatprep.subr.mxu0 0.0
    %1608 = vmatpush2.msra.mxu0 0.0
    %1609 = vmatprep.subr.mxu0 0.0
    %1610 = vmatpush2.msra.mxu0 0.0
    %1611 = vmatprep.subr.mxu0 0.0
    %1612 = vmatpush2.msra.mxu0 0.0
    %1613 = vmatprep.subr.mxu0 0.0
    %1614 = vmatpush2.msra.mxu0 0.0
    %1615 = vmatprep.subr.mxu0 0.0
    %1616 = vmatpush2.msra.mxu0 0.0
    %1617 = vmatprep.subr.mxu0 0.0
    %1618 = vmatpush2.msra.mxu0 0.0
    %1619 = vmatprep.subr.mxu0 0.0
    %1620 = vmatpush2.msra.mxu0 0.0
    %1621 = vmatprep.subr.mxu0 0.0
    %1622 = vmatpush2.msra.mxu0 0.0
    %1623 = vmatprep.subr.mxu0 0.0
    %1624 = vmatpush2.msra.mxu0 0.0
    %1625 = vmatprep.mubr.f32.mxu0 0.0
    %1626 = vmatmul.mubr.f32.gmra.mxu0 %v1559
    %v1627 = vpop.f32.mrf.mxu0
    %v1628 = vadd.f32 %v1553, %v1627
    %v1629 = vpop.f32.mrf.mxu0
    %1630 = vdwg.mxu0
    %v1631 = vadd.f32 %v1628, %v197
    %v1632 = vxor.u32 %v1631, 2147483648
    %v1633 = vmul.f32 %v1632, 1.442695
    %v1634 = vpow.pop %v1633
    %v1635 = vadd.f32 %v1634, 1.0
    %v1636 = vrcp.pop %v1635
    %v1637 = vmul.f32 1.0, %v1636
    %v1638 = vtanh.pop %v1631
    %v1639 = vmul.f32 %v1637, %v1287
    %1641 = vrot.lane.b32.xlu0 %v1638, 32
    %v1642 = vpop.permute.xlu0 %1641
    %v1644 = vmul.f32 %v1637, %v1642
    %1646 = vrot.lane.b32.xlu0 %v1644, 32
    %v1647 = vpop.permute.xlu0 %1646
    %v1649 = vadd.f32 %v1639, %v1647
    %v1650 = vtanh.pop %v1649
    %1652 = vrot.lane.b32.xlu0 %v1650, 32
    %v1653 = vpop.permute.xlu0 %1652
    %v1655 = vmul.f32 %v1637, %v1653
    %1657 = vrot.lane.b32.xlu0 %v1655, 64
    %v1658 = vpop.permute.xlu0 %1657
    %s1660 = scalar_lea.vmem [#allocation2], 24
    %1661 = vst.msk [vmem:[%s1660] sm:$0xff] %vm220, %v1658
    %s1662 = scalar_lea.vmem [#allocation3], 32
    %v1663 = vld [vmem:[%s1662] sm:$0xff]
    %v1664 = vmax.f32 %v1663, 0.0
    %v1665 = vld [vmem:[#allocation6] sm:$0xff]
    %v1666 = vld [vmem:[#allocation8] sm:$0xff]
    %v1667 = vld [vmem:[#allocation8 + $0x8] sm:$0xff]
    %v1668 = vld [vmem:[#allocation8 + $0x10] sm:$0xff]
    %v1669 = vld [vmem:[#allocation8 + $0x18] sm:$0xff]
    %1670 = vmatprep.subr.mxu0 0.0
    %1671 = vmatpush1.msra.mxu0 0.0
    %1672 = vmatprep.subr.mxu0 0.0
    %1673 = vmatpush1.msra.mxu0 0.0
    %1674 = vmatprep.subr.mxu0 0.0
    %1675 = vmatpush1.msra.mxu0 0.0
    %1676 = vmatprep.subr.mxu0 0.0
    %1677 = vmatpush1.msra.mxu0 0.0
    %1678 = vmatprep.subr.mxu0 0.0
    %1679 = vmatpush1.msra.mxu0 0.0
    %1680 = vmatprep.subr.mxu0 0.0
    %1681 = vmatpush1.msra.mxu0 0.0
    %1682 = vmatprep.subr.mxu0 0.0
    %1683 = vmatpush1.msra.mxu0 0.0
    %1684 = vmatprep.subr.mxu0 0.0
    %1685 = vmatpush1.msra.mxu0 0.0
    %1686 = vmatprep.subr.mxu0 0.0
    %1687 = vmatpush1.msra.mxu0 0.0
    %1688 = vmatprep.subr.mxu0 0.0
    %1689 = vmatpush1.msra.mxu0 0.0
    %1690 = vmatprep.subr.mxu0 0.0
    %1691 = vmatpush1.msra.mxu0 0.0
    %1692 = vmatprep.subr.mxu0 0.0
    %1693 = vmatpush1.msra.mxu0 0.0
    %1694 = vmatprep.subr.mxu0 0.0
    %1695 = vmatpush1.msra.mxu0 %v1669
    %1696 = vmatprep.subr.mxu0 0.0
    %1697 = vmatpush1.msra.mxu0 %v1668
    %1698 = vmatprep.subr.mxu0 0.0
    %1699 = vmatpush1.msra.mxu0 %v1667
    %1700 = vmatprep.subr.mxu0 0.0
    %1701 = vmatpush1.msra.mxu0 %v1666
    %1702 = vmatprep.subr.mxu0 0.0
    %1703 = vmatpush2.msra.mxu0 0.0
    %1704 = vmatprep.subr.mxu0 0.0
    %1705 = vmatpush2.msra.mxu0 0.0
    %1706 = vmatprep.subr.mxu0 0.0
    %1707 = vmatpush2.msra.mxu0 0.0
    %1708 = vmatprep.subr.mxu0 0.0
    %1709 = vmatpush2.msra.mxu0 0.0
    %1710 = vmatprep.subr.mxu0 0.0
    %1711 = vmatpush2.msra.mxu0 0.0
    %1712 = vmatprep.subr.mxu0 0.0
    %1713 = vmatpush2.msra.mxu0 0.0
    %1714 = vmatprep.subr.mxu0 0.0
    %1715 = vmatpush2.msra.mxu0 0.0
    %1716 = vmatprep.subr.mxu0 0.0
    %1717 = vmatpush2.msra.mxu0 0.0
    %1718 = vmatprep.subr.mxu0 0.0
    %1719 = vmatpush2.msra.mxu0 0.0
    %1720 = vmatprep.subr.mxu0 0.0
    %1721 = vmatpush2.msra.mxu0 0.0
    %1722 = vmatprep.subr.mxu0 0.0
    %1723 = vmatpush2.msra.mxu0 0.0
    %1724 = vmatprep.subr.mxu0 0.0
    %1725 = vmatpush2.msra.mxu0 0.0
    %1726 = vmatprep.subr.mxu0 0.0
    %1727 = vmatpush2.msra.mxu0 0.0
    %1728 = vmatprep.subr.mxu0 0.0
    %1729 = vmatpush2.msra.mxu0 0.0
    %1730 = vmatprep.subr.mxu0 0.0
    %1731 = vmatpush2.msra.mxu0 0.0
    %1732 = vmatprep.subr.mxu0 0.0
    %1733 = vmatpush2.msra.mxu0 0.0
    %1734 = vmatprep.mubr.f32.mxu0 0.0
    %1735 = vmatmul.mubr.f32.gmra.mxu0 %v1559
    %v1736 = vpop.f32.mrf.mxu0
    %v1737 = vadd.f32 0.0, %v1736
    %v1738 = vpop.f32.mrf.mxu0
    %1739 = vdwg.mxu0
    %v1741 = vsel %vm294, %v1664, 0
    %1743 = vmatprep.subr.mxu0 0.0
    %1744 = vmatpush1.msra.mxu0 0.0
    %1745 = vmatprep.subr.mxu0 0.0
    %1746 = vmatpush1.msra.mxu0 0.0
    %1747 = vmatprep.subr.mxu0 0.0
    %1748 = vmatpush1.msra.mxu0 0.0
    %1749 = vmatprep.subr.mxu0 0.0
    %1750 = vmatpush1.msra.mxu0 0.0
    %1751 = vmatprep.subr.mxu0 0.0
    %1752 = vmatpush1.msra.mxu0 0.0
    %1753 = vmatprep.subr.mxu0 0.0
    %1754 = vmatpush1.msra.mxu0 0.0
    %1755 = vmatprep.subr.mxu0 0.0
    %1756 = vmatpush1.msra.mxu0 0.0
    %1757 = vmatprep.subr.mxu0 0.0
    %1758 = vmatpush1.msra.mxu0 0.0
    %1759 = vmatprep.subr.mxu0 0.0
    %1760 = vmatpush1.msra.mxu0 0.0
    %1761 = vmatprep.subr.mxu0 0.0
    %1762 = vmatpush1.msra.mxu0 0.0
    %1763 = vmatprep.subr.mxu0 0.0
    %1764 = vmatpush1.msra.mxu0 0.0
    %1765 = vmatprep.subr.mxu0 0.0
    %1766 = vmatpush1.msra.mxu0 0.0
    %1767 = vmatprep.subr.mxu0 0.0
    %1768 = vmatpush1.msra.mxu0 0.0
    %1769 = vmatprep.subr.mxu0 0.0
    %1770 = vmatpush1.msra.mxu0 0.0
    %1771 = vmatprep.subr.mxu0 0.0
    %1772 = vmatpush1.msra.mxu0 0.0
    %1773 = vmatprep.subr.mxu0 0.0
    %1774 = vmatpush1.msra.mxu0 %v1665
    %1775 = vmatprep.subr.mxu0 0.0
    %1776 = vmatpush2.msra.mxu0 0.0
    %1777 = vmatprep.subr.mxu0 0.0
    %1778 = vmatpush2.msra.mxu0 0.0
    %1779 = vmatprep.subr.mxu0 0.0
    %1780 = vmatpush2.msra.mxu0 0.0
    %1781 = vmatprep.subr.mxu0 0.0
    %1782 = vmatpush2.msra.mxu0 0.0
    %1783 = vmatprep.subr.mxu0 0.0
    %1784 = vmatpush2.msra.mxu0 0.0
    %1785 = vmatprep.subr.mxu0 0.0
    %1786 = vmatpush2.msra.mxu0 0.0
    %1787 = vmatprep.subr.mxu0 0.0
    %1788 = vmatpush2.msra.mxu0 0.0
    %1789 = vmatprep.subr.mxu0 0.0
    %1790 = vmatpush2.msra.mxu0 0.0
    %1791 = vmatprep.subr.mxu0 0.0
    %1792 = vmatpush2.msra.mxu0 0.0
    %1793 = vmatprep.subr.mxu0 0.0
    %1794 = vmatpush2.msra.mxu0 0.0
    %1795 = vmatprep.subr.mxu0 0.0
    %1796 = vmatpush2.msra.mxu0 0.0
    %1797 = vmatprep.subr.mxu0 0.0
    %1798 = vmatpush2.msra.mxu0 0.0
    %1799 = vmatprep.subr.mxu0 0.0
    %1800 = vmatpush2.msra.mxu0 0.0
    %1801 = vmatprep.subr.mxu0 0.0
    %1802 = vmatpush2.msra.mxu0 0.0
    %1803 = vmatprep.subr.mxu0 0.0
    %1804 = vmatpush2.msra.mxu0 0.0
    %1805 = vmatprep.subr.mxu0 0.0
    %1806 = vmatpush2.msra.mxu0 0.0
    %1807 = vmatprep.mubr.f32.mxu0 0.0
    %1808 = vmatmul.mubr.f32.gmra.mxu0 %v1741
    %v1809 = vpop.f32.mrf.mxu0
    %v1810 = vadd.f32 %v1737, %v1809
    %v1811 = vpop.f32.mrf.mxu0
    %1812 = vdwg.mxu0
    %v1813 = vadd.f32 %v1810, %v190
    %v1814 = vxor.u32 %v1813, 2147483648
    %v1815 = vmul.f32 %v1814, 1.442695
    %v1816 = vpow.pop %v1815
    %v1817 = vadd.f32 %v1816, 1.0
    %v1818 = vrcp.pop %v1817
    %v1819 = vmul.f32 1.0, %v1818
    %v1820 = vtanh.pop %v1813
    %v1821 = vmul.f32 %v1819, %v1469
    %1823 = vrot.lane.b32.xlu0 %v1820, 32
    %v1824 = vpop.permute.xlu0 %1823
    %v1826 = vmul.f32 %v1819, %v1824
    %1828 = vrot.lane.b32.xlu0 %v1826, 32
    %v1829 = vpop.permute.xlu0 %1828
    %v1831 = vadd.f32 %v1821, %v1829
    %v1832 = vtanh.pop %v1831
    %1834 = vrot.lane.b32.xlu0 %v1832, 32
    %v1835 = vpop.permute.xlu0 %1834
    %v1837 = vmul.f32 %v1819, %v1835
    %v1838 = vld [vmem:[#allocation9] sm:$0xff]
    %v1839 = vld [vmem:[#allocation9 + $0x8] sm:$0xff]
    %v1840 = vld [vmem:[#allocation9 + $0x10] sm:$0xff]
    %v1841 = vld [vmem:[#allocation9 + $0x18] sm:$0xff]
    %v1842 = vld [vmem:[#allocation11] sm:$0xff]
    %v1843 = vld [vmem:[#allocation11 + $0x8] sm:$0xff]
    %v1844 = vld [vmem:[#allocation11 + $0x10] sm:$0xff]
    %v1845 = vld [vmem:[#allocation11 + $0x18] sm:$0xff]
    %v1846 = vsel %vm220, %v1658, 0
    %1848 = vmatprep.subr.mxu0 0.0
    %1849 = vmatpush1.msra.mxu0 0.0
    %1850 = vmatprep.subr.mxu0 0.0
    %1851 = vmatpush1.msra.mxu0 0.0
    %1852 = vmatprep.subr.mxu0 0.0
    %1853 = vmatpush1.msra.mxu0 0.0
    %1854 = vmatprep.subr.mxu0 0.0
    %1855 = vmatpush1.msra.mxu0 0.0
    %1856 = vmatprep.subr.mxu0 0.0
    %1857 = vmatpush1.msra.mxu0 0.0
    %1858 = vmatprep.subr.mxu0 0.0
    %1859 = vmatpush1.msra.mxu0 0.0
    %1860 = vmatprep.subr.mxu0 0.0
    %1861 = vmatpush1.msra.mxu0 0.0
    %1862 = vmatprep.subr.mxu0 0.0
    %1863 = vmatpush1.msra.mxu0 0.0
    %1864 = vmatprep.subr.mxu0 0.0
    %1865 = vmatpush1.msra.mxu0 0.0
    %1866 = vmatprep.subr.mxu0 0.0
    %1867 = vmatpush1.msra.mxu0 0.0
    %1868 = vmatprep.subr.mxu0 0.0
    %1869 = vmatpush1.msra.mxu0 0.0
    %1870 = vmatprep.subr.mxu0 0.0
    %1871 = vmatpush1.msra.mxu0 0.0
    %1872 = vmatprep.subr.mxu0 0.0
    %1873 = vmatpush1.msra.mxu0 %v1845
    %1874 = vmatprep.subr.mxu0 0.0
    %1875 = vmatpush1.msra.mxu0 %v1844
    %1876 = vmatprep.subr.mxu0 0.0
    %1877 = vmatpush1.msra.mxu0 %v1843
    %1878 = vmatprep.subr.mxu0 0.0
    %1879 = vmatpush1.msra.mxu0 %v1842
    %1880 = vmatprep.subr.mxu0 0.0
    %1881 = vmatpush2.msra.mxu0 0.0
    %1882 = vmatprep.subr.mxu0 0.0
    %1883 = vmatpush2.msra.mxu0 0.0
    %1884 = vmatprep.subr.mxu0 0.0
    %1885 = vmatpush2.msra.mxu0 0.0
    %1886 = vmatprep.subr.mxu0 0.0
    %1887 = vmatpush2.msra.mxu0 0.0
    %1888 = vmatprep.subr.mxu0 0.0
    %1889 = vmatpush2.msra.mxu0 0.0
    %1890 = vmatprep.subr.mxu0 0.0
    %1891 = vmatpush2.msra.mxu0 0.0
    %1892 = vmatprep.subr.mxu0 0.0
    %1893 = vmatpush2.msra.mxu0 0.0
    %1894 = vmatprep.subr.mxu0 0.0
    %1895 = vmatpush2.msra.mxu0 0.0
    %1896 = vmatprep.subr.mxu0 0.0
    %1897 = vmatpush2.msra.mxu0 0.0
    %1898 = vmatprep.subr.mxu0 0.0
    %1899 = vmatpush2.msra.mxu0 0.0
    %1900 = vmatprep.subr.mxu0 0.0
    %1901 = vmatpush2.msra.mxu0 0.0
    %1902 = vmatprep.subr.mxu0 0.0
    %1903 = vmatpush2.msra.mxu0 0.0
    %1904 = vmatprep.subr.mxu0 0.0
    %1905 = vmatpush2.msra.mxu0 0.0
    %1906 = vmatprep.subr.mxu0 0.0
    %1907 = vmatpush2.msra.mxu0 0.0
    %1908 = vmatprep.subr.mxu0 0.0
    %1909 = vmatpush2.msra.mxu0 0.0
    %1910 = vmatprep.subr.mxu0 0.0
    %1911 = vmatpush2.msra.mxu0 0.0
    %1912 = vmatprep.mubr.f32.mxu0 0.0
    %1913 = vmatmul.mubr.f32.gmra.mxu0 %v1846
    %v1914 = vpop.f32.mrf.mxu0
    %v1915 = vadd.f32 0.0, %v1914
    %v1916 = vpop.f32.mrf.mxu0
    %1917 = vdwg.mxu0
    %1919 = vrot.lane.b32.xlu0 %v1837, 64
    %v1920 = vpop.permute.xlu0 %1919
    %v1921 = vsel %vm220, %v1920, 0
    %1923 = vmatprep.subr.mxu0 0.0
    %1924 = vmatpush1.msra.mxu0 0.0
    %1925 = vmatprep.subr.mxu0 0.0
    %1926 = vmatpush1.msra.mxu0 0.0
    %1927 = vmatprep.subr.mxu0 0.0
    %1928 = vmatpush1.msra.mxu0 0.0
    %1929 = vmatprep.subr.mxu0 0.0
    %1930 = vmatpush1.msra.mxu0 0.0
    %1931 = vmatprep.subr.mxu0 0.0
    %1932 = vmatpush1.msra.mxu0 0.0
    %1933 = vmatprep.subr.mxu0 0.0
    %1934 = vmatpush1.msra.mxu0 0.0
    %1935 = vmatprep.subr.mxu0 0.0
    %1936 = vmatpush1.msra.mxu0 0.0
    %1937 = vmatprep.subr.mxu0 0.0
    %1938 = vmatpush1.msra.mxu0 0.0
    %1939 = vmatprep.subr.mxu0 0.0
    %1940 = vmatpush1.msra.mxu0 0.0
    %1941 = vmatprep.subr.mxu0 0.0
    %1942 = vmatpush1.msra.mxu0 0.0
    %1943 = vmatprep.subr.mxu0 0.0
    %1944 = vmatpush1.msra.mxu0 0.0
    %1945 = vmatprep.subr.mxu0 0.0
    %1946 = vmatpush1.msra.mxu0 0.0
    %1947 = vmatprep.subr.mxu0 0.0
    %1948 = vmatpush1.msra.mxu0 %v1841
    %1949 = vmatprep.subr.mxu0 0.0
    %1950 = vmatpush1.msra.mxu0 %v1840
    %1951 = vmatprep.subr.mxu0 0.0
    %1952 = vmatpush1.msra.mxu0 %v1839
    %1953 = vmatprep.subr.mxu0 0.0
    %1954 = vmatpush1.msra.mxu0 %v1838
    %1955 = vmatprep.subr.mxu0 0.0
    %1956 = vmatpush2.msra.mxu0 0.0
    %1957 = vmatprep.subr.mxu0 0.0
    %1958 = vmatpush2.msra.mxu0 0.0
    %1959 = vmatprep.subr.mxu0 0.0
    %1960 = vmatpush2.msra.mxu0 0.0
    %1961 = vmatprep.subr.mxu0 0.0
    %1962 = vmatpush2.msra.mxu0 0.0
    %1963 = vmatprep.subr.mxu0 0.0
    %1964 = vmatpush2.msra.mxu0 0.0
    %1965 = vmatprep.subr.mxu0 0.0
    %1966 = vmatpush2.msra.mxu0 0.0
    %1967 = vmatprep.subr.mxu0 0.0
    %1968 = vmatpush2.msra.mxu0 0.0
    %1969 = vmatprep.subr.mxu0 0.0
    %1970 = vmatpush2.msra.mxu0 0.0
    %1971 = vmatprep.subr.mxu0 0.0
    %1972 = vmatpush2.msra.mxu0 0.0
    %1973 = vmatprep.subr.mxu0 0.0
    %1974 = vmatpush2.msra.mxu0 0.0
    %1975 = vmatprep.subr.mxu0 0.0
    %1976 = vmatpush2.msra.mxu0 0.0
    %1977 = vmatprep.subr.mxu0 0.0
    %1978 = vmatpush2.msra.mxu0 0.0
    %1979 = vmatprep.subr.mxu0 0.0
    %1980 = vmatpush2.msra.mxu0 0.0
    %1981 = vmatprep.subr.mxu0 0.0
    %1982 = vmatpush2.msra.mxu0 0.0
    %1983 = vmatprep.subr.mxu0 0.0
    %1984 = vmatpush2.msra.mxu0 0.0
    %1985 = vmatprep.subr.mxu0 0.0
    %1986 = vmatpush2.msra.mxu0 0.0
    %1987 = vmatprep.mubr.f32.mxu0 0.0
    %1988 = vmatmul.mubr.f32.gmra.mxu0 %v1921
    %v1989 = vpop.f32.mrf.mxu0
    %v1990 = vadd.f32 %v1915, %v1989
    %v1991 = vpop.f32.mrf.mxu0
    %1992 = vdwg.mxu0
    %v1993 = vadd.f32 %v1990, %v197
    %v1994 = vxor.u32 %v1993, 2147483648
    %v1995 = vmul.f32 %v1994, 1.442695
    %v1996 = vpow.pop %v1995
    %v1997 = vadd.f32 %v1996, 1.0
    %v1998 = vrcp.pop %v1997
    %v1999 = vmul.f32 1.0, %v1998
    %v2000 = vtanh.pop %v1993
    %v2001 = vmul.f32 %v1999, %v1649
    %2003 = vrot.lane.b32.xlu0 %v2000, 32
    %v2004 = vpop.permute.xlu0 %2003
    %v2006 = vmul.f32 %v1999, %v2004
    %2008 = vrot.lane.b32.xlu0 %v2006, 32
    %v2009 = vpop.permute.xlu0 %2008
    %v2011 = vadd.f32 %v2001, %v2009
    %v2012 = vtanh.pop %v2011
    %2014 = vrot.lane.b32.xlu0 %v2012, 32
    %v2015 = vpop.permute.xlu0 %2014
    %v2017 = vmul.f32 %v1999, %v2015
    %2019 = vrot.lane.b32.xlu0 %v2017, 64
    %v2020 = vpop.permute.xlu0 %2019
    %s2022 = scalar_lea.vmem [#allocation2], 32
    %2023 = vst.msk [vmem:[%s2022] sm:$0xff] %vm220, %v2020
    %s2024 = scalar_lea.vmem [#allocation3], 40
    %v2025 = vld [vmem:[%s2024] sm:$0xff]
    %v2026 = vmax.f32 %v2025, 0.0
    %v2027 = vld [vmem:[#allocation6] sm:$0xff]
    %v2028 = vld [vmem:[#allocation8] sm:$0xff]
    %v2029 = vld [vmem:[#allocation8 + $0x8] sm:$0xff]
    %v2030 = vld [vmem:[#allocation8 + $0x10] sm:$0xff]
    %v2031 = vld [vmem:[#allocation8 + $0x18] sm:$0xff]
    %2032 = vmatprep.subr.mxu0 0.0
    %2033 = vmatpush1.msra.mxu0 0.0
    %2034 = vmatprep.subr.mxu0 0.0
    %2035 = vmatpush1.msra.mxu0 0.0
    %2036 = vmatprep.subr.mxu0 0.0
    %2037 = vmatpush1.msra.mxu0 0.0
    %2038 = vmatprep.subr.mxu0 0.0
    %2039 = vmatpush1.msra.mxu0 0.0
    %2040 = vmatprep.subr.mxu0 0.0
    %2041 = vmatpush1.msra.mxu0 0.0
    %2042 = vmatprep.subr.mxu0 0.0
    %2043 = vmatpush1.msra.mxu0 0.0
    %2044 = vmatprep.subr.mxu0 0.0
    %2045 = vmatpush1.msra.mxu0 0.0
    %2046 = vmatprep.subr.mxu0 0.0
    %2047 = vmatpush1.msra.mxu0 0.0
    %2048 = vmatprep.subr.mxu0 0.0
    %2049 = vmatpush1.msra.mxu0 0.0
    %2050 = vmatprep.subr.mxu0 0.0
    %2051 = vmatpush1.msra.mxu0 0.0
    %2052 = vmatprep.subr.mxu0 0.0
    %2053 = vmatpush1.msra.mxu0 0.0
    %2054 = vmatprep.subr.mxu0 0.0
    %2055 = vmatpush1.msra.mxu0 0.0
    %2056 = vmatprep.subr.mxu0 0.0
    %2057 = vmatpush1.msra.mxu0 %v2031
    %2058 = vmatprep.subr.mxu0 0.0
    %2059 = vmatpush1.msra.mxu0 %v2030
    %2060 = vmatprep.subr.mxu0 0.0
    %2061 = vmatpush1.msra.mxu0 %v2029
    %2062 = vmatprep.subr.mxu0 0.0
    %2063 = vmatpush1.msra.mxu0 %v2028
    %2064 = vmatprep.subr.mxu0 0.0
    %2065 = vmatpush2.msra.mxu0 0.0
    %2066 = vmatprep.subr.mxu0 0.0
    %2067 = vmatpush2.msra.mxu0 0.0
    %2068 = vmatprep.subr.mxu0 0.0
    %2069 = vmatpush2.msra.mxu0 0.0
    %2070 = vmatprep.subr.mxu0 0.0
    %2071 = vmatpush2.msra.mxu0 0.0
    %2072 = vmatprep.subr.mxu0 0.0
    %2073 = vmatpush2.msra.mxu0 0.0
    %2074 = vmatprep.subr.mxu0 0.0
    %2075 = vmatpush2.msra.mxu0 0.0
    %2076 = vmatprep.subr.mxu0 0.0
    %2077 = vmatpush2.msra.mxu0 0.0
    %2078 = vmatprep.subr.mxu0 0.0
    %2079 = vmatpush2.msra.mxu0 0.0
    %2080 = vmatprep.subr.mxu0 0.0
    %2081 = vmatpush2.msra.mxu0 0.0
    %2082 = vmatprep.subr.mxu0 0.0
    %2083 = vmatpush2.msra.mxu0 0.0
    %2084 = vmatprep.subr.mxu0 0.0
    %2085 = vmatpush2.msra.mxu0 0.0
    %2086 = vmatprep.subr.mxu0 0.0
    %2087 = vmatpush2.msra.mxu0 0.0
    %2088 = vmatprep.subr.mxu0 0.0
    %2089 = vmatpush2.msra.mxu0 0.0
    %2090 = vmatprep.subr.mxu0 0.0
    %2091 = vmatpush2.msra.mxu0 0.0
    %2092 = vmatprep.subr.mxu0 0.0
    %2093 = vmatpush2.msra.mxu0 0.0
    %2094 = vmatprep.subr.mxu0 0.0
    %2095 = vmatpush2.msra.mxu0 0.0
    %2096 = vmatprep.mubr.f32.mxu0 0.0
    %2097 = vmatmul.mubr.f32.gmra.mxu0 %v1921
    %v2098 = vpop.f32.mrf.mxu0
    %v2099 = vadd.f32 0.0, %v2098
    %v2100 = vpop.f32.mrf.mxu0
    %2101 = vdwg.mxu0
    %v2103 = vsel %vm294, %v2026, 0
    %2105 = vmatprep.subr.mxu0 0.0
    %2106 = vmatpush1.msra.mxu0 0.0
    %2107 = vmatprep.subr.mxu0 0.0
    %2108 = vmatpush1.msra.mxu0 0.0
    %2109 = vmatprep.subr.mxu0 0.0
    %2110 = vmatpush1.msra.mxu0 0.0
    %2111 = vmatprep.subr.mxu0 0.0
    %2112 = vmatpush1.msra.mxu0 0.0
    %2113 = vmatprep.subr.mxu0 0.0
    %2114 = vmatpush1.msra.mxu0 0.0
    %2115 = vmatprep.subr.mxu0 0.0
    %2116 = vmatpush1.msra.mxu0 0.0
    %2117 = vmatprep.subr.mxu0 0.0
    %2118 = vmatpush1.msra.mxu0 0.0
    %2119 = vmatprep.subr.mxu0 0.0
    %2120 = vmatpush1.msra.mxu0 0.0
    %2121 = vmatprep.subr.mxu0 0.0
    %2122 = vmatpush1.msra.mxu0 0.0
    %2123 = vmatprep.subr.mxu0 0.0
    %2124 = vmatpush1.msra.mxu0 0.0
    %2125 = vmatprep.subr.mxu0 0.0
    %2126 = vmatpush1.msra.mxu0 0.0
    %2127 = vmatprep.subr.mxu0 0.0
    %2128 = vmatpush1.msra.mxu0 0.0
    %2129 = vmatprep.subr.mxu0 0.0
    %2130 = vmatpush1.msra.mxu0 0.0
    %2131 = vmatprep.subr.mxu0 0.0
    %2132 = vmatpush1.msra.mxu0 0.0
    %2133 = vmatprep.subr.mxu0 0.0
    %2134 = vmatpush1.msra.mxu0 0.0
    %2135 = vmatprep.subr.mxu0 0.0
    %2136 = vmatpush1.msra.mxu0 %v2027
    %2137 = vmatprep.subr.mxu0 0.0
    %2138 = vmatpush2.msra.mxu0 0.0
    %2139 = vmatprep.subr.mxu0 0.0
    %2140 = vmatpush2.msra.mxu0 0.0
    %2141 = vmatprep.subr.mxu0 0.0
    %2142 = vmatpush2.msra.mxu0 0.0
    %2143 = vmatprep.subr.mxu0 0.0
    %2144 = vmatpush2.msra.mxu0 0.0
    %2145 = vmatprep.subr.mxu0 0.0
    %2146 = vmatpush2.msra.mxu0 0.0
    %2147 = vmatprep.subr.mxu0 0.0
    %2148 = vmatpush2.msra.mxu0 0.0
    %2149 = vmatprep.subr.mxu0 0.0
    %2150 = vmatpush2.msra.mxu0 0.0
    %2151 = vmatprep.subr.mxu0 0.0
    %2152 = vmatpush2.msra.mxu0 0.0
    %2153 = vmatprep.subr.mxu0 0.0
    %2154 = vmatpush2.msra.mxu0 0.0
    %2155 = vmatprep.subr.mxu0 0.0
    %2156 = vmatpush2.msra.mxu0 0.0
    %2157 = vmatprep.subr.mxu0 0.0
    %2158 = vmatpush2.msra.mxu0 0.0
    %2159 = vmatprep.subr.mxu0 0.0
    %2160 = vmatpush2.msra.mxu0 0.0
    %2161 = vmatprep.subr.mxu0 0.0
    %2162 = vmatpush2.msra.mxu0 0.0
    %2163 = vmatprep.subr.mxu0 0.0
    %2164 = vmatpush2.msra.mxu0 0.0
    %2165 = vmatprep.subr.mxu0 0.0
    %2166 = vmatpush2.msra.mxu0 0.0
    %2167 = vmatprep.subr.mxu0 0.0
    %2168 = vmatpush2.msra.mxu0 0.0
    %2169 = vmatprep.mubr.f32.mxu0 0.0
    %2170 = vmatmul.mubr.f32.gmra.mxu0 %v2103
    %v2171 = vpop.f32.mrf.mxu0
    %v2172 = vadd.f32 %v2099, %v2171
    %v2173 = vpop.f32.mrf.mxu0
    %2174 = vdwg.mxu0
    %v2175 = vadd.f32 %v2172, %v190
    %v2176 = vxor.u32 %v2175, 2147483648
    %v2177 = vmul.f32 %v2176, 1.442695
    %v2178 = vpow.pop %v2177
    %v2179 = vadd.f32 %v2178, 1.0
    %v2180 = vrcp.pop %v2179
    %v2181 = vmul.f32 1.0, %v2180
    %v2182 = vtanh.pop %v2175
    %v2183 = vmul.f32 %v2181, %v1831
    %2185 = vrot.lane.b32.xlu0 %v2182, 32
    %v2186 = vpop.permute.xlu0 %2185
    %v2188 = vmul.f32 %v2181, %v2186
    %2190 = vrot.lane.b32.xlu0 %v2188, 32
    %v2191 = vpop.permute.xlu0 %2190
    %v2193 = vadd.f32 %v2183, %v2191
    %v2194 = vtanh.pop %v2193
    %2196 = vrot.lane.b32.xlu0 %v2194, 32
    %v2197 = vpop.permute.xlu0 %2196
    %v2199 = vmul.f32 %v2181, %v2197
    %v2200 = vld [vmem:[#allocation9] sm:$0xff]
    %v2201 = vld [vmem:[#allocation9 + $0x8] sm:$0xff]
    %v2202 = vld [vmem:[#allocation9 + $0x10] sm:$0xff]
    %v2203 = vld [vmem:[#allocation9 + $0x18] sm:$0xff]
    %v2204 = vld [vmem:[#allocation11] sm:$0xff]
    %v2205 = vld [vmem:[#allocation11 + $0x8] sm:$0xff]
    %v2206 = vld [vmem:[#allocation11 + $0x10] sm:$0xff]
    %v2207 = vld [vmem:[#allocation11 + $0x18] sm:$0xff]
    %v2208 = vsel %vm220, %v2020, 0
    %2210 = vmatprep.subr.mxu0 0.0
    %2211 = vmatpush1.msra.mxu0 0.0
    %2212 = vmatprep.subr.mxu0 0.0
    %2213 = vmatpush1.msra.mxu0 0.0
    %2214 = vmatprep.subr.mxu0 0.0
    %2215 = vmatpush1.msra.mxu0 0.0
    %2216 = vmatprep.subr.mxu0 0.0
    %2217 = vmatpush1.msra.mxu0 0.0
    %2218 = vmatprep.subr.mxu0 0.0
    %2219 = vmatpush1.msra.mxu0 0.0
    %2220 = vmatprep.subr.mxu0 0.0
    %2221 = vmatpush1.msra.mxu0 0.0
    %2222 = vmatprep.subr.mxu0 0.0
    %2223 = vmatpush1.msra.mxu0 0.0
    %2224 = vmatprep.subr.mxu0 0.0
    %2225 = vmatpush1.msra.mxu0 0.0
    %2226 = vmatprep.subr.mxu0 0.0
    %2227 = vmatpush1.msra.mxu0 0.0
    %2228 = vmatprep.subr.mxu0 0.0
    %2229 = vmatpush1.msra.mxu0 0.0
    %2230 = vmatprep.subr.mxu0 0.0
    %2231 = vmatpush1.msra.mxu0 0.0
    %2232 = vmatprep.subr.mxu0 0.0
    %2233 = vmatpush1.msra.mxu0 0.0
    %2234 = vmatprep.subr.mxu0 0.0
    %2235 = vmatpush1.msra.mxu0 %v2207
    %2236 = vmatprep.subr.mxu0 0.0
    %2237 = vmatpush1.msra.mxu0 %v2206
    %2238 = vmatprep.subr.mxu0 0.0
    %2239 = vmatpush1.msra.mxu0 %v2205
    %2240 = vmatprep.subr.mxu0 0.0
    %2241 = vmatpush1.msra.mxu0 %v2204
    %2242 = vmatprep.subr.mxu0 0.0
    %2243 = vmatpush2.msra.mxu0 0.0
    %2244 = vmatprep.subr.mxu0 0.0
    %2245 = vmatpush2.msra.mxu0 0.0
    %2246 = vmatprep.subr.mxu0 0.0
    %2247 = vmatpush2.msra.mxu0 0.0
    %2248 = vmatprep.subr.mxu0 0.0
    %2249 = vmatpush2.msra.mxu0 0.0
    %2250 = vmatprep.subr.mxu0 0.0
    %2251 = vmatpush2.msra.mxu0 0.0
    %2252 = vmatprep.subr.mxu0 0.0
    %2253 = vmatpush2.msra.mxu0 0.0
    %2254 = vmatprep.subr.mxu0 0.0
    %2255 = vmatpush2.msra.mxu0 0.0
    %2256 = vmatprep.subr.mxu0 0.0
    %2257 = vmatpush2.msra.mxu0 0.0
    %2258 = vmatprep.subr.mxu0 0.0
    %2259 = vmatpush2.msra.mxu0 0.0
    %2260 = vmatprep.subr.mxu0 0.0
    %2261 = vmatpush2.msra.mxu0 0.0
    %2262 = vmatprep.subr.mxu0 0.0
    %2263 = vmatpush2.msra.mxu0 0.0
    %2264 = vmatprep.subr.mxu0 0.0
    %2265 = vmatpush2.msra.mxu0 0.0
    %2266 = vmatprep.subr.mxu0 0.0
    %2267 = vmatpush2.msra.mxu0 0.0
    %2268 = vmatprep.subr.mxu0 0.0
    %2269 = vmatpush2.msra.mxu0 0.0
    %2270 = vmatprep.subr.mxu0 0.0
    %2271 = vmatpush2.msra.mxu0 0.0
    %2272 = vmatprep.subr.mxu0 0.0
    %2273 = vmatpush2.msra.mxu0 0.0
    %2274 = vmatprep.mubr.f32.mxu0 0.0
    %2275 = vmatmul.mubr.f32.gmra.mxu0 %v2208
    %v2276 = vpop.f32.mrf.mxu0
    %v2277 = vadd.f32 0.0, %v2276
    %v2278 = vpop.f32.mrf.mxu0
    %2279 = vdwg.mxu0
    %2281 = vrot.lane.b32.xlu0 %v2199, 64
    %v2282 = vpop.permute.xlu0 %2281
    %v2283 = vsel %vm220, %v2282, 0
    %2285 = vmatprep.subr.mxu0 0.0
    %2286 = vmatpush1.msra.mxu0 0.0
    %2287 = vmatprep.subr.mxu0 0.0
    %2288 = vmatpush1.msra.mxu0 0.0
    %2289 = vmatprep.subr.mxu0 0.0
    %2290 = vmatpush1.msra.mxu0 0.0
    %2291 = vmatprep.subr.mxu0 0.0
    %2292 = vmatpush1.msra.mxu0 0.0
    %2293 = vmatprep.subr.mxu0 0.0
    %2294 = vmatpush1.msra.mxu0 0.0
    %2295 = vmatprep.subr.mxu0 0.0
    %2296 = vmatpush1.msra.mxu0 0.0
    %2297 = vmatprep.subr.mxu0 0.0
    %2298 = vmatpush1.msra.mxu0 0.0
    %2299 = vmatprep.subr.mxu0 0.0
    %2300 = vmatpush1.msra.mxu0 0.0
    %2301 = vmatprep.subr.mxu0 0.0
    %2302 = vmatpush1.msra.mxu0 0.0
    %2303 = vmatprep.subr.mxu0 0.0
    %2304 = vmatpush1.msra.mxu0 0.0
    %2305 = vmatprep.subr.mxu0 0.0
    %2306 = vmatpush1.msra.mxu0 0.0
    %2307 = vmatprep.subr.mxu0 0.0
    %2308 = vmatpush1.msra.mxu0 0.0
    %2309 = vmatprep.subr.mxu0 0.0
    %2310 = vmatpush1.msra.mxu0 %v2203
    %2311 = vmatprep.subr.mxu0 0.0
    %2312 = vmatpush1.msra.mxu0 %v2202
    %2313 = vmatprep.subr.mxu0 0.0
    %2314 = vmatpush1.msra.mxu0 %v2201
    %2315 = vmatprep.subr.mxu0 0.0
    %2316 = vmatpush1.msra.mxu0 %v2200
    %2317 = vmatprep.subr.mxu0 0.0
    %2318 = vmatpush2.msra.mxu0 0.0
    %2319 = vmatprep.subr.mxu0 0.0
    %2320 = vmatpush2.msra.mxu0 0.0
    %2321 = vmatprep.subr.mxu0 0.0
    %2322 = vmatpush2.msra.mxu0 0.0
    %2323 = vmatprep.subr.mxu0 0.0
    %2324 = vmatpush2.msra.mxu0 0.0
    %2325 = vmatprep.subr.mxu0 0.0
    %2326 = vmatpush2.msra.mxu0 0.0
    %2327 = vmatprep.subr.mxu0 0.0
    %2328 = vmatpush2.msra.mxu0 0.0
    %2329 = vmatprep.subr.mxu0 0.0
    %2330 = vmatpush2.msra.mxu0 0.0
    %2331 = vmatprep.subr.mxu0 0.0
    %2332 = vmatpush2.msra.mxu0 0.0
    %2333 = vmatprep.subr.mxu0 0.0
    %2334 = vmatpush2.msra.mxu0 0.0
    %2335 = vmatprep.subr.mxu0 0.0
    %2336 = vmatpush2.msra.mxu0 0.0
    %2337 = vmatprep.subr.mxu0 0.0
    %2338 = vmatpush2.msra.mxu0 0.0
    %2339 = vmatprep.subr.mxu0 0.0
    %2340 = vmatpush2.msra.mxu0 0.0
    %2341 = vmatprep.subr.mxu0 0.0
    %2342 = vmatpush2.msra.mxu0 0.0
    %2343 = vmatprep.subr.mxu0 0.0
    %2344 = vmatpush2.msra.mxu0 0.0
    %2345 = vmatprep.subr.mxu0 0.0
    %2346 = vmatpush2.msra.mxu0 0.0
    %2347 = vmatprep.subr.mxu0 0.0
    %2348 = vmatpush2.msra.mxu0 0.0
    %2349 = vmatprep.mubr.f32.mxu0 0.0
    %2350 = vmatmul.mubr.f32.gmra.mxu0 %v2283
    %v2351 = vpop.f32.mrf.mxu0
    %v2352 = vadd.f32 %v2277, %v2351
    %v2353 = vpop.f32.mrf.mxu0
    %2354 = vdwg.mxu0
    %v2355 = vadd.f32 %v2352, %v197
    %v2356 = vxor.u32 %v2355, 2147483648
    %v2357 = vmul.f32 %v2356, 1.442695
    %v2358 = vpow.pop %v2357
    %v2359 = vadd.f32 %v2358, 1.0
    %v2360 = vrcp.pop %v2359
    %v2361 = vmul.f32 1.0, %v2360
    %v2362 = vtanh.pop %v2355
    %v2363 = vmul.f32 %v2361, %v2011
    %2365 = vrot.lane.b32.xlu0 %v2362, 32
    %v2366 = vpop.permute.xlu0 %2365
    %v2368 = vmul.f32 %v2361, %v2366
    %2370 = vrot.lane.b32.xlu0 %v2368, 32
    %v2371 = vpop.permute.xlu0 %2370
    %v2373 = vadd.f32 %v2363, %v2371
    %v2374 = vtanh.pop %v2373
    %2376 = vrot.lane.b32.xlu0 %v2374, 32
    %v2377 = vpop.permute.xlu0 %2376
    %v2379 = vmul.f32 %v2361, %v2377
    %2381 = vrot.lane.b32.xlu0 %v2379, 64
    %v2382 = vpop.permute.xlu0 %2381
    %s2384 = scalar_lea.vmem [#allocation2], 40
    %2385 = vst.msk [vmem:[%s2384] sm:$0xff] %vm220, %v2382
    %s2386 = scalar_lea.vmem [#allocation3], 48
    %v2387 = vld [vmem:[%s2386] sm:$0xff]
    %v2388 = vmax.f32 %v2387, 0.0
    %v2389 = vld [vmem:[#allocation6] sm:$0xff]
    %v2390 = vld [vmem:[#allocation8] sm:$0xff]
    %v2391 = vld [vmem:[#allocation8 + $0x8] sm:$0xff]
    %v2392 = vld [vmem:[#allocation8 + $0x10] sm:$0xff]
    %v2393 = vld [vmem:[#allocation8 + $0x18] sm:$0xff]
    %2394 = vmatprep.subr.mxu0 0.0
    %2395 = vmatpush1.msra.mxu0 0.0
    %2396 = vmatprep.subr.mxu0 0.0
    %2397 = vmatpush1.msra.mxu0 0.0
    %2398 = vmatprep.subr.mxu0 0.0
    %2399 = vmatpush1.msra.mxu0 0.0
    %2400 = vmatprep.subr.mxu0 0.0
    %2401 = vmatpush1.msra.mxu0 0.0
    %2402 = vmatprep.subr.mxu0 0.0
    %2403 = vmatpush1.msra.mxu0 0.0
    %2404 = vmatprep.subr.mxu0 0.0
    %2405 = vmatpush1.msra.mxu0 0.0
    %2406 = vmatprep.subr.mxu0 0.0
    %2407 = vmatpush1.msra.mxu0 0.0
    %2408 = vmatprep.subr.mxu0 0.0
    %2409 = vmatpush1.msra.mxu0 0.0
    %2410 = vmatprep.subr.mxu0 0.0
    %2411 = vmatpush1.msra.mxu0 0.0
    %2412 = vmatprep.subr.mxu0 0.0
    %2413 = vmatpush1.msra.mxu0 0.0
    %2414 = vmatprep.subr.mxu0 0.0
    %2415 = vmatpush1.msra.mxu0 0.0
    %2416 = vmatprep.subr.mxu0 0.0
    %2417 = vmatpush1.msra.mxu0 0.0
    %2418 = vmatprep.subr.mxu0 0.0
    %2419 = vmatpush1.msra.mxu0 %v2393
    %2420 = vmatprep.subr.mxu0 0.0
    %2421 = vmatpush1.msra.mxu0 %v2392
    %2422 = vmatprep.subr.mxu0 0.0
    %2423 = vmatpush1.msra.mxu0 %v2391
    %2424 = vmatprep.subr.mxu0 0.0
    %2425 = vmatpush1.msra.mxu0 %v2390
    %2426 = vmatprep.subr.mxu0 0.0
    %2427 = vmatpush2.msra.mxu0 0.0
    %2428 = vmatprep.subr.mxu0 0.0
    %2429 = vmatpush2.msra.mxu0 0.0
    %2430 = vmatprep.subr.mxu0 0.0
    %2431 = vmatpush2.msra.mxu0 0.0
    %2432 = vmatprep.subr.mxu0 0.0
    %2433 = vmatpush2.msra.mxu0 0.0
    %2434 = vmatprep.subr.mxu0 0.0
    %2435 = vmatpush2.msra.mxu0 0.0
    %2436 = vmatprep.subr.mxu0 0.0
    %2437 = vmatpush2.msra.mxu0 0.0
    %2438 = vmatprep.subr.mxu0 0.0
    %2439 = vmatpush2.msra.mxu0 0.0
    %2440 = vmatprep.subr.mxu0 0.0
    %2441 = vmatpush2.msra.mxu0 0.0
    %2442 = vmatprep.subr.mxu0 0.0
    %2443 = vmatpush2.msra.mxu0 0.0
    %2444 = vmatprep.subr.mxu0 0.0
    %2445 = vmatpush2.msra.mxu0 0.0
    %2446 = vmatprep.subr.mxu0 0.0
    %2447 = vmatpush2.msra.mxu0 0.0
    %2448 = vmatprep.subr.mxu0 0.0
    %2449 = vmatpush2.msra.mxu0 0.0
    %2450 = vmatprep.subr.mxu0 0.0
    %2451 = vmatpush2.msra.mxu0 0.0
    %2452 = vmatprep.subr.mxu0 0.0
    %2453 = vmatpush2.msra.mxu0 0.0
    %2454 = vmatprep.subr.mxu0 0.0
    %2455 = vmatpush2.msra.mxu0 0.0
    %2456 = vmatprep.subr.mxu0 0.0
    %2457 = vmatpush2.msra.mxu0 0.0
    %2458 = vmatprep.mubr.f32.mxu0 0.0
    %2459 = vmatmul.mubr.f32.gmra.mxu0 %v2283
    %v2460 = vpop.f32.mrf.mxu0
    %v2461 = vadd.f32 0.0, %v2460
    %v2462 = vpop.f32.mrf.mxu0
    %2463 = vdwg.mxu0
    %v2465 = vsel %vm294, %v2388, 0
    %2467 = vmatprep.subr.mxu0 0.0
    %2468 = vmatpush1.msra.mxu0 0.0
    %2469 = vmatprep.subr.mxu0 0.0
    %2470 = vmatpush1.msra.mxu0 0.0
    %2471 = vmatprep.subr.mxu0 0.0
    %2472 = vmatpush1.msra.mxu0 0.0
    %2473 = vmatprep.subr.mxu0 0.0
    %2474 = vmatpush1.msra.mxu0 0.0
    %2475 = vmatprep.subr.mxu0 0.0
    %2476 = vmatpush1.msra.mxu0 0.0
    %2477 = vmatprep.subr.mxu0 0.0
    %2478 = vmatpush1.msra.mxu0 0.0
    %2479 = vmatprep.subr.mxu0 0.0
    %2480 = vmatpush1.msra.mxu0 0.0
    %2481 = vmatprep.subr.mxu0 0.0
    %2482 = vmatpush1.msra.mxu0 0.0
    %2483 = vmatprep.subr.mxu0 0.0
    %2484 = vmatpush1.msra.mxu0 0.0
    %2485 = vmatprep.subr.mxu0 0.0
    %2486 = vmatpush1.msra.mxu0 0.0
    %2487 = vmatprep.subr.mxu0 0.0
    %2488 = vmatpush1.msra.mxu0 0.0
    %2489 = vmatprep.subr.mxu0 0.0
    %2490 = vmatpush1.msra.mxu0 0.0
    %2491 = vmatprep.subr.mxu0 0.0
    %2492 = vmatpush1.msra.mxu0 0.0
    %2493 = vmatprep.subr.mxu0 0.0
    %2494 = vmatpush1.msra.mxu0 0.0
    %2495 = vmatprep.subr.mxu0 0.0
    %2496 = vmatpush1.msra.mxu0 0.0
    %2497 = vmatprep.subr.mxu0 0.0
    %2498 = vmatpush1.msra.mxu0 %v2389
    %2499 = vmatprep.subr.mxu0 0.0
    %2500 = vmatpush2.msra.mxu0 0.0
    %2501 = vmatprep.subr.mxu0 0.0
    %2502 = vmatpush2.msra.mxu0 0.0
    %2503 = vmatprep.subr.mxu0 0.0
    %2504 = vmatpush2.msra.mxu0 0.0
    %2505 = vmatprep.subr.mxu0 0.0
    %2506 = vmatpush2.msra.mxu0 0.0
    %2507 = vmatprep.subr.mxu0 0.0
    %2508 = vmatpush2.msra.mxu0 0.0
    %2509 = vmatprep.subr.mxu0 0.0
    %2510 = vmatpush2.msra.mxu0 0.0
    %2511 = vmatprep.subr.mxu0 0.0
    %2512 = vmatpush2.msra.mxu0 0.0
    %2513 = vmatprep.subr.mxu0 0.0
    %2514 = vmatpush2.msra.mxu0 0.0
    %2515 = vmatprep.subr.mxu0 0.0
    %2516 = vmatpush2.msra.mxu0 0.0
    %2517 = vmatprep.subr.mxu0 0.0
    %2518 = vmatpush2.msra.mxu0 0.0
    %2519 = vmatprep.subr.mxu0 0.0
    %2520 = vmatpush2.msra.mxu0 0.0
    %2521 = vmatprep.subr.mxu0 0.0
    %2522 = vmatpush2.msra.mxu0 0.0
    %2523 = vmatprep.subr.mxu0 0.0
    %2524 = vmatpush2.msra.mxu0 0.0
    %2525 = vmatprep.subr.mxu0 0.0
    %2526 = vmatpush2.msra.mxu0 0.0
    %2527 = vmatprep.subr.mxu0 0.0
    %2528 = vmatpush2.msra.mxu0 0.0
    %2529 = vmatprep.subr.mxu0 0.0
    %2530 = vmatpush2.msra.mxu0 0.0
    %2531 = vmatprep.mubr.f32.mxu0 0.0
    %2532 = vmatmul.mubr.f32.gmra.mxu0 %v2465
    %v2533 = vpop.f32.mrf.mxu0
    %v2534 = vadd.f32 %v2461, %v2533
    %v2535 = vpop.f32.mrf.mxu0
    %2536 = vdwg.mxu0
    %v2537 = vadd.f32 %v2534, %v190
    %v2538 = vxor.u32 %v2537, 2147483648
    %v2539 = vmul.f32 %v2538, 1.442695
    %v2540 = vpow.pop %v2539
    %v2541 = vadd.f32 %v2540, 1.0
    %v2542 = vrcp.pop %v2541
    %v2543 = vmul.f32 1.0, %v2542
    %v2544 = vtanh.pop %v2537
    %v2545 = vmul.f32 %v2543, %v2193
    %2547 = vrot.lane.b32.xlu0 %v2544, 32
    %v2548 = vpop.permute.xlu0 %2547
    %v2550 = vmul.f32 %v2543, %v2548
    %2552 = vrot.lane.b32.xlu0 %v2550, 32
    %v2553 = vpop.permute.xlu0 %2552
    %v2555 = vadd.f32 %v2545, %v2553
    %v2556 = vtanh.pop %v2555
    %2558 = vrot.lane.b32.xlu0 %v2556, 32
    %v2559 = vpop.permute.xlu0 %2558
    %v2561 = vmul.f32 %v2543, %v2559
    %v2562 = vld [vmem:[#allocation9] sm:$0xff]
    %v2563 = vld [vmem:[#allocation9 + $0x8] sm:$0xff]
    %v2564 = vld [vmem:[#allocation9 + $0x10] sm:$0xff]
    %v2565 = vld [vmem:[#allocation9 + $0x18] sm:$0xff]
    %v2566 = vld [vmem:[#allocation11] sm:$0xff]
    %v2567 = vld [vmem:[#allocation11 + $0x8] sm:$0xff]
    %v2568 = vld [vmem:[#allocation11 + $0x10] sm:$0xff]
    %v2569 = vld [vmem:[#allocation11 + $0x18] sm:$0xff]
    %v2570 = vsel %vm220, %v2382, 0
    %2572 = vmatprep.subr.mxu0 0.0
    %2573 = vmatpush1.msra.mxu0 0.0
    %2574 = vmatprep.subr.mxu0 0.0
    %2575 = vmatpush1.msra.mxu0 0.0
    %2576 = vmatprep.subr.mxu0 0.0
    %2577 = vmatpush1.msra.mxu0 0.0
    %2578 = vmatprep.subr.mxu0 0.0
    %2579 = vmatpush1.msra.mxu0 0.0
    %2580 = vmatprep.subr.mxu0 0.0
    %2581 = vmatpush1.msra.mxu0 0.0
    %2582 = vmatprep.subr.mxu0 0.0
    %2583 = vmatpush1.msra.mxu0 0.0
    %2584 = vmatprep.subr.mxu0 0.0
    %2585 = vmatpush1.msra.mxu0 0.0
    %2586 = vmatprep.subr.mxu0 0.0
    %2587 = vmatpush1.msra.mxu0 0.0
    %2588 = vmatprep.subr.mxu0 0.0
    %2589 = vmatpush1.msra.mxu0 0.0
    %2590 = vmatprep.subr.mxu0 0.0
    %2591 = vmatpush1.msra.mxu0 0.0
    %2592 = vmatprep.subr.mxu0 0.0
    %2593 = vmatpush1.msra.mxu0 0.0
    %2594 = vmatprep.subr.mxu0 0.0
    %2595 = vmatpush1.msra.mxu0 0.0
    %2596 = vmatprep.subr.mxu0 0.0
    %2597 = vmatpush1.msra.mxu0 %v2569
    %2598 = vmatprep.subr.mxu0 0.0
    %2599 = vmatpush1.msra.mxu0 %v2568
    %2600 = vmatprep.subr.mxu0 0.0
    %2601 = vmatpush1.msra.mxu0 %v2567
    %2602 = vmatprep.subr.mxu0 0.0
    %2603 = vmatpush1.msra.mxu0 %v2566
    %2604 = vmatprep.subr.mxu0 0.0
    %2605 = vmatpush2.msra.mxu0 0.0
    %2606 = vmatprep.subr.mxu0 0.0
    %2607 = vmatpush2.msra.mxu0 0.0
    %2608 = vmatprep.subr.mxu0 0.0
    %2609 = vmatpush2.msra.mxu0 0.0
    %2610 = vmatprep.subr.mxu0 0.0
    %2611 = vmatpush2.msra.mxu0 0.0
    %2612 = vmatprep.subr.mxu0 0.0
    %2613 = vmatpush2.msra.mxu0 0.0
    %2614 = vmatprep.subr.mxu0 0.0
    %2615 = vmatpush2.msra.mxu0 0.0
    %2616 = vmatprep.subr.mxu0 0.0
    %2617 = vmatpush2.msra.mxu0 0.0
    %2618 = vmatprep.subr.mxu0 0.0
    %2619 = vmatpush2.msra.mxu0 0.0
    %2620 = vmatprep.subr.mxu0 0.0
    %2621 = vmatpush2.msra.mxu0 0.0
    %2622 = vmatprep.subr.mxu0 0.0
    %2623 = vmatpush2.msra.mxu0 0.0
    %2624 = vmatprep.subr.mxu0 0.0
    %2625 = vmatpush2.msra.mxu0 0.0
    %2626 = vmatprep.subr.mxu0 0.0
    %2627 = vmatpush2.msra.mxu0 0.0
    %2628 = vmatprep.subr.mxu0 0.0
    %2629 = vmatpush2.msra.mxu0 0.0
    %2630 = vmatprep.subr.mxu0 0.0
    %2631 = vmatpush2.msra.mxu0 0.0
    %2632 = vmatprep.subr.mxu0 0.0
    %2633 = vmatpush2.msra.mxu0 0.0
    %2634 = vmatprep.subr.mxu0 0.0
    %2635 = vmatpush2.msra.mxu0 0.0
    %2636 = vmatprep.mubr.f32.mxu0 0.0
    %2637 = vmatmul.mubr.f32.gmra.mxu0 %v2570
    %v2638 = vpop.f32.mrf.mxu0
    %v2639 = vadd.f32 0.0, %v2638
    %v2640 = vpop.f32.mrf.mxu0
    %2641 = vdwg.mxu0
    %2643 = vrot.lane.b32.xlu0 %v2561, 64
    %v2644 = vpop.permute.xlu0 %2643
    %v2645 = vsel %vm220, %v2644, 0
    %2647 = vmatprep.subr.mxu0 0.0
    %2648 = vmatpush1.msra.mxu0 0.0
    %2649 = vmatprep.subr.mxu0 0.0
    %2650 = vmatpush1.msra.mxu0 0.0
    %2651 = vmatprep.subr.mxu0 0.0
    %2652 = vmatpush1.msra.mxu0 0.0
    %2653 = vmatprep.subr.mxu0 0.0
    %2654 = vmatpush1.msra.mxu0 0.0
    %2655 = vmatprep.subr.mxu0 0.0
    %2656 = vmatpush1.msra.mxu0 0.0
    %2657 = vmatprep.subr.mxu0 0.0
    %2658 = vmatpush1.msra.mxu0 0.0
    %2659 = vmatprep.subr.mxu0 0.0
    %2660 = vmatpush1.msra.mxu0 0.0
    %2661 = vmatprep.subr.mxu0 0.0
    %2662 = vmatpush1.msra.mxu0 0.0
    %2663 = vmatprep.subr.mxu0 0.0
    %2664 = vmatpush1.msra.mxu0 0.0
    %2665 = vmatprep.subr.mxu0 0.0
    %2666 = vmatpush1.msra.mxu0 0.0
    %2667 = vmatprep.subr.mxu0 0.0
    %2668 = vmatpush1.msra.mxu0 0.0
    %2669 = vmatprep.subr.mxu0 0.0
    %2670 = vmatpush1.msra.mxu0 0.0
    %2671 = vmatprep.subr.mxu0 0.0
    %2672 = vmatpush1.msra.mxu0 %v2565
    %2673 = vmatprep.subr.mxu0 0.0
    %2674 = vmatpush1.msra.mxu0 %v2564
    %2675 = vmatprep.subr.mxu0 0.0
    %2676 = vmatpush1.msra.mxu0 %v2563
    %2677 = vmatprep.subr.mxu0 0.0
    %2678 = vmatpush1.msra.mxu0 %v2562
    %2679 = vmatprep.subr.mxu0 0.0
    %2680 = vmatpush2.msra.mxu0 0.0
    %2681 = vmatprep.subr.mxu0 0.0
    %2682 = vmatpush2.msra.mxu0 0.0
    %2683 = vmatprep.subr.mxu0 0.0
    %2684 = vmatpush2.msra.mxu0 0.0
    %2685 = vmatprep.subr.mxu0 0.0
    %2686 = vmatpush2.msra.mxu0 0.0
    %2687 = vmatprep.subr.mxu0 0.0
    %2688 = vmatpush2.msra.mxu0 0.0
    %2689 = vmatprep.subr.mxu0 0.0
    %2690 = vmatpush2.msra.mxu0 0.0
    %2691 = vmatprep.subr.mxu0 0.0
    %2692 = vmatpush2.msra.mxu0 0.0
    %2693 = vmatprep.subr.mxu0 0.0
    %2694 = vmatpush2.msra.mxu0 0.0
    %2695 = vmatprep.subr.mxu0 0.0
    %2696 = vmatpush2.msra.mxu0 0.0
    %2697 = vmatprep.subr.mxu0 0.0
    %2698 = vmatpush2.msra.mxu0 0.0
    %2699 = vmatprep.subr.mxu0 0.0
    %2700 = vmatpush2.msra.mxu0 0.0
    %2701 = vmatprep.subr.mxu0 0.0
    %2702 = vmatpush2.msra.mxu0 0.0
    %2703 = vmatprep.subr.mxu0 0.0
    %2704 = vmatpush2.msra.mxu0 0.0
    %2705 = vmatprep.subr.mxu0 0.0
    %2706 = vmatpush2.msra.mxu0 0.0
    %2707 = vmatprep.subr.mxu0 0.0
    %2708 = vmatpush2.msra.mxu0 0.0
    %2709 = vmatprep.subr.mxu0 0.0
    %2710 = vmatpush2.msra.mxu0 0.0
    %2711 = vmatprep.mubr.f32.mxu0 0.0
    %2712 = vmatmul.mubr.f32.gmra.mxu0 %v2645
    %v2713 = vpop.f32.mrf.mxu0
    %v2714 = vadd.f32 %v2639, %v2713
    %v2715 = vpop.f32.mrf.mxu0
    %2716 = vdwg.mxu0
    %v2717 = vadd.f32 %v2714, %v197
    %v2718 = vxor.u32 %v2717, 2147483648
    %v2719 = vmul.f32 %v2718, 1.442695
    %v2720 = vpow.pop %v2719
    %v2721 = vadd.f32 %v2720, 1.0
    %v2722 = vrcp.pop %v2721
    %v2723 = vmul.f32 1.0, %v2722
    %v2724 = vtanh.pop %v2717
    %v2725 = vmul.f32 %v2723, %v2373
    %2727 = vrot.lane.b32.xlu0 %v2724, 32
    %v2728 = vpop.permute.xlu0 %2727
    %v2730 = vmul.f32 %v2723, %v2728
    %2732 = vrot.lane.b32.xlu0 %v2730, 32
    %v2733 = vpop.permute.xlu0 %2732
    %v2735 = vadd.f32 %v2725, %v2733
    %v2736 = vtanh.pop %v2735
    %2738 = vrot.lane.b32.xlu0 %v2736, 32
    %v2739 = vpop.permute.xlu0 %2738
    %v2741 = vmul.f32 %v2723, %v2739
    %2743 = vrot.lane.b32.xlu0 %v2741, 64
    %v2744 = vpop.permute.xlu0 %2743
    %s2746 = scalar_lea.vmem [#allocation2], 48
    %2747 = vst.msk [vmem:[%s2746] sm:$0xff] %vm220, %v2744
    %s2748 = scalar_lea.vmem [#allocation3], 56
    %v2749 = vld [vmem:[%s2748] sm:$0xff]
    %v2750 = vmax.f32 %v2749, 0.0
    %v2751 = vld [vmem:[#allocation6] sm:$0xff]
    %v2752 = vld [vmem:[#allocation8] sm:$0xff]
    %v2753 = vld [vmem:[#allocation8 + $0x8] sm:$0xff]
    %v2754 = vld [vmem:[#allocation8 + $0x10] sm:$0xff]
    %v2755 = vld [vmem:[#allocation8 + $0x18] sm:$0xff]
    %2756 = vmatprep.subr.mxu0 0.0
    %2757 = vmatpush1.msra.mxu0 0.0
    %2758 = vmatprep.subr.mxu0 0.0
    %2759 = vmatpush1.msra.mxu0 0.0
    %2760 = vmatprep.subr.mxu0 0.0
    %2761 = vmatpush1.msra.mxu0 0.0
    %2762 = vmatprep.subr.mxu0 0.0
    %2763 = vmatpush1.msra.mxu0 0.0
    %2764 = vmatprep.subr.mxu0 0.0
    %2765 = vmatpush1.msra.mxu0 0.0
    %2766 = vmatprep.subr.mxu0 0.0
    %2767 = vmatpush1.msra.mxu0 0.0
    %2768 = vmatprep.subr.mxu0 0.0
    %2769 = vmatpush1.msra.mxu0 0.0
    %2770 = vmatprep.subr.mxu0 0.0
    %2771 = vmatpush1.msra.mxu0 0.0
    %2772 = vmatprep.subr.mxu0 0.0
    %2773 = vmatpush1.msra.mxu0 0.0
    %2774 = vmatprep.subr.mxu0 0.0
    %2775 = vmatpush1.msra.mxu0 0.0
    %2776 = vmatprep.subr.mxu0 0.0
    %2777 = vmatpush1.msra.mxu0 0.0
    %2778 = vmatprep.subr.mxu0 0.0
    %2779 = vmatpush1.msra.mxu0 0.0
    %2780 = vmatprep.subr.mxu0 0.0
    %2781 = vmatpush1.msra.mxu0 %v2755
    %2782 = vmatprep.subr.mxu0 0.0
    %2783 = vmatpush1.msra.mxu0 %v2754
    %2784 = vmatprep.subr.mxu0 0.0
    %2785 = vmatpush1.msra.mxu0 %v2753
    %2786 = vmatprep.subr.mxu0 0.0
    %2787 = vmatpush1.msra.mxu0 %v2752
    %2788 = vmatprep.subr.mxu0 0.0
    %2789 = vmatpush2.msra.mxu0 0.0
    %2790 = vmatprep.subr.mxu0 0.0
    %2791 = vmatpush2.msra.mxu0 0.0
    %2792 = vmatprep.subr.mxu0 0.0
    %2793 = vmatpush2.msra.mxu0 0.0
    %2794 = vmatprep.subr.mxu0 0.0
    %2795 = vmatpush2.msra.mxu0 0.0
    %2796 = vmatprep.subr.mxu0 0.0
    %2797 = vmatpush2.msra.mxu0 0.0
    %2798 = vmatprep.subr.mxu0 0.0
    %2799 = vmatpush2.msra.mxu0 0.0
    %2800 = vmatprep.subr.mxu0 0.0
    %2801 = vmatpush2.msra.mxu0 0.0
    %2802 = vmatprep.subr.mxu0 0.0
    %2803 = vmatpush2.msra.mxu0 0.0
    %2804 = vmatprep.subr.mxu0 0.0
    %2805 = vmatpush2.msra.mxu0 0.0
    %2806 = vmatprep.subr.mxu0 0.0
    %2807 = vmatpush2.msra.mxu0 0.0
    %2808 = vmatprep.subr.mxu0 0.0
    %2809 = vmatpush2.msra.mxu0 0.0
    %2810 = vmatprep.subr.mxu0 0.0
    %2811 = vmatpush2.msra.mxu0 0.0
    %2812 = vmatprep.subr.mxu0 0.0
    %2813 = vmatpush2.msra.mxu0 0.0
    %2814 = vmatprep.subr.mxu0 0.0
    %2815 = vmatpush2.msra.mxu0 0.0
    %2816 = vmatprep.subr.mxu0 0.0
    %2817 = vmatpush2.msra.mxu0 0.0
    %2818 = vmatprep.subr.mxu0 0.0
    %2819 = vmatpush2.msra.mxu0 0.0
    %2820 = vmatprep.mubr.f32.mxu0 0.0
    %2821 = vmatmul.mubr.f32.gmra.mxu0 %v2645
    %v2822 = vpop.f32.mrf.mxu0
    %v2823 = vadd.f32 0.0, %v2822
    %v2824 = vpop.f32.mrf.mxu0
    %2825 = vdwg.mxu0
    %v2827 = vsel %vm294, %v2750, 0
    %2829 = vmatprep.subr.mxu0 0.0
    %2830 = vmatpush1.msra.mxu0 0.0
    %2831 = vmatprep.subr.mxu0 0.0
    %2832 = vmatpush1.msra.mxu0 0.0
    %2833 = vmatprep.subr.mxu0 0.0
    %2834 = vmatpush1.msra.mxu0 0.0
    %2835 = vmatprep.subr.mxu0 0.0
    %2836 = vmatpush1.msra.mxu0 0.0
    %2837 = vmatprep.subr.mxu0 0.0
    %2838 = vmatpush1.msra.mxu0 0.0
    %2839 = vmatprep.subr.mxu0 0.0
    %2840 = vmatpush1.msra.mxu0 0.0
    %2841 = vmatprep.subr.mxu0 0.0
    %2842 = vmatpush1.msra.mxu0 0.0
    %2843 = vmatprep.subr.mxu0 0.0
    %2844 = vmatpush1.msra.mxu0 0.0
    %2845 = vmatprep.subr.mxu0 0.0
    %2846 = vmatpush1.msra.mxu0 0.0
    %2847 = vmatprep.subr.mxu0 0.0
    %2848 = vmatpush1.msra.mxu0 0.0
    %2849 = vmatprep.subr.mxu0 0.0
    %2850 = vmatpush1.msra.mxu0 0.0
    %2851 = vmatprep.subr.mxu0 0.0
    %2852 = vmatpush1.msra.mxu0 0.0
    %2853 = vmatprep.subr.mxu0 0.0
    %2854 = vmatpush1.msra.mxu0 0.0
    %2855 = vmatprep.subr.mxu0 0.0
    %2856 = vmatpush1.msra.mxu0 0.0
    %2857 = vmatprep.subr.mxu0 0.0
    %2858 = vmatpush1.msra.mxu0 0.0
    %2859 = vmatprep.subr.mxu0 0.0
    %2860 = vmatpush1.msra.mxu0 %v2751
    %2861 = vmatprep.subr.mxu0 0.0
    %2862 = vmatpush2.msra.mxu0 0.0
    %2863 = vmatprep.subr.mxu0 0.0
    %2864 = vmatpush2.msra.mxu0 0.0
    %2865 = vmatprep.subr.mxu0 0.0
    %2866 = vmatpush2.msra.mxu0 0.0
    %2867 = vmatprep.subr.mxu0 0.0
    %2868 = vmatpush2.msra.mxu0 0.0
    %2869 = vmatprep.subr.mxu0 0.0
    %2870 = vmatpush2.msra.mxu0 0.0
    %2871 = vmatprep.subr.mxu0 0.0
    %2872 = vmatpush2.msra.mxu0 0.0
    %2873 = vmatprep.subr.mxu0 0.0
    %2874 = vmatpush2.msra.mxu0 0.0
    %2875 = vmatprep.subr.mxu0 0.0
    %2876 = vmatpush2.msra.mxu0 0.0
    %2877 = vmatprep.subr.mxu0 0.0
    %2878 = vmatpush2.msra.mxu0 0.0
    %2879 = vmatprep.subr.mxu0 0.0
    %2880 = vmatpush2.msra.mxu0 0.0
    %2881 = vmatprep.subr.mxu0 0.0
    %2882 = vmatpush2.msra.mxu0 0.0
    %2883 = vmatprep.subr.mxu0 0.0
    %2884 = vmatpush2.msra.mxu0 0.0
    %2885 = vmatprep.subr.mxu0 0.0
    %2886 = vmatpush2.msra.mxu0 0.0
    %2887 = vmatprep.subr.mxu0 0.0
    %2888 = vmatpush2.msra.mxu0 0.0
    %2889 = vmatprep.subr.mxu0 0.0
    %2890 = vmatpush2.msra.mxu0 0.0
    %2891 = vmatprep.subr.mxu0 0.0
    %2892 = vmatpush2.msra.mxu0 0.0
    %2893 = vmatprep.mubr.f32.mxu0 0.0
    %2894 = vmatmul.mubr.f32.gmra.mxu0 %v2827
    %v2895 = vpop.f32.mrf.mxu0
    %v2896 = vadd.f32 %v2823, %v2895
    %v2897 = vpop.f32.mrf.mxu0
    %2898 = vdwg.mxu0
    %v2899 = vadd.f32 %v2896, %v190
    %v2900 = vxor.u32 %v2899, 2147483648
    %v2901 = vmul.f32 %v2900, 1.442695
    %v2902 = vpow.pop %v2901
    %v2903 = vadd.f32 %v2902, 1.0
    %v2904 = vrcp.pop %v2903
    %v2905 = vmul.f32 1.0, %v2904
    %v2906 = vtanh.pop %v2899
    %v2907 = vmul.f32 %v2905, %v2555
    %2909 = vrot.lane.b32.xlu0 %v2906, 32
    %v2910 = vpop.permute.xlu0 %2909
    %v2912 = vmul.f32 %v2905, %v2910
    %2914 = vrot.lane.b32.xlu0 %v2912, 32
    %v2915 = vpop.permute.xlu0 %2914
    %v2917 = vadd.f32 %v2907, %v2915
    %v2918 = vtanh.pop %v2917
    %2920 = vrot.lane.b32.xlu0 %v2918, 32
    %v2921 = vpop.permute.xlu0 %2920
    %v2923 = vmul.f32 %v2905, %v2921
    %v2924 = vld [vmem:[#allocation9] sm:$0xff]
    %v2925 = vld [vmem:[#allocation9 + $0x8] sm:$0xff]
    %v2926 = vld [vmem:[#allocation9 + $0x10] sm:$0xff]
    %v2927 = vld [vmem:[#allocation9 + $0x18] sm:$0xff]
    %v2928 = vld [vmem:[#allocation11] sm:$0xff]
    %v2929 = vld [vmem:[#allocation11 + $0x8] sm:$0xff]
    %v2930 = vld [vmem:[#allocation11 + $0x10] sm:$0xff]
    %v2931 = vld [vmem:[#allocation11 + $0x18] sm:$0xff]
    %v2932 = vsel %vm220, %v2744, 0
    %2934 = vmatprep.subr.mxu0 0.0
    %2935 = vmatpush1.msra.mxu0 0.0
    %2936 = vmatprep.subr.mxu0 0.0
    %2937 = vmatpush1.msra.mxu0 0.0
    %2938 = vmatprep.subr.mxu0 0.0
    %2939 = vmatpush1.msra.mxu0 0.0
    %2940 = vmatprep.subr.mxu0 0.0
    %2941 = vmatpush1.msra.mxu0 0.0
    %2942 = vmatprep.subr.mxu0 0.0
    %2943 = vmatpush1.msra.mxu0 0.0
    %2944 = vmatprep.subr.mxu0 0.0
    %2945 = vmatpush1.msra.mxu0 0.0
    %2946 = vmatprep.subr.mxu0 0.0
    %2947 = vmatpush1.msra.mxu0 0.0
    %2948 = vmatprep.subr.mxu0 0.0
    %2949 = vmatpush1.msra.mxu0 0.0
    %2950 = vmatprep.subr.mxu0 0.0
    %2951 = vmatpush1.msra.mxu0 0.0
    %2952 = vmatprep.subr.mxu0 0.0
    %2953 = vmatpush1.msra.mxu0 0.0
    %2954 = vmatprep.subr.mxu0 0.0
    %2955 = vmatpush1.msra.mxu0 0.0
    %2956 = vmatprep.subr.mxu0 0.0
    %2957 = vmatpush1.msra.mxu0 0.0
    %2958 = vmatprep.subr.mxu0 0.0
    %2959 = vmatpush1.msra.mxu0 %v2931
    %2960 = vmatprep.subr.mxu0 0.0
    %2961 = vmatpush1.msra.mxu0 %v2930
    %2962 = vmatprep.subr.mxu0 0.0
    %2963 = vmatpush1.msra.mxu0 %v2929
    %2964 = vmatprep.subr.mxu0 0.0
    %2965 = vmatpush1.msra.mxu0 %v2928
    %2966 = vmatprep.subr.mxu0 0.0
    %2967 = vmatpush2.msra.mxu0 0.0
    %2968 = vmatprep.subr.mxu0 0.0
    %2969 = vmatpush2.msra.mxu0 0.0
    %2970 = vmatprep.subr.mxu0 0.0
    %2971 = vmatpush2.msra.mxu0 0.0
    %2972 = vmatprep.subr.mxu0 0.0
    %2973 = vmatpush2.msra.mxu0 0.0
    %2974 = vmatprep.subr.mxu0 0.0
    %2975 = vmatpush2.msra.mxu0 0.0
    %2976 = vmatprep.subr.mxu0 0.0
    %2977 = vmatpush2.msra.mxu0 0.0
    %2978 = vmatprep.subr.mxu0 0.0
    %2979 = vmatpush2.msra.mxu0 0.0
    %2980 = vmatprep.subr.mxu0 0.0
    %2981 = vmatpush2.msra.mxu0 0.0
    %2982 = vmatprep.subr.mxu0 0.0
    %2983 = vmatpush2.msra.mxu0 0.0
    %2984 = vmatprep.subr.mxu0 0.0
    %2985 = vmatpush2.msra.mxu0 0.0
    %2986 = vmatprep.subr.mxu0 0.0
    %2987 = vmatpush2.msra.mxu0 0.0
    %2988 = vmatprep.subr.mxu0 0.0
    %2989 = vmatpush2.msra.mxu0 0.0
    %2990 = vmatprep.subr.mxu0 0.0
    %2991 = vmatpush2.msra.mxu0 0.0
    %2992 = vmatprep.subr.mxu0 0.0
    %2993 = vmatpush2.msra.mxu0 0.0
    %2994 = vmatprep.subr.mxu0 0.0
    %2995 = vmatpush2.msra.mxu0 0.0
    %2996 = vmatprep.subr.mxu0 0.0
    %2997 = vmatpush2.msra.mxu0 0.0
    %2998 = vmatprep.mubr.f32.mxu0 0.0
    %2999 = vmatmul.mubr.f32.gmra.mxu0 %v2932
    %v3000 = vpop.f32.mrf.mxu0
    %v3001 = vadd.f32 0.0, %v3000
    %v3002 = vpop.f32.mrf.mxu0
    %3003 = vdwg.mxu0
    %3005 = vrot.lane.b32.xlu0 %v2923, 64
    %v3006 = vpop.permute.xlu0 %3005
    %v3007 = vsel %vm220, %v3006, 0
    %3009 = vmatprep.subr.mxu0 0.0
    %3010 = vmatpush1.msra.mxu0 0.0
    %3011 = vmatprep.subr.mxu0 0.0
    %3012 = vmatpush1.msra.mxu0 0.0
    %3013 = vmatprep.subr.mxu0 0.0
    %3014 = vmatpush1.msra.mxu0 0.0
    %3015 = vmatprep.subr.mxu0 0.0
    %3016 = vmatpush1.msra.mxu0 0.0
    %3017 = vmatprep.subr.mxu0 0.0
    %3018 = vmatpush1.msra.mxu0 0.0
    %3019 = vmatprep.subr.mxu0 0.0
    %3020 = vmatpush1.msra.mxu0 0.0
    %3021 = vmatprep.subr.mxu0 0.0
    %3022 = vmatpush1.msra.mxu0 0.0
    %3023 = vmatprep.subr.mxu0 0.0
    %3024 = vmatpush1.msra.mxu0 0.0
    %3025 = vmatprep.subr.mxu0 0.0
    %3026 = vmatpush1.msra.mxu0 0.0
    %3027 = vmatprep.subr.mxu0 0.0
    %3028 = vmatpush1.msra.mxu0 0.0
    %3029 = vmatprep.subr.mxu0 0.0
    %3030 = vmatpush1.msra.mxu0 0.0
    %3031 = vmatprep.subr.mxu0 0.0
    %3032 = vmatpush1.msra.mxu0 0.0
    %3033 = vmatprep.subr.mxu0 0.0
    %3034 = vmatpush1.msra.mxu0 %v2927
    %3035 = vmatprep.subr.mxu0 0.0
    %3036 = vmatpush1.msra.mxu0 %v2926
    %3037 = vmatprep.subr.mxu0 0.0
    %3038 = vmatpush1.msra.mxu0 %v2925
    %3039 = vmatprep.subr.mxu0 0.0
    %3040 = vmatpush1.msra.mxu0 %v2924
    %3041 = vmatprep.subr.mxu0 0.0
    %3042 = vmatpush2.msra.mxu0 0.0
    %3043 = vmatprep.subr.mxu0 0.0
    %3044 = vmatpush2.msra.mxu0 0.0
    %3045 = vmatprep.subr.mxu0 0.0
    %3046 = vmatpush2.msra.mxu0 0.0
    %3047 = vmatprep.subr.mxu0 0.0
    %3048 = vmatpush2.msra.mxu0 0.0
    %3049 = vmatprep.subr.mxu0 0.0
    %3050 = vmatpush2.msra.mxu0 0.0
    %3051 = vmatprep.subr.mxu0 0.0
    %3052 = vmatpush2.msra.mxu0 0.0
    %3053 = vmatprep.subr.mxu0 0.0
    %3054 = vmatpush2.msra.mxu0 0.0
    %3055 = vmatprep.subr.mxu0 0.0
    %3056 = vmatpush2.msra.mxu0 0.0
    %3057 = vmatprep.subr.mxu0 0.0
    %3058 = vmatpush2.msra.mxu0 0.0
    %3059 = vmatprep.subr.mxu0 0.0
    %3060 = vmatpush2.msra.mxu0 0.0
    %3061 = vmatprep.subr.mxu0 0.0
    %3062 = vmatpush2.msra.mxu0 0.0
    %3063 = vmatprep.subr.mxu0 0.0
    %3064 = vmatpush2.msra.mxu0 0.0
    %3065 = vmatprep.subr.mxu0 0.0
    %3066 = vmatpush2.msra.mxu0 0.0
    %3067 = vmatprep.subr.mxu0 0.0
    %3068 = vmatpush2.msra.mxu0 0.0
    %3069 = vmatprep.subr.mxu0 0.0
    %3070 = vmatpush2.msra.mxu0 0.0
    %3071 = vmatprep.subr.mxu0 0.0
    %3072 = vmatpush2.msra.mxu0 0.0
    %3073 = vmatprep.mubr.f32.mxu0 0.0
    %3074 = vmatmul.mubr.f32.gmra.mxu0 %v3007
    %v3075 = vpop.f32.mrf.mxu0
    %v3076 = vadd.f32 %v3001, %v3075
    %v3077 = vpop.f32.mrf.mxu0
    %3078 = vdwg.mxu0
    %v3079 = vadd.f32 %v3076, %v197
    %v3080 = vxor.u32 %v3079, 2147483648
    %v3081 = vmul.f32 %v3080, 1.442695
    %v3082 = vpow.pop %v3081
    %v3083 = vadd.f32 %v3082, 1.0
    %v3084 = vrcp.pop %v3083
    %v3085 = vmul.f32 1.0, %v3084
    %v3086 = vtanh.pop %v3079
    %v3087 = vmul.f32 %v3085, %v2735
    %3089 = vrot.lane.b32.xlu0 %v3086, 32
    %v3090 = vpop.permute.xlu0 %3089
    %v3092 = vmul.f32 %v3085, %v3090
    %3094 = vrot.lane.b32.xlu0 %v3092, 32
    %v3095 = vpop.permute.xlu0 %3094
    %v3097 = vadd.f32 %v3087, %v3095
    %v3098 = vtanh.pop %v3097
    %3100 = vrot.lane.b32.xlu0 %v3098, 32
    %v3101 = vpop.permute.xlu0 %3100
    %v3103 = vmul.f32 %v3085, %v3101
    %3105 = vrot.lane.b32.xlu0 %v3103, 64
    %v3106 = vpop.permute.xlu0 %3105
    %s3108 = scalar_lea.vmem [#allocation2], 56
    %3109 = vst.msk [vmem:[%s3108] sm:$0xff] %vm220, %v3106
    %v3110 = vld [vmem:[#allocation2] sm:$0xff]
    %v3111 = vmax.f32 %v3110, 0.0
    %v3112 = vld [vmem:[#allocation12] sm:$0xff]
    %v3113 = vld [vmem:[#allocation12 + $0x8] sm:$0xff]
    %v3114 = vld [vmem:[#allocation12 + $0x10] sm:$0xff]
    %v3115 = vld [vmem:[#allocation12 + $0x18] sm:$0xff]
    %v3116 = vld [vmem:[#allocation14] sm:$0xff]
    %v3117 = vld [vmem:[#allocation14 + $0x8] sm:$0xff]
    %v3118 = vld [vmem:[#allocation14 + $0x10] sm:$0xff]
    %v3119 = vld [vmem:[#allocation14 + $0x18] sm:$0xff]
    %3120 = vmatprep.subr.mxu0 0.0
    %3121 = vmatpush1.msra.mxu0 0.0
    %3122 = vmatprep.subr.mxu0 0.0
    %3123 = vmatpush1.msra.mxu0 0.0
    %3124 = vmatprep.subr.mxu0 0.0
    %3125 = vmatpush1.msra.mxu0 0.0
    %3126 = vmatprep.subr.mxu0 0.0
    %3127 = vmatpush1.msra.mxu0 0.0
    %3128 = vmatprep.subr.mxu0 0.0
    %3129 = vmatpush1.msra.mxu0 0.0
    %3130 = vmatprep.subr.mxu0 0.0
    %3131 = vmatpush1.msra.mxu0 0.0
    %3132 = vmatprep.subr.mxu0 0.0
    %3133 = vmatpush1.msra.mxu0 0.0
    %3134 = vmatprep.subr.mxu0 0.0
    %3135 = vmatpush1.msra.mxu0 0.0
    %3136 = vmatprep.subr.mxu0 0.0
    %3137 = vmatpush1.msra.mxu0 0.0
    %3138 = vmatprep.subr.mxu0 0.0
    %3139 = vmatpush1.msra.mxu0 0.0
    %3140 = vmatprep.subr.mxu0 0.0
    %3141 = vmatpush1.msra.mxu0 0.0
    %3142 = vmatprep.subr.mxu0 0.0
    %3143 = vmatpush1.msra.mxu0 0.0
    %3144 = vmatprep.subr.mxu0 0.0
    %3145 = vmatpush1.msra.mxu0 %v3119
    %3146 = vmatprep.subr.mxu0 0.0
    %3147 = vmatpush1.msra.mxu0 %v3118
    %3148 = vmatprep.subr.mxu0 0.0
    %3149 = vmatpush1.msra.mxu0 %v3117
    %3150 = vmatprep.subr.mxu0 0.0
    %3151 = vmatpush1.msra.mxu0 %v3116
    %3152 = vmatprep.subr.mxu0 0.0
    %3153 = vmatpush2.msra.mxu0 0.0
    %3154 = vmatprep.subr.mxu0 0.0
    %3155 = vmatpush2.msra.mxu0 0.0
    %3156 = vmatprep.subr.mxu0 0.0
    %3157 = vmatpush2.msra.mxu0 0.0
    %3158 = vmatprep.subr.mxu0 0.0
    %3159 = vmatpush2.msra.mxu0 0.0
    %3160 = vmatprep.subr.mxu0 0.0
    %3161 = vmatpush2.msra.mxu0 0.0
    %3162 = vmatprep.subr.mxu0 0.0
    %3163 = vmatpush2.msra.mxu0 0.0
    %3164 = vmatprep.subr.mxu0 0.0
    %3165 = vmatpush2.msra.mxu0 0.0
    %3166 = vmatprep.subr.mxu0 0.0
    %3167 = vmatpush2.msra.mxu0 0.0
    %3168 = vmatprep.subr.mxu0 0.0
    %3169 = vmatpush2.msra.mxu0 0.0
    %3170 = vmatprep.subr.mxu0 0.0
    %3171 = vmatpush2.msra.mxu0 0.0
    %3172 = vmatprep.subr.mxu0 0.0
    %3173 = vmatpush2.msra.mxu0 0.0
    %3174 = vmatprep.subr.mxu0 0.0
    %3175 = vmatpush2.msra.mxu0 0.0
    %3176 = vmatprep.subr.mxu0 0.0
    %3177 = vmatpush2.msra.mxu0 0.0
    %3178 = vmatprep.subr.mxu0 0.0
    %3179 = vmatpush2.msra.mxu0 0.0
    %3180 = vmatprep.subr.mxu0 0.0
    %3181 = vmatpush2.msra.mxu0 0.0
    %3182 = vmatprep.subr.mxu0 0.0
    %3183 = vmatpush2.msra.mxu0 0.0
    %3184 = vmatprep.mubr.f32.mxu0 0.0
    %3185 = vmatmul.mubr.f32.gmra.mxu0 %v3007
    %v3186 = vpop.f32.mrf.mxu0
    %v3187 = vadd.f32 0.0, %v3186
    %v3188 = vpop.f32.mrf.mxu0
    %3189 = vdwg.mxu0
    %v3191 = vsel %vm220, %v3111, 0
    %3193 = vmatprep.subr.mxu0 0.0
    %3194 = vmatpush1.msra.mxu0 0.0
    %3195 = vmatprep.subr.mxu0 0.0
    %3196 = vmatpush1.msra.mxu0 0.0
    %3197 = vmatprep.subr.mxu0 0.0
    %3198 = vmatpush1.msra.mxu0 0.0
    %3199 = vmatprep.subr.mxu0 0.0
    %3200 = vmatpush1.msra.mxu0 0.0
    %3201 = vmatprep.subr.mxu0 0.0
    %3202 = vmatpush1.msra.mxu0 0.0
    %3203 = vmatprep.subr.mxu0 0.0
    %3204 = vmatpush1.msra.mxu0 0.0
    %3205 = vmatprep.subr.mxu0 0.0
    %3206 = vmatpush1.msra.mxu0 0.0
    %3207 = vmatprep.subr.mxu0 0.0
    %3208 = vmatpush1.msra.mxu0 0.0
    %3209 = vmatprep.subr.mxu0 0.0
    %3210 = vmatpush1.msra.mxu0 0.0
    %3211 = vmatprep.subr.mxu0 0.0
    %3212 = vmatpush1.msra.mxu0 0.0
    %3213 = vmatprep.subr.mxu0 0.0
    %3214 = vmatpush1.msra.mxu0 0.0
    %3215 = vmatprep.subr.mxu0 0.0
    %3216 = vmatpush1.msra.mxu0 0.0
    %3217 = vmatprep.subr.mxu0 0.0
    %3218 = vmatpush1.msra.mxu0 %v3115
    %3219 = vmatprep.subr.mxu0 0.0
    %3220 = vmatpush1.msra.mxu0 %v3114
    %3221 = vmatprep.subr.mxu0 0.0
    %3222 = vmatpush1.msra.mxu0 %v3113
    %3223 = vmatprep.subr.mxu0 0.0
    %3224 = vmatpush1.msra.mxu0 %v3112
    %3225 = vmatprep.subr.mxu0 0.0
    %3226 = vmatpush2.msra.mxu0 0.0
    %3227 = vmatprep.subr.mxu0 0.0
    %3228 = vmatpush2.msra.mxu0 0.0
    %3229 = vmatprep.subr.mxu0 0.0
    %3230 = vmatpush2.msra.mxu0 0.0
    %3231 = vmatprep.subr.mxu0 0.0
    %3232 = vmatpush2.msra.mxu0 0.0
    %3233 = vmatprep.subr.mxu0 0.0
    %3234 = vmatpush2.msra.mxu0 0.0
    %3235 = vmatprep.subr.mxu0 0.0
    %3236 = vmatpush2.msra.mxu0 0.0
    %3237 = vmatprep.subr.mxu0 0.0
    %3238 = vmatpush2.msra.mxu0 0.0
    %3239 = vmatprep.subr.mxu0 0.0
    %3240 = vmatpush2.msra.mxu0 0.0
    %3241 = vmatprep.subr.mxu0 0.0
    %3242 = vmatpush2.msra.mxu0 0.0
    %3243 = vmatprep.subr.mxu0 0.0
    %3244 = vmatpush2.msra.mxu0 0.0
    %3245 = vmatprep.subr.mxu0 0.0
    %3246 = vmatpush2.msra.mxu0 0.0
    %3247 = vmatprep.subr.mxu0 0.0
    %3248 = vmatpush2.msra.mxu0 0.0
    %3249 = vmatprep.subr.mxu0 0.0
    %3250 = vmatpush2.msra.mxu0 0.0
    %3251 = vmatprep.subr.mxu0 0.0
    %3252 = vmatpush2.msra.mxu0 0.0
    %3253 = vmatprep.subr.mxu0 0.0
    %3254 = vmatpush2.msra.mxu0 0.0
    %3255 = vmatprep.subr.mxu0 0.0
    %3256 = vmatpush2.msra.mxu0 0.0
    %3257 = vmatprep.mubr.f32.mxu0 0.0
    %3258 = vmatmul.mubr.f32.gmra.mxu0 %v3191
    %v3259 = vpop.f32.mrf.mxu0
    %v3260 = vadd.f32 %v3187, %v3259
    %v3261 = vpop.f32.mrf.mxu0
    %3262 = vdwg.mxu0
    %v3263 = vadd.f32 %v3260, %v204
    %v3264 = vxor.u32 %v3263, 2147483648
    %v3265 = vmul.f32 %v3264, 1.442695
    %v3266 = vpow.pop %v3265
    %v3267 = vadd.f32 %v3266, 1.0
    %v3268 = vrcp.pop %v3267
    %v3269 = vmul.f32 1.0, %v3268
    %v3270 = vtanh.pop %v3263
    %v3271 = vmul.f32 %v3269, %v2917
    %3273 = vrot.lane.b32.xlu0 %v3270, 32
    %v3274 = vpop.permute.xlu0 %3273
    %v3276 = vmul.f32 %v3269, %v3274
    %3278 = vrot.lane.b32.xlu0 %v3276, 32
    %v3279 = vpop.permute.xlu0 %3278
    %v3281 = vadd.f32 %v3271, %v3279
    %v3282 = vtanh.pop %v3281
    %3284 = vrot.lane.b32.xlu0 %v3282, 32
    %v3285 = vpop.permute.xlu0 %3284
    %v3287 = vmul.f32 %v3269, %v3285
    %v3288 = vld [vmem:[#allocation15] sm:$0xff]
    %v3289 = vld [vmem:[#allocation15 + $0x8] sm:$0xff]
    %v3290 = vld [vmem:[#allocation15 + $0x10] sm:$0xff]
    %v3291 = vld [vmem:[#allocation15 + $0x18] sm:$0xff]
    %v3292 = vld [vmem:[#allocation17] sm:$0xff]
    %v3293 = vld [vmem:[#allocation17 + $0x8] sm:$0xff]
    %v3294 = vld [vmem:[#allocation17 + $0x10] sm:$0xff]
    %v3295 = vld [vmem:[#allocation17 + $0x18] sm:$0xff]
    %v3296 = vsel %vm220, %v3106, 0
    %3298 = vmatprep.subr.mxu0 0.0
    %3299 = vmatpush1.msra.mxu0 0.0
    %3300 = vmatprep.subr.mxu0 0.0
    %3301 = vmatpush1.msra.mxu0 0.0
    %3302 = vmatprep.subr.mxu0 0.0
    %3303 = vmatpush1.msra.mxu0 0.0
    %3304 = vmatprep.subr.mxu0 0.0
    %3305 = vmatpush1.msra.mxu0 0.0
    %3306 = vmatprep.subr.mxu0 0.0
    %3307 = vmatpush1.msra.mxu0 0.0
    %3308 = vmatprep.subr.mxu0 0.0
    %3309 = vmatpush1.msra.mxu0 0.0
    %3310 = vmatprep.subr.mxu0 0.0
    %3311 = vmatpush1.msra.mxu0 0.0
    %3312 = vmatprep.subr.mxu0 0.0
    %3313 = vmatpush1.msra.mxu0 0.0
    %3314 = vmatprep.subr.mxu0 0.0
    %3315 = vmatpush1.msra.mxu0 0.0
    %3316 = vmatprep.subr.mxu0 0.0
    %3317 = vmatpush1.msra.mxu0 0.0
    %3318 = vmatprep.subr.mxu0 0.0
    %3319 = vmatpush1.msra.mxu0 0.0
    %3320 = vmatprep.subr.mxu0 0.0
    %3321 = vmatpush1.msra.mxu0 0.0
    %3322 = vmatprep.subr.mxu0 0.0
    %3323 = vmatpush1.msra.mxu0 %v3295
    %3324 = vmatprep.subr.mxu0 0.0
    %3325 = vmatpush1.msra.mxu0 %v3294
    %3326 = vmatprep.subr.mxu0 0.0
    %3327 = vmatpush1.msra.mxu0 %v3293
    %3328 = vmatprep.subr.mxu0 0.0
    %3329 = vmatpush1.msra.mxu0 %v3292
    %3330 = vmatprep.subr.mxu0 0.0
    %3331 = vmatpush2.msra.mxu0 0.0
    %3332 = vmatprep.subr.mxu0 0.0
    %3333 = vmatpush2.msra.mxu0 0.0
    %3334 = vmatprep.subr.mxu0 0.0
    %3335 = vmatpush2.msra.mxu0 0.0
    %3336 = vmatprep.subr.mxu0 0.0
    %3337 = vmatpush2.msra.mxu0 0.0
    %3338 = vmatprep.subr.mxu0 0.0
    %3339 = vmatpush2.msra.mxu0 0.0
    %3340 = vmatprep.subr.mxu0 0.0
    %3341 = vmatpush2.msra.mxu0 0.0
    %3342 = vmatprep.subr.mxu0 0.0
    %3343 = vmatpush2.msra.mxu0 0.0
    %3344 = vmatprep.subr.mxu0 0.0
    %3345 = vmatpush2.msra.mxu0 0.0
    %3346 = vmatprep.subr.mxu0 0.0
    %3347 = vmatpush2.msra.mxu0 0.0
    %3348 = vmatprep.subr.mxu0 0.0
    %3349 = vmatpush2.msra.mxu0 0.0
    %3350 = vmatprep.subr.mxu0 0.0
    %3351 = vmatpush2.msra.mxu0 0.0
    %3352 = vmatprep.subr.mxu0 0.0
    %3353 = vmatpush2.msra.mxu0 0.0
    %3354 = vmatprep.subr.mxu0 0.0
    %3355 = vmatpush2.msra.mxu0 0.0
    %3356 = vmatprep.subr.mxu0 0.0
    %3357 = vmatpush2.msra.mxu0 0.0
    %3358 = vmatprep.subr.mxu0 0.0
    %3359 = vmatpush2.msra.mxu0 0.0
    %3360 = vmatprep.subr.mxu0 0.0
    %3361 = vmatpush2.msra.mxu0 0.0
    %3362 = vmatprep.mubr.f32.mxu0 0.0
    %3363 = vmatmul.mubr.f32.gmra.mxu0 %v3296
    %v3364 = vpop.f32.mrf.mxu0
    %v3365 = vadd.f32 0.0, %v3364
    %v3366 = vpop.f32.mrf.mxu0
    %3367 = vdwg.mxu0
    %3369 = vrot.lane.b32.xlu0 %v3287, 64
    %v3370 = vpop.permute.xlu0 %3369
    %v3371 = vsel %vm220, %v3370, 0
    %3373 = vmatprep.subr.mxu0 0.0
    %3374 = vmatpush1.msra.mxu0 0.0
    %3375 = vmatprep.subr.mxu0 0.0
    %3376 = vmatpush1.msra.mxu0 0.0
    %3377 = vmatprep.subr.mxu0 0.0
    %3378 = vmatpush1.msra.mxu0 0.0
    %3379 = vmatprep.subr.mxu0 0.0
    %3380 = vmatpush1.msra.mxu0 0.0
    %3381 = vmatprep.subr.mxu0 0.0
    %3382 = vmatpush1.msra.mxu0 0.0
    %3383 = vmatprep.subr.mxu0 0.0
    %3384 = vmatpush1.msra.mxu0 0.0
    %3385 = vmatprep.subr.mxu0 0.0
    %3386 = vmatpush1.msra.mxu0 0.0
    %3387 = vmatprep.subr.mxu0 0.0
    %3388 = vmatpush1.msra.mxu0 0.0
    %3389 = vmatprep.subr.mxu0 0.0
    %3390 = vmatpush1.msra.mxu0 0.0
    %3391 = vmatprep.subr.mxu0 0.0
    %3392 = vmatpush1.msra.mxu0 0.0
    %3393 = vmatprep.subr.mxu0 0.0
    %3394 = vmatpush1.msra.mxu0 0.0
    %3395 = vmatprep.subr.mxu0 0.0
    %3396 = vmatpush1.msra.mxu0 0.0
    %3397 = vmatprep.subr.mxu0 0.0
    %3398 = vmatpush1.msra.mxu0 %v3291
    %3399 = vmatprep.subr.mxu0 0.0
    %3400 = vmatpush1.msra.mxu0 %v3290
    %3401 = vmatprep.subr.mxu0 0.0
    %3402 = vmatpush1.msra.mxu0 %v3289
    %3403 = vmatprep.subr.mxu0 0.0
    %3404 = vmatpush1.msra.mxu0 %v3288
    %3405 = vmatprep.subr.mxu0 0.0
    %3406 = vmatpush2.msra.mxu0 0.0
    %3407 = vmatprep.subr.mxu0 0.0
    %3408 = vmatpush2.msra.mxu0 0.0
    %3409 = vmatprep.subr.mxu0 0.0
    %3410 = vmatpush2.msra.mxu0 0.0
    %3411 = vmatprep.subr.mxu0 0.0
    %3412 = vmatpush2.msra.mxu0 0.0
    %3413 = vmatprep.subr.mxu0 0.0
    %3414 = vmatpush2.msra.mxu0 0.0
    %3415 = vmatprep.subr.mxu0 0.0
    %3416 = vmatpush2.msra.mxu0 0.0
    %3417 = vmatprep.subr.mxu0 0.0
    %3418 = vmatpush2.msra.mxu0 0.0
    %3419 = vmatprep.subr.mxu0 0.0
    %3420 = vmatpush2.msra.mxu0 0.0
    %3421 = vmatprep.subr.mxu0 0.0
    %3422 = vmatpush2.msra.mxu0 0.0
    %3423 = vmatprep.subr.mxu0 0.0
    %3424 = vmatpush2.msra.mxu0 0.0
    %3425 = vmatprep.subr.mxu0 0.0
    %3426 = vmatpush2.msra.mxu0 0.0
    %3427 = vmatprep.subr.mxu0 0.0
    %3428 = vmatpush2.msra.mxu0 0.0
    %3429 = vmatprep.subr.mxu0 0.0
    %3430 = vmatpush2.msra.mxu0 0.0
    %3431 = vmatprep.subr.mxu0 0.0
    %3432 = vmatpush2.msra.mxu0 0.0
    %3433 = vmatprep.subr.mxu0 0.0
    %3434 = vmatpush2.msra.mxu0 0.0
    %3435 = vmatprep.subr.mxu0 0.0
    %3436 = vmatpush2.msra.mxu0 0.0
    %3437 = vmatprep.mubr.f32.mxu0 0.0
    %3438 = vmatmul.mubr.f32.gmra.mxu0 %v3371
    %v3439 = vpop.f32.mrf.mxu0
    %v3440 = vadd.f32 %v3365, %v3439
    %v3441 = vpop.f32.mrf.mxu0
    %3442 = vdwg.mxu0
    %v3443 = vadd.f32 %v3440, %v211
    %v3444 = vxor.u32 %v3443, 2147483648
    %v3445 = vmul.f32 %v3444, 1.442695
    %v3446 = vpow.pop %v3445
    %v3447 = vadd.f32 %v3446, 1.0
    %v3448 = vrcp.pop %v3447
    %v3449 = vmul.f32 1.0, %v3448
    %v3450 = vtanh.pop %v3443
    %v3451 = vmul.f32 %v3449, %v3097
    %3453 = vrot.lane.b32.xlu0 %v3450, 32
    %v3454 = vpop.permute.xlu0 %3453
    %v3456 = vmul.f32 %v3449, %v3454
    %3458 = vrot.lane.b32.xlu0 %v3456, 32
    %v3459 = vpop.permute.xlu0 %3458
    %v3461 = vadd.f32 %v3451, %v3459
    %v3462 = vtanh.pop %v3461
    %3464 = vrot.lane.b32.xlu0 %v3462, 32
    %v3465 = vpop.permute.xlu0 %3464
    %v3467 = vmul.f32 %v3449, %v3465
    %v3468 = vld [vmem:[%s936] sm:$0xff]
    %v3469 = vmax.f32 %v3468, 0.0
    %3470 = vmatprep.subr.mxu0 0.0
    %3471 = vmatpush1.msra.mxu0 0.0
    %3472 = vmatprep.subr.mxu0 0.0
    %3473 = vmatpush1.msra.mxu0 0.0
    %3474 = vmatprep.subr.mxu0 0.0
    %3475 = vmatpush1.msra.mxu0 0.0
    %3476 = vmatprep.subr.mxu0 0.0
    %3477 = vmatpush1.msra.mxu0 0.0
    %3478 = vmatprep.subr.mxu0 0.0
    %3479 = vmatpush1.msra.mxu0 0.0
    %3480 = vmatprep.subr.mxu0 0.0
    %3481 = vmatpush1.msra.mxu0 0.0
    %3482 = vmatprep.subr.mxu0 0.0
    %3483 = vmatpush1.msra.mxu0 0.0
    %3484 = vmatprep.subr.mxu0 0.0
    %3485 = vmatpush1.msra.mxu0 0.0
    %3486 = vmatprep.subr.mxu0 0.0
    %3487 = vmatpush1.msra.mxu0 0.0
    %3488 = vmatprep.subr.mxu0 0.0
    %3489 = vmatpush1.msra.mxu0 0.0
    %3490 = vmatprep.subr.mxu0 0.0
    %3491 = vmatpush1.msra.mxu0 0.0
    %3492 = vmatprep.subr.mxu0 0.0
    %3493 = vmatpush1.msra.mxu0 0.0
    %3494 = vmatprep.subr.mxu0 0.0
    %3495 = vmatpush1.msra.mxu0 %v3119
    %3496 = vmatprep.subr.mxu0 0.0
    %3497 = vmatpush1.msra.mxu0 %v3118
    %3498 = vmatprep.subr.mxu0 0.0
    %3499 = vmatpush1.msra.mxu0 %v3117
    %3500 = vmatprep.subr.mxu0 0.0
    %3501 = vmatpush1.msra.mxu0 %v3116
    %3502 = vmatprep.subr.mxu0 0.0
    %3503 = vmatpush2.msra.mxu0 0.0
    %3504 = vmatprep.subr.mxu0 0.0
    %3505 = vmatpush2.msra.mxu0 0.0
    %3506 = vmatprep.subr.mxu0 0.0
    %3507 = vmatpush2.msra.mxu0 0.0
    %3508 = vmatprep.subr.mxu0 0.0
    %3509 = vmatpush2.msra.mxu0 0.0
    %3510 = vmatprep.subr.mxu0 0.0
    %3511 = vmatpush2.msra.mxu0 0.0
    %3512 = vmatprep.subr.mxu0 0.0
    %3513 = vmatpush2.msra.mxu0 0.0
    %3514 = vmatprep.subr.mxu0 0.0
    %3515 = vmatpush2.msra.mxu0 0.0
    %3516 = vmatprep.subr.mxu0 0.0
    %3517 = vmatpush2.msra.mxu0 0.0
    %3518 = vmatprep.subr.mxu0 0.0
    %3519 = vmatpush2.msra.mxu0 0.0
    %3520 = vmatprep.subr.mxu0 0.0
    %3521 = vmatpush2.msra.mxu0 0.0
    %3522 = vmatprep.subr.mxu0 0.0
    %3523 = vmatpush2.msra.mxu0 0.0
    %3524 = vmatprep.subr.mxu0 0.0
    %3525 = vmatpush2.msra.mxu0 0.0
    %3526 = vmatprep.subr.mxu0 0.0
    %3527 = vmatpush2.msra.mxu0 0.0
    %3528 = vmatprep.subr.mxu0 0.0
    %3529 = vmatpush2.msra.mxu0 0.0
    %3530 = vmatprep.subr.mxu0 0.0
    %3531 = vmatpush2.msra.mxu0 0.0
    %3532 = vmatprep.subr.mxu0 0.0
    %3533 = vmatpush2.msra.mxu0 0.0
    %3534 = vmatprep.mubr.f32.mxu0 0.0
    %3535 = vmatmul.mubr.f32.gmra.mxu0 %v3371
    %v3536 = vpop.f32.mrf.mxu0
    %v3537 = vadd.f32 0.0, %v3536
    %v3538 = vpop.f32.mrf.mxu0
    %3539 = vdwg.mxu0
    %v3541 = vsel %vm220, %v3469, 0
    %3543 = vmatprep.subr.mxu0 0.0
    %3544 = vmatpush1.msra.mxu0 0.0
    %3545 = vmatprep.subr.mxu0 0.0
    %3546 = vmatpush1.msra.mxu0 0.0
    %3547 = vmatprep.subr.mxu0 0.0
    %3548 = vmatpush1.msra.mxu0 0.0
    %3549 = vmatprep.subr.mxu0 0.0
    %3550 = vmatpush1.msra.mxu0 0.0
    %3551 = vmatprep.subr.mxu0 0.0
    %3552 = vmatpush1.msra.mxu0 0.0
    %3553 = vmatprep.subr.mxu0 0.0
    %3554 = vmatpush1.msra.mxu0 0.0
    %3555 = vmatprep.subr.mxu0 0.0
    %3556 = vmatpush1.msra.mxu0 0.0
    %3557 = vmatprep.subr.mxu0 0.0
    %3558 = vmatpush1.msra.mxu0 0.0
    %3559 = vmatprep.subr.mxu0 0.0
    %3560 = vmatpush1.msra.mxu0 0.0
    %3561 = vmatprep.subr.mxu0 0.0
    %3562 = vmatpush1.msra.mxu0 0.0
    %3563 = vmatprep.subr.mxu0 0.0
    %3564 = vmatpush1.msra.mxu0 0.0
    %3565 = vmatprep.subr.mxu0 0.0
    %3566 = vmatpush1.msra.mxu0 0.0
    %3567 = vmatprep.subr.mxu0 0.0
    %3568 = vmatpush1.msra.mxu0 %v3115
    %3569 = vmatprep.subr.mxu0 0.0
    %3570 = vmatpush1.msra.mxu0 %v3114
    %3571 = vmatprep.subr.mxu0 0.0
    %3572 = vmatpush1.msra.mxu0 %v3113
    %3573 = vmatprep.subr.mxu0 0.0
    %3574 = vmatpush1.msra.mxu0 %v3112
    %3575 = vmatprep.subr.mxu0 0.0
    %3576 = vmatpush2.msra.mxu0 0.0
    %3577 = vmatprep.subr.mxu0 0.0
    %3578 = vmatpush2.msra.mxu0 0.0
    %3579 = vmatprep.subr.mxu0 0.0
    %3580 = vmatpush2.msra.mxu0 0.0
    %3581 = vmatprep.subr.mxu0 0.0
    %3582 = vmatpush2.msra.mxu0 0.0
    %3583 = vmatprep.subr.mxu0 0.0
    %3584 = vmatpush2.msra.mxu0 0.0
    %3585 = vmatprep.subr.mxu0 0.0
    %3586 = vmatpush2.msra.mxu0 0.0
    %3587 = vmatprep.subr.mxu0 0.0
    %3588 = vmatpush2.msra.mxu0 0.0
    %3589 = vmatprep.subr.mxu0 0.0
    %3590 = vmatpush2.msra.mxu0 0.0
    %3591 = vmatprep.subr.mxu0 0.0
    %3592 = vmatpush2.msra.mxu0 0.0
    %3593 = vmatprep.subr.mxu0 0.0
    %3594 = vmatpush2.msra.mxu0 0.0
    %3595 = vmatprep.subr.mxu0 0.0
    %3596 = vmatpush2.msra.mxu0 0.0
    %3597 = vmatprep.subr.mxu0 0.0
    %3598 = vmatpush2.msra.mxu0 0.0
    %3599 = vmatprep.subr.mxu0 0.0
    %3600 = vmatpush2.msra.mxu0 0.0
    %3601 = vmatprep.subr.mxu0 0.0
    %3602 = vmatpush2.msra.mxu0 0.0
    %3603 = vmatprep.subr.mxu0 0.0
    %3604 = vmatpush2.msra.mxu0 0.0
    %3605 = vmatprep.subr.mxu0 0.0
    %3606 = vmatpush2.msra.mxu0 0.0
    %3607 = vmatprep.mubr.f32.mxu0 0.0
    %3608 = vmatmul.mubr.f32.gmra.mxu0 %v3541
    %v3609 = vpop.f32.mrf.mxu0
    %v3610 = vadd.f32 %v3537, %v3609
    %v3611 = vpop.f32.mrf.mxu0
    %3612 = vdwg.mxu0
    %v3613 = vadd.f32 %v3610, %v204
    %v3614 = vxor.u32 %v3613, 2147483648
    %v3615 = vmul.f32 %v3614, 1.442695
    %v3616 = vpow.pop %v3615
    %v3617 = vadd.f32 %v3616, 1.0
    %v3618 = vrcp.pop %v3617
    %v3619 = vmul.f32 1.0, %v3618
    %v3620 = vtanh.pop %v3613
    %v3621 = vmul.f32 %v3619, %v3281
    %3623 = vrot.lane.b32.xlu0 %v3620, 32
    %v3624 = vpop.permute.xlu0 %3623
    %v3626 = vmul.f32 %v3619, %v3624
    %3628 = vrot.lane.b32.xlu0 %v3626, 32
    %v3629 = vpop.permute.xlu0 %3628
    %v3631 = vadd.f32 %v3621, %v3629
    %v3632 = vtanh.pop %v3631
    %3634 = vrot.lane.b32.xlu0 %v3632, 32
    %v3635 = vpop.permute.xlu0 %3634
    %v3637 = vmul.f32 %v3619, %v3635
    %3639 = vrot.lane.b32.xlu0 %v3467, 64
    %v3640 = vpop.permute.xlu0 %3639
    %v3641 = vsel %vm220, %v3640, 0
    %3643 = vmatprep.subr.mxu0 0.0
    %3644 = vmatpush1.msra.mxu0 0.0
    %3645 = vmatprep.subr.mxu0 0.0
    %3646 = vmatpush1.msra.mxu0 0.0
    %3647 = vmatprep.subr.mxu0 0.0
    %3648 = vmatpush1.msra.mxu0 0.0
    %3649 = vmatprep.subr.mxu0 0.0
    %3650 = vmatpush1.msra.mxu0 0.0
    %3651 = vmatprep.subr.mxu0 0.0
    %3652 = vmatpush1.msra.mxu0 0.0
    %3653 = vmatprep.subr.mxu0 0.0
    %3654 = vmatpush1.msra.mxu0 0.0
    %3655 = vmatprep.subr.mxu0 0.0
    %3656 = vmatpush1.msra.mxu0 0.0
    %3657 = vmatprep.subr.mxu0 0.0
    %3658 = vmatpush1.msra.mxu0 0.0
    %3659 = vmatprep.subr.mxu0 0.0
    %3660 = vmatpush1.msra.mxu0 0.0
    %3661 = vmatprep.subr.mxu0 0.0
    %3662 = vmatpush1.msra.mxu0 0.0
    %3663 = vmatprep.subr.mxu0 0.0
    %3664 = vmatpush1.msra.mxu0 0.0
    %3665 = vmatprep.subr.mxu0 0.0
    %3666 = vmatpush1.msra.mxu0 0.0
    %3667 = vmatprep.subr.mxu0 0.0
    %3668 = vmatpush1.msra.mxu0 %v3295
    %3669 = vmatprep.subr.mxu0 0.0
    %3670 = vmatpush1.msra.mxu0 %v3294
    %3671 = vmatprep.subr.mxu0 0.0
    %3672 = vmatpush1.msra.mxu0 %v3293
    %3673 = vmatprep.subr.mxu0 0.0
    %3674 = vmatpush1.msra.mxu0 %v3292
    %3675 = vmatprep.subr.mxu0 0.0
    %3676 = vmatpush2.msra.mxu0 0.0
    %3677 = vmatprep.subr.mxu0 0.0
    %3678 = vmatpush2.msra.mxu0 0.0
    %3679 = vmatprep.subr.mxu0 0.0
    %3680 = vmatpush2.msra.mxu0 0.0
    %3681 = vmatprep.subr.mxu0 0.0
    %3682 = vmatpush2.msra.mxu0 0.0
    %3683 = vmatprep.subr.mxu0 0.0
    %3684 = vmatpush2.msra.mxu0 0.0
    %3685 = vmatprep.subr.mxu0 0.0
    %3686 = vmatpush2.msra.mxu0 0.0
    %3687 = vmatprep.subr.mxu0 0.0
    %3688 = vmatpush2.msra.mxu0 0.0
    %3689 = vmatprep.subr.mxu0 0.0
    %3690 = vmatpush2.msra.mxu0 0.0
    %3691 = vmatprep.subr.mxu0 0.0
    %3692 = vmatpush2.msra.mxu0 0.0
    %3693 = vmatprep.subr.mxu0 0.0
    %3694 = vmatpush2.msra.mxu0 0.0
    %3695 = vmatprep.subr.mxu0 0.0
    %3696 = vmatpush2.msra.mxu0 0.0
    %3697 = vmatprep.subr.mxu0 0.0
    %3698 = vmatpush2.msra.mxu0 0.0
    %3699 = vmatprep.subr.mxu0 0.0
    %3700 = vmatpush2.msra.mxu0 0.0
    %3701 = vmatprep.subr.mxu0 0.0
    %3702 = vmatpush2.msra.mxu0 0.0
    %3703 = vmatprep.subr.mxu0 0.0
    %3704 = vmatpush2.msra.mxu0 0.0
    %3705 = vmatprep.subr.mxu0 0.0
    %3706 = vmatpush2.msra.mxu0 0.0
    %3707 = vmatprep.mubr.f32.mxu0 0.0
    %3708 = vmatmul.mubr.f32.gmra.mxu0 %v3641
    %v3709 = vpop.f32.mrf.mxu0
    %v3710 = vadd.f32 0.0, %v3709
    %v3711 = vpop.f32.mrf.mxu0
    %3712 = vdwg.mxu0
    %3714 = vrot.lane.b32.xlu0 %v3637, 64
    %v3715 = vpop.permute.xlu0 %3714
    %v3716 = vsel %vm220, %v3715, 0
    %3718 = vmatprep.subr.mxu0 0.0
    %3719 = vmatpush1.msra.mxu0 0.0
    %3720 = vmatprep.subr.mxu0 0.0
    %3721 = vmatpush1.msra.mxu0 0.0
    %3722 = vmatprep.subr.mxu0 0.0
    %3723 = vmatpush1.msra.mxu0 0.0
    %3724 = vmatprep.subr.mxu0 0.0
    %3725 = vmatpush1.msra.mxu0 0.0
    %3726 = vmatprep.subr.mxu0 0.0
    %3727 = vmatpush1.msra.mxu0 0.0
    %3728 = vmatprep.subr.mxu0 0.0
    %3729 = vmatpush1.msra.mxu0 0.0
    %3730 = vmatprep.subr.mxu0 0.0
    %3731 = vmatpush1.msra.mxu0 0.0
    %3732 = vmatprep.subr.mxu0 0.0
    %3733 = vmatpush1.msra.mxu0 0.0
    %3734 = vmatprep.subr.mxu0 0.0
    %3735 = vmatpush1.msra.mxu0 0.0
    %3736 = vmatprep.subr.mxu0 0.0
    %3737 = vmatpush1.msra.mxu0 0.0
    %3738 = vmatprep.subr.mxu0 0.0
    %3739 = vmatpush1.msra.mxu0 0.0
    %3740 = vmatprep.subr.mxu0 0.0
    %3741 = vmatpush1.msra.mxu0 0.0
    %3742 = vmatprep.subr.mxu0 0.0
    %3743 = vmatpush1.msra.mxu0 %v3291
    %3744 = vmatprep.subr.mxu0 0.0
    %3745 = vmatpush1.msra.mxu0 %v3290
    %3746 = vmatprep.subr.mxu0 0.0
    %3747 = vmatpush1.msra.mxu0 %v3289
    %3748 = vmatprep.subr.mxu0 0.0
    %3749 = vmatpush1.msra.mxu0 %v3288
    %3750 = vmatprep.subr.mxu0 0.0
    %3751 = vmatpush2.msra.mxu0 0.0
    %3752 = vmatprep.subr.mxu0 0.0
    %3753 = vmatpush2.msra.mxu0 0.0
    %3754 = vmatprep.subr.mxu0 0.0
    %3755 = vmatpush2.msra.mxu0 0.0
    %3756 = vmatprep.subr.mxu0 0.0
    %3757 = vmatpush2.msra.mxu0 0.0
    %3758 = vmatprep.subr.mxu0 0.0
    %3759 = vmatpush2.msra.mxu0 0.0
    %3760 = vmatprep.subr.mxu0 0.0
    %3761 = vmatpush2.msra.mxu0 0.0
    %3762 = vmatprep.subr.mxu0 0.0
    %3763 = vmatpush2.msra.mxu0 0.0
    %3764 = vmatprep.subr.mxu0 0.0
    %3765 = vmatpush2.msra.mxu0 0.0
    %3766 = vmatprep.subr.mxu0 0.0
    %3767 = vmatpush2.msra.mxu0 0.0
    %3768 = vmatprep.subr.mxu0 0.0
    %3769 = vmatpush2.msra.mxu0 0.0
    %3770 = vmatprep.subr.mxu0 0.0
    %3771 = vmatpush2.msra.mxu0 0.0
    %3772 = vmatprep.subr.mxu0 0.0
    %3773 = vmatpush2.msra.mxu0 0.0
    %3774 = vmatprep.subr.mxu0 0.0
    %3775 = vmatpush2.msra.mxu0 0.0
    %3776 = vmatprep.subr.mxu0 0.0
    %3777 = vmatpush2.msra.mxu0 0.0
    %3778 = vmatprep.subr.mxu0 0.0
    %3779 = vmatpush2.msra.mxu0 0.0
    %3780 = vmatprep.subr.mxu0 0.0
    %3781 = vmatpush2.msra.mxu0 0.0
    %3782 = vmatprep.mubr.f32.mxu0 0.0
    %3783 = vmatmul.mubr.f32.gmra.mxu0 %v3716
    %v3784 = vpop.f32.mrf.mxu0
    %v3785 = vadd.f32 %v3710, %v3784
    %v3786 = vpop.f32.mrf.mxu0
    %3787 = vdwg.mxu0
    %v3788 = vadd.f32 %v3785, %v211
    %v3789 = vxor.u32 %v3788, 2147483648
    %v3790 = vmul.f32 %v3789, 1.442695
    %v3791 = vpow.pop %v3790
    %v3792 = vadd.f32 %v3791, 1.0
    %v3793 = vrcp.pop %v3792
    %v3794 = vmul.f32 1.0, %v3793
    %v3795 = vtanh.pop %v3788
    %v3796 = vmul.f32 %v3794, %v3461
    %3798 = vrot.lane.b32.xlu0 %v3795, 32
    %v3799 = vpop.permute.xlu0 %3798
    %v3801 = vmul.f32 %v3794, %v3799
    %3803 = vrot.lane.b32.xlu0 %v3801, 32
    %v3804 = vpop.permute.xlu0 %3803
    %v3806 = vadd.f32 %v3796, %v3804
    %v3807 = vtanh.pop %v3806
    %3809 = vrot.lane.b32.xlu0 %v3807, 32
    %v3810 = vpop.permute.xlu0 %3809
    %v3812 = vmul.f32 %v3794, %v3810
    %v3813 = vld [vmem:[%s1298] sm:$0xff]
    %v3814 = vmax.f32 %v3813, 0.0
    %3815 = vmatprep.subr.mxu0 0.0
    %3816 = vmatpush1.msra.mxu0 0.0
    %3817 = vmatprep.subr.mxu0 0.0
    %3818 = vmatpush1.msra.mxu0 0.0
    %3819 = vmatprep.subr.mxu0 0.0
    %3820 = vmatpush1.msra.mxu0 0.0
    %3821 = vmatprep.subr.mxu0 0.0
    %3822 = vmatpush1.msra.mxu0 0.0
    %3823 = vmatprep.subr.mxu0 0.0
    %3824 = vmatpush1.msra.mxu0 0.0
    %3825 = vmatprep.subr.mxu0 0.0
    %3826 = vmatpush1.msra.mxu0 0.0
    %3827 = vmatprep.subr.mxu0 0.0
    %3828 = vmatpush1.msra.mxu0 0.0
    %3829 = vmatprep.subr.mxu0 0.0
    %3830 = vmatpush1.msra.mxu0 0.0
    %3831 = vmatprep.subr.mxu0 0.0
    %3832 = vmatpush1.msra.mxu0 0.0
    %3833 = vmatprep.subr.mxu0 0.0
    %3834 = vmatpush1.msra.mxu0 0.0
    %3835 = vmatprep.subr.mxu0 0.0
    %3836 = vmatpush1.msra.mxu0 0.0
    %3837 = vmatprep.subr.mxu0 0.0
    %3838 = vmatpush1.msra.mxu0 0.0
    %3839 = vmatprep.subr.mxu0 0.0
    %3840 = vmatpush1.msra.mxu0 %v3119
    %3841 = vmatprep.subr.mxu0 0.0
    %3842 = vmatpush1.msra.mxu0 %v3118
    %3843 = vmatprep.subr.mxu0 0.0
    %3844 = vmatpush1.msra.mxu0 %v3117
    %3845 = vmatprep.subr.mxu0 0.0
    %3846 = vmatpush1.msra.mxu0 %v3116
    %3847 = vmatprep.subr.mxu0 0.0
    %3848 = vmatpush2.msra.mxu0 0.0
    %3849 = vmatprep.subr.mxu0 0.0
    %3850 = vmatpush2.msra.mxu0 0.0
    %3851 = vmatprep.subr.mxu0 0.0
    %3852 = vmatpush2.msra.mxu0 0.0
    %3853 = vmatprep.subr.mxu0 0.0
    %3854 = vmatpush2.msra.mxu0 0.0
    %3855 = vmatprep.subr.mxu0 0.0
    %3856 = vmatpush2.msra.mxu0 0.0
    %3857 = vmatprep.subr.mxu0 0.0
    %3858 = vmatpush2.msra.mxu0 0.0
    %3859 = vmatprep.subr.mxu0 0.0
    %3860 = vmatpush2.msra.mxu0 0.0
    %3861 = vmatprep.subr.mxu0 0.0
    %3862 = vmatpush2.msra.mxu0 0.0
    %3863 = vmatprep.subr.mxu0 0.0
    %3864 = vmatpush2.msra.mxu0 0.0
    %3865 = vmatprep.subr.mxu0 0.0
    %3866 = vmatpush2.msra.mxu0 0.0
    %3867 = vmatprep.subr.mxu0 0.0
    %3868 = vmatpush2.msra.mxu0 0.0
    %3869 = vmatprep.subr.mxu0 0.0
    %3870 = vmatpush2.msra.mxu0 0.0
    %3871 = vmatprep.subr.mxu0 0.0
    %3872 = vmatpush2.msra.mxu0 0.0
    %3873 = vmatprep.subr.mxu0 0.0
    %3874 = vmatpush2.msra.mxu0 0.0
    %3875 = vmatprep.subr.mxu0 0.0
    %3876 = vmatpush2.msra.mxu0 0.0
    %3877 = vmatprep.subr.mxu0 0.0
    %3878 = vmatpush2.msra.mxu0 0.0
    %3879 = vmatprep.mubr.f32.mxu0 0.0
    %3880 = vmatmul.mubr.f32.gmra.mxu0 %v3716
    %v3881 = vpop.f32.mrf.mxu0
    %v3882 = vadd.f32 0.0, %v3881
    %v3883 = vpop.f32.mrf.mxu0
    %3884 = vdwg.mxu0
    %v3886 = vsel %vm220, %v3814, 0
    %3888 = vmatprep.subr.mxu0 0.0
    %3889 = vmatpush1.msra.mxu0 0.0
    %3890 = vmatprep.subr.mxu0 0.0
    %3891 = vmatpush1.msra.mxu0 0.0
    %3892 = vmatprep.subr.mxu0 0.0
    %3893 = vmatpush1.msra.mxu0 0.0
    %3894 = vmatprep.subr.mxu0 0.0
    %3895 = vmatpush1.msra.mxu0 0.0
    %3896 = vmatprep.subr.mxu0 0.0
    %3897 = vmatpush1.msra.mxu0 0.0
    %3898 = vmatprep.subr.mxu0 0.0
    %3899 = vmatpush1.msra.mxu0 0.0
    %3900 = vmatprep.subr.mxu0 0.0
    %3901 = vmatpush1.msra.mxu0 0.0
    %3902 = vmatprep.subr.mxu0 0.0
    %3903 = vmatpush1.msra.mxu0 0.0
    %3904 = vmatprep.subr.mxu0 0.0
    %3905 = vmatpush1.msra.mxu0 0.0
    %3906 = vmatprep.subr.mxu0 0.0
    %3907 = vmatpush1.msra.mxu0 0.0
    %3908 = vmatprep.subr.mxu0 0.0
    %3909 = vmatpush1.msra.mxu0 0.0
    %3910 = vmatprep.subr.mxu0 0.0
    %3911 = vmatpush1.msra.mxu0 0.0
    %3912 = vmatprep.subr.mxu0 0.0
    %3913 = vmatpush1.msra.mxu0 %v3115
    %3914 = vmatprep.subr.mxu0 0.0
    %3915 = vmatpush1.msra.mxu0 %v3114
    %3916 = vmatprep.subr.mxu0 0.0
    %3917 = vmatpush1.msra.mxu0 %v3113
    %3918 = vmatprep.subr.mxu0 0.0
    %3919 = vmatpush1.msra.mxu0 %v3112
    %3920 = vmatprep.subr.mxu0 0.0
    %3921 = vmatpush2.msra.mxu0 0.0
    %3922 = vmatprep.subr.mxu0 0.0
    %3923 = vmatpush2.msra.mxu0 0.0
    %3924 = vmatprep.subr.mxu0 0.0
    %3925 = vmatpush2.msra.mxu0 0.0
    %3926 = vmatprep.subr.mxu0 0.0
    %3927 = vmatpush2.msra.mxu0 0.0
    %3928 = vmatprep.subr.mxu0 0.0
    %3929 = vmatpush2.msra.mxu0 0.0
    %3930 = vmatprep.subr.mxu0 0.0
    %3931 = vmatpush2.msra.mxu0 0.0
    %3932 = vmatprep.subr.mxu0 0.0
    %3933 = vmatpush2.msra.mxu0 0.0
    %3934 = vmatprep.subr.mxu0 0.0
    %3935 = vmatpush2.msra.mxu0 0.0
    %3936 = vmatprep.subr.mxu0 0.0
    %3937 = vmatpush2.msra.mxu0 0.0
    %3938 = vmatprep.subr.mxu0 0.0
    %3939 = vmatpush2.msra.mxu0 0.0
    %3940 = vmatprep.subr.mxu0 0.0
    %3941 = vmatpush2.msra.mxu0 0.0
    %3942 = vmatprep.subr.mxu0 0.0
    %3943 = vmatpush2.msra.mxu0 0.0
    %3944 = vmatprep.subr.mxu0 0.0
    %3945 = vmatpush2.msra.mxu0 0.0
    %3946 = vmatprep.subr.mxu0 0.0
    %3947 = vmatpush2.msra.mxu0 0.0
    %3948 = vmatprep.subr.mxu0 0.0
    %3949 = vmatpush2.msra.mxu0 0.0
    %3950 = vmatprep.subr.mxu0 0.0
    %3951 = vmatpush2.msra.mxu0 0.0
    %3952 = vmatprep.mubr.f32.mxu0 0.0
    %3953 = vmatmul.mubr.f32.gmra.mxu0 %v3886
    %v3954 = vpop.f32.mrf.mxu0
    %v3955 = vadd.f32 %v3882, %v3954
    %v3956 = vpop.f32.mrf.mxu0
    %3957 = vdwg.mxu0
    %v3958 = vadd.f32 %v3955, %v204
    %v3959 = vxor.u32 %v3958, 2147483648
    %v3960 = vmul.f32 %v3959, 1.442695
    %v3961 = vpow.pop %v3960
    %v3962 = vadd.f32 %v3961, 1.0
    %v3963 = vrcp.pop %v3962
    %v3964 = vmul.f32 1.0, %v3963
    %v3965 = vtanh.pop %v3958
    %v3966 = vmul.f32 %v3964, %v3631
    %3968 = vrot.lane.b32.xlu0 %v3965, 32
    %v3969 = vpop.permute.xlu0 %3968
    %v3971 = vmul.f32 %v3964, %v3969
    %3973 = vrot.lane.b32.xlu0 %v3971, 32
    %v3974 = vpop.permute.xlu0 %3973
    %v3976 = vadd.f32 %v3966, %v3974
    %v3977 = vtanh.pop %v3976
    %3979 = vrot.lane.b32.xlu0 %v3977, 32
    %v3980 = vpop.permute.xlu0 %3979
    %v3982 = vmul.f32 %v3964, %v3980
    %3984 = vrot.lane.b32.xlu0 %v3812, 64
    %v3985 = vpop.permute.xlu0 %3984
    %v3986 = vsel %vm220, %v3985, 0
    %3988 = vmatprep.subr.mxu0 0.0
    %3989 = vmatpush1.msra.mxu0 0.0
    %3990 = vmatprep.subr.mxu0 0.0
    %3991 = vmatpush1.msra.mxu0 0.0
    %3992 = vmatprep.subr.mxu0 0.0
    %3993 = vmatpush1.msra.mxu0 0.0
    %3994 = vmatprep.subr.mxu0 0.0
    %3995 = vmatpush1.msra.mxu0 0.0
    %3996 = vmatprep.subr.mxu0 0.0
    %3997 = vmatpush1.msra.mxu0 0.0
    %3998 = vmatprep.subr.mxu0 0.0
    %3999 = vmatpush1.msra.mxu0 0.0
    %4000 = vmatprep.subr.mxu0 0.0
    %4001 = vmatpush1.msra.mxu0 0.0
    %4002 = vmatprep.subr.mxu0 0.0
    %4003 = vmatpush1.msra.mxu0 0.0
    %4004 = vmatprep.subr.mxu0 0.0
    %4005 = vmatpush1.msra.mxu0 0.0
    %4006 = vmatprep.subr.mxu0 0.0
    %4007 = vmatpush1.msra.mxu0 0.0
    %4008 = vmatprep.subr.mxu0 0.0
    %4009 = vmatpush1.msra.mxu0 0.0
    %4010 = vmatprep.subr.mxu0 0.0
    %4011 = vmatpush1.msra.mxu0 0.0
    %4012 = vmatprep.subr.mxu0 0.0
    %4013 = vmatpush1.msra.mxu0 %v3295
    %4014 = vmatprep.subr.mxu0 0.0
    %4015 = vmatpush1.msra.mxu0 %v3294
    %4016 = vmatprep.subr.mxu0 0.0
    %4017 = vmatpush1.msra.mxu0 %v3293
    %4018 = vmatprep.subr.mxu0 0.0
    %4019 = vmatpush1.msra.mxu0 %v3292
    %4020 = vmatprep.subr.mxu0 0.0
    %4021 = vmatpush2.msra.mxu0 0.0
    %4022 = vmatprep.subr.mxu0 0.0
    %4023 = vmatpush2.msra.mxu0 0.0
    %4024 = vmatprep.subr.mxu0 0.0
    %4025 = vmatpush2.msra.mxu0 0.0
    %4026 = vmatprep.subr.mxu0 0.0
    %4027 = vmatpush2.msra.mxu0 0.0
    %4028 = vmatprep.subr.mxu0 0.0
    %4029 = vmatpush2.msra.mxu0 0.0
    %4030 = vmatprep.subr.mxu0 0.0
    %4031 = vmatpush2.msra.mxu0 0.0
    %4032 = vmatprep.subr.mxu0 0.0
    %4033 = vmatpush2.msra.mxu0 0.0
    %4034 = vmatprep.subr.mxu0 0.0
    %4035 = vmatpush2.msra.mxu0 0.0
    %4036 = vmatprep.subr.mxu0 0.0
    %4037 = vmatpush2.msra.mxu0 0.0
    %4038 = vmatprep.subr.mxu0 0.0
    %4039 = vmatpush2.msra.mxu0 0.0
    %4040 = vmatprep.subr.mxu0 0.0
    %4041 = vmatpush2.msra.mxu0 0.0
    %4042 = vmatprep.subr.mxu0 0.0
    %4043 = vmatpush2.msra.mxu0 0.0
    %4044 = vmatprep.subr.mxu0 0.0
    %4045 = vmatpush2.msra.mxu0 0.0
    %4046 = vmatprep.subr.mxu0 0.0
    %4047 = vmatpush2.msra.mxu0 0.0
    %4048 = vmatprep.subr.mxu0 0.0
    %4049 = vmatpush2.msra.mxu0 0.0
    %4050 = vmatprep.subr.mxu0 0.0
    %4051 = vmatpush2.msra.mxu0 0.0
    %4052 = vmatprep.mubr.f32.mxu0 0.0
    %4053 = vmatmul.mubr.f32.gmra.mxu0 %v3986
    %v4054 = vpop.f32.mrf.mxu0
    %v4055 = vadd.f32 0.0, %v4054
    %v4056 = vpop.f32.mrf.mxu0
    %4057 = vdwg.mxu0
    %4059 = vrot.lane.b32.xlu0 %v3982, 64
    %v4060 = vpop.permute.xlu0 %4059
    %v4061 = vsel %vm220, %v4060, 0
    %4063 = vmatprep.subr.mxu0 0.0
    %4064 = vmatpush1.msra.mxu0 0.0
    %4065 = vmatprep.subr.mxu0 0.0
    %4066 = vmatpush1.msra.mxu0 0.0
    %4067 = vmatprep.subr.mxu0 0.0
    %4068 = vmatpush1.msra.mxu0 0.0
    %4069 = vmatprep.subr.mxu0 0.0
    %4070 = vmatpush1.msra.mxu0 0.0
    %4071 = vmatprep.subr.mxu0 0.0
    %4072 = vmatpush1.msra.mxu0 0.0
    %4073 = vmatprep.subr.mxu0 0.0
    %4074 = vmatpush1.msra.mxu0 0.0
    %4075 = vmatprep.subr.mxu0 0.0
    %4076 = vmatpush1.msra.mxu0 0.0
    %4077 = vmatprep.subr.mxu0 0.0
    %4078 = vmatpush1.msra.mxu0 0.0
    %4079 = vmatprep.subr.mxu0 0.0
    %4080 = vmatpush1.msra.mxu0 0.0
    %4081 = vmatprep.subr.mxu0 0.0
    %4082 = vmatpush1.msra.mxu0 0.0
    %4083 = vmatprep.subr.mxu0 0.0
    %4084 = vmatpush1.msra.mxu0 0.0
    %4085 = vmatprep.subr.mxu0 0.0
    %4086 = vmatpush1.msra.mxu0 0.0
    %4087 = vmatprep.subr.mxu0 0.0
    %4088 = vmatpush1.msra.mxu0 %v3291
    %4089 = vmatprep.subr.mxu0 0.0
    %4090 = vmatpush1.msra.mxu0 %v3290
    %4091 = vmatprep.subr.mxu0 0.0
    %4092 = vmatpush1.msra.mxu0 %v3289
    %4093 = vmatprep.subr.mxu0 0.0
    %4094 = vmatpush1.msra.mxu0 %v3288
    %4095 = vmatprep.subr.mxu0 0.0
    %4096 = vmatpush2.msra.mxu0 0.0
    %4097 = vmatprep.subr.mxu0 0.0
    %4098 = vmatpush2.msra.mxu0 0.0
    %4099 = vmatprep.subr.mxu0 0.0
    %4100 = vmatpush2.msra.mxu0 0.0
    %4101 = vmatprep.subr.mxu0 0.0
    %4102 = vmatpush2.msra.mxu0 0.0
    %4103 = vmatprep.subr.mxu0 0.0
    %4104 = vmatpush2.msra.mxu0 0.0
    %4105 = vmatprep.subr.mxu0 0.0
    %4106 = vmatpush2.msra.mxu0 0.0
    %4107 = vmatprep.subr.mxu0 0.0
    %4108 = vmatpush2.msra.mxu0 0.0
    %4109 = vmatprep.subr.mxu0 0.0
    %4110 = vmatpush2.msra.mxu0 0.0
    %4111 = vmatprep.subr.mxu0 0.0
    %4112 = vmatpush2.msra.mxu0 0.0
    %4113 = vmatprep.subr.mxu0 0.0
    %4114 = vmatpush2.msra.mxu0 0.0
    %4115 = vmatprep.subr.mxu0 0.0
    %4116 = vmatpush2.msra.mxu0 0.0
    %4117 = vmatprep.subr.mxu0 0.0
    %4118 = vmatpush2.msra.mxu0 0.0
    %4119 = vmatprep.subr.mxu0 0.0
    %4120 = vmatpush2.msra.mxu0 0.0
    %4121 = vmatprep.subr.mxu0 0.0
    %4122 = vmatpush2.msra.mxu0 0.0
    %4123 = vmatprep.subr.mxu0 0.0
    %4124 = vmatpush2.msra.mxu0 0.0
    %4125 = vmatprep.subr.mxu0 0.0
    %4126 = vmatpush2.msra.mxu0 0.0
    %4127 = vmatprep.mubr.f32.mxu0 0.0
    %4128 = vmatmul.mubr.f32.gmra.mxu0 %v4061
    %v4129 = vpop.f32.mrf.mxu0
    %v4130 = vadd.f32 %v4055, %v4129
    %v4131 = vpop.f32.mrf.mxu0
    %4132 = vdwg.mxu0
    %v4133 = vadd.f32 %v4130, %v211
    %v4134 = vxor.u32 %v4133, 2147483648
    %v4135 = vmul.f32 %v4134, 1.442695
    %v4136 = vpow.pop %v4135
    %v4137 = vadd.f32 %v4136, 1.0
    %v4138 = vrcp.pop %v4137
    %v4139 = vmul.f32 1.0, %v4138
    %v4140 = vtanh.pop %v4133
    %v4141 = vmul.f32 %v4139, %v3806
    %4143 = vrot.lane.b32.xlu0 %v4140, 32
    %v4144 = vpop.permute.xlu0 %4143
    %v4146 = vmul.f32 %v4139, %v4144
    %4148 = vrot.lane.b32.xlu0 %v4146, 32
    %v4149 = vpop.permute.xlu0 %4148
    %v4151 = vadd.f32 %v4141, %v4149
    %v4152 = vtanh.pop %v4151
    %4154 = vrot.lane.b32.xlu0 %v4152, 32
    %v4155 = vpop.permute.xlu0 %4154
    %v4157 = vmul.f32 %v4139, %v4155
    %v4158 = vld [vmem:[%s1660] sm:$0xff]
    %v4159 = vmax.f32 %v4158, 0.0
    %4160 = vmatprep.subr.mxu0 0.0
    %4161 = vmatpush1.msra.mxu0 0.0
    %4162 = vmatprep.subr.mxu0 0.0
    %4163 = vmatpush1.msra.mxu0 0.0
    %4164 = vmatprep.subr.mxu0 0.0
    %4165 = vmatpush1.msra.mxu0 0.0
    %4166 = vmatprep.subr.mxu0 0.0
    %4167 = vmatpush1.msra.mxu0 0.0
    %4168 = vmatprep.subr.mxu0 0.0
    %4169 = vmatpush1.msra.mxu0 0.0
    %4170 = vmatprep.subr.mxu0 0.0
    %4171 = vmatpush1.msra.mxu0 0.0
    %4172 = vmatprep.subr.mxu0 0.0
    %4173 = vmatpush1.msra.mxu0 0.0
    %4174 = vmatprep.subr.mxu0 0.0
    %4175 = vmatpush1.msra.mxu0 0.0
    %4176 = vmatprep.subr.mxu0 0.0
    %4177 = vmatpush1.msra.mxu0 0.0
    %4178 = vmatprep.subr.mxu0 0.0
    %4179 = vmatpush1.msra.mxu0 0.0
    %4180 = vmatprep.subr.mxu0 0.0
    %4181 = vmatpush1.msra.mxu0 0.0
    %4182 = vmatprep.subr.mxu0 0.0
    %4183 = vmatpush1.msra.mxu0 0.0
    %4184 = vmatprep.subr.mxu0 0.0
    %4185 = vmatpush1.msra.mxu0 %v3119
    %4186 = vmatprep.subr.mxu0 0.0
    %4187 = vmatpush1.msra.mxu0 %v3118
    %4188 = vmatprep.subr.mxu0 0.0
    %4189 = vmatpush1.msra.mxu0 %v3117
    %4190 = vmatprep.subr.mxu0 0.0
    %4191 = vmatpush1.msra.mxu0 %v3116
    %4192 = vmatprep.subr.mxu0 0.0
    %4193 = vmatpush2.msra.mxu0 0.0
    %4194 = vmatprep.subr.mxu0 0.0
    %4195 = vmatpush2.msra.mxu0 0.0
    %4196 = vmatprep.subr.mxu0 0.0
    %4197 = vmatpush2.msra.mxu0 0.0
    %4198 = vmatprep.subr.mxu0 0.0
    %4199 = vmatpush2.msra.mxu0 0.0
    %4200 = vmatprep.subr.mxu0 0.0
    %4201 = vmatpush2.msra.mxu0 0.0
    %4202 = vmatprep.subr.mxu0 0.0
    %4203 = vmatpush2.msra.mxu0 0.0
    %4204 = vmatprep.subr.mxu0 0.0
    %4205 = vmatpush2.msra.mxu0 0.0
    %4206 = vmatprep.subr.mxu0 0.0
    %4207 = vmatpush2.msra.mxu0 0.0
    %4208 = vmatprep.subr.mxu0 0.0
    %4209 = vmatpush2.msra.mxu0 0.0
    %4210 = vmatprep.subr.mxu0 0.0
    %4211 = vmatpush2.msra.mxu0 0.0
    %4212 = vmatprep.subr.mxu0 0.0
    %4213 = vmatpush2.msra.mxu0 0.0
    %4214 = vmatprep.subr.mxu0 0.0
    %4215 = vmatpush2.msra.mxu0 0.0
    %4216 = vmatprep.subr.mxu0 0.0
    %4217 = vmatpush2.msra.mxu0 0.0
    %4218 = vmatprep.subr.mxu0 0.0
    %4219 = vmatpush2.msra.mxu0 0.0
    %4220 = vmatprep.subr.mxu0 0.0
    %4221 = vmatpush2.msra.mxu0 0.0
    %4222 = vmatprep.subr.mxu0 0.0
    %4223 = vmatpush2.msra.mxu0 0.0
    %4224 = vmatprep.mubr.f32.mxu0 0.0
    %4225 = vmatmul.mubr.f32.gmra.mxu0 %v4061
    %v4226 = vpop.f32.mrf.mxu0
    %v4227 = vadd.f32 0.0, %v4226
    %v4228 = vpop.f32.mrf.mxu0
    %4229 = vdwg.mxu0
    %v4231 = vsel %vm220, %v4159, 0
    %4233 = vmatprep.subr.mxu0 0.0
    %4234 = vmatpush1.msra.mxu0 0.0
    %4235 = vmatprep.subr.mxu0 0.0
    %4236 = vmatpush1.msra.mxu0 0.0
    %4237 = vmatprep.subr.mxu0 0.0
    %4238 = vmatpush1.msra.mxu0 0.0
    %4239 = vmatprep.subr.mxu0 0.0
    %4240 = vmatpush1.msra.mxu0 0.0
    %4241 = vmatprep.subr.mxu0 0.0
    %4242 = vmatpush1.msra.mxu0 0.0
    %4243 = vmatprep.subr.mxu0 0.0
    %4244 = vmatpush1.msra.mxu0 0.0
    %4245 = vmatprep.subr.mxu0 0.0
    %4246 = vmatpush1.msra.mxu0 0.0
    %4247 = vmatprep.subr.mxu0 0.0
    %4248 = vmatpush1.msra.mxu0 0.0
    %4249 = vmatprep.subr.mxu0 0.0
    %4250 = vmatpush1.msra.mxu0 0.0
    %4251 = vmatprep.subr.mxu0 0.0
    %4252 = vmatpush1.msra.mxu0 0.0
    %4253 = vmatprep.subr.mxu0 0.0
    %4254 = vmatpush1.msra.mxu0 0.0
    %4255 = vmatprep.subr.mxu0 0.0
    %4256 = vmatpush1.msra.mxu0 0.0
    %4257 = vmatprep.subr.mxu0 0.0
    %4258 = vmatpush1.msra.mxu0 %v3115
    %4259 = vmatprep.subr.mxu0 0.0
    %4260 = vmatpush1.msra.mxu0 %v3114
    %4261 = vmatprep.subr.mxu0 0.0
    %4262 = vmatpush1.msra.mxu0 %v3113
    %4263 = vmatprep.subr.mxu0 0.0
    %4264 = vmatpush1.msra.mxu0 %v3112
    %4265 = vmatprep.subr.mxu0 0.0
    %4266 = vmatpush2.msra.mxu0 0.0
    %4267 = vmatprep.subr.mxu0 0.0
    %4268 = vmatpush2.msra.mxu0 0.0
    %4269 = vmatprep.subr.mxu0 0.0
    %4270 = vmatpush2.msra.mxu0 0.0
    %4271 = vmatprep.subr.mxu0 0.0
    %4272 = vmatpush2.msra.mxu0 0.0
    %4273 = vmatprep.subr.mxu0 0.0
    %4274 = vmatpush2.msra.mxu0 0.0
    %4275 = vmatprep.subr.mxu0 0.0
    %4276 = vmatpush2.msra.mxu0 0.0
    %4277 = vmatprep.subr.mxu0 0.0
    %4278 = vmatpush2.msra.mxu0 0.0
    %4279 = vmatprep.subr.mxu0 0.0
    %4280 = vmatpush2.msra.mxu0 0.0
    %4281 = vmatprep.subr.mxu0 0.0
    %4282 = vmatpush2.msra.mxu0 0.0
    %4283 = vmatprep.subr.mxu0 0.0
    %4284 = vmatpush2.msra.mxu0 0.0
    %4285 = vmatprep.subr.mxu0 0.0
    %4286 = vmatpush2.msra.mxu0 0.0
    %4287 = vmatprep.subr.mxu0 0.0
    %4288 = vmatpush2.msra.mxu0 0.0
    %4289 = vmatprep.subr.mxu0 0.0
    %4290 = vmatpush2.msra.mxu0 0.0
    %4291 = vmatprep.subr.mxu0 0.0
    %4292 = vmatpush2.msra.mxu0 0.0
    %4293 = vmatprep.subr.mxu0 0.0
    %4294 = vmatpush2.msra.mxu0 0.0
    %4295 = vmatprep.subr.mxu0 0.0
    %4296 = vmatpush2.msra.mxu0 0.0
    %4297 = vmatprep.mubr.f32.mxu0 0.0
    %4298 = vmatmul.mubr.f32.gmra.mxu0 %v4231
    %v4299 = vpop.f32.mrf.mxu0
    %v4300 = vadd.f32 %v4227, %v4299
    %v4301 = vpop.f32.mrf.mxu0
    %4302 = vdwg.mxu0
    %v4303 = vadd.f32 %v4300, %v204
    %v4304 = vxor.u32 %v4303, 2147483648
    %v4305 = vmul.f32 %v4304, 1.442695
    %v4306 = vpow.pop %v4305
    %v4307 = vadd.f32 %v4306, 1.0
    %v4308 = vrcp.pop %v4307
    %v4309 = vmul.f32 1.0, %v4308
    %v4310 = vtanh.pop %v4303
    %v4311 = vmul.f32 %v4309, %v3976
    %4313 = vrot.lane.b32.xlu0 %v4310, 32
    %v4314 = vpop.permute.xlu0 %4313
    %v4316 = vmul.f32 %v4309, %v4314
    %4318 = vrot.lane.b32.xlu0 %v4316, 32
    %v4319 = vpop.permute.xlu0 %4318
    %v4321 = vadd.f32 %v4311, %v4319
    %v4322 = vtanh.pop %v4321
    %4324 = vrot.lane.b32.xlu0 %v4322, 32
    %v4325 = vpop.permute.xlu0 %4324
    %v4327 = vmul.f32 %v4309, %v4325
    %4329 = vrot.lane.b32.xlu0 %v4157, 64
    %v4330 = vpop.permute.xlu0 %4329
    %v4331 = vsel %vm220, %v4330, 0
    %4333 = vmatprep.subr.mxu0 0.0
    %4334 = vmatpush1.msra.mxu0 0.0
    %4335 = vmatprep.subr.mxu0 0.0
    %4336 = vmatpush1.msra.mxu0 0.0
    %4337 = vmatprep.subr.mxu0 0.0
    %4338 = vmatpush1.msra.mxu0 0.0
    %4339 = vmatprep.subr.mxu0 0.0
    %4340 = vmatpush1.msra.mxu0 0.0
    %4341 = vmatprep.subr.mxu0 0.0
    %4342 = vmatpush1.msra.mxu0 0.0
    %4343 = vmatprep.subr.mxu0 0.0
    %4344 = vmatpush1.msra.mxu0 0.0
    %4345 = vmatprep.subr.mxu0 0.0
    %4346 = vmatpush1.msra.mxu0 0.0
    %4347 = vmatprep.subr.mxu0 0.0
    %4348 = vmatpush1.msra.mxu0 0.0
    %4349 = vmatprep.subr.mxu0 0.0
    %4350 = vmatpush1.msra.mxu0 0.0
    %4351 = vmatprep.subr.mxu0 0.0
    %4352 = vmatpush1.msra.mxu0 0.0
    %4353 = vmatprep.subr.mxu0 0.0
    %4354 = vmatpush1.msra.mxu0 0.0
    %4355 = vmatprep.subr.mxu0 0.0
    %4356 = vmatpush1.msra.mxu0 0.0
    %4357 = vmatprep.subr.mxu0 0.0
    %4358 = vmatpush1.msra.mxu0 %v3295
    %4359 = vmatprep.subr.mxu0 0.0
    %4360 = vmatpush1.msra.mxu0 %v3294
    %4361 = vmatprep.subr.mxu0 0.0
    %4362 = vmatpush1.msra.mxu0 %v3293
    %4363 = vmatprep.subr.mxu0 0.0
    %4364 = vmatpush1.msra.mxu0 %v3292
    %4365 = vmatprep.subr.mxu0 0.0
    %4366 = vmatpush2.msra.mxu0 0.0
    %4367 = vmatprep.subr.mxu0 0.0
    %4368 = vmatpush2.msra.mxu0 0.0
    %4369 = vmatprep.subr.mxu0 0.0
    %4370 = vmatpush2.msra.mxu0 0.0
    %4371 = vmatprep.subr.mxu0 0.0
    %4372 = vmatpush2.msra.mxu0 0.0
    %4373 = vmatprep.subr.mxu0 0.0
    %4374 = vmatpush2.msra.mxu0 0.0
    %4375 = vmatprep.subr.mxu0 0.0
    %4376 = vmatpush2.msra.mxu0 0.0
    %4377 = vmatprep.subr.mxu0 0.0
    %4378 = vmatpush2.msra.mxu0 0.0
    %4379 = vmatprep.subr.mxu0 0.0
    %4380 = vmatpush2.msra.mxu0 0.0
    %4381 = vmatprep.subr.mxu0 0.0
    %4382 = vmatpush2.msra.mxu0 0.0
    %4383 = vmatprep.subr.mxu0 0.0
    %4384 = vmatpush2.msra.mxu0 0.0
    %4385 = vmatprep.subr.mxu0 0.0
    %4386 = vmatpush2.msra.mxu0 0.0
    %4387 = vmatprep.subr.mxu0 0.0
    %4388 = vmatpush2.msra.mxu0 0.0
    %4389 = vmatprep.subr.mxu0 0.0
    %4390 = vmatpush2.msra.mxu0 0.0
    %4391 = vmatprep.subr.mxu0 0.0
    %4392 = vmatpush2.msra.mxu0 0.0
    %4393 = vmatprep.subr.mxu0 0.0
    %4394 = vmatpush2.msra.mxu0 0.0
    %4395 = vmatprep.subr.mxu0 0.0
    %4396 = vmatpush2.msra.mxu0 0.0
    %4397 = vmatprep.mubr.f32.mxu0 0.0
    %4398 = vmatmul.mubr.f32.gmra.mxu0 %v4331
    %v4399 = vpop.f32.mrf.mxu0
    %v4400 = vadd.f32 0.0, %v4399
    %v4401 = vpop.f32.mrf.mxu0
    %4402 = vdwg.mxu0
    %4404 = vrot.lane.b32.xlu0 %v4327, 64
    %v4405 = vpop.permute.xlu0 %4404
    %v4406 = vsel %vm220, %v4405, 0
    %4408 = vmatprep.subr.mxu0 0.0
    %4409 = vmatpush1.msra.mxu0 0.0
    %4410 = vmatprep.subr.mxu0 0.0
    %4411 = vmatpush1.msra.mxu0 0.0
    %4412 = vmatprep.subr.mxu0 0.0
    %4413 = vmatpush1.msra.mxu0 0.0
    %4414 = vmatprep.subr.mxu0 0.0
    %4415 = vmatpush1.msra.mxu0 0.0
    %4416 = vmatprep.subr.mxu0 0.0
    %4417 = vmatpush1.msra.mxu0 0.0
    %4418 = vmatprep.subr.mxu0 0.0
    %4419 = vmatpush1.msra.mxu0 0.0
    %4420 = vmatprep.subr.mxu0 0.0
    %4421 = vmatpush1.msra.mxu0 0.0
    %4422 = vmatprep.subr.mxu0 0.0
    %4423 = vmatpush1.msra.mxu0 0.0
    %4424 = vmatprep.subr.mxu0 0.0
    %4425 = vmatpush1.msra.mxu0 0.0
    %4426 = vmatprep.subr.mxu0 0.0
    %4427 = vmatpush1.msra.mxu0 0.0
    %4428 = vmatprep.subr.mxu0 0.0
    %4429 = vmatpush1.msra.mxu0 0.0
    %4430 = vmatprep.subr.mxu0 0.0
    %4431 = vmatpush1.msra.mxu0 0.0
    %4432 = vmatprep.subr.mxu0 0.0
    %4433 = vmatpush1.msra.mxu0 %v3291
    %4434 = vmatprep.subr.mxu0 0.0
    %4435 = vmatpush1.msra.mxu0 %v3290
    %4436 = vmatprep.subr.mxu0 0.0
    %4437 = vmatpush1.msra.mxu0 %v3289
    %4438 = vmatprep.subr.mxu0 0.0
    %4439 = vmatpush1.msra.mxu0 %v3288
    %4440 = vmatprep.subr.mxu0 0.0
    %4441 = vmatpush2.msra.mxu0 0.0
    %4442 = vmatprep.subr.mxu0 0.0
    %4443 = vmatpush2.msra.mxu0 0.0
    %4444 = vmatprep.subr.mxu0 0.0
    %4445 = vmatpush2.msra.mxu0 0.0
    %4446 = vmatprep.subr.mxu0 0.0
    %4447 = vmatpush2.msra.mxu0 0.0
    %4448 = vmatprep.subr.mxu0 0.0
    %4449 = vmatpush2.msra.mxu0 0.0
    %4450 = vmatprep.subr.mxu0 0.0
    %4451 = vmatpush2.msra.mxu0 0.0
    %4452 = vmatprep.subr.mxu0 0.0
    %4453 = vmatpush2.msra.mxu0 0.0
    %4454 = vmatprep.subr.mxu0 0.0
    %4455 = vmatpush2.msra.mxu0 0.0
    %4456 = vmatprep.subr.mxu0 0.0
    %4457 = vmatpush2.msra.mxu0 0.0
    %4458 = vmatprep.subr.mxu0 0.0
    %4459 = vmatpush2.msra.mxu0 0.0
    %4460 = vmatprep.subr.mxu0 0.0
    %4461 = vmatpush2.msra.mxu0 0.0
    %4462 = vmatprep.subr.mxu0 0.0
    %4463 = vmatpush2.msra.mxu0 0.0
    %4464 = vmatprep.subr.mxu0 0.0
    %4465 = vmatpush2.msra.mxu0 0.0
    %4466 = vmatprep.subr.mxu0 0.0
    %4467 = vmatpush2.msra.mxu0 0.0
    %4468 = vmatprep.subr.mxu0 0.0
    %4469 = vmatpush2.msra.mxu0 0.0
    %4470 = vmatprep.subr.mxu0 0.0
    %4471 = vmatpush2.msra.mxu0 0.0
    %4472 = vmatprep.mubr.f32.mxu0 0.0
    %4473 = vmatmul.mubr.f32.gmra.mxu0 %v4406
    %v4474 = vpop.f32.mrf.mxu0
    %v4475 = vadd.f32 %v4400, %v4474
    %v4476 = vpop.f32.mrf.mxu0
    %4477 = vdwg.mxu0
    %v4478 = vadd.f32 %v4475, %v211
    %v4479 = vxor.u32 %v4478, 2147483648
    %v4480 = vmul.f32 %v4479, 1.442695
    %v4481 = vpow.pop %v4480
    %v4482 = vadd.f32 %v4481, 1.0
    %v4483 = vrcp.pop %v4482
    %v4484 = vmul.f32 1.0, %v4483
    %v4485 = vtanh.pop %v4478
    %v4486 = vmul.f32 %v4484, %v4151
    %4488 = vrot.lane.b32.xlu0 %v4485, 32
    %v4489 = vpop.permute.xlu0 %4488
    %v4491 = vmul.f32 %v4484, %v4489
    %4493 = vrot.lane.b32.xlu0 %v4491, 32
    %v4494 = vpop.permute.xlu0 %4493
    %v4496 = vadd.f32 %v4486, %v4494
    %v4497 = vtanh.pop %v4496
    %4499 = vrot.lane.b32.xlu0 %v4497, 32
    %v4500 = vpop.permute.xlu0 %4499
    %v4502 = vmul.f32 %v4484, %v4500
    %v4503 = vld [vmem:[%s2022] sm:$0xff]
    %v4504 = vmax.f32 %v4503, 0.0
    %4505 = vmatprep.subr.mxu0 0.0
    %4506 = vmatpush1.msra.mxu0 0.0
    %4507 = vmatprep.subr.mxu0 0.0
    %4508 = vmatpush1.msra.mxu0 0.0
    %4509 = vmatprep.subr.mxu0 0.0
    %4510 = vmatpush1.msra.mxu0 0.0
    %4511 = vmatprep.subr.mxu0 0.0
    %4512 = vmatpush1.msra.mxu0 0.0
    %4513 = vmatprep.subr.mxu0 0.0
    %4514 = vmatpush1.msra.mxu0 0.0
    %4515 = vmatprep.subr.mxu0 0.0
    %4516 = vmatpush1.msra.mxu0 0.0
    %4517 = vmatprep.subr.mxu0 0.0
    %4518 = vmatpush1.msra.mxu0 0.0
    %4519 = vmatprep.subr.mxu0 0.0
    %4520 = vmatpush1.msra.mxu0 0.0
    %4521 = vmatprep.subr.mxu0 0.0
    %4522 = vmatpush1.msra.mxu0 0.0
    %4523 = vmatprep.subr.mxu0 0.0
    %4524 = vmatpush1.msra.mxu0 0.0
    %4525 = vmatprep.subr.mxu0 0.0
    %4526 = vmatpush1.msra.mxu0 0.0
    %4527 = vmatprep.subr.mxu0 0.0
    %4528 = vmatpush1.msra.mxu0 0.0
    %4529 = vmatprep.subr.mxu0 0.0
    %4530 = vmatpush1.msra.mxu0 %v3119
    %4531 = vmatprep.subr.mxu0 0.0
    %4532 = vmatpush1.msra.mxu0 %v3118
    %4533 = vmatprep.subr.mxu0 0.0
    %4534 = vmatpush1.msra.mxu0 %v3117
    %4535 = vmatprep.subr.mxu0 0.0
    %4536 = vmatpush1.msra.mxu0 %v3116
    %4537 = vmatprep.subr.mxu0 0.0
    %4538 = vmatpush2.msra.mxu0 0.0
    %4539 = vmatprep.subr.mxu0 0.0
    %4540 = vmatpush2.msra.mxu0 0.0
    %4541 = vmatprep.subr.mxu0 0.0
    %4542 = vmatpush2.msra.mxu0 0.0
    %4543 = vmatprep.subr.mxu0 0.0
    %4544 = vmatpush2.msra.mxu0 0.0
    %4545 = vmatprep.subr.mxu0 0.0
    %4546 = vmatpush2.msra.mxu0 0.0
    %4547 = vmatprep.subr.mxu0 0.0
    %4548 = vmatpush2.msra.mxu0 0.0
    %4549 = vmatprep.subr.mxu0 0.0
    %4550 = vmatpush2.msra.mxu0 0.0
    %4551 = vmatprep.subr.mxu0 0.0
    %4552 = vmatpush2.msra.mxu0 0.0
    %4553 = vmatprep.subr.mxu0 0.0
    %4554 = vmatpush2.msra.mxu0 0.0
    %4555 = vmatprep.subr.mxu0 0.0
    %4556 = vmatpush2.msra.mxu0 0.0
    %4557 = vmatprep.subr.mxu0 0.0
    %4558 = vmatpush2.msra.mxu0 0.0
    %4559 = vmatprep.subr.mxu0 0.0
    %4560 = vmatpush2.msra.mxu0 0.0
    %4561 = vmatprep.subr.mxu0 0.0
    %4562 = vmatpush2.msra.mxu0 0.0
    %4563 = vmatprep.subr.mxu0 0.0
    %4564 = vmatpush2.msra.mxu0 0.0
    %4565 = vmatprep.subr.mxu0 0.0
    %4566 = vmatpush2.msra.mxu0 0.0
    %4567 = vmatprep.subr.mxu0 0.0
    %4568 = vmatpush2.msra.mxu0 0.0
    %4569 = vmatprep.mubr.f32.mxu0 0.0
    %4570 = vmatmul.mubr.f32.gmra.mxu0 %v4406
    %v4571 = vpop.f32.mrf.mxu0
    %v4572 = vadd.f32 0.0, %v4571
    %v4573 = vpop.f32.mrf.mxu0
    %4574 = vdwg.mxu0
    %v4576 = vsel %vm220, %v4504, 0
    %4578 = vmatprep.subr.mxu0 0.0
    %4579 = vmatpush1.msra.mxu0 0.0
    %4580 = vmatprep.subr.mxu0 0.0
    %4581 = vmatpush1.msra.mxu0 0.0
    %4582 = vmatprep.subr.mxu0 0.0
    %4583 = vmatpush1.msra.mxu0 0.0
    %4584 = vmatprep.subr.mxu0 0.0
    %4585 = vmatpush1.msra.mxu0 0.0
    %4586 = vmatprep.subr.mxu0 0.0
    %4587 = vmatpush1.msra.mxu0 0.0
    %4588 = vmatprep.subr.mxu0 0.0
    %4589 = vmatpush1.msra.mxu0 0.0
    %4590 = vmatprep.subr.mxu0 0.0
    %4591 = vmatpush1.msra.mxu0 0.0
    %4592 = vmatprep.subr.mxu0 0.0
    %4593 = vmatpush1.msra.mxu0 0.0
    %4594 = vmatprep.subr.mxu0 0.0
    %4595 = vmatpush1.msra.mxu0 0.0
    %4596 = vmatprep.subr.mxu0 0.0
    %4597 = vmatpush1.msra.mxu0 0.0
    %4598 = vmatprep.subr.mxu0 0.0
    %4599 = vmatpush1.msra.mxu0 0.0
    %4600 = vmatprep.subr.mxu0 0.0
    %4601 = vmatpush1.msra.mxu0 0.0
    %4602 = vmatprep.subr.mxu0 0.0
    %4603 = vmatpush1.msra.mxu0 %v3115
    %4604 = vmatprep.subr.mxu0 0.0
    %4605 = vmatpush1.msra.mxu0 %v3114
    %4606 = vmatprep.subr.mxu0 0.0
    %4607 = vmatpush1.msra.mxu0 %v3113
    %4608 = vmatprep.subr.mxu0 0.0
    %4609 = vmatpush1.msra.mxu0 %v3112
    %4610 = vmatprep.subr.mxu0 0.0
    %4611 = vmatpush2.msra.mxu0 0.0
    %4612 = vmatprep.subr.mxu0 0.0
    %4613 = vmatpush2.msra.mxu0 0.0
    %4614 = vmatprep.subr.mxu0 0.0
    %4615 = vmatpush2.msra.mxu0 0.0
    %4616 = vmatprep.subr.mxu0 0.0
    %4617 = vmatpush2.msra.mxu0 0.0
    %4618 = vmatprep.subr.mxu0 0.0
    %4619 = vmatpush2.msra.mxu0 0.0
    %4620 = vmatprep.subr.mxu0 0.0
    %4621 = vmatpush2.msra.mxu0 0.0
    %4622 = vmatprep.subr.mxu0 0.0
    %4623 = vmatpush2.msra.mxu0 0.0
    %4624 = vmatprep.subr.mxu0 0.0
    %4625 = vmatpush2.msra.mxu0 0.0
    %4626 = vmatprep.subr.mxu0 0.0
    %4627 = vmatpush2.msra.mxu0 0.0
    %4628 = vmatprep.subr.mxu0 0.0
    %4629 = vmatpush2.msra.mxu0 0.0
    %4630 = vmatprep.subr.mxu0 0.0
    %4631 = vmatpush2.msra.mxu0 0.0
    %4632 = vmatprep.subr.mxu0 0.0
    %4633 = vmatpush2.msra.mxu0 0.0
    %4634 = vmatprep.subr.mxu0 0.0
    %4635 = vmatpush2.msra.mxu0 0.0
    %4636 = vmatprep.subr.mxu0 0.0
    %4637 = vmatpush2.msra.mxu0 0.0
    %4638 = vmatprep.subr.mxu0 0.0
    %4639 = vmatpush2.msra.mxu0 0.0
    %4640 = vmatprep.subr.mxu0 0.0
    %4641 = vmatpush2.msra.mxu0 0.0
    %4642 = vmatprep.mubr.f32.mxu0 0.0
    %4643 = vmatmul.mubr.f32.gmra.mxu0 %v4576
    %v4644 = vpop.f32.mrf.mxu0
    %v4645 = vadd.f32 %v4572, %v4644
    %v4646 = vpop.f32.mrf.mxu0
    %4647 = vdwg.mxu0
    %v4648 = vadd.f32 %v4645, %v204
    %v4649 = vxor.u32 %v4648, 2147483648
    %v4650 = vmul.f32 %v4649, 1.442695
    %v4651 = vpow.pop %v4650
    %v4652 = vadd.f32 %v4651, 1.0
    %v4653 = vrcp.pop %v4652
    %v4654 = vmul.f32 1.0, %v4653
    %v4655 = vtanh.pop %v4648
    %v4656 = vmul.f32 %v4654, %v4321
    %4658 = vrot.lane.b32.xlu0 %v4655, 32
    %v4659 = vpop.permute.xlu0 %4658
    %v4661 = vmul.f32 %v4654, %v4659
    %4663 = vrot.lane.b32.xlu0 %v4661, 32
    %v4664 = vpop.permute.xlu0 %4663
    %v4666 = vadd.f32 %v4656, %v4664
    %v4667 = vtanh.pop %v4666
    %4669 = vrot.lane.b32.xlu0 %v4667, 32
    %v4670 = vpop.permute.xlu0 %4669
    %v4672 = vmul.f32 %v4654, %v4670
    %4674 = vrot.lane.b32.xlu0 %v4502, 64
    %v4675 = vpop.permute.xlu0 %4674
    %v4676 = vsel %vm220, %v4675, 0
    %4678 = vmatprep.subr.mxu0 0.0
    %4679 = vmatpush1.msra.mxu0 0.0
    %4680 = vmatprep.subr.mxu0 0.0
    %4681 = vmatpush1.msra.mxu0 0.0
    %4682 = vmatprep.subr.mxu0 0.0
    %4683 = vmatpush1.msra.mxu0 0.0
    %4684 = vmatprep.subr.mxu0 0.0
    %4685 = vmatpush1.msra.mxu0 0.0
    %4686 = vmatprep.subr.mxu0 0.0
    %4687 = vmatpush1.msra.mxu0 0.0
    %4688 = vmatprep.subr.mxu0 0.0
    %4689 = vmatpush1.msra.mxu0 0.0
    %4690 = vmatprep.subr.mxu0 0.0
    %4691 = vmatpush1.msra.mxu0 0.0
    %4692 = vmatprep.subr.mxu0 0.0
    %4693 = vmatpush1.msra.mxu0 0.0
    %4694 = vmatprep.subr.mxu0 0.0
    %4695 = vmatpush1.msra.mxu0 0.0
    %4696 = vmatprep.subr.mxu0 0.0
    %4697 = vmatpush1.msra.mxu0 0.0
    %4698 = vmatprep.subr.mxu0 0.0
    %4699 = vmatpush1.msra.mxu0 0.0
    %4700 = vmatprep.subr.mxu0 0.0
    %4701 = vmatpush1.msra.mxu0 0.0
    %4702 = vmatprep.subr.mxu0 0.0
    %4703 = vmatpush1.msra.mxu0 %v3295
    %4704 = vmatprep.subr.mxu0 0.0
    %4705 = vmatpush1.msra.mxu0 %v3294
    %4706 = vmatprep.subr.mxu0 0.0
    %4707 = vmatpush1.msra.mxu0 %v3293
    %4708 = vmatprep.subr.mxu0 0.0
    %4709 = vmatpush1.msra.mxu0 %v3292
    %4710 = vmatprep.subr.mxu0 0.0
    %4711 = vmatpush2.msra.mxu0 0.0
    %4712 = vmatprep.subr.mxu0 0.0
    %4713 = vmatpush2.msra.mxu0 0.0
    %4714 = vmatprep.subr.mxu0 0.0
    %4715 = vmatpush2.msra.mxu0 0.0
    %4716 = vmatprep.subr.mxu0 0.0
    %4717 = vmatpush2.msra.mxu0 0.0
    %4718 = vmatprep.subr.mxu0 0.0
    %4719 = vmatpush2.msra.mxu0 0.0
    %4720 = vmatprep.subr.mxu0 0.0
    %4721 = vmatpush2.msra.mxu0 0.0
    %4722 = vmatprep.subr.mxu0 0.0
    %4723 = vmatpush2.msra.mxu0 0.0
    %4724 = vmatprep.subr.mxu0 0.0
    %4725 = vmatpush2.msra.mxu0 0.0
    %4726 = vmatprep.subr.mxu0 0.0
    %4727 = vmatpush2.msra.mxu0 0.0
    %4728 = vmatprep.subr.mxu0 0.0
    %4729 = vmatpush2.msra.mxu0 0.0
    %4730 = vmatprep.subr.mxu0 0.0
    %4731 = vmatpush2.msra.mxu0 0.0
    %4732 = vmatprep.subr.mxu0 0.0
    %4733 = vmatpush2.msra.mxu0 0.0
    %4734 = vmatprep.subr.mxu0 0.0
    %4735 = vmatpush2.msra.mxu0 0.0
    %4736 = vmatprep.subr.mxu0 0.0
    %4737 = vmatpush2.msra.mxu0 0.0
    %4738 = vmatprep.subr.mxu0 0.0
    %4739 = vmatpush2.msra.mxu0 0.0
    %4740 = vmatprep.subr.mxu0 0.0
    %4741 = vmatpush2.msra.mxu0 0.0
    %4742 = vmatprep.mubr.f32.mxu0 0.0
    %4743 = vmatmul.mubr.f32.gmra.mxu0 %v4676
    %v4744 = vpop.f32.mrf.mxu0
    %v4745 = vadd.f32 0.0, %v4744
    %v4746 = vpop.f32.mrf.mxu0
    %4747 = vdwg.mxu0
    %4749 = vrot.lane.b32.xlu0 %v4672, 64
    %v4750 = vpop.permute.xlu0 %4749
    %v4751 = vsel %vm220, %v4750, 0
    %4753 = vmatprep.subr.mxu0 0.0
    %4754 = vmatpush1.msra.mxu0 0.0
    %4755 = vmatprep.subr.mxu0 0.0
    %4756 = vmatpush1.msra.mxu0 0.0
    %4757 = vmatprep.subr.mxu0 0.0
    %4758 = vmatpush1.msra.mxu0 0.0
    %4759 = vmatprep.subr.mxu0 0.0
    %4760 = vmatpush1.msra.mxu0 0.0
    %4761 = vmatprep.subr.mxu0 0.0
    %4762 = vmatpush1.msra.mxu0 0.0
    %4763 = vmatprep.subr.mxu0 0.0
    %4764 = vmatpush1.msra.mxu0 0.0
    %4765 = vmatprep.subr.mxu0 0.0
    %4766 = vmatpush1.msra.mxu0 0.0
    %4767 = vmatprep.subr.mxu0 0.0
    %4768 = vmatpush1.msra.mxu0 0.0
    %4769 = vmatprep.subr.mxu0 0.0
    %4770 = vmatpush1.msra.mxu0 0.0
    %4771 = vmatprep.subr.mxu0 0.0
    %4772 = vmatpush1.msra.mxu0 0.0
    %4773 = vmatprep.subr.mxu0 0.0
    %4774 = vmatpush1.msra.mxu0 0.0
    %4775 = vmatprep.subr.mxu0 0.0
    %4776 = vmatpush1.msra.mxu0 0.0
    %4777 = vmatprep.subr.mxu0 0.0
    %4778 = vmatpush1.msra.mxu0 %v3291
    %4779 = vmatprep.subr.mxu0 0.0
    %4780 = vmatpush1.msra.mxu0 %v3290
    %4781 = vmatprep.subr.mxu0 0.0
    %4782 = vmatpush1.msra.mxu0 %v3289
    %4783 = vmatprep.subr.mxu0 0.0
    %4784 = vmatpush1.msra.mxu0 %v3288
    %4785 = vmatprep.subr.mxu0 0.0
    %4786 = vmatpush2.msra.mxu0 0.0
    %4787 = vmatprep.subr.mxu0 0.0
    %4788 = vmatpush2.msra.mxu0 0.0
    %4789 = vmatprep.subr.mxu0 0.0
    %4790 = vmatpush2.msra.mxu0 0.0
    %4791 = vmatprep.subr.mxu0 0.0
    %4792 = vmatpush2.msra.mxu0 0.0
    %4793 = vmatprep.subr.mxu0 0.0
    %4794 = vmatpush2.msra.mxu0 0.0
    %4795 = vmatprep.subr.mxu0 0.0
    %4796 = vmatpush2.msra.mxu0 0.0
    %4797 = vmatprep.subr.mxu0 0.0
    %4798 = vmatpush2.msra.mxu0 0.0
    %4799 = vmatprep.subr.mxu0 0.0
    %4800 = vmatpush2.msra.mxu0 0.0
    %4801 = vmatprep.subr.mxu0 0.0
    %4802 = vmatpush2.msra.mxu0 0.0
    %4803 = vmatprep.subr.mxu0 0.0
    %4804 = vmatpush2.msra.mxu0 0.0
    %4805 = vmatprep.subr.mxu0 0.0
    %4806 = vmatpush2.msra.mxu0 0.0
    %4807 = vmatprep.subr.mxu0 0.0
    %4808 = vmatpush2.msra.mxu0 0.0
    %4809 = vmatprep.subr.mxu0 0.0
    %4810 = vmatpush2.msra.mxu0 0.0
    %4811 = vmatprep.subr.mxu0 0.0
    %4812 = vmatpush2.msra.mxu0 0.0
    %4813 = vmatprep.subr.mxu0 0.0
    %4814 = vmatpush2.msra.mxu0 0.0
    %4815 = vmatprep.subr.mxu0 0.0
    %4816 = vmatpush2.msra.mxu0 0.0
    %4817 = vmatprep.mubr.f32.mxu0 0.0
    %4818 = vmatmul.mubr.f32.gmra.mxu0 %v4751
    %v4819 = vpop.f32.mrf.mxu0
    %v4820 = vadd.f32 %v4745, %v4819
    %v4821 = vpop.f32.mrf.mxu0
    %4822 = vdwg.mxu0
    %v4823 = vadd.f32 %v4820, %v211
    %v4824 = vxor.u32 %v4823, 2147483648
    %v4825 = vmul.f32 %v4824, 1.442695
    %v4826 = vpow.pop %v4825
    %v4827 = vadd.f32 %v4826, 1.0
    %v4828 = vrcp.pop %v4827
    %v4829 = vmul.f32 1.0, %v4828
    %v4830 = vtanh.pop %v4823
    %v4831 = vmul.f32 %v4829, %v4496
    %4833 = vrot.lane.b32.xlu0 %v4830, 32
    %v4834 = vpop.permute.xlu0 %4833
    %v4836 = vmul.f32 %v4829, %v4834
    %4838 = vrot.lane.b32.xlu0 %v4836, 32
    %v4839 = vpop.permute.xlu0 %4838
    %v4841 = vadd.f32 %v4831, %v4839
    %v4842 = vtanh.pop %v4841
    %4844 = vrot.lane.b32.xlu0 %v4842, 32
    %v4845 = vpop.permute.xlu0 %4844
    %v4847 = vmul.f32 %v4829, %v4845
    %v4848 = vld [vmem:[%s2384] sm:$0xff]
    %v4849 = vmax.f32 %v4848, 0.0
    %4850 = vmatprep.subr.mxu0 0.0
    %4851 = vmatpush1.msra.mxu0 0.0
    %4852 = vmatprep.subr.mxu0 0.0
    %4853 = vmatpush1.msra.mxu0 0.0
    %4854 = vmatprep.subr.mxu0 0.0
    %4855 = vmatpush1.msra.mxu0 0.0
    %4856 = vmatprep.subr.mxu0 0.0
    %4857 = vmatpush1.msra.mxu0 0.0
    %4858 = vmatprep.subr.mxu0 0.0
    %4859 = vmatpush1.msra.mxu0 0.0
    %4860 = vmatprep.subr.mxu0 0.0
    %4861 = vmatpush1.msra.mxu0 0.0
    %4862 = vmatprep.subr.mxu0 0.0
    %4863 = vmatpush1.msra.mxu0 0.0
    %4864 = vmatprep.subr.mxu0 0.0
    %4865 = vmatpush1.msra.mxu0 0.0
    %4866 = vmatprep.subr.mxu0 0.0
    %4867 = vmatpush1.msra.mxu0 0.0
    %4868 = vmatprep.subr.mxu0 0.0
    %4869 = vmatpush1.msra.mxu0 0.0
    %4870 = vmatprep.subr.mxu0 0.0
    %4871 = vmatpush1.msra.mxu0 0.0
    %4872 = vmatprep.subr.mxu0 0.0
    %4873 = vmatpush1.msra.mxu0 0.0
    %4874 = vmatprep.subr.mxu0 0.0
    %4875 = vmatpush1.msra.mxu0 %v3119
    %4876 = vmatprep.subr.mxu0 0.0
    %4877 = vmatpush1.msra.mxu0 %v3118
    %4878 = vmatprep.subr.mxu0 0.0
    %4879 = vmatpush1.msra.mxu0 %v3117
    %4880 = vmatprep.subr.mxu0 0.0
    %4881 = vmatpush1.msra.mxu0 %v3116
    %4882 = vmatprep.subr.mxu0 0.0
    %4883 = vmatpush2.msra.mxu0 0.0
    %4884 = vmatprep.subr.mxu0 0.0
    %4885 = vmatpush2.msra.mxu0 0.0
    %4886 = vmatprep.subr.mxu0 0.0
    %4887 = vmatpush2.msra.mxu0 0.0
    %4888 = vmatprep.subr.mxu0 0.0
    %4889 = vmatpush2.msra.mxu0 0.0
    %4890 = vmatprep.subr.mxu0 0.0
    %4891 = vmatpush2.msra.mxu0 0.0
    %4892 = vmatprep.subr.mxu0 0.0
    %4893 = vmatpush2.msra.mxu0 0.0
    %4894 = vmatprep.subr.mxu0 0.0
    %4895 = vmatpush2.msra.mxu0 0.0
    %4896 = vmatprep.subr.mxu0 0.0
    %4897 = vmatpush2.msra.mxu0 0.0
    %4898 = vmatprep.subr.mxu0 0.0
    %4899 = vmatpush2.msra.mxu0 0.0
    %4900 = vmatprep.subr.mxu0 0.0
    %4901 = vmatpush2.msra.mxu0 0.0
    %4902 = vmatprep.subr.mxu0 0.0
    %4903 = vmatpush2.msra.mxu0 0.0
    %4904 = vmatprep.subr.mxu0 0.0
    %4905 = vmatpush2.msra.mxu0 0.0
    %4906 = vmatprep.subr.mxu0 0.0
    %4907 = vmatpush2.msra.mxu0 0.0
    %4908 = vmatprep.subr.mxu0 0.0
    %4909 = vmatpush2.msra.mxu0 0.0
    %4910 = vmatprep.subr.mxu0 0.0
    %4911 = vmatpush2.msra.mxu0 0.0
    %4912 = vmatprep.subr.mxu0 0.0
    %4913 = vmatpush2.msra.mxu0 0.0
    %4914 = vmatprep.mubr.f32.mxu0 0.0
    %4915 = vmatmul.mubr.f32.gmra.mxu0 %v4751
    %v4916 = vpop.f32.mrf.mxu0
    %v4917 = vadd.f32 0.0, %v4916
    %v4918 = vpop.f32.mrf.mxu0
    %4919 = vdwg.mxu0
    %v4921 = vsel %vm220, %v4849, 0
    %4923 = vmatprep.subr.mxu0 0.0
    %4924 = vmatpush1.msra.mxu0 0.0
    %4925 = vmatprep.subr.mxu0 0.0
    %4926 = vmatpush1.msra.mxu0 0.0
    %4927 = vmatprep.subr.mxu0 0.0
    %4928 = vmatpush1.msra.mxu0 0.0
    %4929 = vmatprep.subr.mxu0 0.0
    %4930 = vmatpush1.msra.mxu0 0.0
    %4931 = vmatprep.subr.mxu0 0.0
    %4932 = vmatpush1.msra.mxu0 0.0
    %4933 = vmatprep.subr.mxu0 0.0
    %4934 = vmatpush1.msra.mxu0 0.0
    %4935 = vmatprep.subr.mxu0 0.0
    %4936 = vmatpush1.msra.mxu0 0.0
    %4937 = vmatprep.subr.mxu0 0.0
    %4938 = vmatpush1.msra.mxu0 0.0
    %4939 = vmatprep.subr.mxu0 0.0
    %4940 = vmatpush1.msra.mxu0 0.0
    %4941 = vmatprep.subr.mxu0 0.0
    %4942 = vmatpush1.msra.mxu0 0.0
    %4943 = vmatprep.subr.mxu0 0.0
    %4944 = vmatpush1.msra.mxu0 0.0
    %4945 = vmatprep.subr.mxu0 0.0
    %4946 = vmatpush1.msra.mxu0 0.0
    %4947 = vmatprep.subr.mxu0 0.0
    %4948 = vmatpush1.msra.mxu0 %v3115
    %4949 = vmatprep.subr.mxu0 0.0
    %4950 = vmatpush1.msra.mxu0 %v3114
    %4951 = vmatprep.subr.mxu0 0.0
    %4952 = vmatpush1.msra.mxu0 %v3113
    %4953 = vmatprep.subr.mxu0 0.0
    %4954 = vmatpush1.msra.mxu0 %v3112
    %4955 = vmatprep.subr.mxu0 0.0
    %4956 = vmatpush2.msra.mxu0 0.0
    %4957 = vmatprep.subr.mxu0 0.0
    %4958 = vmatpush2.msra.mxu0 0.0
    %4959 = vmatprep.subr.mxu0 0.0
    %4960 = vmatpush2.msra.mxu0 0.0
    %4961 = vmatprep.subr.mxu0 0.0
    %4962 = vmatpush2.msra.mxu0 0.0
    %4963 = vmatprep.subr.mxu0 0.0
    %4964 = vmatpush2.msra.mxu0 0.0
    %4965 = vmatprep.subr.mxu0 0.0
    %4966 = vmatpush2.msra.mxu0 0.0
    %4967 = vmatprep.subr.mxu0 0.0
    %4968 = vmatpush2.msra.mxu0 0.0
    %4969 = vmatprep.subr.mxu0 0.0
    %4970 = vmatpush2.msra.mxu0 0.0
    %4971 = vmatprep.subr.mxu0 0.0
    %4972 = vmatpush2.msra.mxu0 0.0
    %4973 = vmatprep.subr.mxu0 0.0
    %4974 = vmatpush2.msra.mxu0 0.0
    %4975 = vmatprep.subr.mxu0 0.0
    %4976 = vmatpush2.msra.mxu0 0.0
    %4977 = vmatprep.subr.mxu0 0.0
    %4978 = vmatpush2.msra.mxu0 0.0
    %4979 = vmatprep.subr.mxu0 0.0
    %4980 = vmatpush2.msra.mxu0 0.0
    %4981 = vmatprep.subr.mxu0 0.0
    %4982 = vmatpush2.msra.mxu0 0.0
    %4983 = vmatprep.subr.mxu0 0.0
    %4984 = vmatpush2.msra.mxu0 0.0
    %4985 = vmatprep.subr.mxu0 0.0
    %4986 = vmatpush2.msra.mxu0 0.0
    %4987 = vmatprep.mubr.f32.mxu0 0.0
    %4988 = vmatmul.mubr.f32.gmra.mxu0 %v4921
    %v4989 = vpop.f32.mrf.mxu0
    %v4990 = vadd.f32 %v4917, %v4989
    %v4991 = vpop.f32.mrf.mxu0
    %4992 = vdwg.mxu0
    %v4993 = vadd.f32 %v4990, %v204
    %v4994 = vxor.u32 %v4993, 2147483648
    %v4995 = vmul.f32 %v4994, 1.442695
    %v4996 = vpow.pop %v4995
    %v4997 = vadd.f32 %v4996, 1.0
    %v4998 = vrcp.pop %v4997
    %v4999 = vmul.f32 1.0, %v4998
    %v5000 = vtanh.pop %v4993
    %v5001 = vmul.f32 %v4999, %v4666
    %5003 = vrot.lane.b32.xlu0 %v5000, 32
    %v5004 = vpop.permute.xlu0 %5003
    %v5006 = vmul.f32 %v4999, %v5004
    %5008 = vrot.lane.b32.xlu0 %v5006, 32
    %v5009 = vpop.permute.xlu0 %5008
    %v5011 = vadd.f32 %v5001, %v5009
    %v5012 = vtanh.pop %v5011
    %5014 = vrot.lane.b32.xlu0 %v5012, 32
    %v5015 = vpop.permute.xlu0 %5014
    %v5017 = vmul.f32 %v4999, %v5015
    %5019 = vrot.lane.b32.xlu0 %v4847, 64
    %v5020 = vpop.permute.xlu0 %5019
    %v5021 = vsel %vm220, %v5020, 0
    %5023 = vmatprep.subr.mxu0 0.0
    %5024 = vmatpush1.msra.mxu0 0.0
    %5025 = vmatprep.subr.mxu0 0.0
    %5026 = vmatpush1.msra.mxu0 0.0
    %5027 = vmatprep.subr.mxu0 0.0
    %5028 = vmatpush1.msra.mxu0 0.0
    %5029 = vmatprep.subr.mxu0 0.0
    %5030 = vmatpush1.msra.mxu0 0.0
    %5031 = vmatprep.subr.mxu0 0.0
    %5032 = vmatpush1.msra.mxu0 0.0
    %5033 = vmatprep.subr.mxu0 0.0
    %5034 = vmatpush1.msra.mxu0 0.0
    %5035 = vmatprep.subr.mxu0 0.0
    %5036 = vmatpush1.msra.mxu0 0.0
    %5037 = vmatprep.subr.mxu0 0.0
    %5038 = vmatpush1.msra.mxu0 0.0
    %5039 = vmatprep.subr.mxu0 0.0
    %5040 = vmatpush1.msra.mxu0 0.0
    %5041 = vmatprep.subr.mxu0 0.0
    %5042 = vmatpush1.msra.mxu0 0.0
    %5043 = vmatprep.subr.mxu0 0.0
    %5044 = vmatpush1.msra.mxu0 0.0
    %5045 = vmatprep.subr.mxu0 0.0
    %5046 = vmatpush1.msra.mxu0 0.0
    %5047 = vmatprep.subr.mxu0 0.0
    %5048 = vmatpush1.msra.mxu0 %v3295
    %5049 = vmatprep.subr.mxu0 0.0
    %5050 = vmatpush1.msra.mxu0 %v3294
    %5051 = vmatprep.subr.mxu0 0.0
    %5052 = vmatpush1.msra.mxu0 %v3293
    %5053 = vmatprep.subr.mxu0 0.0
    %5054 = vmatpush1.msra.mxu0 %v3292
    %5055 = vmatprep.subr.mxu0 0.0
    %5056 = vmatpush2.msra.mxu0 0.0
    %5057 = vmatprep.subr.mxu0 0.0
    %5058 = vmatpush2.msra.mxu0 0.0
    %5059 = vmatprep.subr.mxu0 0.0
    %5060 = vmatpush2.msra.mxu0 0.0
    %5061 = vmatprep.subr.mxu0 0.0
    %5062 = vmatpush2.msra.mxu0 0.0
    %5063 = vmatprep.subr.mxu0 0.0
    %5064 = vmatpush2.msra.mxu0 0.0
    %5065 = vmatprep.subr.mxu0 0.0
    %5066 = vmatpush2.msra.mxu0 0.0
    %5067 = vmatprep.subr.mxu0 0.0
    %5068 = vmatpush2.msra.mxu0 0.0
    %5069 = vmatprep.subr.mxu0 0.0
    %5070 = vmatpush2.msra.mxu0 0.0
    %5071 = vmatprep.subr.mxu0 0.0
    %5072 = vmatpush2.msra.mxu0 0.0
    %5073 = vmatprep.subr.mxu0 0.0
    %5074 = vmatpush2.msra.mxu0 0.0
    %5075 = vmatprep.subr.mxu0 0.0
    %5076 = vmatpush2.msra.mxu0 0.0
    %5077 = vmatprep.subr.mxu0 0.0
    %5078 = vmatpush2.msra.mxu0 0.0
    %5079 = vmatprep.subr.mxu0 0.0
    %5080 = vmatpush2.msra.mxu0 0.0
    %5081 = vmatprep.subr.mxu0 0.0
    %5082 = vmatpush2.msra.mxu0 0.0
    %5083 = vmatprep.subr.mxu0 0.0
    %5084 = vmatpush2.msra.mxu0 0.0
    %5085 = vmatprep.subr.mxu0 0.0
    %5086 = vmatpush2.msra.mxu0 0.0
    %5087 = vmatprep.mubr.f32.mxu0 0.0
    %5088 = vmatmul.mubr.f32.gmra.mxu0 %v5021
    %v5089 = vpop.f32.mrf.mxu0
    %v5090 = vadd.f32 0.0, %v5089
    %v5091 = vpop.f32.mrf.mxu0
    %5092 = vdwg.mxu0
    %5094 = vrot.lane.b32.xlu0 %v5017, 64
    %v5095 = vpop.permute.xlu0 %5094
    %v5096 = vsel %vm220, %v5095, 0
    %5098 = vmatprep.subr.mxu0 0.0
    %5099 = vmatpush1.msra.mxu0 0.0
    %5100 = vmatprep.subr.mxu0 0.0
    %5101 = vmatpush1.msra.mxu0 0.0
    %5102 = vmatprep.subr.mxu0 0.0
    %5103 = vmatpush1.msra.mxu0 0.0
    %5104 = vmatprep.subr.mxu0 0.0
    %5105 = vmatpush1.msra.mxu0 0.0
    %5106 = vmatprep.subr.mxu0 0.0
    %5107 = vmatpush1.msra.mxu0 0.0
    %5108 = vmatprep.subr.mxu0 0.0
    %5109 = vmatpush1.msra.mxu0 0.0
    %5110 = vmatprep.subr.mxu0 0.0
    %5111 = vmatpush1.msra.mxu0 0.0
    %5112 = vmatprep.subr.mxu0 0.0
    %5113 = vmatpush1.msra.mxu0 0.0
    %5114 = vmatprep.subr.mxu0 0.0
    %5115 = vmatpush1.msra.mxu0 0.0
    %5116 = vmatprep.subr.mxu0 0.0
    %5117 = vmatpush1.msra.mxu0 0.0
    %5118 = vmatprep.subr.mxu0 0.0
    %5119 = vmatpush1.msra.mxu0 0.0
    %5120 = vmatprep.subr.mxu0 0.0
    %5121 = vmatpush1.msra.mxu0 0.0
    %5122 = vmatprep.subr.mxu0 0.0
    %5123 = vmatpush1.msra.mxu0 %v3291
    %5124 = vmatprep.subr.mxu0 0.0
    %5125 = vmatpush1.msra.mxu0 %v3290
    %5126 = vmatprep.subr.mxu0 0.0
    %5127 = vmatpush1.msra.mxu0 %v3289
    %5128 = vmatprep.subr.mxu0 0.0
    %5129 = vmatpush1.msra.mxu0 %v3288
    %5130 = vmatprep.subr.mxu0 0.0
    %5131 = vmatpush2.msra.mxu0 0.0
    %5132 = vmatprep.subr.mxu0 0.0
    %5133 = vmatpush2.msra.mxu0 0.0
    %5134 = vmatprep.subr.mxu0 0.0
    %5135 = vmatpush2.msra.mxu0 0.0
    %5136 = vmatprep.subr.mxu0 0.0
    %5137 = vmatpush2.msra.mxu0 0.0
    %5138 = vmatprep.subr.mxu0 0.0
    %5139 = vmatpush2.msra.mxu0 0.0
    %5140 = vmatprep.subr.mxu0 0.0
    %5141 = vmatpush2.msra.mxu0 0.0
    %5142 = vmatprep.subr.mxu0 0.0
    %5143 = vmatpush2.msra.mxu0 0.0
    %5144 = vmatprep.subr.mxu0 0.0
    %5145 = vmatpush2.msra.mxu0 0.0
    %5146 = vmatprep.subr.mxu0 0.0
    %5147 = vmatpush2.msra.mxu0 0.0
    %5148 = vmatprep.subr.mxu0 0.0
    %5149 = vmatpush2.msra.mxu0 0.0
    %5150 = vmatprep.subr.mxu0 0.0
    %5151 = vmatpush2.msra.mxu0 0.0
    %5152 = vmatprep.subr.mxu0 0.0
    %5153 = vmatpush2.msra.mxu0 0.0
    %5154 = vmatprep.subr.mxu0 0.0
    %5155 = vmatpush2.msra.mxu0 0.0
    %5156 = vmatprep.subr.mxu0 0.0
    %5157 = vmatpush2.msra.mxu0 0.0
    %5158 = vmatprep.subr.mxu0 0.0
    %5159 = vmatpush2.msra.mxu0 0.0
    %5160 = vmatprep.subr.mxu0 0.0
    %5161 = vmatpush2.msra.mxu0 0.0
    %5162 = vmatprep.mubr.f32.mxu0 0.0
    %5163 = vmatmul.mubr.f32.gmra.mxu0 %v5096
    %v5164 = vpop.f32.mrf.mxu0
    %v5165 = vadd.f32 %v5090, %v5164
    %v5166 = vpop.f32.mrf.mxu0
    %5167 = vdwg.mxu0
    %v5168 = vadd.f32 %v5165, %v211
    %v5169 = vxor.u32 %v5168, 2147483648
    %v5170 = vmul.f32 %v5169, 1.442695
    %v5171 = vpow.pop %v5170
    %v5172 = vadd.f32 %v5171, 1.0
    %v5173 = vrcp.pop %v5172
    %v5174 = vmul.f32 1.0, %v5173
    %v5175 = vtanh.pop %v5168
    %v5176 = vmul.f32 %v5174, %v4841
    %5178 = vrot.lane.b32.xlu0 %v5175, 32
    %v5179 = vpop.permute.xlu0 %5178
    %v5181 = vmul.f32 %v5174, %v5179
    %5183 = vrot.lane.b32.xlu0 %v5181, 32
    %v5184 = vpop.permute.xlu0 %5183
    %v5186 = vadd.f32 %v5176, %v5184
    %v5187 = vtanh.pop %v5186
    %5189 = vrot.lane.b32.xlu0 %v5187, 32
    %v5190 = vpop.permute.xlu0 %5189
    %v5192 = vmul.f32 %v5174, %v5190
    %v5193 = vld [vmem:[%s2746] sm:$0xff]
    %v5194 = vmax.f32 %v5193, 0.0
    %5195 = vmatprep.subr.mxu0 0.0
    %5196 = vmatpush1.msra.mxu0 0.0
    %5197 = vmatprep.subr.mxu0 0.0
    %5198 = vmatpush1.msra.mxu0 0.0
    %5199 = vmatprep.subr.mxu0 0.0
    %5200 = vmatpush1.msra.mxu0 0.0
    %5201 = vmatprep.subr.mxu0 0.0
    %5202 = vmatpush1.msra.mxu0 0.0
    %5203 = vmatprep.subr.mxu0 0.0
    %5204 = vmatpush1.msra.mxu0 0.0
    %5205 = vmatprep.subr.mxu0 0.0
    %5206 = vmatpush1.msra.mxu0 0.0
    %5207 = vmatprep.subr.mxu0 0.0
    %5208 = vmatpush1.msra.mxu0 0.0
    %5209 = vmatprep.subr.mxu0 0.0
    %5210 = vmatpush1.msra.mxu0 0.0
    %5211 = vmatprep.subr.mxu0 0.0
    %5212 = vmatpush1.msra.mxu0 0.0
    %5213 = vmatprep.subr.mxu0 0.0
    %5214 = vmatpush1.msra.mxu0 0.0
    %5215 = vmatprep.subr.mxu0 0.0
    %5216 = vmatpush1.msra.mxu0 0.0
    %5217 = vmatprep.subr.mxu0 0.0
    %5218 = vmatpush1.msra.mxu0 0.0
    %5219 = vmatprep.subr.mxu0 0.0
    %5220 = vmatpush1.msra.mxu0 %v3119
    %5221 = vmatprep.subr.mxu0 0.0
    %5222 = vmatpush1.msra.mxu0 %v3118
    %5223 = vmatprep.subr.mxu0 0.0
    %5224 = vmatpush1.msra.mxu0 %v3117
    %5225 = vmatprep.subr.mxu0 0.0
    %5226 = vmatpush1.msra.mxu0 %v3116
    %5227 = vmatprep.subr.mxu0 0.0
    %5228 = vmatpush2.msra.mxu0 0.0
    %5229 = vmatprep.subr.mxu0 0.0
    %5230 = vmatpush2.msra.mxu0 0.0
    %5231 = vmatprep.subr.mxu0 0.0
    %5232 = vmatpush2.msra.mxu0 0.0
    %5233 = vmatprep.subr.mxu0 0.0
    %5234 = vmatpush2.msra.mxu0 0.0
    %5235 = vmatprep.subr.mxu0 0.0
    %5236 = vmatpush2.msra.mxu0 0.0
    %5237 = vmatprep.subr.mxu0 0.0
    %5238 = vmatpush2.msra.mxu0 0.0
    %5239 = vmatprep.subr.mxu0 0.0
    %5240 = vmatpush2.msra.mxu0 0.0
    %5241 = vmatprep.subr.mxu0 0.0
    %5242 = vmatpush2.msra.mxu0 0.0
    %5243 = vmatprep.subr.mxu0 0.0
    %5244 = vmatpush2.msra.mxu0 0.0
    %5245 = vmatprep.subr.mxu0 0.0
    %5246 = vmatpush2.msra.mxu0 0.0
    %5247 = vmatprep.subr.mxu0 0.0
    %5248 = vmatpush2.msra.mxu0 0.0
    %5249 = vmatprep.subr.mxu0 0.0
    %5250 = vmatpush2.msra.mxu0 0.0
    %5251 = vmatprep.subr.mxu0 0.0
    %5252 = vmatpush2.msra.mxu0 0.0
    %5253 = vmatprep.subr.mxu0 0.0
    %5254 = vmatpush2.msra.mxu0 0.0
    %5255 = vmatprep.subr.mxu0 0.0
    %5256 = vmatpush2.msra.mxu0 0.0
    %5257 = vmatprep.subr.mxu0 0.0
    %5258 = vmatpush2.msra.mxu0 0.0
    %5259 = vmatprep.mubr.f32.mxu0 0.0
    %5260 = vmatmul.mubr.f32.gmra.mxu0 %v5096
    %v5261 = vpop.f32.mrf.mxu0
    %v5262 = vadd.f32 0.0, %v5261
    %v5263 = vpop.f32.mrf.mxu0
    %5264 = vdwg.mxu0
    %v5266 = vsel %vm220, %v5194, 0
    %5268 = vmatprep.subr.mxu0 0.0
    %5269 = vmatpush1.msra.mxu0 0.0
    %5270 = vmatprep.subr.mxu0 0.0
    %5271 = vmatpush1.msra.mxu0 0.0
    %5272 = vmatprep.subr.mxu0 0.0
    %5273 = vmatpush1.msra.mxu0 0.0
    %5274 = vmatprep.subr.mxu0 0.0
    %5275 = vmatpush1.msra.mxu0 0.0
    %5276 = vmatprep.subr.mxu0 0.0
    %5277 = vmatpush1.msra.mxu0 0.0
    %5278 = vmatprep.subr.mxu0 0.0
    %5279 = vmatpush1.msra.mxu0 0.0
    %5280 = vmatprep.subr.mxu0 0.0
    %5281 = vmatpush1.msra.mxu0 0.0
    %5282 = vmatprep.subr.mxu0 0.0
    %5283 = vmatpush1.msra.mxu0 0.0
    %5284 = vmatprep.subr.mxu0 0.0
    %5285 = vmatpush1.msra.mxu0 0.0
    %5286 = vmatprep.subr.mxu0 0.0
    %5287 = vmatpush1.msra.mxu0 0.0
    %5288 = vmatprep.subr.mxu0 0.0
    %5289 = vmatpush1.msra.mxu0 0.0
    %5290 = vmatprep.subr.mxu0 0.0
    %5291 = vmatpush1.msra.mxu0 0.0
    %5292 = vmatprep.subr.mxu0 0.0
    %5293 = vmatpush1.msra.mxu0 %v3115
    %5294 = vmatprep.subr.mxu0 0.0
    %5295 = vmatpush1.msra.mxu0 %v3114
    %5296 = vmatprep.subr.mxu0 0.0
    %5297 = vmatpush1.msra.mxu0 %v3113
    %5298 = vmatprep.subr.mxu0 0.0
    %5299 = vmatpush1.msra.mxu0 %v3112
    %5300 = vmatprep.subr.mxu0 0.0
    %5301 = vmatpush2.msra.mxu0 0.0
    %5302 = vmatprep.subr.mxu0 0.0
    %5303 = vmatpush2.msra.mxu0 0.0
    %5304 = vmatprep.subr.mxu0 0.0
    %5305 = vmatpush2.msra.mxu0 0.0
    %5306 = vmatprep.subr.mxu0 0.0
    %5307 = vmatpush2.msra.mxu0 0.0
    %5308 = vmatprep.subr.mxu0 0.0
    %5309 = vmatpush2.msra.mxu0 0.0
    %5310 = vmatprep.subr.mxu0 0.0
    %5311 = vmatpush2.msra.mxu0 0.0
    %5312 = vmatprep.subr.mxu0 0.0
    %5313 = vmatpush2.msra.mxu0 0.0
    %5314 = vmatprep.subr.mxu0 0.0
    %5315 = vmatpush2.msra.mxu0 0.0
    %5316 = vmatprep.subr.mxu0 0.0
    %5317 = vmatpush2.msra.mxu0 0.0
    %5318 = vmatprep.subr.mxu0 0.0
    %5319 = vmatpush2.msra.mxu0 0.0
    %5320 = vmatprep.subr.mxu0 0.0
    %5321 = vmatpush2.msra.mxu0 0.0
    %5322 = vmatprep.subr.mxu0 0.0
    %5323 = vmatpush2.msra.mxu0 0.0
    %5324 = vmatprep.subr.mxu0 0.0
    %5325 = vmatpush2.msra.mxu0 0.0
    %5326 = vmatprep.subr.mxu0 0.0
    %5327 = vmatpush2.msra.mxu0 0.0
    %5328 = vmatprep.subr.mxu0 0.0
    %5329 = vmatpush2.msra.mxu0 0.0
    %5330 = vmatprep.subr.mxu0 0.0
    %5331 = vmatpush2.msra.mxu0 0.0
    %5332 = vmatprep.mubr.f32.mxu0 0.0
    %5333 = vmatmul.mubr.f32.gmra.mxu0 %v5266
    %v5334 = vpop.f32.mrf.mxu0
    %v5335 = vadd.f32 %v5262, %v5334
    %v5336 = vpop.f32.mrf.mxu0
    %5337 = vdwg.mxu0
    %v5338 = vadd.f32 %v5335, %v204
    %v5339 = vxor.u32 %v5338, 2147483648
    %v5340 = vmul.f32 %v5339, 1.442695
    %v5341 = vpow.pop %v5340
    %v5342 = vadd.f32 %v5341, 1.0
    %v5343 = vrcp.pop %v5342
    %v5344 = vmul.f32 1.0, %v5343
    %v5345 = vtanh.pop %v5338
    %v5346 = vmul.f32 %v5344, %v5011
    %5348 = vrot.lane.b32.xlu0 %v5345, 32
    %v5349 = vpop.permute.xlu0 %5348
    %v5351 = vmul.f32 %v5344, %v5349
    %5353 = vrot.lane.b32.xlu0 %v5351, 32
    %v5354 = vpop.permute.xlu0 %5353
    %v5356 = vadd.f32 %v5346, %v5354
    %v5357 = vtanh.pop %v5356
    %5359 = vrot.lane.b32.xlu0 %v5357, 32
    %v5360 = vpop.permute.xlu0 %5359
    %v5362 = vmul.f32 %v5344, %v5360
    %5364 = vrot.lane.b32.xlu0 %v5192, 64
    %v5365 = vpop.permute.xlu0 %5364
    %v5366 = vsel %vm220, %v5365, 0
    %5368 = vmatprep.subr.mxu0 0.0
    %5369 = vmatpush1.msra.mxu0 0.0
    %5370 = vmatprep.subr.mxu0 0.0
    %5371 = vmatpush1.msra.mxu0 0.0
    %5372 = vmatprep.subr.mxu0 0.0
    %5373 = vmatpush1.msra.mxu0 0.0
    %5374 = vmatprep.subr.mxu0 0.0
    %5375 = vmatpush1.msra.mxu0 0.0
    %5376 = vmatprep.subr.mxu0 0.0
    %5377 = vmatpush1.msra.mxu0 0.0
    %5378 = vmatprep.subr.mxu0 0.0
    %5379 = vmatpush1.msra.mxu0 0.0
    %5380 = vmatprep.subr.mxu0 0.0
    %5381 = vmatpush1.msra.mxu0 0.0
    %5382 = vmatprep.subr.mxu0 0.0
    %5383 = vmatpush1.msra.mxu0 0.0
    %5384 = vmatprep.subr.mxu0 0.0
    %5385 = vmatpush1.msra.mxu0 0.0
    %5386 = vmatprep.subr.mxu0 0.0
    %5387 = vmatpush1.msra.mxu0 0.0
    %5388 = vmatprep.subr.mxu0 0.0
    %5389 = vmatpush1.msra.mxu0 0.0
    %5390 = vmatprep.subr.mxu0 0.0
    %5391 = vmatpush1.msra.mxu0 0.0
    %5392 = vmatprep.subr.mxu0 0.0
    %5393 = vmatpush1.msra.mxu0 %v3295
    %5394 = vmatprep.subr.mxu0 0.0
    %5395 = vmatpush1.msra.mxu0 %v3294
    %5396 = vmatprep.subr.mxu0 0.0
    %5397 = vmatpush1.msra.mxu0 %v3293
    %5398 = vmatprep.subr.mxu0 0.0
    %5399 = vmatpush1.msra.mxu0 %v3292
    %5400 = vmatprep.subr.mxu0 0.0
    %5401 = vmatpush2.msra.mxu0 0.0
    %5402 = vmatprep.subr.mxu0 0.0
    %5403 = vmatpush2.msra.mxu0 0.0
    %5404 = vmatprep.subr.mxu0 0.0
    %5405 = vmatpush2.msra.mxu0 0.0
    %5406 = vmatprep.subr.mxu0 0.0
    %5407 = vmatpush2.msra.mxu0 0.0
    %5408 = vmatprep.subr.mxu0 0.0
    %5409 = vmatpush2.msra.mxu0 0.0
    %5410 = vmatprep.subr.mxu0 0.0
    %5411 = vmatpush2.msra.mxu0 0.0
    %5412 = vmatprep.subr.mxu0 0.0
    %5413 = vmatpush2.msra.mxu0 0.0
    %5414 = vmatprep.subr.mxu0 0.0
    %5415 = vmatpush2.msra.mxu0 0.0
    %5416 = vmatprep.subr.mxu0 0.0
    %5417 = vmatpush2.msra.mxu0 0.0
    %5418 = vmatprep.subr.mxu0 0.0
    %5419 = vmatpush2.msra.mxu0 0.0
    %5420 = vmatprep.subr.mxu0 0.0
    %5421 = vmatpush2.msra.mxu0 0.0
    %5422 = vmatprep.subr.mxu0 0.0
    %5423 = vmatpush2.msra.mxu0 0.0
    %5424 = vmatprep.subr.mxu0 0.0
    %5425 = vmatpush2.msra.mxu0 0.0
    %5426 = vmatprep.subr.mxu0 0.0
    %5427 = vmatpush2.msra.mxu0 0.0
    %5428 = vmatprep.subr.mxu0 0.0
    %5429 = vmatpush2.msra.mxu0 0.0
    %5430 = vmatprep.subr.mxu0 0.0
    %5431 = vmatpush2.msra.mxu0 0.0
    %5432 = vmatprep.mubr.f32.mxu0 0.0
    %5433 = vmatmul.mubr.f32.gmra.mxu0 %v5366
    %v5434 = vpop.f32.mrf.mxu0
    %v5435 = vadd.f32 0.0, %v5434
    %v5436 = vpop.f32.mrf.mxu0
    %5437 = vdwg.mxu0
    %5439 = vrot.lane.b32.xlu0 %v5362, 64
    %v5440 = vpop.permute.xlu0 %5439
    %v5441 = vsel %vm220, %v5440, 0
    %5443 = vmatprep.subr.mxu0 0.0
    %5444 = vmatpush1.msra.mxu0 0.0
    %5445 = vmatprep.subr.mxu0 0.0
    %5446 = vmatpush1.msra.mxu0 0.0
    %5447 = vmatprep.subr.mxu0 0.0
    %5448 = vmatpush1.msra.mxu0 0.0
    %5449 = vmatprep.subr.mxu0 0.0
    %5450 = vmatpush1.msra.mxu0 0.0
    %5451 = vmatprep.subr.mxu0 0.0
    %5452 = vmatpush1.msra.mxu0 0.0
    %5453 = vmatprep.subr.mxu0 0.0
    %5454 = vmatpush1.msra.mxu0 0.0
    %5455 = vmatprep.subr.mxu0 0.0
    %5456 = vmatpush1.msra.mxu0 0.0
    %5457 = vmatprep.subr.mxu0 0.0
    %5458 = vmatpush1.msra.mxu0 0.0
    %5459 = vmatprep.subr.mxu0 0.0
    %5460 = vmatpush1.msra.mxu0 0.0
    %5461 = vmatprep.subr.mxu0 0.0
    %5462 = vmatpush1.msra.mxu0 0.0
    %5463 = vmatprep.subr.mxu0 0.0
    %5464 = vmatpush1.msra.mxu0 0.0
    %5465 = vmatprep.subr.mxu0 0.0
    %5466 = vmatpush1.msra.mxu0 0.0
    %5467 = vmatprep.subr.mxu0 0.0
    %5468 = vmatpush1.msra.mxu0 %v3291
    %5469 = vmatprep.subr.mxu0 0.0
    %5470 = vmatpush1.msra.mxu0 %v3290
    %5471 = vmatprep.subr.mxu0 0.0
    %5472 = vmatpush1.msra.mxu0 %v3289
    %5473 = vmatprep.subr.mxu0 0.0
    %5474 = vmatpush1.msra.mxu0 %v3288
    %5475 = vmatprep.subr.mxu0 0.0
    %5476 = vmatpush2.msra.mxu0 0.0
    %5477 = vmatprep.subr.mxu0 0.0
    %5478 = vmatpush2.msra.mxu0 0.0
    %5479 = vmatprep.subr.mxu0 0.0
    %5480 = vmatpush2.msra.mxu0 0.0
    %5481 = vmatprep.subr.mxu0 0.0
    %5482 = vmatpush2.msra.mxu0 0.0
    %5483 = vmatprep.subr.mxu0 0.0
    %5484 = vmatpush2.msra.mxu0 0.0
    %5485 = vmatprep.subr.mxu0 0.0
    %5486 = vmatpush2.msra.mxu0 0.0
    %5487 = vmatprep.subr.mxu0 0.0
    %5488 = vmatpush2.msra.mxu0 0.0
    %5489 = vmatprep.subr.mxu0 0.0
    %5490 = vmatpush2.msra.mxu0 0.0
    %5491 = vmatprep.subr.mxu0 0.0
    %5492 = vmatpush2.msra.mxu0 0.0
    %5493 = vmatprep.subr.mxu0 0.0
    %5494 = vmatpush2.msra.mxu0 0.0
    %5495 = vmatprep.subr.mxu0 0.0
    %5496 = vmatpush2.msra.mxu0 0.0
    %5497 = vmatprep.subr.mxu0 0.0
    %5498 = vmatpush2.msra.mxu0 0.0
    %5499 = vmatprep.subr.mxu0 0.0
    %5500 = vmatpush2.msra.mxu0 0.0
    %5501 = vmatprep.subr.mxu0 0.0
    %5502 = vmatpush2.msra.mxu0 0.0
    %5503 = vmatprep.subr.mxu0 0.0
    %5504 = vmatpush2.msra.mxu0 0.0
    %5505 = vmatprep.subr.mxu0 0.0
    %5506 = vmatpush2.msra.mxu0 0.0
    %5507 = vmatprep.mubr.f32.mxu0 0.0
    %5508 = vmatmul.mubr.f32.gmra.mxu0 %v5441
    %v5509 = vpop.f32.mrf.mxu0
    %v5510 = vadd.f32 %v5435, %v5509
    %v5511 = vpop.f32.mrf.mxu0
    %5512 = vdwg.mxu0
    %v5513 = vadd.f32 %v5510, %v211
    %v5514 = vxor.u32 %v5513, 2147483648
    %v5515 = vmul.f32 %v5514, 1.442695
    %v5516 = vpow.pop %v5515
    %v5517 = vadd.f32 %v5516, 1.0
    %v5518 = vrcp.pop %v5517
    %v5519 = vmul.f32 1.0, %v5518
    %v5520 = vtanh.pop %v5513
    %v5521 = vmul.f32 %v5519, %v5186
    %5523 = vrot.lane.b32.xlu0 %v5520, 32
    %v5524 = vpop.permute.xlu0 %5523
    %v5526 = vmul.f32 %v5519, %v5524
    %5528 = vrot.lane.b32.xlu0 %v5526, 32
    %v5529 = vpop.permute.xlu0 %5528
    %v5531 = vadd.f32 %v5521, %v5529
    %v5532 = vtanh.pop %v5531
    %5534 = vrot.lane.b32.xlu0 %v5532, 32
    %v5535 = vpop.permute.xlu0 %5534
    %v5537 = vmul.f32 %v5519, %v5535
    %v5538 = vld [vmem:[%s3108] sm:$0xff]
    %v5539 = vmax.f32 %v5538, 0.0
    %5540 = vmatprep.subr.mxu0 0.0
    %5541 = vmatpush1.msra.mxu0 0.0
    %5542 = vmatprep.subr.mxu0 0.0
    %5543 = vmatpush1.msra.mxu0 0.0
    %5544 = vmatprep.subr.mxu0 0.0
    %5545 = vmatpush1.msra.mxu0 0.0
    %5546 = vmatprep.subr.mxu0 0.0
    %5547 = vmatpush1.msra.mxu0 0.0
    %5548 = vmatprep.subr.mxu0 0.0
    %5549 = vmatpush1.msra.mxu0 0.0
    %5550 = vmatprep.subr.mxu0 0.0
    %5551 = vmatpush1.msra.mxu0 0.0
    %5552 = vmatprep.subr.mxu0 0.0
    %5553 = vmatpush1.msra.mxu0 0.0
    %5554 = vmatprep.subr.mxu0 0.0
    %5555 = vmatpush1.msra.mxu0 0.0
    %5556 = vmatprep.subr.mxu0 0.0
    %5557 = vmatpush1.msra.mxu0 0.0
    %5558 = vmatprep.subr.mxu0 0.0
    %5559 = vmatpush1.msra.mxu0 0.0
    %5560 = vmatprep.subr.mxu0 0.0
    %5561 = vmatpush1.msra.mxu0 0.0
    %5562 = vmatprep.subr.mxu0 0.0
    %5563 = vmatpush1.msra.mxu0 0.0
    %5564 = vmatprep.subr.mxu0 0.0
    %5565 = vmatpush1.msra.mxu0 %v3119
    %5566 = vmatprep.subr.mxu0 0.0
    %5567 = vmatpush1.msra.mxu0 %v3118
    %5568 = vmatprep.subr.mxu0 0.0
    %5569 = vmatpush1.msra.mxu0 %v3117
    %5570 = vmatprep.subr.mxu0 0.0
    %5571 = vmatpush1.msra.mxu0 %v3116
    %5572 = vmatprep.subr.mxu0 0.0
    %5573 = vmatpush2.msra.mxu0 0.0
    %5574 = vmatprep.subr.mxu0 0.0
    %5575 = vmatpush2.msra.mxu0 0.0
    %5576 = vmatprep.subr.mxu0 0.0
    %5577 = vmatpush2.msra.mxu0 0.0
    %5578 = vmatprep.subr.mxu0 0.0
    %5579 = vmatpush2.msra.mxu0 0.0
    %5580 = vmatprep.subr.mxu0 0.0
    %5581 = vmatpush2.msra.mxu0 0.0
    %5582 = vmatprep.subr.mxu0 0.0
    %5583 = vmatpush2.msra.mxu0 0.0
    %5584 = vmatprep.subr.mxu0 0.0
    %5585 = vmatpush2.msra.mxu0 0.0
    %5586 = vmatprep.subr.mxu0 0.0
    %5587 = vmatpush2.msra.mxu0 0.0
    %5588 = vmatprep.subr.mxu0 0.0
    %5589 = vmatpush2.msra.mxu0 0.0
    %5590 = vmatprep.subr.mxu0 0.0
    %5591 = vmatpush2.msra.mxu0 0.0
    %5592 = vmatprep.subr.mxu0 0.0
    %5593 = vmatpush2.msra.mxu0 0.0
    %5594 = vmatprep.subr.mxu0 0.0
    %5595 = vmatpush2.msra.mxu0 0.0
    %5596 = vmatprep.subr.mxu0 0.0
    %5597 = vmatpush2.msra.mxu0 0.0
    %5598 = vmatprep.subr.mxu0 0.0
    %5599 = vmatpush2.msra.mxu0 0.0
    %5600 = vmatprep.subr.mxu0 0.0
    %5601 = vmatpush2.msra.mxu0 0.0
    %5602 = vmatprep.subr.mxu0 0.0
    %5603 = vmatpush2.msra.mxu0 0.0
    %5604 = vmatprep.mubr.f32.mxu0 0.0
    %5605 = vmatmul.mubr.f32.gmra.mxu0 %v5441
    %v5606 = vpop.f32.mrf.mxu0
    %v5607 = vadd.f32 0.0, %v5606
    %v5608 = vpop.f32.mrf.mxu0
    %5609 = vdwg.mxu0
    %v5611 = vsel %vm220, %v5539, 0
    %5613 = vmatprep.subr.mxu0 0.0
    %5614 = vmatpush1.msra.mxu0 0.0
    %5615 = vmatprep.subr.mxu0 0.0
    %5616 = vmatpush1.msra.mxu0 0.0
    %5617 = vmatprep.subr.mxu0 0.0
    %5618 = vmatpush1.msra.mxu0 0.0
    %5619 = vmatprep.subr.mxu0 0.0
    %5620 = vmatpush1.msra.mxu0 0.0
    %5621 = vmatprep.subr.mxu0 0.0
    %5622 = vmatpush1.msra.mxu0 0.0
    %5623 = vmatprep.subr.mxu0 0.0
    %5624 = vmatpush1.msra.mxu0 0.0
    %5625 = vmatprep.subr.mxu0 0.0
    %5626 = vmatpush1.msra.mxu0 0.0
    %5627 = vmatprep.subr.mxu0 0.0
    %5628 = vmatpush1.msra.mxu0 0.0
    %5629 = vmatprep.subr.mxu0 0.0
    %5630 = vmatpush1.msra.mxu0 0.0
    %5631 = vmatprep.subr.mxu0 0.0
    %5632 = vmatpush1.msra.mxu0 0.0
    %5633 = vmatprep.subr.mxu0 0.0
    %5634 = vmatpush1.msra.mxu0 0.0
    %5635 = vmatprep.subr.mxu0 0.0
    %5636 = vmatpush1.msra.mxu0 0.0
    %5637 = vmatprep.subr.mxu0 0.0
    %5638 = vmatpush1.msra.mxu0 %v3115
    %5639 = vmatprep.subr.mxu0 0.0
    %5640 = vmatpush1.msra.mxu0 %v3114
    %5641 = vmatprep.subr.mxu0 0.0
    %5642 = vmatpush1.msra.mxu0 %v3113
    %5643 = vmatprep.subr.mxu0 0.0
    %5644 = vmatpush1.msra.mxu0 %v3112
    %5645 = vmatprep.subr.mxu0 0.0
    %5646 = vmatpush2.msra.mxu0 0.0
    %5647 = vmatprep.subr.mxu0 0.0
    %5648 = vmatpush2.msra.mxu0 0.0
    %5649 = vmatprep.subr.mxu0 0.0
    %5650 = vmatpush2.msra.mxu0 0.0
    %5651 = vmatprep.subr.mxu0 0.0
    %5652 = vmatpush2.msra.mxu0 0.0
    %5653 = vmatprep.subr.mxu0 0.0
    %5654 = vmatpush2.msra.mxu0 0.0
    %5655 = vmatprep.subr.mxu0 0.0
    %5656 = vmatpush2.msra.mxu0 0.0
    %5657 = vmatprep.subr.mxu0 0.0
    %5658 = vmatpush2.msra.mxu0 0.0
    %5659 = vmatprep.subr.mxu0 0.0
    %5660 = vmatpush2.msra.mxu0 0.0
    %5661 = vmatprep.subr.mxu0 0.0
    %5662 = vmatpush2.msra.mxu0 0.0
    %5663 = vmatprep.subr.mxu0 0.0
    %5664 = vmatpush2.msra.mxu0 0.0
    %5665 = vmatprep.subr.mxu0 0.0
    %5666 = vmatpush2.msra.mxu0 0.0
    %5667 = vmatprep.subr.mxu0 0.0
    %5668 = vmatpush2.msra.mxu0 0.0
    %5669 = vmatprep.subr.mxu0 0.0
    %5670 = vmatpush2.msra.mxu0 0.0
    %5671 = vmatprep.subr.mxu0 0.0
    %5672 = vmatpush2.msra.mxu0 0.0
    %5673 = vmatprep.subr.mxu0 0.0
    %5674 = vmatpush2.msra.mxu0 0.0
    %5675 = vmatprep.subr.mxu0 0.0
    %5676 = vmatpush2.msra.mxu0 0.0
    %5677 = vmatprep.mubr.f32.mxu0 0.0
    %5678 = vmatmul.mubr.f32.gmra.mxu0 %v5611
    %v5679 = vpop.f32.mrf.mxu0
    %v5680 = vadd.f32 %v5607, %v5679
    %v5681 = vpop.f32.mrf.mxu0
    %5682 = vdwg.mxu0
    %v5683 = vadd.f32 %v5680, %v204
    %v5684 = vxor.u32 %v5683, 2147483648
    %v5685 = vmul.f32 %v5684, 1.442695
    %v5686 = vpow.pop %v5685
    %v5687 = vadd.f32 %v5686, 1.0
    %v5688 = vrcp.pop %v5687
    %v5689 = vmul.f32 1.0, %v5688
    %v5690 = vtanh.pop %v5683
    %v5691 = vmul.f32 %v5689, %v5356
    %5693 = vrot.lane.b32.xlu0 %v5690, 32
    %v5694 = vpop.permute.xlu0 %5693
    %v5696 = vmul.f32 %v5689, %v5694
    %5698 = vrot.lane.b32.xlu0 %v5696, 32
    %v5699 = vpop.permute.xlu0 %5698
    %v5701 = vadd.f32 %v5691, %v5699
    %v5702 = vtanh.pop %v5701
    %5704 = vrot.lane.b32.xlu0 %v5702, 32
    %v5705 = vpop.permute.xlu0 %5704
    %v5707 = vmul.f32 %v5689, %v5705
    %5709 = vrot.lane.b32.xlu0 %v5537, 64
    %v5710 = vpop.permute.xlu0 %5709
    %v5711 = vsel %vm220, %v5710, 0
    %5713 = vmatprep.subr.mxu0 0.0
    %5714 = vmatpush1.msra.mxu0 0.0
    %5715 = vmatprep.subr.mxu0 0.0
    %5716 = vmatpush1.msra.mxu0 0.0
    %5717 = vmatprep.subr.mxu0 0.0
    %5718 = vmatpush1.msra.mxu0 0.0
    %5719 = vmatprep.subr.mxu0 0.0
    %5720 = vmatpush1.msra.mxu0 0.0
    %5721 = vmatprep.subr.mxu0 0.0
    %5722 = vmatpush1.msra.mxu0 0.0
    %5723 = vmatprep.subr.mxu0 0.0
    %5724 = vmatpush1.msra.mxu0 0.0
    %5725 = vmatprep.subr.mxu0 0.0
    %5726 = vmatpush1.msra.mxu0 0.0
    %5727 = vmatprep.subr.mxu0 0.0
    %5728 = vmatpush1.msra.mxu0 0.0
    %5729 = vmatprep.subr.mxu0 0.0
    %5730 = vmatpush1.msra.mxu0 0.0
    %5731 = vmatprep.subr.mxu0 0.0
    %5732 = vmatpush1.msra.mxu0 0.0
    %5733 = vmatprep.subr.mxu0 0.0
    %5734 = vmatpush1.msra.mxu0 0.0
    %5735 = vmatprep.subr.mxu0 0.0
    %5736 = vmatpush1.msra.mxu0 0.0
    %5737 = vmatprep.subr.mxu0 0.0
    %5738 = vmatpush1.msra.mxu0 %v3295
    %5739 = vmatprep.subr.mxu0 0.0
    %5740 = vmatpush1.msra.mxu0 %v3294
    %5741 = vmatprep.subr.mxu0 0.0
    %5742 = vmatpush1.msra.mxu0 %v3293
    %5743 = vmatprep.subr.mxu0 0.0
    %5744 = vmatpush1.msra.mxu0 %v3292
    %5745 = vmatprep.subr.mxu0 0.0
    %5746 = vmatpush2.msra.mxu0 0.0
    %5747 = vmatprep.subr.mxu0 0.0
    %5748 = vmatpush2.msra.mxu0 0.0
    %5749 = vmatprep.subr.mxu0 0.0
    %5750 = vmatpush2.msra.mxu0 0.0
    %5751 = vmatprep.subr.mxu0 0.0
    %5752 = vmatpush2.msra.mxu0 0.0
    %5753 = vmatprep.subr.mxu0 0.0
    %5754 = vmatpush2.msra.mxu0 0.0
    %5755 = vmatprep.subr.mxu0 0.0
    %5756 = vmatpush2.msra.mxu0 0.0
    %5757 = vmatprep.subr.mxu0 0.0
    %5758 = vmatpush2.msra.mxu0 0.0
    %5759 = vmatprep.subr.mxu0 0.0
    %5760 = vmatpush2.msra.mxu0 0.0
    %5761 = vmatprep.subr.mxu0 0.0
    %5762 = vmatpush2.msra.mxu0 0.0
    %5763 = vmatprep.subr.mxu0 0.0
    %5764 = vmatpush2.msra.mxu0 0.0
    %5765 = vmatprep.subr.mxu0 0.0
    %5766 = vmatpush2.msra.mxu0 0.0
    %5767 = vmatprep.subr.mxu0 0.0
    %5768 = vmatpush2.msra.mxu0 0.0
    %5769 = vmatprep.subr.mxu0 0.0
    %5770 = vmatpush2.msra.mxu0 0.0
    %5771 = vmatprep.subr.mxu0 0.0
    %5772 = vmatpush2.msra.mxu0 0.0
    %5773 = vmatprep.subr.mxu0 0.0
    %5774 = vmatpush2.msra.mxu0 0.0
    %5775 = vmatprep.subr.mxu0 0.0
    %5776 = vmatpush2.msra.mxu0 0.0
    %5777 = vmatprep.mubr.f32.mxu0 0.0
    %5778 = vmatmul.mubr.f32.gmra.mxu0 %v5711
    %v5779 = vpop.f32.mrf.mxu0
    %v5780 = vadd.f32 0.0, %v5779
    %v5781 = vpop.f32.mrf.mxu0
    %5782 = vdwg.mxu0
    %5784 = vrot.lane.b32.xlu0 %v5707, 64
    %v5785 = vpop.permute.xlu0 %5784
    %v5786 = vsel %vm220, %v5785, 0
    %5788 = vmatprep.subr.mxu0 0.0
    %5789 = vmatpush1.msra.mxu0 0.0
    %5790 = vmatprep.subr.mxu0 0.0
    %5791 = vmatpush1.msra.mxu0 0.0
    %5792 = vmatprep.subr.mxu0 0.0
    %5793 = vmatpush1.msra.mxu0 0.0
    %5794 = vmatprep.subr.mxu0 0.0
    %5795 = vmatpush1.msra.mxu0 0.0
    %5796 = vmatprep.subr.mxu0 0.0
    %5797 = vmatpush1.msra.mxu0 0.0
    %5798 = vmatprep.subr.mxu0 0.0
    %5799 = vmatpush1.msra.mxu0 0.0
    %5800 = vmatprep.subr.mxu0 0.0
    %5801 = vmatpush1.msra.mxu0 0.0
    %5802 = vmatprep.subr.mxu0 0.0
    %5803 = vmatpush1.msra.mxu0 0.0
    %5804 = vmatprep.subr.mxu0 0.0
    %5805 = vmatpush1.msra.mxu0 0.0
    %5806 = vmatprep.subr.mxu0 0.0
    %5807 = vmatpush1.msra.mxu0 0.0
    %5808 = vmatprep.subr.mxu0 0.0
    %5809 = vmatpush1.msra.mxu0 0.0
    %5810 = vmatprep.subr.mxu0 0.0
    %5811 = vmatpush1.msra.mxu0 0.0
    %5812 = vmatprep.subr.mxu0 0.0
    %5813 = vmatpush1.msra.mxu0 %v3291
    %5814 = vmatprep.subr.mxu0 0.0
    %5815 = vmatpush1.msra.mxu0 %v3290
    %5816 = vmatprep.subr.mxu0 0.0
    %5817 = vmatpush1.msra.mxu0 %v3289
    %5818 = vmatprep.subr.mxu0 0.0
    %5819 = vmatpush1.msra.mxu0 %v3288
    %5820 = vmatprep.subr.mxu0 0.0
    %5821 = vmatpush2.msra.mxu0 0.0
    %5822 = vmatprep.subr.mxu0 0.0
    %5823 = vmatpush2.msra.mxu0 0.0
    %5824 = vmatprep.subr.mxu0 0.0
    %5825 = vmatpush2.msra.mxu0 0.0
    %5826 = vmatprep.subr.mxu0 0.0
    %5827 = vmatpush2.msra.mxu0 0.0
    %5828 = vmatprep.subr.mxu0 0.0
    %5829 = vmatpush2.msra.mxu0 0.0
    %5830 = vmatprep.subr.mxu0 0.0
    %5831 = vmatpush2.msra.mxu0 0.0
    %5832 = vmatprep.subr.mxu0 0.0
    %5833 = vmatpush2.msra.mxu0 0.0
    %5834 = vmatprep.subr.mxu0 0.0
    %5835 = vmatpush2.msra.mxu0 0.0
    %5836 = vmatprep.subr.mxu0 0.0
    %5837 = vmatpush2.msra.mxu0 0.0
    %5838 = vmatprep.subr.mxu0 0.0
    %5839 = vmatpush2.msra.mxu0 0.0
    %5840 = vmatprep.subr.mxu0 0.0
    %5841 = vmatpush2.msra.mxu0 0.0
    %5842 = vmatprep.subr.mxu0 0.0
    %5843 = vmatpush2.msra.mxu0 0.0
    %5844 = vmatprep.subr.mxu0 0.0
    %5845 = vmatpush2.msra.mxu0 0.0
    %5846 = vmatprep.subr.mxu0 0.0
    %5847 = vmatpush2.msra.mxu0 0.0
    %5848 = vmatprep.subr.mxu0 0.0
    %5849 = vmatpush2.msra.mxu0 0.0
    %5850 = vmatprep.subr.mxu0 0.0
    %5851 = vmatpush2.msra.mxu0 0.0
    %5852 = vmatprep.mubr.f32.mxu0 0.0
    %5853 = vmatmul.mubr.f32.gmra.mxu0 %v5786
    %v5854 = vpop.f32.mrf.mxu0
    %v5855 = vadd.f32 %v5780, %v5854
    %v5856 = vpop.f32.mrf.mxu0
    %5857 = vdwg.mxu0
    %v5858 = vadd.f32 %v5855, %v211
    %v5859 = vxor.u32 %v5858, 2147483648
    %v5860 = vmul.f32 %v5859, 1.442695
    %v5861 = vpow.pop %v5860
    %v5862 = vadd.f32 %v5861, 1.0
    %v5863 = vrcp.pop %v5862
    %v5864 = vmul.f32 1.0, %v5863
    %v5865 = vtanh.pop %v5858
    %v5866 = vmul.f32 %v5864, %v5531
    %5868 = vrot.lane.b32.xlu0 %v5865, 32
    %v5869 = vpop.permute.xlu0 %5868
    %v5871 = vmul.f32 %v5864, %v5869
    %5873 = vrot.lane.b32.xlu0 %v5871, 32
    %v5874 = vpop.permute.xlu0 %5873
    %v5876 = vadd.f32 %v5866, %v5874
    %v5877 = vtanh.pop %v5876
    %5879 = vrot.lane.b32.xlu0 %v5877, 32
    %v5880 = vpop.permute.xlu0 %5879
    %v5882 = vmul.f32 %v5864, %v5880
    %v5883 = vld [vmem:[#allocation18] sm:$0xff]
    %v5884 = vld [vmem:[#allocation18 + $0x8] sm:$0xff]
    %v5885 = vld [vmem:[#allocation18 + $0x10] sm:$0xff]
    %v5886 = vld [vmem:[#allocation18 + $0x18] sm:$0xff]
    %v5887 = vld [vmem:[%s14] sm:$0x1]
    %v5889 = vlaneseq
    %v5890 = vshrl.u32 %v5889, 7
    %v5891 = vsub.s32 0, %v5890
    %v5892 = vrot.slane %v5887, %v5891
    %5895 = vrot.lane.b32.xlu0 %v5882, 64
    %v5896 = vpop.permute.xlu0 %5895
    %v5897 = vsel %vm220, %v5896, 0
    %5899 = vmatprep.subr.mxu0 0.0
    %5900 = vmatpush1.msra.mxu0 0.0
    %5901 = vmatprep.subr.mxu0 0.0
    %5902 = vmatpush1.msra.mxu0 0.0
    %5903 = vmatprep.subr.mxu0 0.0
    %5904 = vmatpush1.msra.mxu0 0.0
    %5905 = vmatprep.subr.mxu0 0.0
    %5906 = vmatpush1.msra.mxu0 0.0
    %5907 = vmatprep.subr.mxu0 0.0
    %5908 = vmatpush1.msra.mxu0 0.0
    %5909 = vmatprep.subr.mxu0 0.0
    %5910 = vmatpush1.msra.mxu0 0.0
    %5911 = vmatprep.subr.mxu0 0.0
    %5912 = vmatpush1.msra.mxu0 0.0
    %5913 = vmatprep.subr.mxu0 0.0
    %5914 = vmatpush1.msra.mxu0 0.0
    %5915 = vmatprep.subr.mxu0 0.0
    %5916 = vmatpush1.msra.mxu0 0.0
    %5917 = vmatprep.subr.mxu0 0.0
    %5918 = vmatpush1.msra.mxu0 0.0
    %5919 = vmatprep.subr.mxu0 0.0
    %5920 = vmatpush1.msra.mxu0 0.0
    %5921 = vmatprep.subr.mxu0 0.0
    %5922 = vmatpush1.msra.mxu0 0.0
    %5923 = vmatprep.subr.mxu0 0.0
    %5924 = vmatpush1.msra.mxu0 %v5886
    %5925 = vmatprep.subr.mxu0 0.0
    %5926 = vmatpush1.msra.mxu0 %v5885
    %5927 = vmatprep.subr.mxu0 0.0
    %5928 = vmatpush1.msra.mxu0 %v5884
    %5929 = vmatprep.subr.mxu0 0.0
    %5930 = vmatpush1.msra.mxu0 %v5883
    %5931 = vmatprep.subr.mxu0 0.0
    %5932 = vmatpush2.msra.mxu0 0.0
    %5933 = vmatprep.subr.mxu0 0.0
    %5934 = vmatpush2.msra.mxu0 0.0
    %5935 = vmatprep.subr.mxu0 0.0
    %5936 = vmatpush2.msra.mxu0 0.0
    %5937 = vmatprep.subr.mxu0 0.0
    %5938 = vmatpush2.msra.mxu0 0.0
    %5939 = vmatprep.subr.mxu0 0.0
    %5940 = vmatpush2.msra.mxu0 0.0
    %5941 = vmatprep.subr.mxu0 0.0
    %5942 = vmatpush2.msra.mxu0 0.0
    %5943 = vmatprep.subr.mxu0 0.0
    %5944 = vmatpush2.msra.mxu0 0.0
    %5945 = vmatprep.subr.mxu0 0.0
    %5946 = vmatpush2.msra.mxu0 0.0
    %5947 = vmatprep.subr.mxu0 0.0
    %5948 = vmatpush2.msra.mxu0 0.0
    %5949 = vmatprep.subr.mxu0 0.0
    %5950 = vmatpush2.msra.mxu0 0.0
    %5951 = vmatprep.subr.mxu0 0.0
    %5952 = vmatpush2.msra.mxu0 0.0
    %5953 = vmatprep.subr.mxu0 0.0
    %5954 = vmatpush2.msra.mxu0 0.0
    %5955 = vmatprep.subr.mxu0 0.0
    %5956 = vmatpush2.msra.mxu0 0.0
    %5957 = vmatprep.subr.mxu0 0.0
    %5958 = vmatpush2.msra.mxu0 0.0
    %5959 = vmatprep.subr.mxu0 0.0
    %5960 = vmatpush2.msra.mxu0 0.0
    %5961 = vmatprep.subr.mxu0 0.0
    %5962 = vmatpush2.msra.mxu0 0.0
    %5963 = vmatprep.mubr.f32.mxu0 0.0
    %5964 = vmatmul.mubr.f32.gmra.mxu0 %v5897
    %v5965 = vpop.f32.mrf.mxu0
    %v5966 = vadd.f32 %v5892, %v5965
    %v5967 = vpop.f32.mrf.mxu0
    %5968 = vdwg.mxu0
    %5969 = vst [vmem:[#allocation20] sm:$0xff] %v5966
    // Predicated region
    $region102: #{tpu_custom_call.1} parent=1 // pred_check
      _
    $region103: #{tpu_custom_call.1} parent=1 // pred_check_branch
      %5971 = sbr.rel (0) target = $region105
    $region104: #{tpu_custom_call.1} parent=1 // pred_region
      %s5973 = ssub.s32 128, 128
      %5974 = vsyncadd [#allocation5], %s5973
      %s5976 = sshll.u32 [#allocation20], 4
      %s5977 = int_to_ptr.vmem [resolvable:$true] %s5976
      %5979 = dma.vmem_to_hbm [thread:$0]  %s5977, 128, %s15, [#allocation5]
    $region105: #{tpu_custom_call.1} parent=1 // pred_fallthru
      _
    // Predicated region
    $region106: #{tpu_custom_call.1} parent=1 // pred_check
      _
    $region107: #{tpu_custom_call.1} parent=1 // pred_check_branch
      %5981 = sbr.rel (0) target = $region109
    $region108: #{tpu_custom_call.1} parent=1 // pred_region
      %5982 = dma.done [#allocation5], 128
    $region109: #{tpu_custom_call.1} parent=1 // pred_fallthru
      _
    %5983 = vsyncpa [#allocation4], 1
    %5984 = vsyncpa [#allocation7], 1
    %5985 = vsyncpa [#allocation10], 1
    %5986 = vsyncpa [#allocation13], 1
    %5987 = vsyncpa [#allocation16], 1
    %5988 = vsyncpa [#allocation19], 1
    %5989 = vsyncpa [#allocation5], 1

</llo_original>
